<compile_context>
chip_gen: v7x
topology: tpu7x:2x2x1
jax: 0.10.0
libtpu: 0.0.40
codegen_flags: <defaults>
</compile_context>

<pallas_src>
import functools

import numpy as np
import jax
import jax.numpy as jnp
from jax import lax
from jax.experimental import pallas as pl
from jax.experimental.pallas import tpu as pltpu

# ----------------------------- configuration -------------------------------
B = 2
IMG_C = 3
IMG_H = 64
IMG_W = 64
HIDDEN = 32
NUM_CLASSES = 3
ROW, COL = 2, 2
GRID_SCALE = (32, 32)
NUM_LEVELS = 3
STRIDES = [2 ** (i + 1) for i in range(NUM_LEVELS)]  # [2, 4, 8]
OUT_W = 2 + NUM_CLASSES + 1                          # packed output: pnt | cls


# ----------------------------- anchor points --------------------------------
def anchor_points(bs, h, w, row=ROW, col=COL, grid_scale=GRID_SCALE):
    """Exact reimplementation of AnchorPoints.forward (numpy, like PyTorch)."""
    x_space = grid_scale[0] / row
    y_space = grid_scale[1] / col
    deltas = np.array([[-x_space, -y_space], [x_space, -y_space], [0, 0],
                       [-x_space, y_space], [x_space, y_space]]) / 2
    gs = np.array(grid_scale)
    centers = np.stack(
        np.meshgrid(np.arange(np.ceil(w / gs[0])) + 0.5,
                    np.arange(np.ceil(h / gs[1])) + 0.5), -1) * gs
    anchors = np.expand_dims(centers, 2) + deltas            # (gy, gx, 5, 2)
    anchors = anchors.reshape(-1, 2).astype(np.float32)      # flatten(0, 2)
    return np.tile(anchors[None], (bs, 1, 1))                # repeat(bs, 1, 1)


# ----------------------------- parameter init -------------------------------
def init_params(key):
    ks = iter(jax.random.split(key, 64))

    def lin(fan_in, fan_out, zero=False):
        if zero:  # matches nn.init.constant_(..., 0) on deformable last layer
            return (jnp.zeros((fan_in, fan_out), jnp.float32),
                    jnp.zeros((1, fan_out), jnp.float32))
        w = 0.05 * jax.random.normal(next(ks), (fan_in, fan_out), jnp.float32)
        b = 0.01 * jax.random.normal(next(ks), (1, fan_out), jnp.float32)
        return w, b

    params = {}
    params["backbone"] = [lin(IMG_C * s * s, HIDDEN) for s in STRIDES]
    params["deform"] = []
    for _ in range(NUM_LEVELS):
        w1, b1 = lin(HIDDEN, HIDDEN)
        w2, b2 = lin(HIDDEN, 2, zero=True)
        params["deform"].append({"w1": w1, "b1": b1, "w2": w2, "b2": b2})
    w1, b1 = lin(HIDDEN, HIDDEN)
    w2, b2 = lin(HIDDEN, HIDDEN)
    w3, b3 = lin(HIDDEN, 2)
    params["reg_head"] = {"w1": w1, "b1": b1, "w2": w2, "b2": b2, "w3": w3, "b3": b3}
    w, b = lin(HIDDEN, NUM_CLASSES + 1)
    params["cls_head"] = {"w": w, "b": b}
    w1, b1 = lin(HIDDEN * NUM_LEVELS, HIDDEN)
    w2, b2 = lin(HIDDEN, NUM_LEVELS)
    params["loc_aggr"] = {"w1": w1, "b1": b1, "w2": w2, "b2": b2}
    w1, b1 = lin(HIDDEN * NUM_LEVELS, HIDDEN)
    w2, b2 = lin(HIDDEN, NUM_LEVELS)
    params["cls_aggr"] = {"w1": w1, "b1": b1, "w2": w2, "b2": b2}
    return params


# ------------------------------ patchify ------------------------------------
def patchify(images, s):
    """(B, C, H, W) -> (B, (H/s)*(W/s), C*s*s), row-major over H then W."""
    b, c, h, w = images.shape
    x = images.reshape(b, c, h // s, s, w // s, s)
    x = jnp.transpose(x, (0, 2, 4, 1, 3, 5))
    return x.reshape(b, (h // s) * (w // s), c * s * s)


# ------------------------ packed weight slab layout --------------------------
def _round_up(x, m):
    return (x + m - 1) // m * m


def _slab_layout():
    """Every layer gets: 1 bias row at `row` (8-aligned) + weight rows at
    row+8 .. row+8+fan_in.  Slab width = HIDDEN lanes; narrow outputs are
    zero padded to HIDDEN columns."""
    layers = []
    for l, s in enumerate(STRIDES):
        layers.append(("bb%d" % l, IMG_C * s * s, HIDDEN))
    for l in range(NUM_LEVELS):
        layers.append(("def%d_w1" % l, HIDDEN, HIDDEN))
        layers.append(("def%d_w2" % l, HIDDEN, 2))
    layers += [
        ("reg_w1", HIDDEN, HIDDEN), ("reg_w2", HIDDEN, HIDDEN),
        ("reg_w3", HIDDEN, 2), ("cls_w", HIDDEN, NUM_CLASSES + 1),
        ("loc_w1", HIDDEN * NUM_LEVELS, HIDDEN), ("loc_w2", HIDDEN, NUM_LEVELS),
        ("cga_w1", HIDDEN * NUM_LEVELS, HIDDEN), ("cga_w2", HIDDEN, NUM_LEVELS),
    ]
    offs = {}
    row = 0
    for name, k, n in layers:
        offs[name] = (row, k, n)
        row += 8 + _round_up(k, 8)      # bias row block + weight rows, 8-aligned
    return offs, row


SLAB_LAYOUT, SLAB_ROWS = _slab_layout()


def pack_weights(params):
    """Concatenate every weight/bias into one lane-dense (SLAB_ROWS, HIDDEN) slab."""
    pieces = {}
    for l in range(NUM_LEVELS):
        w, b = params["backbone"][l]
        pieces["bb%d" % l] = (w, b)
        d = params["deform"][l]
        pieces["def%d_w1" % l] = (d["w1"], d["b1"])
        pieces["def%d_w2" % l] = (d["w2"], d["b2"])
    r = params["reg_head"]
    pieces["reg_w1"] = (r["w1"], r["b1"])
    pieces["reg_w2"] = (r["w2"], r["b2"])
    pieces["reg_w3"] = (r["w3"], r["b3"])
    c = params["cls_head"]
    pieces["cls_w"] = (c["w"], c["b"])
    la = params["loc_aggr"]
    pieces["loc_w1"] = (la["w1"], la["b1"])
    pieces["loc_w2"] = (la["w2"], la["b2"])
    ca = params["cls_aggr"]
    pieces["cga_w1"] = (ca["w1"], ca["b1"])
    pieces["cga_w2"] = (ca["w2"], ca["b2"])

    slab = jnp.zeros((SLAB_ROWS, HIDDEN), jnp.float32)
    for name, (w, b) in pieces.items():
        row, k, n = SLAB_LAYOUT[name]
        slab = slab.at[row, :n].set(b.reshape(-1))
        slab = slab.at[row + 8:row + 8 + k, :n].set(w)
    return slab


# ------------------------------ DETR kernel ---------------------------------
def _detr_kernel(feat_hw, strides, anchors_ref, *refs):
    num_levels = len(strides)
    patch_refs = refs[:num_levels]
    slab_ref = refs[num_levels]
    out_ref = refs[num_levels + 1]

    def lin(x, name, relu=False):
        row, k, n = SLAB_LAYOUT[name]
        b = slab_ref[row:row + 1, :]                 # (1, HIDDEN), 8-aligned row
        w = slab_ref[row + 8:row + 8 + k, :]         # (k, HIDDEN), 8-aligned row
        y = jnp.dot(x, w, preferred_element_type=jnp.float32) + b
        return jnp.maximum(y, 0.0) if relu else y

    pts = anchors_ref[...]                           # (P, 2)
    num_pts = pts.shape[0]

    roi = []
    for l in range(num_levels):
        hl, wl = feat_hw[l]
        hw = hl * wl
        stride = float(strides[l])

        # fused synthetic backbone level: relu(patches @ W + b) kept in VMEM
        feat = lin(patch_refs[l][...], "bb%d" % l, relu=True)       # (HW, C)

        # hoisted flat-index -> (row, col) maps, reused by both samples
        idx_f = lax.broadcasted_iota(jnp.int32, (num_pts, hw), 1).astype(jnp.float32)
        row_f = jnp.floor(idx_f * (1.0 / wl))        # wl is a power of two: exact
        col_f = idx_f - row_f * wl

        def sample(p_xy, hl=hl, wl=wl, stride=stride,
                   row_f=row_f, col_f=col_f, feat=feat):
            # F.grid_sample(mode='bilinear', padding_mode='zeros',
            #               align_corners=True), separable mask construction.
            xpix = p_xy[:, 0:1] * ((wl - 1.0) / (stride * wl))
            ypix = p_xy[:, 1:2] * ((hl - 1.0) / (stride * hl))
            x0 = jnp.floor(xpix)
            y0 = jnp.floor(ypix)
            wx1 = xpix - x0
            wy1 = ypix - y0
            wx0 = jnp.where((x0 >= 0.0) & (x0 <= wl - 1.0), 1.0 - wx1, 0.0)
            wx1 = jnp.where((x0 + 1.0 >= 0.0) & (x0 + 1.0 <= wl - 1.0), wx1, 0.0)
            wy0 = jnp.where((y0 >= 0.0) & (y0 <= hl - 1.0), 1.0 - wy1, 0.0)
            wy1 = jnp.where((y0 + 1.0 >= 0.0) & (y0 + 1.0 <= hl - 1.0), wy1, 0.0)
            colm = (jnp.where(col_f == x0, wx0, 0.0)
                    + jnp.where(col_f == x0 + 1.0, wx1, 0.0))       # (P, HW)
            rowm = (jnp.where(row_f == y0, wy0, 0.0)
                    + jnp.where(row_f == y0 + 1.0, wy1, 0.0))       # (P, HW)
            m = rowm * colm                                          # (P, HW)
            return jnp.dot(m, feat, preferred_element_type=jnp.float32)

        pre = sample(pts)                                            # (P, C)
        hid = lin(pre, "def%d_w1" % l, relu=True)
        off = lin(hid, "def%d_w2" % l)[:, :2]                        # (P, 2)
        roi.append(sample(pts + off))                                # (P, C)

    attn_feat = jnp.concatenate(roi, axis=-1)                        # (P, L*C)

    def aggr(n1, n2):
        hid = lin(attn_feat, n1, relu=True)
        logits = lin(hid, n2)[:, :NUM_LEVELS]
        logits = logits - jnp.max(logits, axis=-1, keepdims=True)
        e = jnp.exp(logits)
        return e / jnp.sum(e, axis=-1, keepdims=True)

    reg_attn = aggr("loc_w1", "loc_w2")
    cls_attn = aggr("cga_w1", "cga_w2")

    reg_feat = jnp.zeros_like(roi[0])
    cls_feat = jnp.zeros_like(roi[0])
    for l in range(NUM_LEVELS):
        reg_feat = reg_feat + reg_attn[:, l:l + 1] * roi[l]
        cls_feat = cls_feat + cls_attn[:, l:l + 1] * roi[l]

    hid = lin(reg_feat, "reg_w1", relu=True)
    hid = lin(hid, "reg_w2", relu=True)
    pnt = lin(hid, "reg_w3")[:, :2] + pts
    cls = lin(cls_feat, "cls_w")[:, :NUM_CLASSES + 1]
    out_ref[...] = jnp.concatenate([pnt, cls], axis=-1)              # (P, 6)


# ------------------------------ forward wrapper ------------------------------
def _detr_forward_impl(images, params):
    bsz, _, h, w = images.shape
    # anchors are identical per image; built once at trace time (jit constant)
    anchors = jnp.asarray(anchor_points(1, h, w)[0])                 # (P, 2)
    num_pts = anchors.shape[0]
    feat_hw = tuple((h // s, w // s) for s in STRIDES)

    patches = [patchify(images, s) for s in STRIDES]                 # [(B, HW_l, K_l)]
    slab = pack_weights(params)                                      # (SLAB_ROWS, C)

    in_specs = [pl.BlockSpec((num_pts, 2), lambda b: (0, 0))]
    for l in range(NUM_LEVELS):
        hw = feat_hw[l][0] * feat_hw[l][1]
        k = IMG_C * STRIDES[l] * STRIDES[l]
        in_specs.append(pl.BlockSpec((None, hw, k), lambda b: (b, 0, 0)))
    in_specs.append(pl.BlockSpec((SLAB_ROWS, HIDDEN), lambda b: (0, 0)))

    out_specs = pl.BlockSpec((None, num_pts, OUT_W), lambda b: (b, 0, 0))
    out_shape = jax.ShapeDtypeStruct((bsz, num_pts, OUT_W), jnp.float32)

    kernel = functools.partial(_detr_kernel, feat_hw, tuple(STRIDES))
    packed = pl.pallas_call(
        kernel,
        grid=(bsz,),
        in_specs=in_specs,
        out_specs=out_specs,
        out_shape=out_shape,
        compiler_params=pltpu.CompilerParams(
            dimension_semantics=("parallel",)),       # 2 TCs on v7x
    )(anchors, *patches, slab)

    return {"pnt_coords": packed[..., :2],
            "cls_logits": packed[..., 2:2 + NUM_CLASSES + 1]}


detr_forward = jax.jit(_detr_forward_impl)


# ------------------------- pure-JAX reference -------------------------------
def _ref_sample(feat_flat, hl, wl, stride, pts):
    gx = 2.0 * pts[:, 0] / (stride * wl) - 1.0
    gy = 2.0 * pts[:, 1] / (stride * hl) - 1.0
    x = (gx + 1.0) * 0.5 * (wl - 1)
    y = (gy + 1.0) * 0.5 * (hl - 1)
    x0 = jnp.floor(x)
    y0 = jnp.floor(y)
    out = jnp.zeros((pts.shape[0], feat_flat.shape[1]), jnp.float32)
    for cx, cy, wt in ((x0, y0, (x0 + 1 - x) * (y0 + 1 - y)),
                       (x0 + 1, y0, (x - x0) * (y0 + 1 - y)),
                       (x0, y0 + 1, (x0 + 1 - x) * (y - y0)),
                       (x0 + 1, y0 + 1, (x - x0) * (y - y0))):
        valid = (cx >= 0) & (cx <= wl - 1) & (cy >= 0) & (cy <= hl - 1)
        idx = jnp.clip(cy * wl + cx, 0, hl * wl - 1).astype(jnp.int32)
        v = jnp.take(feat_flat, idx, axis=0)
        out = out + jnp.where(valid, wt, 0.0)[:, None] * v
    return out


def ref_forward(images, params):
    bsz, _, h, w = images.shape
    anchors = jnp.asarray(anchor_points(bsz, h, w))
    feats = []
    for l, s in enumerate(STRIDES):
        wgt, bias = params["backbone"][l]
        feats.append(jnp.maximum(patchify(images, s) @ wgt + bias, 0.0))
    pnt_all, cls_all = [], []
    for bi in range(bsz):
        pts = anchors[bi]
        roi = []
        for l, s in enumerate(STRIDES):
            hl, wl = h // s, w // s
            ff = feats[l][bi]
            d = params["deform"][l]
            pre = _ref_sample(ff, hl, wl, s, pts)
            hid = jnp.maximum(pre @ d["w1"] + d["b1"], 0.0)
            off = hid @ d["w2"] + d["b2"]
            roi.append(_ref_sample(ff, hl, wl, s, pts + off))
        attn_feat = jnp.concatenate(roi, -1)

        def aggr(p):
            hid = jnp.maximum(attn_feat @ p["w1"] + p["b1"], 0.0)
            return jax.nn.softmax(hid @ p["w2"] + p["b2"], axis=-1)

        reg_attn = aggr(params["loc_aggr"])
        cls_attn = aggr(params["cls_aggr"])
        reg_f = sum(reg_attn[:, l:l + 1] * roi[l] for l in range(NUM_LEVELS))
        cls_f = sum(cls_attn[:, l:l + 1] * roi[l] for l in range(NUM_LEVELS))
        r = params["reg_head"]
        hid = jnp.maximum(reg_f @ r["w1"] + r["b1"], 0.0)
        hid = jnp.maximum(hid @ r["w2"] + r["b2"], 0.0)
        pnt_all.append(hid @ r["w3"] + r["b3"] + pts)
        c = params["cls_head"]
        cls_all.append(cls_f @ c["w"] + c["b"])
    return jnp.stack(pnt_all), jnp.stack(cls_all)


# ---------------------------------- main -------------------------------------
if __name__ == "__main__":
    key = jax.random.PRNGKey(0)
    k_img, k_par = jax.random.split(key)
    images = jax.random.normal(k_img, (B, IMG_C, IMG_H, IMG_W), jnp.float32)
    params = init_params(k_par)

    outputs = detr_forward(images, params)
    jax.block_until_ready(outputs)

    pnt_ref, cls_ref = ref_forward(images, params)
    np.testing.assert_allclose(np.asarray(outputs["pnt_coords"]),
                               np.asarray(pnt_ref), rtol=1e-3, atol=1e-3)
    np.testing.assert_allclose(np.asarray(outputs["cls_logits"]),
                               np.asarray(cls_ref), rtol=1e-3, atol=1e-3)

    print("KERNEL_OK")
</pallas_src>

<mosaic_0001>
module attributes {stable_mosaic.version = 11 : i64} {
  func.func @_detr_kernel(%arg0: i32, %arg1: memref<20x2xf32, #tpu.memory_space<vmem>>, %arg2: memref<1x1024x12xf32, #tpu.memory_space<vmem>>, %arg3: memref<1x256x48xf32, #tpu.memory_space<vmem>>, %arg4: memref<1x64x192xf32, #tpu.memory_space<vmem>>, %arg5: memref<968x32xf32, #tpu.memory_space<vmem>>, %arg6: memref<1x20x6xf32, #tpu.memory_space<vmem>>) attributes {dimension_semantics = [#tpu.dimension_semantics<parallel>], iteration_bounds = array<i64: 2>, scalar_prefetch = 0 : i64, scratch_operands = 0 : i64, tpu.core_type = #tpu.core_type<tc>, window_params = [{pipeline_mode = #tpu.pipeline_mode<synchronous>, transform_indices = @transform_0, window_bounds = array<i64: 20, 2>}, {transform_indices = @transform_1, window_bounds = array<i64: 1, 1024, 12>}, {transform_indices = @transform_2, window_bounds = array<i64: 1, 256, 48>}, {transform_indices = @transform_3, window_bounds = array<i64: 1, 64, 192>}, {pipeline_mode = #tpu.pipeline_mode<synchronous>, transform_indices = @transform_4, window_bounds = array<i64: 968, 32>}, {transform_indices = @transform_5, window_bounds = array<i64: 1, 20, 6>}]} {
    %c0 = arith.constant 0 : index
    %c0_0 = arith.constant 0 : index
    %0 = vector.load %arg1[%c0, %c0_0] : memref<20x2xf32, #tpu.memory_space<vmem>>, vector<20x2xf32>
    %c0_1 = arith.constant 0 : index
    %c0_2 = arith.constant 0 : index
    %c0_3 = arith.constant 0 : index
    %1 = vector.load %arg2[%c0_1, %c0_2, %c0_3] : memref<1x1024x12xf32, #tpu.memory_space<vmem>>, vector<1x1024x12xf32>
    %2 = vector.shape_cast %1 : vector<1x1024x12xf32> to vector<1024x12xf32>
    %c0_4 = arith.constant 0 : index
    %c0_5 = arith.constant 0 : index
    %3 = vector.load %arg5[%c0_4, %c0_5] : memref<968x32xf32, #tpu.memory_space<vmem>>, vector<1x32xf32>
    %c8 = arith.constant 8 : index
    %c0_6 = arith.constant 0 : index
    %4 = vector.load %arg5[%c8, %c0_6] : memref<968x32xf32, #tpu.memory_space<vmem>>, vector<12x32xf32>
    %cst = arith.constant dense<0.000000e+00> : vector<1024x32xf32>
    %5 = tpu.matmul %2, %4, %cst {dimension_numbers = #tpu.dot_dimension_numbers<[1], [0], [0], [1], [0, 0, 1, 1], [], []>} : vector<1024x12xf32>, vector<12x32xf32>, vector<1024x32xf32> -> vector<1024x32xf32>
    %6 = vector.broadcast %3 : vector<1x32xf32> to vector<1024x32xf32>
    %7 = arith.addf %5, %6 : vector<1024x32xf32>
    %cst_7 = arith.constant 0.000000e+00 : f32
    %8 = vector.broadcast %cst_7 : f32 to vector<1024x32xf32>
    %9 = arith.maximumf %7, %8 : vector<1024x32xf32>
    %10 = tpu.iota {dimensions = array<i32: 1>} : vector<20x1024xi32>
    %11 = arith.sitofp %10 : vector<20x1024xi32> to vector<20x1024xf32>
    %cst_8 = arith.constant 3.125000e-02 : f32
    %12 = vector.broadcast %cst_8 : f32 to vector<20x1024xf32>
    %13 = arith.mulf %11, %12 : vector<20x1024xf32>
    %14 = math.floor %13 : vector<20x1024xf32>
    %cst_9 = arith.constant 3.200000e+01 : f32
    %15 = vector.broadcast %cst_9 : f32 to vector<20x1024xf32>
    %16 = arith.mulf %14, %15 : vector<20x1024xf32>
    %17 = arith.subf %11, %16 : vector<20x1024xf32>
    %18 = vector.extract_strided_slice %0 {offsets = [0, 0], sizes = [20, 1], strides = [1, 1]} : vector<20x2xf32> to vector<20x1xf32>
    %cst_10 = arith.constant 4.843750e-01 : f32
    %19 = vector.broadcast %cst_10 : f32 to vector<20x1xf32>
    %20 = arith.mulf %18, %19 : vector<20x1xf32>
    %21 = vector.extract_strided_slice %0 {offsets = [0, 1], sizes = [20, 1], strides = [1, 1]} : vector<20x2xf32> to vector<20x1xf32>
    %cst_11 = arith.constant 4.843750e-01 : f32
    %22 = vector.broadcast %cst_11 : f32 to vector<20x1xf32>
    %23 = arith.mulf %21, %22 : vector<20x1xf32>
    %24 = math.floor %20 : vector<20x1xf32>
    %25 = math.floor %23 : vector<20x1xf32>
    %26 = arith.subf %20, %24 : vector<20x1xf32>
    %27 = arith.subf %23, %25 : vector<20x1xf32>
    %cst_12 = arith.constant 0.000000e+00 : f32
    %28 = vector.broadcast %cst_12 : f32 to vector<20x1xf32>
    %29 = arith.cmpf oge, %24, %28 : vector<20x1xf32>
    %cst_13 = arith.constant 3.100000e+01 : f32
    %30 = vector.broadcast %cst_13 : f32 to vector<20x1xf32>
    %31 = arith.cmpf ole, %24, %30 : vector<20x1xf32>
    %32 = arith.andi %29, %31 : vector<20x1xi1>
    %cst_14 = arith.constant 1.000000e+00 : f32
    %33 = vector.broadcast %cst_14 : f32 to vector<20x1xf32>
    %34 = arith.subf %33, %26 : vector<20x1xf32>
    %cst_15 = arith.constant 0.000000e+00 : f32
    %35 = vector.broadcast %cst_15 : f32 to vector<20x1xf32>
    %36 = arith.select %32, %34, %35 : vector<20x1xi1>, vector<20x1xf32>
    %cst_16 = arith.constant 1.000000e+00 : f32
    %37 = vector.broadcast %cst_16 : f32 to vector<20x1xf32>
    %38 = arith.addf %24, %37 : vector<20x1xf32>
    %cst_17 = arith.constant 0.000000e+00 : f32
    %39 = vector.broadcast %cst_17 : f32 to vector<20x1xf32>
    %40 = arith.cmpf oge, %38, %39 : vector<20x1xf32>
    %cst_18 = arith.constant 1.000000e+00 : f32
    %41 = vector.broadcast %cst_18 : f32 to vector<20x1xf32>
    %42 = arith.addf %24, %41 : vector<20x1xf32>
    %cst_19 = arith.constant 3.100000e+01 : f32
    %43 = vector.broadcast %cst_19 : f32 to vector<20x1xf32>
    %44 = arith.cmpf ole, %42, %43 : vector<20x1xf32>
    %45 = arith.andi %40, %44 : vector<20x1xi1>
    %cst_20 = arith.constant 0.000000e+00 : f32
    %46 = vector.broadcast %cst_20 : f32 to vector<20x1xf32>
    %47 = arith.select %45, %26, %46 : vector<20x1xi1>, vector<20x1xf32>
    %cst_21 = arith.constant 0.000000e+00 : f32
    %48 = vector.broadcast %cst_21 : f32 to vector<20x1xf32>
    %49 = arith.cmpf oge, %25, %48 : vector<20x1xf32>
    %cst_22 = arith.constant 3.100000e+01 : f32
    %50 = vector.broadcast %cst_22 : f32 to vector<20x1xf32>
    %51 = arith.cmpf ole, %25, %50 : vector<20x1xf32>
    %52 = arith.andi %49, %51 : vector<20x1xi1>
    %cst_23 = arith.constant 1.000000e+00 : f32
    %53 = vector.broadcast %cst_23 : f32 to vector<20x1xf32>
    %54 = arith.subf %53, %27 : vector<20x1xf32>
    %cst_24 = arith.constant 0.000000e+00 : f32
    %55 = vector.broadcast %cst_24 : f32 to vector<20x1xf32>
    %56 = arith.select %52, %54, %55 : vector<20x1xi1>, vector<20x1xf32>
    %cst_25 = arith.constant 1.000000e+00 : f32
    %57 = vector.broadcast %cst_25 : f32 to vector<20x1xf32>
    %58 = arith.addf %25, %57 : vector<20x1xf32>
    %cst_26 = arith.constant 0.000000e+00 : f32
    %59 = vector.broadcast %cst_26 : f32 to vector<20x1xf32>
    %60 = arith.cmpf oge, %58, %59 : vector<20x1xf32>
    %cst_27 = arith.constant 1.000000e+00 : f32
    %61 = vector.broadcast %cst_27 : f32 to vector<20x1xf32>
    %62 = arith.addf %25, %61 : vector<20x1xf32>
    %cst_28 = arith.constant 3.100000e+01 : f32
    %63 = vector.broadcast %cst_28 : f32 to vector<20x1xf32>
    %64 = arith.cmpf ole, %62, %63 : vector<20x1xf32>
    %65 = arith.andi %60, %64 : vector<20x1xi1>
    %cst_29 = arith.constant 0.000000e+00 : f32
    %66 = vector.broadcast %cst_29 : f32 to vector<20x1xf32>
    %67 = arith.select %65, %27, %66 : vector<20x1xi1>, vector<20x1xf32>
    %68 = vector.broadcast %24 : vector<20x1xf32> to vector<20x1024xf32>
    %69 = arith.cmpf oeq, %17, %68 : vector<20x1024xf32>
    %cst_30 = arith.constant 0.000000e+00 : f32
    %70 = vector.shape_cast %36 : vector<20x1xf32> to vector<20x1xf32>
    %71 = vector.broadcast %70 : vector<20x1xf32> to vector<20x1024xf32>
    %72 = vector.broadcast %cst_30 : f32 to vector<20x1024xf32>
    %73 = arith.select %69, %71, %72 : vector<20x1024xi1>, vector<20x1024xf32>
    %cst_31 = arith.constant 1.000000e+00 : f32
    %74 = vector.broadcast %cst_31 : f32 to vector<20x1xf32>
    %75 = arith.addf %24, %74 : vector<20x1xf32>
    %76 = vector.broadcast %75 : vector<20x1xf32> to vector<20x1024xf32>
    %77 = arith.cmpf oeq, %17, %76 : vector<20x1024xf32>
    %cst_32 = arith.constant 0.000000e+00 : f32
    %78 = vector.shape_cast %47 : vector<20x1xf32> to vector<20x1xf32>
    %79 = vector.broadcast %78 : vector<20x1xf32> to vector<20x1024xf32>
    %80 = vector.broadcast %cst_32 : f32 to vector<20x1024xf32>
    %81 = arith.select %77, %79, %80 : vector<20x1024xi1>, vector<20x1024xf32>
    %82 = arith.addf %73, %81 : vector<20x1024xf32>
    %83 = vector.broadcast %25 : vector<20x1xf32> to vector<20x1024xf32>
    %84 = arith.cmpf oeq, %14, %83 : vector<20x1024xf32>
    %cst_33 = arith.constant 0.000000e+00 : f32
    %85 = vector.shape_cast %56 : vector<20x1xf32> to vector<20x1xf32>
    %86 = vector.broadcast %85 : vector<20x1xf32> to vector<20x1024xf32>
    %87 = vector.broadcast %cst_33 : f32 to vector<20x1024xf32>
    %88 = arith.select %84, %86, %87 : vector<20x1024xi1>, vector<20x1024xf32>
    %cst_34 = arith.constant 1.000000e+00 : f32
    %89 = vector.broadcast %cst_34 : f32 to vector<20x1xf32>
    %90 = arith.addf %25, %89 : vector<20x1xf32>
    %91 = vector.broadcast %90 : vector<20x1xf32> to vector<20x1024xf32>
    %92 = arith.cmpf oeq, %14, %91 : vector<20x1024xf32>
    %cst_35 = arith.constant 0.000000e+00 : f32
    %93 = vector.shape_cast %67 : vector<20x1xf32> to vector<20x1xf32>
    %94 = vector.broadcast %93 : vector<20x1xf32> to vector<20x1024xf32>
    %95 = vector.broadcast %cst_35 : f32 to vector<20x1024xf32>
    %96 = arith.select %92, %94, %95 : vector<20x1024xi1>, vector<20x1024xf32>
    %97 = arith.addf %88, %96 : vector<20x1024xf32>
    %98 = arith.mulf %97, %82 : vector<20x1024xf32>
    %cst_36 = arith.constant dense<0.000000e+00> : vector<20x32xf32>
    %99 = tpu.matmul %98, %9, %cst_36 {dimension_numbers = #tpu.dot_dimension_numbers<[1], [0], [0], [1], [0, 0, 1, 1], [], []>} : vector<20x1024xf32>, vector<1024x32xf32>, vector<20x32xf32> -> vector<20x32xf32>
    %c280 = arith.constant 280 : index
    %c0_37 = arith.constant 0 : index
    %100 = vector.load %arg5[%c280, %c0_37] : memref<968x32xf32, #tpu.memory_space<vmem>>, vector<1x32xf32>
    %c288 = arith.constant 288 : index
    %c0_38 = arith.constant 0 : index
    %101 = vector.load %arg5[%c288, %c0_38] : memref<968x32xf32, #tpu.memory_space<vmem>>, vector<32x32xf32>
    %cst_39 = arith.constant dense<0.000000e+00> : vector<20x32xf32>
    %102 = tpu.matmul %99, %101, %cst_39 {dimension_numbers = #tpu.dot_dimension_numbers<[1], [0], [0], [1], [0, 0, 1, 1], [], []>} : vector<20x32xf32>, vector<32x32xf32>, vector<20x32xf32> -> vector<20x32xf32>
    %103 = vector.broadcast %100 : vector<1x32xf32> to vector<20x32xf32>
    %104 = arith.addf %102, %103 : vector<20x32xf32>
    %cst_40 = arith.constant 0.000000e+00 : f32
    %105 = vector.broadcast %cst_40 : f32 to vector<20x32xf32>
    %106 = arith.maximumf %104, %105 : vector<20x32xf32>
    %c320 = arith.constant 320 : index
    %c0_41 = arith.constant 0 : index
    %107 = vector.load %arg5[%c320, %c0_41] : memref<968x32xf32, #tpu.memory_space<vmem>>, vector<1x32xf32>
    %c328 = arith.constant 328 : index
    %c0_42 = arith.constant 0 : index
    %108 = vector.load %arg5[%c328, %c0_42] : memref<968x32xf32, #tpu.memory_space<vmem>>, vector<32x32xf32>
    %cst_43 = arith.constant dense<0.000000e+00> : vector<20x32xf32>
    %109 = tpu.matmul %106, %108, %cst_43 {dimension_numbers = #tpu.dot_dimension_numbers<[1], [0], [0], [1], [0, 0, 1, 1], [], []>} : vector<20x32xf32>, vector<32x32xf32>, vector<20x32xf32> -> vector<20x32xf32>
    %110 = vector.broadcast %107 : vector<1x32xf32> to vector<20x32xf32>
    %111 = arith.addf %109, %110 : vector<20x32xf32>
    %112 = vector.extract_strided_slice %111 {offsets = [0, 0], sizes = [20, 2], strides = [1, 1]} : vector<20x32xf32> to vector<20x2xf32>
    %113 = arith.addf %0, %112 : vector<20x2xf32>
    %114 = vector.extract_strided_slice %113 {offsets = [0, 0], sizes = [20, 1], strides = [1, 1]} : vector<20x2xf32> to vector<20x1xf32>
    %cst_44 = arith.constant 4.843750e-01 : f32
    %115 = vector.broadcast %cst_44 : f32 to vector<20x1xf32>
    %116 = arith.mulf %114, %115 : vector<20x1xf32>
    %117 = vector.extract_strided_slice %113 {offsets = [0, 1], sizes = [20, 1], strides = [1, 1]} : vector<20x2xf32> to vector<20x1xf32>
    %cst_45 = arith.constant 4.843750e-01 : f32
    %118 = vector.broadcast %cst_45 : f32 to vector<20x1xf32>
    %119 = arith.mulf %117, %118 : vector<20x1xf32>
    %120 = math.floor %116 : vector<20x1xf32>
    %121 = math.floor %119 : vector<20x1xf32>
    %122 = arith.subf %116, %120 : vector<20x1xf32>
    %123 = arith.subf %119, %121 : vector<20x1xf32>
    %cst_46 = arith.constant 0.000000e+00 : f32
    %124 = vector.broadcast %cst_46 : f32 to vector<20x1xf32>
    %125 = arith.cmpf oge, %120, %124 : vector<20x1xf32>
    %cst_47 = arith.constant 3.100000e+01 : f32
    %126 = vector.broadcast %cst_47 : f32 to vector<20x1xf32>
    %127 = arith.cmpf ole, %120, %126 : vector<20x1xf32>
    %128 = arith.andi %125, %127 : vector<20x1xi1>
    %cst_48 = arith.constant 1.000000e+00 : f32
    %129 = vector.broadcast %cst_48 : f32 to vector<20x1xf32>
    %130 = arith.subf %129, %122 : vector<20x1xf32>
    %cst_49 = arith.constant 0.000000e+00 : f32
    %131 = vector.broadcast %cst_49 : f32 to vector<20x1xf32>
    %132 = arith.select %128, %130, %131 : vector<20x1xi1>, vector<20x1xf32>
    %cst_50 = arith.constant 1.000000e+00 : f32
    %133 = vector.broadcast %cst_50 : f32 to vector<20x1xf32>
    %134 = arith.addf %120, %133 : vector<20x1xf32>
    %cst_51 = arith.constant 0.000000e+00 : f32
    %135 = vector.broadcast %cst_51 : f32 to vector<20x1xf32>
    %136 = arith.cmpf oge, %134, %135 : vector<20x1xf32>
    %cst_52 = arith.constant 1.000000e+00 : f32
    %137 = vector.broadcast %cst_52 : f32 to vector<20x1xf32>
    %138 = arith.addf %120, %137 : vector<20x1xf32>
    %cst_53 = arith.constant 3.100000e+01 : f32
    %139 = vector.broadcast %cst_53 : f32 to vector<20x1xf32>
    %140 = arith.cmpf ole, %138, %139 : vector<20x1xf32>
    %141 = arith.andi %136, %140 : vector<20x1xi1>
    %cst_54 = arith.constant 0.000000e+00 : f32
    %142 = vector.broadcast %cst_54 : f32 to vector<20x1xf32>
    %143 = arith.select %141, %122, %142 : vector<20x1xi1>, vector<20x1xf32>
    %cst_55 = arith.constant 0.000000e+00 : f32
    %144 = vector.broadcast %cst_55 : f32 to vector<20x1xf32>
    %145 = arith.cmpf oge, %121, %144 : vector<20x1xf32>
    %cst_56 = arith.constant 3.100000e+01 : f32
    %146 = vector.broadcast %cst_56 : f32 to vector<20x1xf32>
    %147 = arith.cmpf ole, %121, %146 : vector<20x1xf32>
    %148 = arith.andi %145, %147 : vector<20x1xi1>
    %cst_57 = arith.constant 1.000000e+00 : f32
    %149 = vector.broadcast %cst_57 : f32 to vector<20x1xf32>
    %150 = arith.subf %149, %123 : vector<20x1xf32>
    %cst_58 = arith.constant 0.000000e+00 : f32
    %151 = vector.broadcast %cst_58 : f32 to vector<20x1xf32>
    %152 = arith.select %148, %150, %151 : vector<20x1xi1>, vector<20x1xf32>
    %cst_59 = arith.constant 1.000000e+00 : f32
    %153 = vector.broadcast %cst_59 : f32 to vector<20x1xf32>
    %154 = arith.addf %121, %153 : vector<20x1xf32>
    %cst_60 = arith.constant 0.000000e+00 : f32
    %155 = vector.broadcast %cst_60 : f32 to vector<20x1xf32>
    %156 = arith.cmpf oge, %154, %155 : vector<20x1xf32>
    %cst_61 = arith.constant 1.000000e+00 : f32
    %157 = vector.broadcast %cst_61 : f32 to vector<20x1xf32>
    %158 = arith.addf %121, %157 : vector<20x1xf32>
    %cst_62 = arith.constant 3.100000e+01 : f32
    %159 = vector.broadcast %cst_62 : f32 to vector<20x1xf32>
    %160 = arith.cmpf ole, %158, %159 : vector<20x1xf32>
    %161 = arith.andi %156, %160 : vector<20x1xi1>
    %cst_63 = arith.constant 0.000000e+00 : f32
    %162 = vector.broadcast %cst_63 : f32 to vector<20x1xf32>
    %163 = arith.select %161, %123, %162 : vector<20x1xi1>, vector<20x1xf32>
    %164 = vector.broadcast %120 : vector<20x1xf32> to vector<20x1024xf32>
    %165 = arith.cmpf oeq, %17, %164 : vector<20x1024xf32>
    %cst_64 = arith.constant 0.000000e+00 : f32
    %166 = vector.shape_cast %132 : vector<20x1xf32> to vector<20x1xf32>
    %167 = vector.broadcast %166 : vector<20x1xf32> to vector<20x1024xf32>
    %168 = vector.broadcast %cst_64 : f32 to vector<20x1024xf32>
    %169 = arith.select %165, %167, %168 : vector<20x1024xi1>, vector<20x1024xf32>
    %cst_65 = arith.constant 1.000000e+00 : f32
    %170 = vector.broadcast %cst_65 : f32 to vector<20x1xf32>
    %171 = arith.addf %120, %170 : vector<20x1xf32>
    %172 = vector.broadcast %171 : vector<20x1xf32> to vector<20x1024xf32>
    %173 = arith.cmpf oeq, %17, %172 : vector<20x1024xf32>
    %cst_66 = arith.constant 0.000000e+00 : f32
    %174 = vector.shape_cast %143 : vector<20x1xf32> to vector<20x1xf32>
    %175 = vector.broadcast %174 : vector<20x1xf32> to vector<20x1024xf32>
    %176 = vector.broadcast %cst_66 : f32 to vector<20x1024xf32>
    %177 = arith.select %173, %175, %176 : vector<20x1024xi1>, vector<20x1024xf32>
    %178 = arith.addf %169, %177 : vector<20x1024xf32>
    %179 = vector.broadcast %121 : vector<20x1xf32> to vector<20x1024xf32>
    %180 = arith.cmpf oeq, %14, %179 : vector<20x1024xf32>
    %cst_67 = arith.constant 0.000000e+00 : f32
    %181 = vector.shape_cast %152 : vector<20x1xf32> to vector<20x1xf32>
    %182 = vector.broadcast %181 : vector<20x1xf32> to vector<20x1024xf32>
    %183 = vector.broadcast %cst_67 : f32 to vector<20x1024xf32>
    %184 = arith.select %180, %182, %183 : vector<20x1024xi1>, vector<20x1024xf32>
    %cst_68 = arith.constant 1.000000e+00 : f32
    %185 = vector.broadcast %cst_68 : f32 to vector<20x1xf32>
    %186 = arith.addf %121, %185 : vector<20x1xf32>
    %187 = vector.broadcast %186 : vector<20x1xf32> to vector<20x1024xf32>
    %188 = arith.cmpf oeq, %14, %187 : vector<20x1024xf32>
    %cst_69 = arith.constant 0.000000e+00 : f32
    %189 = vector.shape_cast %163 : vector<20x1xf32> to vector<20x1xf32>
    %190 = vector.broadcast %189 : vector<20x1xf32> to vector<20x1024xf32>
    %191 = vector.broadcast %cst_69 : f32 to vector<20x1024xf32>
    %192 = arith.select %188, %190, %191 : vector<20x1024xi1>, vector<20x1024xf32>
    %193 = arith.addf %184, %192 : vector<20x1024xf32>
    %194 = arith.mulf %193, %178 : vector<20x1024xf32>
    %cst_70 = arith.constant dense<0.000000e+00> : vector<20x32xf32>
    %195 = tpu.matmul %194, %9, %cst_70 {dimension_numbers = #tpu.dot_dimension_numbers<[1], [0], [0], [1], [0, 0, 1, 1], [], []>} : vector<20x1024xf32>, vector<1024x32xf32>, vector<20x32xf32> -> vector<20x32xf32>
    %c0_71 = arith.constant 0 : index
    %c0_72 = arith.constant 0 : index
    %c0_73 = arith.constant 0 : index
    %196 = vector.load %arg3[%c0_71, %c0_72, %c0_73] : memref<1x256x48xf32, #tpu.memory_space<vmem>>, vector<1x256x48xf32>
    %197 = vector.shape_cast %196 : vector<1x256x48xf32> to vector<256x48xf32>
    %c24 = arith.constant 24 : index
    %c0_74 = arith.constant 0 : index
    %198 = vector.load %arg5[%c24, %c0_74] : memref<968x32xf32, #tpu.memory_space<vmem>>, vector<1x32xf32>
    %c32 = arith.constant 32 : index
    %c0_75 = arith.constant 0 : index
    %199 = vector.load %arg5[%c32, %c0_75] : memref<968x32xf32, #tpu.memory_space<vmem>>, vector<48x32xf32>
    %cst_76 = arith.constant dense<0.000000e+00> : vector<256x32xf32>
    %200 = tpu.matmul %197, %199, %cst_76 {dimension_numbers = #tpu.dot_dimension_numbers<[1], [0], [0], [1], [0, 0, 1, 1], [], []>} : vector<256x48xf32>, vector<48x32xf32>, vector<256x32xf32> -> vector<256x32xf32>
    %201 = vector.broadcast %198 : vector<1x32xf32> to vector<256x32xf32>
    %202 = arith.addf %200, %201 : vector<256x32xf32>
    %cst_77 = arith.constant 0.000000e+00 : f32
    %203 = vector.broadcast %cst_77 : f32 to vector<256x32xf32>
    %204 = arith.maximumf %202, %203 : vector<256x32xf32>
    %205 = tpu.iota {dimensions = array<i32: 1>} : vector<20x256xi32>
    %206 = arith.sitofp %205 : vector<20x256xi32> to vector<20x256xf32>
    %cst_78 = arith.constant 6.250000e-02 : f32
    %207 = vector.broadcast %cst_78 : f32 to vector<20x256xf32>
    %208 = arith.mulf %206, %207 : vector<20x256xf32>
    %209 = math.floor %208 : vector<20x256xf32>
    %cst_79 = arith.constant 1.600000e+01 : f32
    %210 = vector.broadcast %cst_79 : f32 to vector<20x256xf32>
    %211 = arith.mulf %209, %210 : vector<20x256xf32>
    %212 = arith.subf %206, %211 : vector<20x256xf32>
    %213 = vector.extract_strided_slice %0 {offsets = [0, 0], sizes = [20, 1], strides = [1, 1]} : vector<20x2xf32> to vector<20x1xf32>
    %cst_80 = arith.constant 2.343750e-01 : f32
    %214 = vector.broadcast %cst_80 : f32 to vector<20x1xf32>
    %215 = arith.mulf %213, %214 : vector<20x1xf32>
    %216 = vector.extract_strided_slice %0 {offsets = [0, 1], sizes = [20, 1], strides = [1, 1]} : vector<20x2xf32> to vector<20x1xf32>
    %cst_81 = arith.constant 2.343750e-01 : f32
    %217 = vector.broadcast %cst_81 : f32 to vector<20x1xf32>
    %218 = arith.mulf %216, %217 : vector<20x1xf32>
    %219 = math.floor %215 : vector<20x1xf32>
    %220 = math.floor %218 : vector<20x1xf32>
    %221 = arith.subf %215, %219 : vector<20x1xf32>
    %222 = arith.subf %218, %220 : vector<20x1xf32>
    %cst_82 = arith.constant 0.000000e+00 : f32
    %223 = vector.broadcast %cst_82 : f32 to vector<20x1xf32>
    %224 = arith.cmpf oge, %219, %223 : vector<20x1xf32>
    %cst_83 = arith.constant 1.500000e+01 : f32
    %225 = vector.broadcast %cst_83 : f32 to vector<20x1xf32>
    %226 = arith.cmpf ole, %219, %225 : vector<20x1xf32>
    %227 = arith.andi %224, %226 : vector<20x1xi1>
    %cst_84 = arith.constant 1.000000e+00 : f32
    %228 = vector.broadcast %cst_84 : f32 to vector<20x1xf32>
    %229 = arith.subf %228, %221 : vector<20x1xf32>
    %cst_85 = arith.constant 0.000000e+00 : f32
    %230 = vector.broadcast %cst_85 : f32 to vector<20x1xf32>
    %231 = arith.select %227, %229, %230 : vector<20x1xi1>, vector<20x1xf32>
    %cst_86 = arith.constant 1.000000e+00 : f32
    %232 = vector.broadcast %cst_86 : f32 to vector<20x1xf32>
    %233 = arith.addf %219, %232 : vector<20x1xf32>
    %cst_87 = arith.constant 0.000000e+00 : f32
    %234 = vector.broadcast %cst_87 : f32 to vector<20x1xf32>
    %235 = arith.cmpf oge, %233, %234 : vector<20x1xf32>
    %cst_88 = arith.constant 1.000000e+00 : f32
    %236 = vector.broadcast %cst_88 : f32 to vector<20x1xf32>
    %237 = arith.addf %219, %236 : vector<20x1xf32>
    %cst_89 = arith.constant 1.500000e+01 : f32
    %238 = vector.broadcast %cst_89 : f32 to vector<20x1xf32>
    %239 = arith.cmpf ole, %237, %238 : vector<20x1xf32>
    %240 = arith.andi %235, %239 : vector<20x1xi1>
    %cst_90 = arith.constant 0.000000e+00 : f32
    %241 = vector.broadcast %cst_90 : f32 to vector<20x1xf32>
    %242 = arith.select %240, %221, %241 : vector<20x1xi1>, vector<20x1xf32>
    %cst_91 = arith.constant 0.000000e+00 : f32
    %243 = vector.broadcast %cst_91 : f32 to vector<20x1xf32>
    %244 = arith.cmpf oge, %220, %243 : vector<20x1xf32>
    %cst_92 = arith.constant 1.500000e+01 : f32
    %245 = vector.broadcast %cst_92 : f32 to vector<20x1xf32>
    %246 = arith.cmpf ole, %220, %245 : vector<20x1xf32>
    %247 = arith.andi %244, %246 : vector<20x1xi1>
    %cst_93 = arith.constant 1.000000e+00 : f32
    %248 = vector.broadcast %cst_93 : f32 to vector<20x1xf32>
    %249 = arith.subf %248, %222 : vector<20x1xf32>
    %cst_94 = arith.constant 0.000000e+00 : f32
    %250 = vector.broadcast %cst_94 : f32 to vector<20x1xf32>
    %251 = arith.select %247, %249, %250 : vector<20x1xi1>, vector<20x1xf32>
    %cst_95 = arith.constant 1.000000e+00 : f32
    %252 = vector.broadcast %cst_95 : f32 to vector<20x1xf32>
    %253 = arith.addf %220, %252 : vector<20x1xf32>
    %cst_96 = arith.constant 0.000000e+00 : f32
    %254 = vector.broadcast %cst_96 : f32 to vector<20x1xf32>
    %255 = arith.cmpf oge, %253, %254 : vector<20x1xf32>
    %cst_97 = arith.constant 1.000000e+00 : f32
    %256 = vector.broadcast %cst_97 : f32 to vector<20x1xf32>
    %257 = arith.addf %220, %256 : vector<20x1xf32>
    %cst_98 = arith.constant 1.500000e+01 : f32
    %258 = vector.broadcast %cst_98 : f32 to vector<20x1xf32>
    %259 = arith.cmpf ole, %257, %258 : vector<20x1xf32>
    %260 = arith.andi %255, %259 : vector<20x1xi1>
    %cst_99 = arith.constant 0.000000e+00 : f32
    %261 = vector.broadcast %cst_99 : f32 to vector<20x1xf32>
    %262 = arith.select %260, %222, %261 : vector<20x1xi1>, vector<20x1xf32>
    %263 = vector.broadcast %219 : vector<20x1xf32> to vector<20x256xf32>
    %264 = arith.cmpf oeq, %212, %263 : vector<20x256xf32>
    %cst_100 = arith.constant 0.000000e+00 : f32
    %265 = vector.shape_cast %231 : vector<20x1xf32> to vector<20x1xf32>
    %266 = vector.broadcast %265 : vector<20x1xf32> to vector<20x256xf32>
    %267 = vector.broadcast %cst_100 : f32 to vector<20x256xf32>
    %268 = arith.select %264, %266, %267 : vector<20x256xi1>, vector<20x256xf32>
    %cst_101 = arith.constant 1.000000e+00 : f32
    %269 = vector.broadcast %cst_101 : f32 to vector<20x1xf32>
    %270 = arith.addf %219, %269 : vector<20x1xf32>
    %271 = vector.broadcast %270 : vector<20x1xf32> to vector<20x256xf32>
    %272 = arith.cmpf oeq, %212, %271 : vector<20x256xf32>
    %cst_102 = arith.constant 0.000000e+00 : f32
    %273 = vector.shape_cast %242 : vector<20x1xf32> to vector<20x1xf32>
    %274 = vector.broadcast %273 : vector<20x1xf32> to vector<20x256xf32>
    %275 = vector.broadcast %cst_102 : f32 to vector<20x256xf32>
    %276 = arith.select %272, %274, %275 : vector<20x256xi1>, vector<20x256xf32>
    %277 = arith.addf %268, %276 : vector<20x256xf32>
    %278 = vector.broadcast %220 : vector<20x1xf32> to vector<20x256xf32>
    %279 = arith.cmpf oeq, %209, %278 : vector<20x256xf32>
    %cst_103 = arith.constant 0.000000e+00 : f32
    %280 = vector.shape_cast %251 : vector<20x1xf32> to vector<20x1xf32>
    %281 = vector.broadcast %280 : vector<20x1xf32> to vector<20x256xf32>
    %282 = vector.broadcast %cst_103 : f32 to vector<20x256xf32>
    %283 = arith.select %279, %281, %282 : vector<20x256xi1>, vector<20x256xf32>
    %cst_104 = arith.constant 1.000000e+00 : f32
    %284 = vector.broadcast %cst_104 : f32 to vector<20x1xf32>
    %285 = arith.addf %220, %284 : vector<20x1xf32>
    %286 = vector.broadcast %285 : vector<20x1xf32> to vector<20x256xf32>
    %287 = arith.cmpf oeq, %209, %286 : vector<20x256xf32>
    %cst_105 = arith.constant 0.000000e+00 : f32
    %288 = vector.shape_cast %262 : vector<20x1xf32> to vector<20x1xf32>
    %289 = vector.broadcast %288 : vector<20x1xf32> to vector<20x256xf32>
    %290 = vector.broadcast %cst_105 : f32 to vector<20x256xf32>
    %291 = arith.select %287, %289, %290 : vector<20x256xi1>, vector<20x256xf32>
    %292 = arith.addf %283, %291 : vector<20x256xf32>
    %293 = arith.mulf %292, %277 : vector<20x256xf32>
    %cst_106 = arith.constant dense<0.000000e+00> : vector<20x32xf32>
    %294 = tpu.matmul %293, %204, %cst_106 {dimension_numbers = #tpu.dot_dimension_numbers<[1], [0], [0], [1], [0, 0, 1, 1], [], []>} : vector<20x256xf32>, vector<256x32xf32>, vector<20x32xf32> -> vector<20x32xf32>
    %c360 = arith.constant 360 : index
    %c0_107 = arith.constant 0 : index
    %295 = vector.load %arg5[%c360, %c0_107] : memref<968x32xf32, #tpu.memory_space<vmem>>, vector<1x32xf32>
    %c368 = arith.constant 368 : index
    %c0_108 = arith.constant 0 : index
    %296 = vector.load %arg5[%c368, %c0_108] : memref<968x32xf32, #tpu.memory_space<vmem>>, vector<32x32xf32>
    %cst_109 = arith.constant dense<0.000000e+00> : vector<20x32xf32>
    %297 = tpu.matmul %294, %296, %cst_109 {dimension_numbers = #tpu.dot_dimension_numbers<[1], [0], [0], [1], [0, 0, 1, 1], [], []>} : vector<20x32xf32>, vector<32x32xf32>, vector<20x32xf32> -> vector<20x32xf32>
    %298 = vector.broadcast %295 : vector<1x32xf32> to vector<20x32xf32>
    %299 = arith.addf %297, %298 : vector<20x32xf32>
    %cst_110 = arith.constant 0.000000e+00 : f32
    %300 = vector.broadcast %cst_110 : f32 to vector<20x32xf32>
    %301 = arith.maximumf %299, %300 : vector<20x32xf32>
    %c400 = arith.constant 400 : index
    %c0_111 = arith.constant 0 : index
    %302 = vector.load %arg5[%c400, %c0_111] : memref<968x32xf32, #tpu.memory_space<vmem>>, vector<1x32xf32>
    %c408 = arith.constant 408 : index
    %c0_112 = arith.constant 0 : index
    %303 = vector.load %arg5[%c408, %c0_112] : memref<968x32xf32, #tpu.memory_space<vmem>>, vector<32x32xf32>
    %cst_113 = arith.constant dense<0.000000e+00> : vector<20x32xf32>
    %304 = tpu.matmul %301, %303, %cst_113 {dimension_numbers = #tpu.dot_dimension_numbers<[1], [0], [0], [1], [0, 0, 1, 1], [], []>} : vector<20x32xf32>, vector<32x32xf32>, vector<20x32xf32> -> vector<20x32xf32>
    %305 = vector.broadcast %302 : vector<1x32xf32> to vector<20x32xf32>
    %306 = arith.addf %304, %305 : vector<20x32xf32>
    %307 = vector.extract_strided_slice %306 {offsets = [0, 0], sizes = [20, 2], strides = [1, 1]} : vector<20x32xf32> to vector<20x2xf32>
    %308 = arith.addf %0, %307 : vector<20x2xf32>
    %309 = vector.extract_strided_slice %308 {offsets = [0, 0], sizes = [20, 1], strides = [1, 1]} : vector<20x2xf32> to vector<20x1xf32>
    %cst_114 = arith.constant 2.343750e-01 : f32
    %310 = vector.broadcast %cst_114 : f32 to vector<20x1xf32>
    %311 = arith.mulf %309, %310 : vector<20x1xf32>
    %312 = vector.extract_strided_slice %308 {offsets = [0, 1], sizes = [20, 1], strides = [1, 1]} : vector<20x2xf32> to vector<20x1xf32>
    %cst_115 = arith.constant 2.343750e-01 : f32
    %313 = vector.broadcast %cst_115 : f32 to vector<20x1xf32>
    %314 = arith.mulf %312, %313 : vector<20x1xf32>
    %315 = math.floor %311 : vector<20x1xf32>
    %316 = math.floor %314 : vector<20x1xf32>
    %317 = arith.subf %311, %315 : vector<20x1xf32>
    %318 = arith.subf %314, %316 : vector<20x1xf32>
    %cst_116 = arith.constant 0.000000e+00 : f32
    %319 = vector.broadcast %cst_116 : f32 to vector<20x1xf32>
    %320 = arith.cmpf oge, %315, %319 : vector<20x1xf32>
    %cst_117 = arith.constant 1.500000e+01 : f32
    %321 = vector.broadcast %cst_117 : f32 to vector<20x1xf32>
    %322 = arith.cmpf ole, %315, %321 : vector<20x1xf32>
    %323 = arith.andi %320, %322 : vector<20x1xi1>
    %cst_118 = arith.constant 1.000000e+00 : f32
    %324 = vector.broadcast %cst_118 : f32 to vector<20x1xf32>
    %325 = arith.subf %324, %317 : vector<20x1xf32>
    %cst_119 = arith.constant 0.000000e+00 : f32
    %326 = vector.broadcast %cst_119 : f32 to vector<20x1xf32>
    %327 = arith.select %323, %325, %326 : vector<20x1xi1>, vector<20x1xf32>
    %cst_120 = arith.constant 1.000000e+00 : f32
    %328 = vector.broadcast %cst_120 : f32 to vector<20x1xf32>
    %329 = arith.addf %315, %328 : vector<20x1xf32>
    %cst_121 = arith.constant 0.000000e+00 : f32
    %330 = vector.broadcast %cst_121 : f32 to vector<20x1xf32>
    %331 = arith.cmpf oge, %329, %330 : vector<20x1xf32>
    %cst_122 = arith.constant 1.000000e+00 : f32
    %332 = vector.broadcast %cst_122 : f32 to vector<20x1xf32>
    %333 = arith.addf %315, %332 : vector<20x1xf32>
    %cst_123 = arith.constant 1.500000e+01 : f32
    %334 = vector.broadcast %cst_123 : f32 to vector<20x1xf32>
    %335 = arith.cmpf ole, %333, %334 : vector<20x1xf32>
    %336 = arith.andi %331, %335 : vector<20x1xi1>
    %cst_124 = arith.constant 0.000000e+00 : f32
    %337 = vector.broadcast %cst_124 : f32 to vector<20x1xf32>
    %338 = arith.select %336, %317, %337 : vector<20x1xi1>, vector<20x1xf32>
    %cst_125 = arith.constant 0.000000e+00 : f32
    %339 = vector.broadcast %cst_125 : f32 to vector<20x1xf32>
    %340 = arith.cmpf oge, %316, %339 : vector<20x1xf32>
    %cst_126 = arith.constant 1.500000e+01 : f32
    %341 = vector.broadcast %cst_126 : f32 to vector<20x1xf32>
    %342 = arith.cmpf ole, %316, %341 : vector<20x1xf32>
    %343 = arith.andi %340, %342 : vector<20x1xi1>
    %cst_127 = arith.constant 1.000000e+00 : f32
    %344 = vector.broadcast %cst_127 : f32 to vector<20x1xf32>
    %345 = arith.subf %344, %318 : vector<20x1xf32>
    %cst_128 = arith.constant 0.000000e+00 : f32
    %346 = vector.broadcast %cst_128 : f32 to vector<20x1xf32>
    %347 = arith.select %343, %345, %346 : vector<20x1xi1>, vector<20x1xf32>
    %cst_129 = arith.constant 1.000000e+00 : f32
    %348 = vector.broadcast %cst_129 : f32 to vector<20x1xf32>
    %349 = arith.addf %316, %348 : vector<20x1xf32>
    %cst_130 = arith.constant 0.000000e+00 : f32
    %350 = vector.broadcast %cst_130 : f32 to vector<20x1xf32>
    %351 = arith.cmpf oge, %349, %350 : vector<20x1xf32>
    %cst_131 = arith.constant 1.000000e+00 : f32
    %352 = vector.broadcast %cst_131 : f32 to vector<20x1xf32>
    %353 = arith.addf %316, %352 : vector<20x1xf32>
    %cst_132 = arith.constant 1.500000e+01 : f32
    %354 = vector.broadcast %cst_132 : f32 to vector<20x1xf32>
    %355 = arith.cmpf ole, %353, %354 : vector<20x1xf32>
    %356 = arith.andi %351, %355 : vector<20x1xi1>
    %cst_133 = arith.constant 0.000000e+00 : f32
    %357 = vector.broadcast %cst_133 : f32 to vector<20x1xf32>
    %358 = arith.select %356, %318, %357 : vector<20x1xi1>, vector<20x1xf32>
    %359 = vector.broadcast %315 : vector<20x1xf32> to vector<20x256xf32>
    %360 = arith.cmpf oeq, %212, %359 : vector<20x256xf32>
    %cst_134 = arith.constant 0.000000e+00 : f32
    %361 = vector.shape_cast %327 : vector<20x1xf32> to vector<20x1xf32>
    %362 = vector.broadcast %361 : vector<20x1xf32> to vector<20x256xf32>
    %363 = vector.broadcast %cst_134 : f32 to vector<20x256xf32>
    %364 = arith.select %360, %362, %363 : vector<20x256xi1>, vector<20x256xf32>
    %cst_135 = arith.constant 1.000000e+00 : f32
    %365 = vector.broadcast %cst_135 : f32 to vector<20x1xf32>
    %366 = arith.addf %315, %365 : vector<20x1xf32>
    %367 = vector.broadcast %366 : vector<20x1xf32> to vector<20x256xf32>
    %368 = arith.cmpf oeq, %212, %367 : vector<20x256xf32>
    %cst_136 = arith.constant 0.000000e+00 : f32
    %369 = vector.shape_cast %338 : vector<20x1xf32> to vector<20x1xf32>
    %370 = vector.broadcast %369 : vector<20x1xf32> to vector<20x256xf32>
    %371 = vector.broadcast %cst_136 : f32 to vector<20x256xf32>
    %372 = arith.select %368, %370, %371 : vector<20x256xi1>, vector<20x256xf32>
    %373 = arith.addf %364, %372 : vector<20x256xf32>
    %374 = vector.broadcast %316 : vector<20x1xf32> to vector<20x256xf32>
    %375 = arith.cmpf oeq, %209, %374 : vector<20x256xf32>
    %cst_137 = arith.constant 0.000000e+00 : f32
    %376 = vector.shape_cast %347 : vector<20x1xf32> to vector<20x1xf32>
    %377 = vector.broadcast %376 : vector<20x1xf32> to vector<20x256xf32>
    %378 = vector.broadcast %cst_137 : f32 to vector<20x256xf32>
    %379 = arith.select %375, %377, %378 : vector<20x256xi1>, vector<20x256xf32>
    %cst_138 = arith.constant 1.000000e+00 : f32
    %380 = vector.broadcast %cst_138 : f32 to vector<20x1xf32>
    %381 = arith.addf %316, %380 : vector<20x1xf32>
    %382 = vector.broadcast %381 : vector<20x1xf32> to vector<20x256xf32>
    %383 = arith.cmpf oeq, %209, %382 : vector<20x256xf32>
    %cst_139 = arith.constant 0.000000e+00 : f32
    %384 = vector.shape_cast %358 : vector<20x1xf32> to vector<20x1xf32>
    %385 = vector.broadcast %384 : vector<20x1xf32> to vector<20x256xf32>
    %386 = vector.broadcast %cst_139 : f32 to vector<20x256xf32>
    %387 = arith.select %383, %385, %386 : vector<20x256xi1>, vector<20x256xf32>
    %388 = arith.addf %379, %387 : vector<20x256xf32>
    %389 = arith.mulf %388, %373 : vector<20x256xf32>
    %cst_140 = arith.constant dense<0.000000e+00> : vector<20x32xf32>
    %390 = tpu.matmul %389, %204, %cst_140 {dimension_numbers = #tpu.dot_dimension_numbers<[1], [0], [0], [1], [0, 0, 1, 1], [], []>} : vector<20x256xf32>, vector<256x32xf32>, vector<20x32xf32> -> vector<20x32xf32>
    %c0_141 = arith.constant 0 : index
    %c0_142 = arith.constant 0 : index
    %c0_143 = arith.constant 0 : index
    %391 = vector.load %arg4[%c0_141, %c0_142, %c0_143] : memref<1x64x192xf32, #tpu.memory_space<vmem>>, vector<1x64x192xf32>
    %392 = vector.shape_cast %391 : vector<1x64x192xf32> to vector<64x192xf32>
    %c80 = arith.constant 80 : index
    %c0_144 = arith.constant 0 : index
    %393 = vector.load %arg5[%c80, %c0_144] : memref<968x32xf32, #tpu.memory_space<vmem>>, vector<1x32xf32>
    %c88 = arith.constant 88 : index
    %c0_145 = arith.constant 0 : index
    %394 = vector.load %arg5[%c88, %c0_145] : memref<968x32xf32, #tpu.memory_space<vmem>>, vector<192x32xf32>
    %cst_146 = arith.constant dense<0.000000e+00> : vector<64x32xf32>
    %395 = tpu.matmul %392, %394, %cst_146 {dimension_numbers = #tpu.dot_dimension_numbers<[1], [0], [0], [1], [0, 0, 1, 1], [], []>} : vector<64x192xf32>, vector<192x32xf32>, vector<64x32xf32> -> vector<64x32xf32>
    %396 = vector.broadcast %393 : vector<1x32xf32> to vector<64x32xf32>
    %397 = arith.addf %395, %396 : vector<64x32xf32>
    %cst_147 = arith.constant 0.000000e+00 : f32
    %398 = vector.broadcast %cst_147 : f32 to vector<64x32xf32>
    %399 = arith.maximumf %397, %398 : vector<64x32xf32>
    %400 = tpu.iota {dimensions = array<i32: 1>} : vector<20x64xi32>
    %401 = arith.sitofp %400 : vector<20x64xi32> to vector<20x64xf32>
    %cst_148 = arith.constant 1.250000e-01 : f32
    %402 = vector.broadcast %cst_148 : f32 to vector<20x64xf32>
    %403 = arith.mulf %401, %402 : vector<20x64xf32>
    %404 = math.floor %403 : vector<20x64xf32>
    %cst_149 = arith.constant 8.000000e+00 : f32
    %405 = vector.broadcast %cst_149 : f32 to vector<20x64xf32>
    %406 = arith.mulf %404, %405 : vector<20x64xf32>
    %407 = arith.subf %401, %406 : vector<20x64xf32>
    %408 = vector.extract_strided_slice %0 {offsets = [0, 0], sizes = [20, 1], strides = [1, 1]} : vector<20x2xf32> to vector<20x1xf32>
    %cst_150 = arith.constant 1.093750e-01 : f32
    %409 = vector.broadcast %cst_150 : f32 to vector<20x1xf32>
    %410 = arith.mulf %408, %409 : vector<20x1xf32>
    %411 = vector.extract_strided_slice %0 {offsets = [0, 1], sizes = [20, 1], strides = [1, 1]} : vector<20x2xf32> to vector<20x1xf32>
    %cst_151 = arith.constant 1.093750e-01 : f32
    %412 = vector.broadcast %cst_151 : f32 to vector<20x1xf32>
    %413 = arith.mulf %411, %412 : vector<20x1xf32>
    %414 = math.floor %410 : vector<20x1xf32>
    %415 = math.floor %413 : vector<20x1xf32>
    %416 = arith.subf %410, %414 : vector<20x1xf32>
    %417 = arith.subf %413, %415 : vector<20x1xf32>
    %cst_152 = arith.constant 0.000000e+00 : f32
    %418 = vector.broadcast %cst_152 : f32 to vector<20x1xf32>
    %419 = arith.cmpf oge, %414, %418 : vector<20x1xf32>
    %cst_153 = arith.constant 7.000000e+00 : f32
    %420 = vector.broadcast %cst_153 : f32 to vector<20x1xf32>
    %421 = arith.cmpf ole, %414, %420 : vector<20x1xf32>
    %422 = arith.andi %419, %421 : vector<20x1xi1>
    %cst_154 = arith.constant 1.000000e+00 : f32
    %423 = vector.broadcast %cst_154 : f32 to vector<20x1xf32>
    %424 = arith.subf %423, %416 : vector<20x1xf32>
    %cst_155 = arith.constant 0.000000e+00 : f32
    %425 = vector.broadcast %cst_155 : f32 to vector<20x1xf32>
    %426 = arith.select %422, %424, %425 : vector<20x1xi1>, vector<20x1xf32>
    %cst_156 = arith.constant 1.000000e+00 : f32
    %427 = vector.broadcast %cst_156 : f32 to vector<20x1xf32>
    %428 = arith.addf %414, %427 : vector<20x1xf32>
    %cst_157 = arith.constant 0.000000e+00 : f32
    %429 = vector.broadcast %cst_157 : f32 to vector<20x1xf32>
    %430 = arith.cmpf oge, %428, %429 : vector<20x1xf32>
    %cst_158 = arith.constant 1.000000e+00 : f32
    %431 = vector.broadcast %cst_158 : f32 to vector<20x1xf32>
    %432 = arith.addf %414, %431 : vector<20x1xf32>
    %cst_159 = arith.constant 7.000000e+00 : f32
    %433 = vector.broadcast %cst_159 : f32 to vector<20x1xf32>
    %434 = arith.cmpf ole, %432, %433 : vector<20x1xf32>
    %435 = arith.andi %430, %434 : vector<20x1xi1>
    %cst_160 = arith.constant 0.000000e+00 : f32
    %436 = vector.broadcast %cst_160 : f32 to vector<20x1xf32>
    %437 = arith.select %435, %416, %436 : vector<20x1xi1>, vector<20x1xf32>
    %cst_161 = arith.constant 0.000000e+00 : f32
    %438 = vector.broadcast %cst_161 : f32 to vector<20x1xf32>
    %439 = arith.cmpf oge, %415, %438 : vector<20x1xf32>
    %cst_162 = arith.constant 7.000000e+00 : f32
    %440 = vector.broadcast %cst_162 : f32 to vector<20x1xf32>
    %441 = arith.cmpf ole, %415, %440 : vector<20x1xf32>
    %442 = arith.andi %439, %441 : vector<20x1xi1>
    %cst_163 = arith.constant 1.000000e+00 : f32
    %443 = vector.broadcast %cst_163 : f32 to vector<20x1xf32>
    %444 = arith.subf %443, %417 : vector<20x1xf32>
    %cst_164 = arith.constant 0.000000e+00 : f32
    %445 = vector.broadcast %cst_164 : f32 to vector<20x1xf32>
    %446 = arith.select %442, %444, %445 : vector<20x1xi1>, vector<20x1xf32>
    %cst_165 = arith.constant 1.000000e+00 : f32
    %447 = vector.broadcast %cst_165 : f32 to vector<20x1xf32>
    %448 = arith.addf %415, %447 : vector<20x1xf32>
    %cst_166 = arith.constant 0.000000e+00 : f32
    %449 = vector.broadcast %cst_166 : f32 to vector<20x1xf32>
    %450 = arith.cmpf oge, %448, %449 : vector<20x1xf32>
    %cst_167 = arith.constant 1.000000e+00 : f32
    %451 = vector.broadcast %cst_167 : f32 to vector<20x1xf32>
    %452 = arith.addf %415, %451 : vector<20x1xf32>
    %cst_168 = arith.constant 7.000000e+00 : f32
    %453 = vector.broadcast %cst_168 : f32 to vector<20x1xf32>
    %454 = arith.cmpf ole, %452, %453 : vector<20x1xf32>
    %455 = arith.andi %450, %454 : vector<20x1xi1>
    %cst_169 = arith.constant 0.000000e+00 : f32
    %456 = vector.broadcast %cst_169 : f32 to vector<20x1xf32>
    %457 = arith.select %455, %417, %456 : vector<20x1xi1>, vector<20x1xf32>
    %458 = vector.broadcast %414 : vector<20x1xf32> to vector<20x64xf32>
    %459 = arith.cmpf oeq, %407, %458 : vector<20x64xf32>
    %cst_170 = arith.constant 0.000000e+00 : f32
    %460 = vector.shape_cast %426 : vector<20x1xf32> to vector<20x1xf32>
    %461 = vector.broadcast %460 : vector<20x1xf32> to vector<20x64xf32>
    %462 = vector.broadcast %cst_170 : f32 to vector<20x64xf32>
    %463 = arith.select %459, %461, %462 : vector<20x64xi1>, vector<20x64xf32>
    %cst_171 = arith.constant 1.000000e+00 : f32
    %464 = vector.broadcast %cst_171 : f32 to vector<20x1xf32>
    %465 = arith.addf %414, %464 : vector<20x1xf32>
    %466 = vector.broadcast %465 : vector<20x1xf32> to vector<20x64xf32>
    %467 = arith.cmpf oeq, %407, %466 : vector<20x64xf32>
    %cst_172 = arith.constant 0.000000e+00 : f32
    %468 = vector.shape_cast %437 : vector<20x1xf32> to vector<20x1xf32>
    %469 = vector.broadcast %468 : vector<20x1xf32> to vector<20x64xf32>
    %470 = vector.broadcast %cst_172 : f32 to vector<20x64xf32>
    %471 = arith.select %467, %469, %470 : vector<20x64xi1>, vector<20x64xf32>
    %472 = arith.addf %463, %471 : vector<20x64xf32>
    %473 = vector.broadcast %415 : vector<20x1xf32> to vector<20x64xf32>
    %474 = arith.cmpf oeq, %404, %473 : vector<20x64xf32>
    %cst_173 = arith.constant 0.000000e+00 : f32
    %475 = vector.shape_cast %446 : vector<20x1xf32> to vector<20x1xf32>
    %476 = vector.broadcast %475 : vector<20x1xf32> to vector<20x64xf32>
    %477 = vector.broadcast %cst_173 : f32 to vector<20x64xf32>
    %478 = arith.select %474, %476, %477 : vector<20x64xi1>, vector<20x64xf32>
    %cst_174 = arith.constant 1.000000e+00 : f32
    %479 = vector.broadcast %cst_174 : f32 to vector<20x1xf32>
    %480 = arith.addf %415, %479 : vector<20x1xf32>
    %481 = vector.broadcast %480 : vector<20x1xf32> to vector<20x64xf32>
    %482 = arith.cmpf oeq, %404, %481 : vector<20x64xf32>
    %cst_175 = arith.constant 0.000000e+00 : f32
    %483 = vector.shape_cast %457 : vector<20x1xf32> to vector<20x1xf32>
    %484 = vector.broadcast %483 : vector<20x1xf32> to vector<20x64xf32>
    %485 = vector.broadcast %cst_175 : f32 to vector<20x64xf32>
    %486 = arith.select %482, %484, %485 : vector<20x64xi1>, vector<20x64xf32>
    %487 = arith.addf %478, %486 : vector<20x64xf32>
    %488 = arith.mulf %487, %472 : vector<20x64xf32>
    %cst_176 = arith.constant dense<0.000000e+00> : vector<20x32xf32>
    %489 = tpu.matmul %488, %399, %cst_176 {dimension_numbers = #tpu.dot_dimension_numbers<[1], [0], [0], [1], [0, 0, 1, 1], [], []>} : vector<20x64xf32>, vector<64x32xf32>, vector<20x32xf32> -> vector<20x32xf32>
    %c440 = arith.constant 440 : index
    %c0_177 = arith.constant 0 : index
    %490 = vector.load %arg5[%c440, %c0_177] : memref<968x32xf32, #tpu.memory_space<vmem>>, vector<1x32xf32>
    %c448 = arith.constant 448 : index
    %c0_178 = arith.constant 0 : index
    %491 = vector.load %arg5[%c448, %c0_178] : memref<968x32xf32, #tpu.memory_space<vmem>>, vector<32x32xf32>
    %cst_179 = arith.constant dense<0.000000e+00> : vector<20x32xf32>
    %492 = tpu.matmul %489, %491, %cst_179 {dimension_numbers = #tpu.dot_dimension_numbers<[1], [0], [0], [1], [0, 0, 1, 1], [], []>} : vector<20x32xf32>, vector<32x32xf32>, vector<20x32xf32> -> vector<20x32xf32>
    %493 = vector.broadcast %490 : vector<1x32xf32> to vector<20x32xf32>
    %494 = arith.addf %492, %493 : vector<20x32xf32>
    %cst_180 = arith.constant 0.000000e+00 : f32
    %495 = vector.broadcast %cst_180 : f32 to vector<20x32xf32>
    %496 = arith.maximumf %494, %495 : vector<20x32xf32>
    %c480 = arith.constant 480 : index
    %c0_181 = arith.constant 0 : index
    %497 = vector.load %arg5[%c480, %c0_181] : memref<968x32xf32, #tpu.memory_space<vmem>>, vector<1x32xf32>
    %c488 = arith.constant 488 : index
    %c0_182 = arith.constant 0 : index
    %498 = vector.load %arg5[%c488, %c0_182] : memref<968x32xf32, #tpu.memory_space<vmem>>, vector<32x32xf32>
    %cst_183 = arith.constant dense<0.000000e+00> : vector<20x32xf32>
    %499 = tpu.matmul %496, %498, %cst_183 {dimension_numbers = #tpu.dot_dimension_numbers<[1], [0], [0], [1], [0, 0, 1, 1], [], []>} : vector<20x32xf32>, vector<32x32xf32>, vector<20x32xf32> -> vector<20x32xf32>
    %500 = vector.broadcast %497 : vector<1x32xf32> to vector<20x32xf32>
    %501 = arith.addf %499, %500 : vector<20x32xf32>
    %502 = vector.extract_strided_slice %501 {offsets = [0, 0], sizes = [20, 2], strides = [1, 1]} : vector<20x32xf32> to vector<20x2xf32>
    %503 = arith.addf %0, %502 : vector<20x2xf32>
    %504 = vector.extract_strided_slice %503 {offsets = [0, 0], sizes = [20, 1], strides = [1, 1]} : vector<20x2xf32> to vector<20x1xf32>
    %cst_184 = arith.constant 1.093750e-01 : f32
    %505 = vector.broadcast %cst_184 : f32 to vector<20x1xf32>
    %506 = arith.mulf %504, %505 : vector<20x1xf32>
    %507 = vector.extract_strided_slice %503 {offsets = [0, 1], sizes = [20, 1], strides = [1, 1]} : vector<20x2xf32> to vector<20x1xf32>
    %cst_185 = arith.constant 1.093750e-01 : f32
    %508 = vector.broadcast %cst_185 : f32 to vector<20x1xf32>
    %509 = arith.mulf %507, %508 : vector<20x1xf32>
    %510 = math.floor %506 : vector<20x1xf32>
    %511 = math.floor %509 : vector<20x1xf32>
    %512 = arith.subf %506, %510 : vector<20x1xf32>
    %513 = arith.subf %509, %511 : vector<20x1xf32>
    %cst_186 = arith.constant 0.000000e+00 : f32
    %514 = vector.broadcast %cst_186 : f32 to vector<20x1xf32>
    %515 = arith.cmpf oge, %510, %514 : vector<20x1xf32>
    %cst_187 = arith.constant 7.000000e+00 : f32
    %516 = vector.broadcast %cst_187 : f32 to vector<20x1xf32>
    %517 = arith.cmpf ole, %510, %516 : vector<20x1xf32>
    %518 = arith.andi %515, %517 : vector<20x1xi1>
    %cst_188 = arith.constant 1.000000e+00 : f32
    %519 = vector.broadcast %cst_188 : f32 to vector<20x1xf32>
    %520 = arith.subf %519, %512 : vector<20x1xf32>
    %cst_189 = arith.constant 0.000000e+00 : f32
    %521 = vector.broadcast %cst_189 : f32 to vector<20x1xf32>
    %522 = arith.select %518, %520, %521 : vector<20x1xi1>, vector<20x1xf32>
    %cst_190 = arith.constant 1.000000e+00 : f32
    %523 = vector.broadcast %cst_190 : f32 to vector<20x1xf32>
    %524 = arith.addf %510, %523 : vector<20x1xf32>
    %cst_191 = arith.constant 0.000000e+00 : f32
    %525 = vector.broadcast %cst_191 : f32 to vector<20x1xf32>
    %526 = arith.cmpf oge, %524, %525 : vector<20x1xf32>
    %cst_192 = arith.constant 1.000000e+00 : f32
    %527 = vector.broadcast %cst_192 : f32 to vector<20x1xf32>
    %528 = arith.addf %510, %527 : vector<20x1xf32>
    %cst_193 = arith.constant 7.000000e+00 : f32
    %529 = vector.broadcast %cst_193 : f32 to vector<20x1xf32>
    %530 = arith.cmpf ole, %528, %529 : vector<20x1xf32>
    %531 = arith.andi %526, %530 : vector<20x1xi1>
    %cst_194 = arith.constant 0.000000e+00 : f32
    %532 = vector.broadcast %cst_194 : f32 to vector<20x1xf32>
    %533 = arith.select %531, %512, %532 : vector<20x1xi1>, vector<20x1xf32>
    %cst_195 = arith.constant 0.000000e+00 : f32
    %534 = vector.broadcast %cst_195 : f32 to vector<20x1xf32>
    %535 = arith.cmpf oge, %511, %534 : vector<20x1xf32>
    %cst_196 = arith.constant 7.000000e+00 : f32
    %536 = vector.broadcast %cst_196 : f32 to vector<20x1xf32>
    %537 = arith.cmpf ole, %511, %536 : vector<20x1xf32>
    %538 = arith.andi %535, %537 : vector<20x1xi1>
    %cst_197 = arith.constant 1.000000e+00 : f32
    %539 = vector.broadcast %cst_197 : f32 to vector<20x1xf32>
    %540 = arith.subf %539, %513 : vector<20x1xf32>
    %cst_198 = arith.constant 0.000000e+00 : f32
    %541 = vector.broadcast %cst_198 : f32 to vector<20x1xf32>
    %542 = arith.select %538, %540, %541 : vector<20x1xi1>, vector<20x1xf32>
    %cst_199 = arith.constant 1.000000e+00 : f32
    %543 = vector.broadcast %cst_199 : f32 to vector<20x1xf32>
    %544 = arith.addf %511, %543 : vector<20x1xf32>
    %cst_200 = arith.constant 0.000000e+00 : f32
    %545 = vector.broadcast %cst_200 : f32 to vector<20x1xf32>
    %546 = arith.cmpf oge, %544, %545 : vector<20x1xf32>
    %cst_201 = arith.constant 1.000000e+00 : f32
    %547 = vector.broadcast %cst_201 : f32 to vector<20x1xf32>
    %548 = arith.addf %511, %547 : vector<20x1xf32>
    %cst_202 = arith.constant 7.000000e+00 : f32
    %549 = vector.broadcast %cst_202 : f32 to vector<20x1xf32>
    %550 = arith.cmpf ole, %548, %549 : vector<20x1xf32>
    %551 = arith.andi %546, %550 : vector<20x1xi1>
    %cst_203 = arith.constant 0.000000e+00 : f32
    %552 = vector.broadcast %cst_203 : f32 to vector<20x1xf32>
    %553 = arith.select %551, %513, %552 : vector<20x1xi1>, vector<20x1xf32>
    %554 = vector.broadcast %510 : vector<20x1xf32> to vector<20x64xf32>
    %555 = arith.cmpf oeq, %407, %554 : vector<20x64xf32>
    %cst_204 = arith.constant 0.000000e+00 : f32
    %556 = vector.shape_cast %522 : vector<20x1xf32> to vector<20x1xf32>
    %557 = vector.broadcast %556 : vector<20x1xf32> to vector<20x64xf32>
    %558 = vector.broadcast %cst_204 : f32 to vector<20x64xf32>
    %559 = arith.select %555, %557, %558 : vector<20x64xi1>, vector<20x64xf32>
    %cst_205 = arith.constant 1.000000e+00 : f32
    %560 = vector.broadcast %cst_205 : f32 to vector<20x1xf32>
    %561 = arith.addf %510, %560 : vector<20x1xf32>
    %562 = vector.broadcast %561 : vector<20x1xf32> to vector<20x64xf32>
    %563 = arith.cmpf oeq, %407, %562 : vector<20x64xf32>
    %cst_206 = arith.constant 0.000000e+00 : f32
    %564 = vector.shape_cast %533 : vector<20x1xf32> to vector<20x1xf32>
    %565 = vector.broadcast %564 : vector<20x1xf32> to vector<20x64xf32>
    %566 = vector.broadcast %cst_206 : f32 to vector<20x64xf32>
    %567 = arith.select %563, %565, %566 : vector<20x64xi1>, vector<20x64xf32>
    %568 = arith.addf %559, %567 : vector<20x64xf32>
    %569 = vector.broadcast %511 : vector<20x1xf32> to vector<20x64xf32>
    %570 = arith.cmpf oeq, %404, %569 : vector<20x64xf32>
    %cst_207 = arith.constant 0.000000e+00 : f32
    %571 = vector.shape_cast %542 : vector<20x1xf32> to vector<20x1xf32>
    %572 = vector.broadcast %571 : vector<20x1xf32> to vector<20x64xf32>
    %573 = vector.broadcast %cst_207 : f32 to vector<20x64xf32>
    %574 = arith.select %570, %572, %573 : vector<20x64xi1>, vector<20x64xf32>
    %cst_208 = arith.constant 1.000000e+00 : f32
    %575 = vector.broadcast %cst_208 : f32 to vector<20x1xf32>
    %576 = arith.addf %511, %575 : vector<20x1xf32>
    %577 = vector.broadcast %576 : vector<20x1xf32> to vector<20x64xf32>
    %578 = arith.cmpf oeq, %404, %577 : vector<20x64xf32>
    %cst_209 = arith.constant 0.000000e+00 : f32
    %579 = vector.shape_cast %553 : vector<20x1xf32> to vector<20x1xf32>
    %580 = vector.broadcast %579 : vector<20x1xf32> to vector<20x64xf32>
    %581 = vector.broadcast %cst_209 : f32 to vector<20x64xf32>
    %582 = arith.select %578, %580, %581 : vector<20x64xi1>, vector<20x64xf32>
    %583 = arith.addf %574, %582 : vector<20x64xf32>
    %584 = arith.mulf %583, %568 : vector<20x64xf32>
    %cst_210 = arith.constant dense<0.000000e+00> : vector<20x32xf32>
    %585 = tpu.matmul %584, %399, %cst_210 {dimension_numbers = #tpu.dot_dimension_numbers<[1], [0], [0], [1], [0, 0, 1, 1], [], []>} : vector<20x64xf32>, vector<64x32xf32>, vector<20x32xf32> -> vector<20x32xf32>
    %586 = tpu.concatenate %195, %390, %585 in 1 : vector<20x32xf32>, vector<20x32xf32>, vector<20x32xf32> -> vector<20x96xf32>
    %c680 = arith.constant 680 : index
    %c0_211 = arith.constant 0 : index
    %587 = vector.load %arg5[%c680, %c0_211] : memref<968x32xf32, #tpu.memory_space<vmem>>, vector<1x32xf32>
    %c688 = arith.constant 688 : index
    %c0_212 = arith.constant 0 : index
    %588 = vector.load %arg5[%c688, %c0_212] : memref<968x32xf32, #tpu.memory_space<vmem>>, vector<96x32xf32>
    %cst_213 = arith.constant dense<0.000000e+00> : vector<20x32xf32>
    %589 = tpu.matmul %586, %588, %cst_213 {dimension_numbers = #tpu.dot_dimension_numbers<[1], [0], [0], [1], [0, 0, 1, 1], [], []>} : vector<20x96xf32>, vector<96x32xf32>, vector<20x32xf32> -> vector<20x32xf32>
    %590 = vector.broadcast %587 : vector<1x32xf32> to vector<20x32xf32>
    %591 = arith.addf %589, %590 : vector<20x32xf32>
    %cst_214 = arith.constant 0.000000e+00 : f32
    %592 = vector.broadcast %cst_214 : f32 to vector<20x32xf32>
    %593 = arith.maximumf %591, %592 : vector<20x32xf32>
    %c784 = arith.constant 784 : index
    %c0_215 = arith.constant 0 : index
    %594 = vector.load %arg5[%c784, %c0_215] : memref<968x32xf32, #tpu.memory_space<vmem>>, vector<1x32xf32>
    %c792 = arith.constant 792 : index
    %c0_216 = arith.constant 0 : index
    %595 = vector.load %arg5[%c792, %c0_216] : memref<968x32xf32, #tpu.memory_space<vmem>>, vector<32x32xf32>
    %cst_217 = arith.constant dense<0.000000e+00> : vector<20x32xf32>
    %596 = tpu.matmul %593, %595, %cst_217 {dimension_numbers = #tpu.dot_dimension_numbers<[1], [0], [0], [1], [0, 0, 1, 1], [], []>} : vector<20x32xf32>, vector<32x32xf32>, vector<20x32xf32> -> vector<20x32xf32>
    %597 = vector.broadcast %594 : vector<1x32xf32> to vector<20x32xf32>
    %598 = arith.addf %596, %597 : vector<20x32xf32>
    %599 = vector.extract_strided_slice %598 {offsets = [0, 0], sizes = [20, 3], strides = [1, 1]} : vector<20x32xf32> to vector<20x3xf32>
    %cst_218 = arith.constant dense<0xFF800000> : vector<20xf32>
    %600 = vector.multi_reduction <maximumf>, %599, %cst_218 [1] : vector<20x3xf32> to vector<20xf32>
    %601 = vector.shape_cast %600 : vector<20xf32> to vector<20x1xf32>
    %602 = vector.broadcast %601 : vector<20x1xf32> to vector<20x3xf32>
    %603 = arith.subf %599, %602 : vector<20x3xf32>
    %604 = math.exp %603 : vector<20x3xf32>
    %cst_219 = arith.constant dense<0.000000e+00> : vector<20xf32>
    %605 = vector.multi_reduction <add>, %604, %cst_219 [1] : vector<20x3xf32> to vector<20xf32>
    %606 = vector.shape_cast %605 : vector<20xf32> to vector<20x1xf32>
    %607 = vector.broadcast %606 : vector<20x1xf32> to vector<20x3xf32>
    %608 = arith.divf %604, %607 : vector<20x3xf32>
    %c824 = arith.constant 824 : index
    %c0_220 = arith.constant 0 : index
    %609 = vector.load %arg5[%c824, %c0_220] : memref<968x32xf32, #tpu.memory_space<vmem>>, vector<1x32xf32>
    %c832 = arith.constant 832 : index
    %c0_221 = arith.constant 0 : index
    %610 = vector.load %arg5[%c832, %c0_221] : memref<968x32xf32, #tpu.memory_space<vmem>>, vector<96x32xf32>
    %cst_222 = arith.constant dense<0.000000e+00> : vector<20x32xf32>
    %611 = tpu.matmul %586, %610, %cst_222 {dimension_numbers = #tpu.dot_dimension_numbers<[1], [0], [0], [1], [0, 0, 1, 1], [], []>} : vector<20x96xf32>, vector<96x32xf32>, vector<20x32xf32> -> vector<20x32xf32>
    %612 = vector.broadcast %609 : vector<1x32xf32> to vector<20x32xf32>
    %613 = arith.addf %611, %612 : vector<20x32xf32>
    %cst_223 = arith.constant 0.000000e+00 : f32
    %614 = vector.broadcast %cst_223 : f32 to vector<20x32xf32>
    %615 = arith.maximumf %613, %614 : vector<20x32xf32>
    %c928 = arith.constant 928 : index
    %c0_224 = arith.constant 0 : index
    %616 = vector.load %arg5[%c928, %c0_224] : memref<968x32xf32, #tpu.memory_space<vmem>>, vector<1x32xf32>
    %c936 = arith.constant 936 : index
    %c0_225 = arith.constant 0 : index
    %617 = vector.load %arg5[%c936, %c0_225] : memref<968x32xf32, #tpu.memory_space<vmem>>, vector<32x32xf32>
    %cst_226 = arith.constant dense<0.000000e+00> : vector<20x32xf32>
    %618 = tpu.matmul %615, %617, %cst_226 {dimension_numbers = #tpu.dot_dimension_numbers<[1], [0], [0], [1], [0, 0, 1, 1], [], []>} : vector<20x32xf32>, vector<32x32xf32>, vector<20x32xf32> -> vector<20x32xf32>
    %619 = vector.broadcast %616 : vector<1x32xf32> to vector<20x32xf32>
    %620 = arith.addf %618, %619 : vector<20x32xf32>
    %621 = vector.extract_strided_slice %620 {offsets = [0, 0], sizes = [20, 3], strides = [1, 1]} : vector<20x32xf32> to vector<20x3xf32>
    %cst_227 = arith.constant dense<0xFF800000> : vector<20xf32>
    %622 = vector.multi_reduction <maximumf>, %621, %cst_227 [1] : vector<20x3xf32> to vector<20xf32>
    %623 = vector.shape_cast %622 : vector<20xf32> to vector<20x1xf32>
    %624 = vector.broadcast %623 : vector<20x1xf32> to vector<20x3xf32>
    %625 = arith.subf %621, %624 : vector<20x3xf32>
    %626 = math.exp %625 : vector<20x3xf32>
    %cst_228 = arith.constant dense<0.000000e+00> : vector<20xf32>
    %627 = vector.multi_reduction <add>, %626, %cst_228 [1] : vector<20x3xf32> to vector<20xf32>
    %628 = vector.shape_cast %627 : vector<20xf32> to vector<20x1xf32>
    %629 = vector.broadcast %628 : vector<20x1xf32> to vector<20x3xf32>
    %630 = arith.divf %626, %629 : vector<20x3xf32>
    %cst_229 = arith.constant 0.000000e+00 : f32
    %631 = vector.broadcast %cst_229 : f32 to vector<20x32xf32>
    %cst_230 = arith.constant 0.000000e+00 : f32
    %632 = vector.broadcast %cst_230 : f32 to vector<20x32xf32>
    %633 = vector.extract_strided_slice %608 {offsets = [0, 0], sizes = [20, 1], strides = [1, 1]} : vector<20x3xf32> to vector<20x1xf32>
    %634 = vector.broadcast %633 : vector<20x1xf32> to vector<20x32xf32>
    %635 = arith.mulf %634, %195 : vector<20x32xf32>
    %636 = arith.addf %631, %635 : vector<20x32xf32>
    %637 = vector.extract_strided_slice %630 {offsets = [0, 0], sizes = [20, 1], strides = [1, 1]} : vector<20x3xf32> to vector<20x1xf32>
    %638 = vector.broadcast %637 : vector<20x1xf32> to vector<20x32xf32>
    %639 = arith.mulf %638, %195 : vector<20x32xf32>
    %640 = arith.addf %632, %639 : vector<20x32xf32>
    %641 = vector.extract_strided_slice %608 {offsets = [0, 1], sizes = [20, 1], strides = [1, 1]} : vector<20x3xf32> to vector<20x1xf32>
    %642 = vector.broadcast %641 : vector<20x1xf32> to vector<20x32xf32>
    %643 = arith.mulf %642, %390 : vector<20x32xf32>
    %644 = arith.addf %636, %643 : vector<20x32xf32>
    %645 = vector.extract_strided_slice %630 {offsets = [0, 1], sizes = [20, 1], strides = [1, 1]} : vector<20x3xf32> to vector<20x1xf32>
    %646 = vector.broadcast %645 : vector<20x1xf32> to vector<20x32xf32>
    %647 = arith.mulf %646, %390 : vector<20x32xf32>
    %648 = arith.addf %640, %647 : vector<20x32xf32>
    %649 = vector.extract_strided_slice %608 {offsets = [0, 2], sizes = [20, 1], strides = [1, 1]} : vector<20x3xf32> to vector<20x1xf32>
    %650 = vector.broadcast %649 : vector<20x1xf32> to vector<20x32xf32>
    %651 = arith.mulf %650, %585 : vector<20x32xf32>
    %652 = arith.addf %644, %651 : vector<20x32xf32>
    %653 = vector.extract_strided_slice %630 {offsets = [0, 2], sizes = [20, 1], strides = [1, 1]} : vector<20x3xf32> to vector<20x1xf32>
    %654 = vector.broadcast %653 : vector<20x1xf32> to vector<20x32xf32>
    %655 = arith.mulf %654, %585 : vector<20x32xf32>
    %656 = arith.addf %648, %655 : vector<20x32xf32>
    %c520 = arith.constant 520 : index
    %c0_231 = arith.constant 0 : index
    %657 = vector.load %arg5[%c520, %c0_231] : memref<968x32xf32, #tpu.memory_space<vmem>>, vector<1x32xf32>
    %c528 = arith.constant 528 : index
    %c0_232 = arith.constant 0 : index
    %658 = vector.load %arg5[%c528, %c0_232] : memref<968x32xf32, #tpu.memory_space<vmem>>, vector<32x32xf32>
    %cst_233 = arith.constant dense<0.000000e+00> : vector<20x32xf32>
    %659 = tpu.matmul %652, %658, %cst_233 {dimension_numbers = #tpu.dot_dimension_numbers<[1], [0], [0], [1], [0, 0, 1, 1], [], []>} : vector<20x32xf32>, vector<32x32xf32>, vector<20x32xf32> -> vector<20x32xf32>
    %660 = vector.broadcast %657 : vector<1x32xf32> to vector<20x32xf32>
    %661 = arith.addf %659, %660 : vector<20x32xf32>
    %cst_234 = arith.constant 0.000000e+00 : f32
    %662 = vector.broadcast %cst_234 : f32 to vector<20x32xf32>
    %663 = arith.maximumf %661, %662 : vector<20x32xf32>
    %c560 = arith.constant 560 : index
    %c0_235 = arith.constant 0 : index
    %664 = vector.load %arg5[%c560, %c0_235] : memref<968x32xf32, #tpu.memory_space<vmem>>, vector<1x32xf32>
    %c568 = arith.constant 568 : index
    %c0_236 = arith.constant 0 : index
    %665 = vector.load %arg5[%c568, %c0_236] : memref<968x32xf32, #tpu.memory_space<vmem>>, vector<32x32xf32>
    %cst_237 = arith.constant dense<0.000000e+00> : vector<20x32xf32>
    %666 = tpu.matmul %663, %665, %cst_237 {dimension_numbers = #tpu.dot_dimension_numbers<[1], [0], [0], [1], [0, 0, 1, 1], [], []>} : vector<20x32xf32>, vector<32x32xf32>, vector<20x32xf32> -> vector<20x32xf32>
    %667 = vector.broadcast %664 : vector<1x32xf32> to vector<20x32xf32>
    %668 = arith.addf %666, %667 : vector<20x32xf32>
    %cst_238 = arith.constant 0.000000e+00 : f32
    %669 = vector.broadcast %cst_238 : f32 to vector<20x32xf32>
    %670 = arith.maximumf %668, %669 : vector<20x32xf32>
    %c600 = arith.constant 600 : index
    %c0_239 = arith.constant 0 : index
    %671 = vector.load %arg5[%c600, %c0_239] : memref<968x32xf32, #tpu.memory_space<vmem>>, vector<1x32xf32>
    %c608 = arith.constant 608 : index
    %c0_240 = arith.constant 0 : index
    %672 = vector.load %arg5[%c608, %c0_240] : memref<968x32xf32, #tpu.memory_space<vmem>>, vector<32x32xf32>
    %cst_241 = arith.constant dense<0.000000e+00> : vector<20x32xf32>
    %673 = tpu.matmul %670, %672, %cst_241 {dimension_numbers = #tpu.dot_dimension_numbers<[1], [0], [0], [1], [0, 0, 1, 1], [], []>} : vector<20x32xf32>, vector<32x32xf32>, vector<20x32xf32> -> vector<20x32xf32>
    %674 = vector.broadcast %671 : vector<1x32xf32> to vector<20x32xf32>
    %675 = arith.addf %673, %674 : vector<20x32xf32>
    %676 = vector.extract_strided_slice %675 {offsets = [0, 0], sizes = [20, 2], strides = [1, 1]} : vector<20x32xf32> to vector<20x2xf32>
    %677 = arith.addf %676, %0 : vector<20x2xf32>
    %c640 = arith.constant 640 : index
    %c0_242 = arith.constant 0 : index
    %678 = vector.load %arg5[%c640, %c0_242] : memref<968x32xf32, #tpu.memory_space<vmem>>, vector<1x32xf32>
    %c648 = arith.constant 648 : index
    %c0_243 = arith.constant 0 : index
    %679 = vector.load %arg5[%c648, %c0_243] : memref<968x32xf32, #tpu.memory_space<vmem>>, vector<32x32xf32>
    %cst_244 = arith.constant dense<0.000000e+00> : vector<20x32xf32>
    %680 = tpu.matmul %656, %679, %cst_244 {dimension_numbers = #tpu.dot_dimension_numbers<[1], [0], [0], [1], [0, 0, 1, 1], [], []>} : vector<20x32xf32>, vector<32x32xf32>, vector<20x32xf32> -> vector<20x32xf32>
    %681 = vector.broadcast %678 : vector<1x32xf32> to vector<20x32xf32>
    %682 = arith.addf %680, %681 : vector<20x32xf32>
    %683 = vector.extract_strided_slice %682 {offsets = [0, 0], sizes = [20, 4], strides = [1, 1]} : vector<20x32xf32> to vector<20x4xf32>
    %684 = tpu.concatenate %677, %683 in 1 : vector<20x2xf32>, vector<20x4xf32> -> vector<20x6xf32>
    %c0_245 = arith.constant 0 : index
    %c0_246 = arith.constant 0 : index
    %c0_247 = arith.constant 0 : index
    %685 = vector.load %arg6[%c0_245, %c0_246, %c0_247] : memref<1x20x6xf32, #tpu.memory_space<vmem>>, vector<1x20x6xf32>
    %686 = vector.shape_cast %685 : vector<1x20x6xf32> to vector<20x6xf32>
    %687 = vector.shape_cast %684 : vector<20x6xf32> to vector<1x20x6xf32>
    tpu.vector_store %arg6[%c0_245, %c0_246, %c0_247], %687 {strides = array<i32>} : memref<1x20x6xf32, #tpu.memory_space<vmem>>, vector<1x20x6xf32>,
    return
  }
  func.func @transform_0(%arg0: i32) -> (i32, i32) {
    %c0_i32 = arith.constant 0 : i32
    %c0_i32_0 = arith.constant 0 : i32
    %c0_i32_1 = arith.constant 0 : i32
    return %c0_i32, %c0_i32_0 : i32, i32
  }
  func.func @transform_1(%arg0: i32) -> (i32, i32, i32) {
    %c0_i32 = arith.constant 0 : i32
    %c0_i32_0 = arith.constant 0 : i32
    %c0_i32_1 = arith.constant 0 : i32
    return %arg0, %c0_i32, %c0_i32_0 : i32, i32, i32
  }
  func.func @transform_2(%arg0: i32) -> (i32, i32, i32) {
    %c0_i32 = arith.constant 0 : i32
    %c0_i32_0 = arith.constant 0 : i32
    %c0_i32_1 = arith.constant 0 : i32
    return %arg0, %c0_i32, %c0_i32_0 : i32, i32, i32
  }
  func.func @transform_3(%arg0: i32) -> (i32, i32, i32) {
    %c0_i32 = arith.constant 0 : i32
    %c0_i32_0 = arith.constant 0 : i32
    %c0_i32_1 = arith.constant 0 : i32
    return %arg0, %c0_i32, %c0_i32_0 : i32, i32, i32
  }
  func.func @transform_4(%arg0: i32) -> (i32, i32) {
    %c0_i32 = arith.constant 0 : i32
    %c0_i32_0 = arith.constant 0 : i32
    %c0_i32_1 = arith.constant 0 : i32
    return %c0_i32, %c0_i32_0 : i32, i32
  }
  func.func @transform_5(%arg0: i32) -> (i32, i32, i32) {
    %c0_i32 = arith.constant 0 : i32
    %c0_i32_0 = arith.constant 0 : i32
    %c0_i32_1 = arith.constant 0 : i32
    return %arg0, %c0_i32, %c0_i32_0 : i32, i32, i32
  }
}

</mosaic_0001>

<llo_original>
// kernel: _detr_forward_impl.1
$region0: #{_detr_forward_impl.1}
  #allocation0 [shape = 'u32[]', space=smem, size = 0x4, offset = 0x4, fixed_abs, tag = 'smem constant byte address 0x4 - core index']
  #allocation1 [shape = 'u32[144,128]{1,0:T(1,128)}', space=vmem, size = 0x12000, scoped, tag = 'internal scratch']
  %s0 = inlined_call_operand.vmem [shape: f32[20,2], index: 0, kind: input, shape index: {}]
  %s1 = inlined_call_operand.vmem [shape: f32[2,1024,12], index: 1, kind: input, shape index: {}]
  %s2 = inlined_call_operand.vmem [shape: f32[2,256,48], index: 2, kind: input, shape index: {}]
  %s3 = inlined_call_operand.vmem [shape: f32[2,64,192], index: 3, kind: input, shape index: {}]
  %s4 = inlined_call_operand.vmem [shape: f32[968,32], index: 4, kind: input, shape index: {}]
  %s5 = inlined_call_operand.vmem [shape: f32[2,20,6], index: 5, kind: output, shape index: {}]
  %s6 = sld [smem:[#allocation0]]
  $region53: #{_detr_forward_impl.1} parent=0
    _
  %s8 = ssub.s32 1, %s6
  %s9 = scalar_select 0, %s8, %s6
  loop: start=0, step=1, limit=4
  $region2: #{_detr_forward_impl.1} parent=0 // loop_pre_header
    _
  $region3: #{_detr_forward_impl.1} parent=0 // loop_header
    %s11 = sphi 0, %s15
    %p12 = scmp.ge.s32.totalorder %s11, 4
    %s19 = sphi 0, %s19
    %s21 = sphi 0, %s19
    %s22 = sphi 0, %s21
    %s36 = sphi 0, %s22
    %s42 = sphi 0, %s44
    %s45 = sphi 0, %s42
    %s46 = sphi 0, %s45
    %s62 = sphi 0, %s46
    %s68 = sphi 0, %s70
    %s71 = sphi 0, %s68
    %s72 = sphi 0, %s71
    %s88 = sphi 0, %s72
    %s94 = sphi 0, %s96
    %s97 = sphi 0, %s94
    %s98 = sphi 0, %s97
    %s114 = sphi 0, %s98
    %s118 = sphi 0, %s118
    %s120 = sphi 0, %s118
    %s121 = sphi 0, %s120
    %s135 = sphi 0, %s121
    %s141 = sphi 0, %s143
    %s144 = sphi 0, %s141
    %s145 = sphi 0, %s144
    %s161 = sphi 0, %s145
  $region4: #{_detr_forward_impl.1} parent=0 // loop_header_branch
    %14 = sbr.rel (%p12) target = $region8
  $region5: #{_detr_forward_impl.1} parent=0 // loop_body
    %s16 = ssub.s32 %s11, 1
    %s17 = ssub.s32 %s11, 2
    %s18 = sadd.s32 %s11, 1
    %s20 = sadd.s32 %s19, 1
    %p23 = scmp.eq.s32.totalorder %s11, 1
    %p24 = scmp.ne.s32.totalorder %s19, %s21
    %p25 = scmp.eq.s32.totalorder %s11, 0
    %p26 = por %p24, %p25
    %p27 = scmp.ne.s32.totalorder %s19, %s21
    %p28 = scmp.eq.s32.totalorder %s16, 1
    %p29 = por %p27, %p28
    %p30 = scmp.ne.s32.totalorder %s21, %s22
    %p31 = scmp.eq.s32.totalorder %s16, 0
    %p32 = por %p30, %p31
    %p33 = scmp.ne.s32.totalorder %s21, %s22
    %p34 = scmp.eq.s32.totalorder %s17, 1
    %p35 = por %p33, %p34
    %p37 = scmp.ne.s32.totalorder %s22, %s36
    %p38 = scmp.eq.s32.totalorder %s17, 0
    %p39 = por %p37, %p38
    %s40 = ssub.s32 %s11, %s18
    %p41 = scmp.eq.s32.totalorder %s40, 0
    %s43 = sadd.s32 %s42, 1
    %s44 = scalar_select %p41, %s42, %s43
    %p47 = pneg %p41
    %p48 = scmp.eq.s32.totalorder %s11, 1
    %p49 = por %p47, %p48
    %p50 = scmp.ne.s32.totalorder %s42, %s45
    %p51 = scmp.eq.s32.totalorder %s11, 0
    %p52 = por %p50, %p51
    %p53 = scmp.ne.s32.totalorder %s42, %s45
    %p54 = scmp.eq.s32.totalorder %s16, 1
    %p55 = por %p53, %p54
    %p56 = scmp.ne.s32.totalorder %s45, %s46
    %p57 = scmp.eq.s32.totalorder %s16, 0
    %p58 = por %p56, %p57
    %p59 = scmp.ne.s32.totalorder %s45, %s46
    %p60 = scmp.eq.s32.totalorder %s17, 1
    %p61 = por %p59, %p60
    %p63 = scmp.ne.s32.totalorder %s46, %s62
    %p64 = scmp.eq.s32.totalorder %s17, 0
    %p65 = por %p63, %p64
    %s66 = ssub.s32 %s11, %s18
    %p67 = scmp.eq.s32.totalorder %s66, 0
    %s69 = sadd.s32 %s68, 1
    %s70 = scalar_select %p67, %s68, %s69
    %p73 = pneg %p67
    %p74 = scmp.eq.s32.totalorder %s11, 1
    %p75 = por %p73, %p74
    %p76 = scmp.ne.s32.totalorder %s68, %s71
    %p77 = scmp.eq.s32.totalorder %s11, 0
    %p78 = por %p76, %p77
    %p79 = scmp.ne.s32.totalorder %s68, %s71
    %p80 = scmp.eq.s32.totalorder %s16, 1
    %p81 = por %p79, %p80
    %p82 = scmp.ne.s32.totalorder %s71, %s72
    %p83 = scmp.eq.s32.totalorder %s16, 0
    %p84 = por %p82, %p83
    %p85 = scmp.ne.s32.totalorder %s71, %s72
    %p86 = scmp.eq.s32.totalorder %s17, 1
    %p87 = por %p85, %p86
    %p89 = scmp.ne.s32.totalorder %s72, %s88
    %p90 = scmp.eq.s32.totalorder %s17, 0
    %p91 = por %p89, %p90
    %s92 = ssub.s32 %s11, %s18
    %p93 = scmp.eq.s32.totalorder %s92, 0
    %s95 = sadd.s32 %s94, 1
    %s96 = scalar_select %p93, %s94, %s95
    %p99 = pneg %p93
    %p100 = scmp.eq.s32.totalorder %s11, 1
    %p101 = por %p99, %p100
    %p102 = scmp.ne.s32.totalorder %s94, %s97
    %p103 = scmp.eq.s32.totalorder %s11, 0
    %p104 = por %p102, %p103
    %p105 = scmp.ne.s32.totalorder %s94, %s97
    %p106 = scmp.eq.s32.totalorder %s16, 1
    %p107 = por %p105, %p106
    %p108 = scmp.ne.s32.totalorder %s97, %s98
    %p109 = scmp.eq.s32.totalorder %s16, 0
    %p110 = por %p108, %p109
    %p111 = scmp.ne.s32.totalorder %s97, %s98
    %p112 = scmp.eq.s32.totalorder %s17, 1
    %p113 = por %p111, %p112
    %p115 = scmp.ne.s32.totalorder %s98, %s114
    %p116 = scmp.eq.s32.totalorder %s17, 0
    %p117 = por %p115, %p116
    %s119 = sadd.s32 %s118, 1
    %p122 = scmp.eq.s32.totalorder %s11, 1
    %p123 = scmp.ne.s32.totalorder %s118, %s120
    %p124 = scmp.eq.s32.totalorder %s11, 0
    %p125 = por %p123, %p124
    %p126 = scmp.ne.s32.totalorder %s118, %s120
    %p127 = scmp.eq.s32.totalorder %s16, 1
    %p128 = por %p126, %p127
    %p129 = scmp.ne.s32.totalorder %s120, %s121
    %p130 = scmp.eq.s32.totalorder %s16, 0
    %p131 = por %p129, %p130
    %p132 = scmp.ne.s32.totalorder %s120, %s121
    %p133 = scmp.eq.s32.totalorder %s17, 1
    %p134 = por %p132, %p133
    %p136 = scmp.ne.s32.totalorder %s121, %s135
    %p137 = scmp.eq.s32.totalorder %s17, 0
    %p138 = por %p136, %p137
    %s139 = ssub.s32 %s11, %s18
    %p140 = scmp.eq.s32.totalorder %s139, 0
    %s142 = sadd.s32 %s141, 1
    %s143 = scalar_select %p140, %s141, %s142
    %p146 = pneg %p140
    %p147 = scmp.eq.s32.totalorder %s11, 1
    %p148 = por %p146, %p147
    %p149 = scmp.ne.s32.totalorder %s141, %s144
    %p150 = scmp.eq.s32.totalorder %s11, 0
    %p151 = por %p149, %p150
    %p152 = scmp.ne.s32.totalorder %s141, %s144
    %p153 = scmp.eq.s32.totalorder %s16, 1
    %p154 = por %p152, %p153
    %p155 = scmp.ne.s32.totalorder %s144, %s145
    %p156 = scmp.eq.s32.totalorder %s16, 0
    %p157 = por %p155, %p156
    %p158 = scmp.ne.s32.totalorder %s144, %s145
    %p159 = scmp.eq.s32.totalorder %s17, 1
    %p160 = por %p158, %p159
    %p162 = scmp.ne.s32.totalorder %s145, %s161
    %p163 = scmp.eq.s32.totalorder %s17, 0
    %p164 = por %p162, %p163
    %p165 = scmp.le.s32.totalorder 1, %s11
    %p166 = scmp.lt.s32.totalorder %s11, 3
    %p167 = pnand %p165, %p166
    %p168 = pneg %p167
    // Predicated region
    $region9: #{_detr_forward_impl.1} parent=5 // pred_check
      _
    $region10: #{_detr_forward_impl.1} parent=5 // pred_check_branch
      %170 = sbr.rel (%p167) target = $region12
    $region11: #{_detr_forward_impl.1} parent=5 // pred_region
      %s171 = ssub.s32 %s11, 1
      // Predicated region
      $region13: #{_detr_forward_impl.1} parent=11 // pred_check
        %p172 = pneg %p32
      $region14: #{_detr_forward_impl.1} parent=11 // pred_check_branch
        %174 = sbr.rel (%p172) target = $region16
      $region15: #{_detr_forward_impl.1} parent=11 // pred_region
        _
      $region16: #{_detr_forward_impl.1} parent=11 // pred_fallthru
        _
      // Predicated region
      $region17: #{_detr_forward_impl.1} parent=11 // pred_check
        %p175 = pneg %p131
      $region18: #{_detr_forward_impl.1} parent=11 // pred_check_branch
        %177 = sbr.rel (%p175) target = $region20
      $region19: #{_detr_forward_impl.1} parent=11 // pred_region
        _
      $region20: #{_detr_forward_impl.1} parent=11 // pred_fallthru
        _
    $region12: #{_detr_forward_impl.1} parent=5 // pred_fallthru
      _
    %p178 = scmp.lt.s32.totalorder %s11, 2
    // Predicated region
    $region21: #{_detr_forward_impl.1} parent=5 // pred_check
      %p179 = pneg %p178
    $region22: #{_detr_forward_impl.1} parent=5 // pred_check_branch
      %181 = sbr.rel (%p179) target = $region24
    $region23: #{_detr_forward_impl.1} parent=5 // pred_region
      // Predicated region
      $region25: #{_detr_forward_impl.1} parent=23 // pred_check
        %p182 = pneg %p52
      $region26: #{_detr_forward_impl.1} parent=23 // pred_check_branch
        %184 = sbr.rel (%p182) target = $region28
      $region27: #{_detr_forward_impl.1} parent=23 // pred_region
        %p185 = scmp.lt.s32.totalorder %s11, 1
        %s186 = scalar_select %p185, %s11, 1
        %s187 = smul.addr %s186, 128
        %s188 = smul.addr %s187, 8
        %s189 = scalar_lea.vmem %s1, %s188
      $region28: #{_detr_forward_impl.1} parent=23 // pred_fallthru
        _
      // Predicated region
      $region29: #{_detr_forward_impl.1} parent=23 // pred_check
        %p190 = pneg %p78
      $region30: #{_detr_forward_impl.1} parent=23 // pred_check_branch
        %192 = sbr.rel (%p190) target = $region32
      $region31: #{_detr_forward_impl.1} parent=23 // pred_region
        %p193 = scmp.lt.s32.totalorder %s11, 1
        %s194 = scalar_select %p193, %s11, 1
        %s195 = smul.addr %s194, 32
        %s196 = smul.addr %s195, 8
        %s197 = scalar_lea.vmem %s2, %s196
      $region32: #{_detr_forward_impl.1} parent=23 // pred_fallthru
        _
      // Predicated region
      $region33: #{_detr_forward_impl.1} parent=23 // pred_check
        %p198 = pneg %p104
      $region34: #{_detr_forward_impl.1} parent=23 // pred_check_branch
        %200 = sbr.rel (%p198) target = $region36
      $region35: #{_detr_forward_impl.1} parent=23 // pred_region
        %p201 = scmp.lt.s32.totalorder %s11, 1
        %s202 = scalar_select %p201, %s11, 1
        %s203 = smul.addr %s202, 16
        %s204 = smul.addr %s203, 8
        %s205 = scalar_lea.vmem %s3, %s204
      $region36: #{_detr_forward_impl.1} parent=23 // pred_fallthru
        _
    $region24: #{_detr_forward_impl.1} parent=5 // pred_fallthru
      _
    %p206 = scmp.le.s32.totalorder 1, %s11
    %p207 = scmp.lt.s32.totalorder %s11, 3
    %p208 = pnand %p206, %p207
    %p209 = pneg %p208
    // Predicated region
    $region37: #{_detr_forward_impl.1} parent=5 // pred_check
      _
    $region38: #{_detr_forward_impl.1} parent=5 // pred_check_branch
      %211 = sbr.rel (%p208) target = $region40
    $region39: #{_detr_forward_impl.1} parent=5 // pred_region
      %s212 = ssub.s32 %s11, 1
      %p213 = pneg %p32
      %p214 = pneg %p29
      %p215 = scmp.lt.s32.totalorder %s16, 1
      %s216 = scalar_select %p215, %s16, 1
      %s217 = smul.addr %s216, 128
      %s218 = smul.addr %s217, 8
      %s219 = scalar_lea.vmem %s1, %s218
      %p220 = pneg %p58
      %p221 = pneg %p55
      %p222 = scmp.lt.s32.totalorder %s16, 1
      %s223 = scalar_select %p222, %s16, 1
      %s224 = smul.addr %s223, 32
      %s225 = smul.addr %s224, 8
      %s226 = scalar_lea.vmem %s2, %s225
      %p227 = pneg %p84
      %p228 = pneg %p81
      %p229 = scmp.lt.s32.totalorder %s16, 1
      %s230 = scalar_select %p229, %s16, 1
      %s231 = smul.addr %s230, 16
      %s232 = smul.addr %s231, 8
      %s233 = scalar_lea.vmem %s3, %s232
      %p234 = pneg %p110
      %p235 = pneg %p107
      %p236 = pneg %p131
      %p237 = pneg %p128
      %p238 = pneg %p157
      %p239 = pneg %p154
      %p240 = scmp.lt.s32.totalorder %s16, 1
      %s241 = scalar_select %p240, %s16, 1
      %s242 = smul.addr %s241, 3
      %s243 = smul.addr %s242, 8
      %s244 = scalar_lea.vmem %s5, %s243
      %p245 = scmp.lt.s32.totalorder %s16, 1
      %s246 = scalar_select %p245, %s16, 1
      %s247 = smul.addr %s246, 128
      %s248 = smul.addr %s247, 8
      %s249 = scalar_lea.vmem %s1, %s248
      %p250 = scmp.lt.s32.totalorder %s16, 1
      %s251 = scalar_select %p250, %s16, 1
      %s252 = smul.addr %s251, 32
      %s253 = smul.addr %s252, 8
      %s254 = scalar_lea.vmem %s2, %s253
      %p255 = scmp.lt.s32.totalorder %s16, 1
      %s256 = scalar_select %p255, %s16, 1
      %s257 = smul.addr %s256, 16
      %s258 = smul.addr %s257, 8
      %s259 = scalar_lea.vmem %s3, %s258
      %p260 = scmp.lt.s32.totalorder %s16, 1
      %s261 = scalar_select %p260, %s16, 1
      %s262 = smul.addr %s261, 3
      %s263 = smul.addr %s262, 8
      %s264 = scalar_lea.vmem %s5, %s263
      %v265 = vld [vmem:[%s0] sm:$0xff]
      %v266 = vld [vmem:[%s0 + $0x8] sm:$0xff]
      %v267 = vld [vmem:[%s0 + $0x10] sm:$0xf]
      %v268 = vld [vmem:[%s249] sm:$0xff]
      %v269 = vld [vmem:[%s249 + $0x8] sm:$0xff]
      %v270 = vld [vmem:[%s249 + $0x10] sm:$0xff]
      %v271 = vld [vmem:[%s249 + $0x18] sm:$0xff]
      %v272 = vld [vmem:[%s249 + $0x20] sm:$0xff]
      %v273 = vld [vmem:[%s249 + $0x28] sm:$0xff]
      %v274 = vld [vmem:[%s249 + $0x30] sm:$0xff]
      %v275 = vld [vmem:[%s249 + $0x38] sm:$0xff]
      %v276 = vld [vmem:[%s249 + $0x40] sm:$0xff]
      %v277 = vld [vmem:[%s249 + $0x48] sm:$0xff]
      %v278 = vld [vmem:[%s249 + $0x50] sm:$0xff]
      %v279 = vld [vmem:[%s249 + $0x58] sm:$0xff]
      %v280 = vld [vmem:[%s249 + $0x60] sm:$0xff]
      %v281 = vld [vmem:[%s249 + $0x68] sm:$0xff]
      %v282 = vld [vmem:[%s249 + $0x70] sm:$0xff]
      %v283 = vld [vmem:[%s249 + $0x78] sm:$0xff]
      %v284 = vld [vmem:[%s249 + $0x80] sm:$0xff]
      %v285 = vld [vmem:[%s249 + $0x88] sm:$0xff]
      %v286 = vld [vmem:[%s249 + $0x90] sm:$0xff]
      %v287 = vld [vmem:[%s249 + $0x98] sm:$0xff]
      %v288 = vld [vmem:[%s249 + $0xa0] sm:$0xff]
      %v289 = vld [vmem:[%s249 + $0xa8] sm:$0xff]
      %v290 = vld [vmem:[%s249 + $0xb0] sm:$0xff]
      %v291 = vld [vmem:[%s249 + $0xb8] sm:$0xff]
      %v292 = vld [vmem:[%s249 + $0xc0] sm:$0xff]
      %v293 = vld [vmem:[%s249 + $0xc8] sm:$0xff]
      %v294 = vld [vmem:[%s249 + $0xd0] sm:$0xff]
      %v295 = vld [vmem:[%s249 + $0xd8] sm:$0xff]
      %v296 = vld [vmem:[%s249 + $0xe0] sm:$0xff]
      %v297 = vld [vmem:[%s249 + $0xe8] sm:$0xff]
      %v298 = vld [vmem:[%s249 + $0xf0] sm:$0xff]
      %v299 = vld [vmem:[%s249 + $0xf8] sm:$0xff]
      %v300 = vld [vmem:[%s249 + $0x100] sm:$0xff]
      %v301 = vld [vmem:[%s249 + $0x108] sm:$0xff]
      %v302 = vld [vmem:[%s249 + $0x110] sm:$0xff]
      %v303 = vld [vmem:[%s249 + $0x118] sm:$0xff]
      %v304 = vld [vmem:[%s249 + $0x120] sm:$0xff]
      %v305 = vld [vmem:[%s249 + $0x128] sm:$0xff]
      %v306 = vld [vmem:[%s249 + $0x130] sm:$0xff]
      %v307 = vld [vmem:[%s249 + $0x138] sm:$0xff]
      %v308 = vld [vmem:[%s249 + $0x140] sm:$0xff]
      %v309 = vld [vmem:[%s249 + $0x148] sm:$0xff]
      %v310 = vld [vmem:[%s249 + $0x150] sm:$0xff]
      %v311 = vld [vmem:[%s249 + $0x158] sm:$0xff]
      %v312 = vld [vmem:[%s249 + $0x160] sm:$0xff]
      %v313 = vld [vmem:[%s249 + $0x168] sm:$0xff]
      %v314 = vld [vmem:[%s249 + $0x170] sm:$0xff]
      %v315 = vld [vmem:[%s249 + $0x178] sm:$0xff]
      %v316 = vld [vmem:[%s249 + $0x180] sm:$0xff]
      %v317 = vld [vmem:[%s249 + $0x188] sm:$0xff]
      %v318 = vld [vmem:[%s249 + $0x190] sm:$0xff]
      %v319 = vld [vmem:[%s249 + $0x198] sm:$0xff]
      %v320 = vld [vmem:[%s249 + $0x1a0] sm:$0xff]
      %v321 = vld [vmem:[%s249 + $0x1a8] sm:$0xff]
      %v322 = vld [vmem:[%s249 + $0x1b0] sm:$0xff]
      %v323 = vld [vmem:[%s249 + $0x1b8] sm:$0xff]
      %v324 = vld [vmem:[%s249 + $0x1c0] sm:$0xff]
      %v325 = vld [vmem:[%s249 + $0x1c8] sm:$0xff]
      %v326 = vld [vmem:[%s249 + $0x1d0] sm:$0xff]
      %v327 = vld [vmem:[%s249 + $0x1d8] sm:$0xff]
      %v328 = vld [vmem:[%s249 + $0x1e0] sm:$0xff]
      %v329 = vld [vmem:[%s249 + $0x1e8] sm:$0xff]
      %v330 = vld [vmem:[%s249 + $0x1f0] sm:$0xff]
      %v331 = vld [vmem:[%s249 + $0x1f8] sm:$0xff]
      %v332 = vld [vmem:[%s249 + $0x200] sm:$0xff]
      %v333 = vld [vmem:[%s249 + $0x208] sm:$0xff]
      %v334 = vld [vmem:[%s249 + $0x210] sm:$0xff]
      %v335 = vld [vmem:[%s249 + $0x218] sm:$0xff]
      %v336 = vld [vmem:[%s249 + $0x220] sm:$0xff]
      %v337 = vld [vmem:[%s249 + $0x228] sm:$0xff]
      %v338 = vld [vmem:[%s249 + $0x230] sm:$0xff]
      %v339 = vld [vmem:[%s249 + $0x238] sm:$0xff]
      %v340 = vld [vmem:[%s249 + $0x240] sm:$0xff]
      %v341 = vld [vmem:[%s249 + $0x248] sm:$0xff]
      %v342 = vld [vmem:[%s249 + $0x250] sm:$0xff]
      %v343 = vld [vmem:[%s249 + $0x258] sm:$0xff]
      %v344 = vld [vmem:[%s249 + $0x260] sm:$0xff]
      %v345 = vld [vmem:[%s249 + $0x268] sm:$0xff]
      %v346 = vld [vmem:[%s249 + $0x270] sm:$0xff]
      %v347 = vld [vmem:[%s249 + $0x278] sm:$0xff]
      %v348 = vld [vmem:[%s249 + $0x280] sm:$0xff]
      %v349 = vld [vmem:[%s249 + $0x288] sm:$0xff]
      %v350 = vld [vmem:[%s249 + $0x290] sm:$0xff]
      %v351 = vld [vmem:[%s249 + $0x298] sm:$0xff]
      %v352 = vld [vmem:[%s249 + $0x2a0] sm:$0xff]
      %v353 = vld [vmem:[%s249 + $0x2a8] sm:$0xff]
      %v354 = vld [vmem:[%s249 + $0x2b0] sm:$0xff]
      %v355 = vld [vmem:[%s249 + $0x2b8] sm:$0xff]
      %v356 = vld [vmem:[%s249 + $0x2c0] sm:$0xff]
      %v357 = vld [vmem:[%s249 + $0x2c8] sm:$0xff]
      %v358 = vld [vmem:[%s249 + $0x2d0] sm:$0xff]
      %v359 = vld [vmem:[%s249 + $0x2d8] sm:$0xff]
      %v360 = vld [vmem:[%s249 + $0x2e0] sm:$0xff]
      %v361 = vld [vmem:[%s249 + $0x2e8] sm:$0xff]
      %v362 = vld [vmem:[%s249 + $0x2f0] sm:$0xff]
      %v363 = vld [vmem:[%s249 + $0x2f8] sm:$0xff]
      %v364 = vld [vmem:[%s249 + $0x300] sm:$0xff]
      %v365 = vld [vmem:[%s249 + $0x308] sm:$0xff]
      %v366 = vld [vmem:[%s249 + $0x310] sm:$0xff]
      %v367 = vld [vmem:[%s249 + $0x318] sm:$0xff]
      %v368 = vld [vmem:[%s249 + $0x320] sm:$0xff]
      %v369 = vld [vmem:[%s249 + $0x328] sm:$0xff]
      %v370 = vld [vmem:[%s249 + $0x330] sm:$0xff]
      %v371 = vld [vmem:[%s249 + $0x338] sm:$0xff]
      %v372 = vld [vmem:[%s249 + $0x340] sm:$0xff]
      %v373 = vld [vmem:[%s249 + $0x348] sm:$0xff]
      %v374 = vld [vmem:[%s249 + $0x350] sm:$0xff]
      %v375 = vld [vmem:[%s249 + $0x358] sm:$0xff]
      %v376 = vld [vmem:[%s249 + $0x360] sm:$0xff]
      %v377 = vld [vmem:[%s249 + $0x368] sm:$0xff]
      %v378 = vld [vmem:[%s249 + $0x370] sm:$0xff]
      %v379 = vld [vmem:[%s249 + $0x378] sm:$0xff]
      %v380 = vld [vmem:[%s249 + $0x380] sm:$0xff]
      %v381 = vld [vmem:[%s249 + $0x388] sm:$0xff]
      %v382 = vld [vmem:[%s249 + $0x390] sm:$0xff]
      %v383 = vld [vmem:[%s249 + $0x398] sm:$0xff]
      %v384 = vld [vmem:[%s249 + $0x3a0] sm:$0xff]
      %v385 = vld [vmem:[%s249 + $0x3a8] sm:$0xff]
      %v386 = vld [vmem:[%s249 + $0x3b0] sm:$0xff]
      %v387 = vld [vmem:[%s249 + $0x3b8] sm:$0xff]
      %v388 = vld [vmem:[%s249 + $0x3c0] sm:$0xff]
      %v389 = vld [vmem:[%s249 + $0x3c8] sm:$0xff]
      %v390 = vld [vmem:[%s249 + $0x3d0] sm:$0xff]
      %v391 = vld [vmem:[%s249 + $0x3d8] sm:$0xff]
      %v392 = vld [vmem:[%s249 + $0x3e0] sm:$0xff]
      %v393 = vld [vmem:[%s249 + $0x3e8] sm:$0xff]
      %v394 = vld [vmem:[%s249 + $0x3f0] sm:$0xff]
      %v395 = vld [vmem:[%s249 + $0x3f8] sm:$0xff]
      %v396 = vld [vmem:[%s4] sm:$0x1]
      %v397 = vld [vmem:[%s4 + $0x8] sm:$0xff]
      %v398 = vld [vmem:[%s4 + $0x10] sm:$0xf]
      %v399 = vlaneseq
      %v400 = vshrl.u32 %v399, 7
      %v401 = vsub.s32 0, %v400
      %v402 = vrot.slane %v396, %v401
      %vm403 = vcmask 97280
      %v405 = vsel %vm403, %v268, 0
      %v408 = vsel %vm403, %v269, 0
      %v411 = vsel %vm403, %v270, 0
      %v414 = vsel %vm403, %v271, 0
      %v417 = vsel %vm403, %v272, 0
      %v420 = vsel %vm403, %v273, 0
      %v423 = vsel %vm403, %v274, 0
      %v426 = vsel %vm403, %v275, 0
      %v429 = vsel %vm403, %v276, 0
      %v432 = vsel %vm403, %v277, 0
      %v435 = vsel %vm403, %v278, 0
      %v438 = vsel %vm403, %v279, 0
      %v441 = vsel %vm403, %v280, 0
      %v444 = vsel %vm403, %v281, 0
      %v447 = vsel %vm403, %v282, 0
      %v450 = vsel %vm403, %v283, 0
      %v453 = vsel %vm403, %v284, 0
      %v456 = vsel %vm403, %v285, 0
      %v459 = vsel %vm403, %v286, 0
      %v462 = vsel %vm403, %v287, 0
      %v465 = vsel %vm403, %v288, 0
      %v468 = vsel %vm403, %v289, 0
      %v471 = vsel %vm403, %v290, 0
      %v474 = vsel %vm403, %v291, 0
      %v477 = vsel %vm403, %v292, 0
      %v480 = vsel %vm403, %v293, 0
      %v483 = vsel %vm403, %v294, 0
      %v486 = vsel %vm403, %v295, 0
      %v489 = vsel %vm403, %v296, 0
      %v492 = vsel %vm403, %v297, 0
      %v495 = vsel %vm403, %v298, 0
      %v498 = vsel %vm403, %v299, 0
      %v501 = vsel %vm403, %v300, 0
      %v504 = vsel %vm403, %v301, 0
      %v507 = vsel %vm403, %v302, 0
      %v510 = vsel %vm403, %v303, 0
      %v513 = vsel %vm403, %v304, 0
      %v516 = vsel %vm403, %v305, 0
      %v519 = vsel %vm403, %v306, 0
      %v522 = vsel %vm403, %v307, 0
      %v525 = vsel %vm403, %v308, 0
      %v528 = vsel %vm403, %v309, 0
      %v531 = vsel %vm403, %v310, 0
      %v534 = vsel %vm403, %v311, 0
      %v537 = vsel %vm403, %v312, 0
      %v540 = vsel %vm403, %v313, 0
      %v543 = vsel %vm403, %v314, 0
      %v546 = vsel %vm403, %v315, 0
      %v549 = vsel %vm403, %v316, 0
      %v552 = vsel %vm403, %v317, 0
      %v555 = vsel %vm403, %v318, 0
      %v558 = vsel %vm403, %v319, 0
      %v561 = vsel %vm403, %v320, 0
      %v564 = vsel %vm403, %v321, 0
      %v567 = vsel %vm403, %v322, 0
      %v570 = vsel %vm403, %v323, 0
      %v573 = vsel %vm403, %v324, 0
      %v576 = vsel %vm403, %v325, 0
      %v579 = vsel %vm403, %v326, 0
      %v582 = vsel %vm403, %v327, 0
      %v585 = vsel %vm403, %v328, 0
      %v588 = vsel %vm403, %v329, 0
      %v591 = vsel %vm403, %v330, 0
      %v594 = vsel %vm403, %v331, 0
      %v597 = vsel %vm403, %v332, 0
      %v600 = vsel %vm403, %v333, 0
      %v603 = vsel %vm403, %v334, 0
      %v606 = vsel %vm403, %v335, 0
      %v609 = vsel %vm403, %v336, 0
      %v612 = vsel %vm403, %v337, 0
      %v615 = vsel %vm403, %v338, 0
      %v618 = vsel %vm403, %v339, 0
      %v621 = vsel %vm403, %v340, 0
      %v624 = vsel %vm403, %v341, 0
      %v627 = vsel %vm403, %v342, 0
      %v630 = vsel %vm403, %v343, 0
      %v633 = vsel %vm403, %v344, 0
      %v636 = vsel %vm403, %v345, 0
      %v639 = vsel %vm403, %v346, 0
      %v642 = vsel %vm403, %v347, 0
      %v645 = vsel %vm403, %v348, 0
      %v648 = vsel %vm403, %v349, 0
      %v651 = vsel %vm403, %v350, 0
      %v654 = vsel %vm403, %v351, 0
      %v657 = vsel %vm403, %v352, 0
      %v660 = vsel %vm403, %v353, 0
      %v663 = vsel %vm403, %v354, 0
      %v666 = vsel %vm403, %v355, 0
      %v669 = vsel %vm403, %v356, 0
      %v672 = vsel %vm403, %v357, 0
      %v675 = vsel %vm403, %v358, 0
      %v678 = vsel %vm403, %v359, 0
      %v681 = vsel %vm403, %v360, 0
      %v684 = vsel %vm403, %v361, 0
      %v687 = vsel %vm403, %v362, 0
      %v690 = vsel %vm403, %v363, 0
      %v693 = vsel %vm403, %v364, 0
      %v696 = vsel %vm403, %v365, 0
      %v699 = vsel %vm403, %v366, 0
      %v702 = vsel %vm403, %v367, 0
      %v705 = vsel %vm403, %v368, 0
      %v708 = vsel %vm403, %v369, 0
      %v711 = vsel %vm403, %v370, 0
      %v714 = vsel %vm403, %v371, 0
      %v717 = vsel %vm403, %v372, 0
      %v720 = vsel %vm403, %v373, 0
      %v723 = vsel %vm403, %v374, 0
      %v726 = vsel %vm403, %v375, 0
      %v729 = vsel %vm403, %v376, 0
      %v732 = vsel %vm403, %v377, 0
      %v735 = vsel %vm403, %v378, 0
      %v738 = vsel %vm403, %v379, 0
      %v741 = vsel %vm403, %v380, 0
      %v744 = vsel %vm403, %v381, 0
      %v747 = vsel %vm403, %v382, 0
      %v750 = vsel %vm403, %v383, 0
      %v753 = vsel %vm403, %v384, 0
      %v756 = vsel %vm403, %v385, 0
      %v759 = vsel %vm403, %v386, 0
      %v762 = vsel %vm403, %v387, 0
      %v765 = vsel %vm403, %v388, 0
      %v768 = vsel %vm403, %v389, 0
      %v771 = vsel %vm403, %v390, 0
      %v774 = vsel %vm403, %v391, 0
      %v777 = vsel %vm403, %v392, 0
      %v780 = vsel %vm403, %v393, 0
      %v783 = vsel %vm403, %v394, 0
      %v786 = vsel %vm403, %v395, 0
      %vm788 = vcmask 1043456
      %v790 = vsel %vm788, %v398, 0
      %792 = vmatprep.subr.mxu0 0.0
      %793 = vmatpush1.msra.mxu0 %v397
      %794 = vmatprep.subr.mxu0 0.0
      %795 = vmatpush1.msra.mxu0 %v790
      %796 = vmatprep.subr.mxu0 0.0
      %797 = vmatpush1.msra.mxu0 0.0
      %798 = vmatprep.subr.mxu0 0.0
      %799 = vmatpush1.msra.mxu0 0.0
      %800 = vmatprep.subr.mxu0 0.0
      %801 = vmatpush1.msra.mxu0 0.0
      %802 = vmatprep.subr.mxu0 0.0
      %803 = vmatpush1.msra.mxu0 0.0
      %804 = vmatprep.subr.mxu0 0.0
      %805 = vmatpush1.msra.mxu0 0.0
      %806 = vmatprep.subr.mxu0 0.0
      %807 = vmatpush1.msra.mxu0 0.0
      %808 = vmatprep.subr.mxu0 0.0
      %809 = vmatpush1.msra.mxu0 0.0
      %810 = vmatprep.subr.mxu0 0.0
      %811 = vmatpush1.msra.mxu0 0.0
      %812 = vmatprep.subr.mxu0 0.0
      %813 = vmatpush1.msra.mxu0 0.0
      %814 = vmatprep.subr.mxu0 0.0
      %815 = vmatpush1.msra.mxu0 0.0
      %816 = vmatprep.subr.mxu0 0.0
      %817 = vmatpush1.msra.mxu0 0.0
      %818 = vmatprep.subr.mxu0 0.0
      %819 = vmatpush1.msra.mxu0 0.0
      %820 = vmatprep.subr.mxu0 0.0
      %821 = vmatpush1.msra.mxu0 0.0
      %822 = vmatprep.subr.mxu0 0.0
      %823 = vmatpush1.msra.mxu0 0.0
      %824 = vmatprep.subr.mxu0 0.0
      %825 = vmatpush1.msra.mxu0 0.0
      %826 = vmatprep.subr.mxu0 0.0
      %827 = vmatpush1.msra.mxu0 0.0
      %828 = vmatprep.subr.mxu0 0.0
      %829 = vmatpush1.msra.mxu0 0.0
      %830 = vmatprep.subr.mxu0 0.0
      %831 = vmatpush1.msra.mxu0 0.0
      %832 = vmatprep.subr.mxu0 0.0
      %833 = vmatpush1.msra.mxu0 0.0
      %834 = vmatprep.subr.mxu0 0.0
      %835 = vmatpush1.msra.mxu0 0.0
      %836 = vmatprep.subr.mxu0 0.0
      %837 = vmatpush1.msra.mxu0 0.0
      %838 = vmatprep.subr.mxu0 0.0
      %839 = vmatpush1.msra.mxu0 0.0
      %840 = vmatprep.subr.mxu0 0.0
      %841 = vmatpush1.msra.mxu0 0.0
      %842 = vmatprep.subr.mxu0 0.0
      %843 = vmatpush1.msra.mxu0 0.0
      %844 = vmatprep.subr.mxu0 0.0
      %845 = vmatpush1.msra.mxu0 0.0
      %846 = vmatprep.subr.mxu0 0.0
      %847 = vmatpush1.msra.mxu0 0.0
      %848 = vmatprep.subr.mxu0 0.0
      %849 = vmatpush1.msra.mxu0 0.0
      %850 = vmatprep.subr.mxu0 0.0
      %851 = vmatpush1.msra.mxu0 0.0
      %852 = vmatprep.subr.mxu0 0.0
      %853 = vmatpush1.msra.mxu0 0.0
      %854 = vmatprep.subr.mxu0 0.0
      %855 = vmatpush1.msra.mxu0 0.0
      %856 = vmatprep.mubr.f32.mxu0 0.0
      %857 = vmatmul.mubr.f32.gmra.mrb[0].mxu0 %v405
      %v858 = vpop.f32.mrb[0].mxu0
      %v859 = vadd.f32 %v402, %v858
      %v860 = vpop.f32.mrb[0].mxu0
      %861 = vmatprep.mubr.f32.mxu0 0.0
      %862 = vmatmul.mubr.f32.gmra.mrb[0].mxu0 %v408
      %v863 = vpop.f32.mrb[0].mxu0
      %v864 = vadd.f32 %v402, %v863
      %v865 = vpop.f32.mrb[0].mxu0
      %866 = vmatprep.mubr.f32.mxu0 0.0
      %867 = vmatmul.mubr.f32.gmra.mrb[0].mxu0 %v411
      %v868 = vpop.f32.mrb[0].mxu0
      %v869 = vadd.f32 %v402, %v868
      %v870 = vpop.f32.mrb[0].mxu0
      %871 = vmatprep.mubr.f32.mxu0 0.0
      %872 = vmatmul.mubr.f32.gmra.mrb[0].mxu0 %v414
      %v873 = vpop.f32.mrb[0].mxu0
      %v874 = vadd.f32 %v402, %v873
      %v875 = vpop.f32.mrb[0].mxu0
      %876 = vmatprep.mubr.f32.mxu0 0.0
      %877 = vmatmul.mubr.f32.gmra.mrb[0].mxu0 %v417
      %v878 = vpop.f32.mrb[0].mxu0
      %v879 = vadd.f32 %v402, %v878
      %v880 = vpop.f32.mrb[0].mxu0
      %881 = vmatprep.mubr.f32.mxu0 0.0
      %882 = vmatmul.mubr.f32.gmra.mrb[0].mxu0 %v420
      %v883 = vpop.f32.mrb[0].mxu0
      %v884 = vadd.f32 %v402, %v883
      %v885 = vpop.f32.mrb[0].mxu0
      %886 = vmatprep.mubr.f32.mxu0 0.0
      %887 = vmatmul.mubr.f32.gmra.mrb[0].mxu0 %v423
      %v888 = vpop.f32.mrb[0].mxu0
      %v889 = vadd.f32 %v402, %v888
      %v890 = vpop.f32.mrb[0].mxu0
      %891 = vmatprep.mubr.f32.mxu0 0.0
      %892 = vmatmul.mubr.f32.gmra.mrb[0].mxu0 %v426
      %v893 = vpop.f32.mrb[0].mxu0
      %v894 = vadd.f32 %v402, %v893
      %v895 = vpop.f32.mrb[0].mxu0
      %896 = vmatprep.mubr.f32.mxu0 0.0
      %897 = vmatmul.mubr.f32.gmra.mrb[0].mxu0 %v429
      %v898 = vpop.f32.mrb[0].mxu0
      %v899 = vadd.f32 %v402, %v898
      %v900 = vpop.f32.mrb[0].mxu0
      %901 = vmatprep.mubr.f32.mxu0 0.0
      %902 = vmatmul.mubr.f32.gmra.mrb[0].mxu0 %v432
      %v903 = vpop.f32.mrb[0].mxu0
      %v904 = vadd.f32 %v402, %v903
      %v905 = vpop.f32.mrb[0].mxu0
      %906 = vmatprep.mubr.f32.mxu0 0.0
      %907 = vmatmul.mubr.f32.gmra.mrb[0].mxu0 %v435
      %v908 = vpop.f32.mrb[0].mxu0
      %v909 = vadd.f32 %v402, %v908
      %v910 = vpop.f32.mrb[0].mxu0
      %911 = vmatprep.mubr.f32.mxu0 0.0
      %912 = vmatmul.mubr.f32.gmra.mrb[0].mxu0 %v438
      %v913 = vpop.f32.mrb[0].mxu0
      %v914 = vadd.f32 %v402, %v913
      %v915 = vpop.f32.mrb[0].mxu0
      %916 = vmatprep.mubr.f32.mxu0 0.0
      %917 = vmatmul.mubr.f32.gmra.mrb[0].mxu0 %v441
      %v918 = vpop.f32.mrb[0].mxu0
      %v919 = vadd.f32 %v402, %v918
      %v920 = vpop.f32.mrb[0].mxu0
      %921 = vmatprep.mubr.f32.mxu0 0.0
      %922 = vmatmul.mubr.f32.gmra.mrb[0].mxu0 %v444
      %v923 = vpop.f32.mrb[0].mxu0
      %v924 = vadd.f32 %v402, %v923
      %v925 = vpop.f32.mrb[0].mxu0
      %926 = vmatprep.mubr.f32.mxu0 0.0
      %927 = vmatmul.mubr.f32.gmra.mrb[0].mxu0 %v447
      %v928 = vpop.f32.mrb[0].mxu0
      %v929 = vadd.f32 %v402, %v928
      %v930 = vpop.f32.mrb[0].mxu0
      %931 = vmatprep.mubr.f32.mxu0 0.0
      %932 = vmatmul.mubr.f32.gmra.mrb[0].mxu0 %v450
      %v933 = vpop.f32.mrb[0].mxu0
      %v934 = vadd.f32 %v402, %v933
      %v935 = vpop.f32.mrb[0].mxu0
      %936 = vmatprep.mubr.f32.mxu0 0.0
      %937 = vmatmul.mubr.f32.gmra.mrb[0].mxu0 %v453
      %v938 = vpop.f32.mrb[0].mxu0
      %v939 = vadd.f32 %v402, %v938
      %v940 = vpop.f32.mrb[0].mxu0
      %941 = vmatprep.mubr.f32.mxu0 0.0
      %942 = vmatmul.mubr.f32.gmra.mrb[0].mxu0 %v456
      %v943 = vpop.f32.mrb[0].mxu0
      %v944 = vadd.f32 %v402, %v943
      %v945 = vpop.f32.mrb[0].mxu0
      %946 = vmatprep.mubr.f32.mxu0 0.0
      %947 = vmatmul.mubr.f32.gmra.mrb[0].mxu0 %v459
      %v948 = vpop.f32.mrb[0].mxu0
      %v949 = vadd.f32 %v402, %v948
      %v950 = vpop.f32.mrb[0].mxu0
      %951 = vmatprep.mubr.f32.mxu0 0.0
      %952 = vmatmul.mubr.f32.gmra.mrb[0].mxu0 %v462
      %v953 = vpop.f32.mrb[0].mxu0
      %v954 = vadd.f32 %v402, %v953
      %v955 = vpop.f32.mrb[0].mxu0
      %956 = vmatprep.mubr.f32.mxu0 0.0
      %957 = vmatmul.mubr.f32.gmra.mrb[0].mxu0 %v465
      %v958 = vpop.f32.mrb[0].mxu0
      %v959 = vadd.f32 %v402, %v958
      %v960 = vpop.f32.mrb[0].mxu0
      %961 = vmatprep.mubr.f32.mxu0 0.0
      %962 = vmatmul.mubr.f32.gmra.mrb[0].mxu0 %v468
      %v963 = vpop.f32.mrb[0].mxu0
      %v964 = vadd.f32 %v402, %v963
      %v965 = vpop.f32.mrb[0].mxu0
      %966 = vmatprep.mubr.f32.mxu0 0.0
      %967 = vmatmul.mubr.f32.gmra.mrb[0].mxu0 %v471
      %v968 = vpop.f32.mrb[0].mxu0
      %v969 = vadd.f32 %v402, %v968
      %v970 = vpop.f32.mrb[0].mxu0
      %971 = vmatprep.mubr.f32.mxu0 0.0
      %972 = vmatmul.mubr.f32.gmra.mrb[0].mxu0 %v474
      %v973 = vpop.f32.mrb[0].mxu0
      %v974 = vadd.f32 %v402, %v973
      %v975 = vpop.f32.mrb[0].mxu0
      %976 = vmatprep.mubr.f32.mxu0 0.0
      %977 = vmatmul.mubr.f32.gmra.mrb[0].mxu0 %v477
      %v978 = vpop.f32.mrb[0].mxu0
      %v979 = vadd.f32 %v402, %v978
      %v980 = vpop.f32.mrb[0].mxu0
      %981 = vmatprep.mubr.f32.mxu0 0.0
      %982 = vmatmul.mubr.f32.gmra.mrb[0].mxu0 %v480
      %v983 = vpop.f32.mrb[0].mxu0
      %v984 = vadd.f32 %v402, %v983
      %v985 = vpop.f32.mrb[0].mxu0
      %986 = vmatprep.mubr.f32.mxu0 0.0
      %987 = vmatmul.mubr.f32.gmra.mrb[0].mxu0 %v483
      %v988 = vpop.f32.mrb[0].mxu0
      %v989 = vadd.f32 %v402, %v988
      %v990 = vpop.f32.mrb[0].mxu0
      %991 = vmatprep.mubr.f32.mxu0 0.0
      %992 = vmatmul.mubr.f32.gmra.mrb[0].mxu0 %v486
      %v993 = vpop.f32.mrb[0].mxu0
      %v994 = vadd.f32 %v402, %v993
      %v995 = vpop.f32.mrb[0].mxu0
      %996 = vmatprep.mubr.f32.mxu0 0.0
      %997 = vmatmul.mubr.f32.gmra.mrb[0].mxu0 %v489
      %v998 = vpop.f32.mrb[0].mxu0
      %v999 = vadd.f32 %v402, %v998
      %v1000 = vpop.f32.mrb[0].mxu0
      %1001 = vmatprep.mubr.f32.mxu0 0.0
      %1002 = vmatmul.mubr.f32.gmra.mrb[0].mxu0 %v492
      %v1003 = vpop.f32.mrb[0].mxu0
      %v1004 = vadd.f32 %v402, %v1003
      %v1005 = vpop.f32.mrb[0].mxu0
      %1006 = vmatprep.mubr.f32.mxu0 0.0
      %1007 = vmatmul.mubr.f32.gmra.mrb[0].mxu0 %v495
      %v1008 = vpop.f32.mrb[0].mxu0
      %v1009 = vadd.f32 %v402, %v1008
      %v1010 = vpop.f32.mrb[0].mxu0
      %1011 = vmatprep.mubr.f32.mxu0 0.0
      %1012 = vmatmul.mubr.f32.gmra.mrb[0].mxu0 %v498
      %v1013 = vpop.f32.mrb[0].mxu0
      %v1014 = vadd.f32 %v402, %v1013
      %v1015 = vpop.f32.mrb[0].mxu0
      %1016 = vmatprep.mubr.f32.mxu0 0.0
      %1017 = vmatmul.mubr.f32.gmra.mrb[0].mxu0 %v501
      %v1018 = vpop.f32.mrb[0].mxu0
      %v1019 = vadd.f32 %v402, %v1018
      %v1020 = vpop.f32.mrb[0].mxu0
      %1021 = vmatprep.mubr.f32.mxu0 0.0
      %1022 = vmatmul.mubr.f32.gmra.mrb[0].mxu0 %v504
      %v1023 = vpop.f32.mrb[0].mxu0
      %v1024 = vadd.f32 %v402, %v1023
      %v1025 = vpop.f32.mrb[0].mxu0
      %1026 = vmatprep.mubr.f32.mxu0 0.0
      %1027 = vmatmul.mubr.f32.gmra.mrb[0].mxu0 %v507
      %v1028 = vpop.f32.mrb[0].mxu0
      %v1029 = vadd.f32 %v402, %v1028
      %v1030 = vpop.f32.mrb[0].mxu0
      %1031 = vmatprep.mubr.f32.mxu0 0.0
      %1032 = vmatmul.mubr.f32.gmra.mrb[0].mxu0 %v510
      %v1033 = vpop.f32.mrb[0].mxu0
      %v1034 = vadd.f32 %v402, %v1033
      %v1035 = vpop.f32.mrb[0].mxu0
      %1036 = vmatprep.mubr.f32.mxu0 0.0
      %1037 = vmatmul.mubr.f32.gmra.mrb[0].mxu0 %v513
      %v1038 = vpop.f32.mrb[0].mxu0
      %v1039 = vadd.f32 %v402, %v1038
      %v1040 = vpop.f32.mrb[0].mxu0
      %1041 = vmatprep.mubr.f32.mxu0 0.0
      %1042 = vmatmul.mubr.f32.gmra.mrb[0].mxu0 %v516
      %v1043 = vpop.f32.mrb[0].mxu0
      %v1044 = vadd.f32 %v402, %v1043
      %v1045 = vpop.f32.mrb[0].mxu0
      %1046 = vmatprep.mubr.f32.mxu0 0.0
      %1047 = vmatmul.mubr.f32.gmra.mrb[0].mxu0 %v519
      %v1048 = vpop.f32.mrb[0].mxu0
      %v1049 = vadd.f32 %v402, %v1048
      %v1050 = vpop.f32.mrb[0].mxu0
      %1051 = vmatprep.mubr.f32.mxu0 0.0
      %1052 = vmatmul.mubr.f32.gmra.mrb[0].mxu0 %v522
      %v1053 = vpop.f32.mrb[0].mxu0
      %v1054 = vadd.f32 %v402, %v1053
      %v1055 = vpop.f32.mrb[0].mxu0
      %1056 = vmatprep.mubr.f32.mxu0 0.0
      %1057 = vmatmul.mubr.f32.gmra.mrb[0].mxu0 %v525
      %v1058 = vpop.f32.mrb[0].mxu0
      %v1059 = vadd.f32 %v402, %v1058
      %v1060 = vpop.f32.mrb[0].mxu0
      %1061 = vmatprep.mubr.f32.mxu0 0.0
      %1062 = vmatmul.mubr.f32.gmra.mrb[0].mxu0 %v528
      %v1063 = vpop.f32.mrb[0].mxu0
      %v1064 = vadd.f32 %v402, %v1063
      %v1065 = vpop.f32.mrb[0].mxu0
      %1066 = vmatprep.mubr.f32.mxu0 0.0
      %1067 = vmatmul.mubr.f32.gmra.mrb[0].mxu0 %v531
      %v1068 = vpop.f32.mrb[0].mxu0
      %v1069 = vadd.f32 %v402, %v1068
      %v1070 = vpop.f32.mrb[0].mxu0
      %1071 = vmatprep.mubr.f32.mxu0 0.0
      %1072 = vmatmul.mubr.f32.gmra.mrb[0].mxu0 %v534
      %v1073 = vpop.f32.mrb[0].mxu0
      %v1074 = vadd.f32 %v402, %v1073
      %v1075 = vpop.f32.mrb[0].mxu0
      %1076 = vmatprep.mubr.f32.mxu0 0.0
      %1077 = vmatmul.mubr.f32.gmra.mrb[0].mxu0 %v537
      %v1078 = vpop.f32.mrb[0].mxu0
      %v1079 = vadd.f32 %v402, %v1078
      %v1080 = vpop.f32.mrb[0].mxu0
      %1081 = vmatprep.mubr.f32.mxu0 0.0
      %1082 = vmatmul.mubr.f32.gmra.mrb[0].mxu0 %v540
      %v1083 = vpop.f32.mrb[0].mxu0
      %v1084 = vadd.f32 %v402, %v1083
      %v1085 = vpop.f32.mrb[0].mxu0
      %1086 = vmatprep.mubr.f32.mxu0 0.0
      %1087 = vmatmul.mubr.f32.gmra.mrb[0].mxu0 %v543
      %v1088 = vpop.f32.mrb[0].mxu0
      %v1089 = vadd.f32 %v402, %v1088
      %v1090 = vpop.f32.mrb[0].mxu0
      %1091 = vmatprep.mubr.f32.mxu0 0.0
      %1092 = vmatmul.mubr.f32.gmra.mrb[0].mxu0 %v546
      %v1093 = vpop.f32.mrb[0].mxu0
      %v1094 = vadd.f32 %v402, %v1093
      %v1095 = vpop.f32.mrb[0].mxu0
      %1096 = vmatprep.mubr.f32.mxu0 0.0
      %1097 = vmatmul.mubr.f32.gmra.mrb[0].mxu0 %v549
      %v1098 = vpop.f32.mrb[0].mxu0
      %v1099 = vadd.f32 %v402, %v1098
      %v1100 = vpop.f32.mrb[0].mxu0
      %1101 = vmatprep.mubr.f32.mxu0 0.0
      %1102 = vmatmul.mubr.f32.gmra.mrb[0].mxu0 %v552
      %v1103 = vpop.f32.mrb[0].mxu0
      %v1104 = vadd.f32 %v402, %v1103
      %v1105 = vpop.f32.mrb[0].mxu0
      %1106 = vmatprep.mubr.f32.mxu0 0.0
      %1107 = vmatmul.mubr.f32.gmra.mrb[0].mxu0 %v555
      %v1108 = vpop.f32.mrb[0].mxu0
      %v1109 = vadd.f32 %v402, %v1108
      %v1110 = vpop.f32.mrb[0].mxu0
      %1111 = vmatprep.mubr.f32.mxu0 0.0
      %1112 = vmatmul.mubr.f32.gmra.mrb[0].mxu0 %v558
      %v1113 = vpop.f32.mrb[0].mxu0
      %v1114 = vadd.f32 %v402, %v1113
      %v1115 = vpop.f32.mrb[0].mxu0
      %1116 = vmatprep.mubr.f32.mxu0 0.0
      %1117 = vmatmul.mubr.f32.gmra.mrb[0].mxu0 %v561
      %v1118 = vpop.f32.mrb[0].mxu0
      %v1119 = vadd.f32 %v402, %v1118
      %v1120 = vpop.f32.mrb[0].mxu0
      %1121 = vmatprep.mubr.f32.mxu0 0.0
      %1122 = vmatmul.mubr.f32.gmra.mrb[0].mxu0 %v564
      %v1123 = vpop.f32.mrb[0].mxu0
      %v1124 = vadd.f32 %v402, %v1123
      %v1125 = vpop.f32.mrb[0].mxu0
      %1126 = vmatprep.mubr.f32.mxu0 0.0
      %1127 = vmatmul.mubr.f32.gmra.mrb[0].mxu0 %v567
      %v1128 = vpop.f32.mrb[0].mxu0
      %v1129 = vadd.f32 %v402, %v1128
      %v1130 = vpop.f32.mrb[0].mxu0
      %1131 = vmatprep.mubr.f32.mxu0 0.0
      %1132 = vmatmul.mubr.f32.gmra.mrb[0].mxu0 %v570
      %v1133 = vpop.f32.mrb[0].mxu0
      %v1134 = vadd.f32 %v402, %v1133
      %v1135 = vpop.f32.mrb[0].mxu0
      %1136 = vmatprep.mubr.f32.mxu0 0.0
      %1137 = vmatmul.mubr.f32.gmra.mrb[0].mxu0 %v573
      %v1138 = vpop.f32.mrb[0].mxu0
      %v1139 = vadd.f32 %v402, %v1138
      %v1140 = vpop.f32.mrb[0].mxu0
      %1141 = vmatprep.mubr.f32.mxu0 0.0
      %1142 = vmatmul.mubr.f32.gmra.mrb[0].mxu0 %v576
      %v1143 = vpop.f32.mrb[0].mxu0
      %v1144 = vadd.f32 %v402, %v1143
      %v1145 = vpop.f32.mrb[0].mxu0
      %1146 = vmatprep.mubr.f32.mxu0 0.0
      %1147 = vmatmul.mubr.f32.gmra.mrb[0].mxu0 %v579
      %v1148 = vpop.f32.mrb[0].mxu0
      %v1149 = vadd.f32 %v402, %v1148
      %v1150 = vpop.f32.mrb[0].mxu0
      %1151 = vmatprep.mubr.f32.mxu0 0.0
      %1152 = vmatmul.mubr.f32.gmra.mrb[0].mxu0 %v582
      %v1153 = vpop.f32.mrb[0].mxu0
      %v1154 = vadd.f32 %v402, %v1153
      %v1155 = vpop.f32.mrb[0].mxu0
      %1156 = vmatprep.mubr.f32.mxu0 0.0
      %1157 = vmatmul.mubr.f32.gmra.mrb[0].mxu0 %v585
      %v1158 = vpop.f32.mrb[0].mxu0
      %v1159 = vadd.f32 %v402, %v1158
      %v1160 = vpop.f32.mrb[0].mxu0
      %1161 = vmatprep.mubr.f32.mxu0 0.0
      %1162 = vmatmul.mubr.f32.gmra.mrb[0].mxu0 %v588
      %v1163 = vpop.f32.mrb[0].mxu0
      %v1164 = vadd.f32 %v402, %v1163
      %v1165 = vpop.f32.mrb[0].mxu0
      %1166 = vmatprep.mubr.f32.mxu0 0.0
      %1167 = vmatmul.mubr.f32.gmra.mrb[0].mxu0 %v591
      %v1168 = vpop.f32.mrb[0].mxu0
      %v1169 = vadd.f32 %v402, %v1168
      %v1170 = vpop.f32.mrb[0].mxu0
      %1171 = vmatprep.mubr.f32.mxu0 0.0
      %1172 = vmatmul.mubr.f32.gmra.mrb[0].mxu0 %v594
      %v1173 = vpop.f32.mrb[0].mxu0
      %v1174 = vadd.f32 %v402, %v1173
      %v1175 = vpop.f32.mrb[0].mxu0
      %1176 = vmatprep.mubr.f32.mxu0 0.0
      %1177 = vmatmul.mubr.f32.gmra.mrb[0].mxu0 %v597
      %v1178 = vpop.f32.mrb[0].mxu0
      %v1179 = vadd.f32 %v402, %v1178
      %v1180 = vpop.f32.mrb[0].mxu0
      %1181 = vmatprep.mubr.f32.mxu0 0.0
      %1182 = vmatmul.mubr.f32.gmra.mrb[0].mxu0 %v600
      %v1183 = vpop.f32.mrb[0].mxu0
      %v1184 = vadd.f32 %v402, %v1183
      %v1185 = vpop.f32.mrb[0].mxu0
      %1186 = vmatprep.mubr.f32.mxu0 0.0
      %1187 = vmatmul.mubr.f32.gmra.mrb[0].mxu0 %v603
      %v1188 = vpop.f32.mrb[0].mxu0
      %v1189 = vadd.f32 %v402, %v1188
      %v1190 = vpop.f32.mrb[0].mxu0
      %1191 = vmatprep.mubr.f32.mxu0 0.0
      %1192 = vmatmul.mubr.f32.gmra.mrb[0].mxu0 %v606
      %v1193 = vpop.f32.mrb[0].mxu0
      %v1194 = vadd.f32 %v402, %v1193
      %v1195 = vpop.f32.mrb[0].mxu0
      %1196 = vmatprep.mubr.f32.mxu0 0.0
      %1197 = vmatmul.mubr.f32.gmra.mrb[0].mxu0 %v609
      %v1198 = vpop.f32.mrb[0].mxu0
      %v1199 = vadd.f32 %v402, %v1198
      %v1200 = vpop.f32.mrb[0].mxu0
      %1201 = vmatprep.mubr.f32.mxu0 0.0
      %1202 = vmatmul.mubr.f32.gmra.mrb[0].mxu0 %v612
      %v1203 = vpop.f32.mrb[0].mxu0
      %v1204 = vadd.f32 %v402, %v1203
      %v1205 = vpop.f32.mrb[0].mxu0
      %1206 = vmatprep.mubr.f32.mxu0 0.0
      %1207 = vmatmul.mubr.f32.gmra.mrb[0].mxu0 %v615
      %v1208 = vpop.f32.mrb[0].mxu0
      %v1209 = vadd.f32 %v402, %v1208
      %v1210 = vpop.f32.mrb[0].mxu0
      %1211 = vmatprep.mubr.f32.mxu0 0.0
      %1212 = vmatmul.mubr.f32.gmra.mrb[0].mxu0 %v618
      %v1213 = vpop.f32.mrb[0].mxu0
      %v1214 = vadd.f32 %v402, %v1213
      %v1215 = vpop.f32.mrb[0].mxu0
      %1216 = vmatprep.mubr.f32.mxu0 0.0
      %1217 = vmatmul.mubr.f32.gmra.mrb[0].mxu0 %v621
      %v1218 = vpop.f32.mrb[0].mxu0
      %v1219 = vadd.f32 %v402, %v1218
      %v1220 = vpop.f32.mrb[0].mxu0
      %1221 = vmatprep.mubr.f32.mxu0 0.0
      %1222 = vmatmul.mubr.f32.gmra.mrb[0].mxu0 %v624
      %v1223 = vpop.f32.mrb[0].mxu0
      %v1224 = vadd.f32 %v402, %v1223
      %v1225 = vpop.f32.mrb[0].mxu0
      %1226 = vmatprep.mubr.f32.mxu0 0.0
      %1227 = vmatmul.mubr.f32.gmra.mrb[0].mxu0 %v627
      %v1228 = vpop.f32.mrb[0].mxu0
      %v1229 = vadd.f32 %v402, %v1228
      %v1230 = vpop.f32.mrb[0].mxu0
      %1231 = vmatprep.mubr.f32.mxu0 0.0
      %1232 = vmatmul.mubr.f32.gmra.mrb[0].mxu0 %v630
      %v1233 = vpop.f32.mrb[0].mxu0
      %v1234 = vadd.f32 %v402, %v1233
      %v1235 = vpop.f32.mrb[0].mxu0
      %1236 = vmatprep.mubr.f32.mxu0 0.0
      %1237 = vmatmul.mubr.f32.gmra.mrb[0].mxu0 %v633
      %v1238 = vpop.f32.mrb[0].mxu0
      %v1239 = vadd.f32 %v402, %v1238
      %v1240 = vpop.f32.mrb[0].mxu0
      %1241 = vmatprep.mubr.f32.mxu0 0.0
      %1242 = vmatmul.mubr.f32.gmra.mrb[0].mxu0 %v636
      %v1243 = vpop.f32.mrb[0].mxu0
      %v1244 = vadd.f32 %v402, %v1243
      %v1245 = vpop.f32.mrb[0].mxu0
      %1246 = vmatprep.mubr.f32.mxu0 0.0
      %1247 = vmatmul.mubr.f32.gmra.mrb[0].mxu0 %v639
      %v1248 = vpop.f32.mrb[0].mxu0
      %v1249 = vadd.f32 %v402, %v1248
      %v1250 = vpop.f32.mrb[0].mxu0
      %1251 = vmatprep.mubr.f32.mxu0 0.0
      %1252 = vmatmul.mubr.f32.gmra.mrb[0].mxu0 %v642
      %v1253 = vpop.f32.mrb[0].mxu0
      %v1254 = vadd.f32 %v402, %v1253
      %v1255 = vpop.f32.mrb[0].mxu0
      %1256 = vmatprep.mubr.f32.mxu0 0.0
      %1257 = vmatmul.mubr.f32.gmra.mrb[0].mxu0 %v645
      %v1258 = vpop.f32.mrb[0].mxu0
      %v1259 = vadd.f32 %v402, %v1258
      %v1260 = vpop.f32.mrb[0].mxu0
      %1261 = vmatprep.mubr.f32.mxu0 0.0
      %1262 = vmatmul.mubr.f32.gmra.mrb[0].mxu0 %v648
      %v1263 = vpop.f32.mrb[0].mxu0
      %v1264 = vadd.f32 %v402, %v1263
      %v1265 = vpop.f32.mrb[0].mxu0
      %1266 = vmatprep.mubr.f32.mxu0 0.0
      %1267 = vmatmul.mubr.f32.gmra.mrb[0].mxu0 %v651
      %v1268 = vpop.f32.mrb[0].mxu0
      %v1269 = vadd.f32 %v402, %v1268
      %v1270 = vpop.f32.mrb[0].mxu0
      %1271 = vmatprep.mubr.f32.mxu0 0.0
      %1272 = vmatmul.mubr.f32.gmra.mrb[0].mxu0 %v654
      %v1273 = vpop.f32.mrb[0].mxu0
      %v1274 = vadd.f32 %v402, %v1273
      %v1275 = vpop.f32.mrb[0].mxu0
      %1276 = vmatprep.mubr.f32.mxu0 0.0
      %1277 = vmatmul.mubr.f32.gmra.mrb[0].mxu0 %v657
      %v1278 = vpop.f32.mrb[0].mxu0
      %v1279 = vadd.f32 %v402, %v1278
      %v1280 = vpop.f32.mrb[0].mxu0
      %1281 = vmatprep.mubr.f32.mxu0 0.0
      %1282 = vmatmul.mubr.f32.gmra.mrb[0].mxu0 %v660
      %v1283 = vpop.f32.mrb[0].mxu0
      %v1284 = vadd.f32 %v402, %v1283
      %v1285 = vpop.f32.mrb[0].mxu0
      %1286 = vmatprep.mubr.f32.mxu0 0.0
      %1287 = vmatmul.mubr.f32.gmra.mrb[0].mxu0 %v663
      %v1288 = vpop.f32.mrb[0].mxu0
      %v1289 = vadd.f32 %v402, %v1288
      %v1290 = vpop.f32.mrb[0].mxu0
      %1291 = vmatprep.mubr.f32.mxu0 0.0
      %1292 = vmatmul.mubr.f32.gmra.mrb[0].mxu0 %v666
      %v1293 = vpop.f32.mrb[0].mxu0
      %v1294 = vadd.f32 %v402, %v1293
      %v1295 = vpop.f32.mrb[0].mxu0
      %1296 = vmatprep.mubr.f32.mxu0 0.0
      %1297 = vmatmul.mubr.f32.gmra.mrb[0].mxu0 %v669
      %v1298 = vpop.f32.mrb[0].mxu0
      %v1299 = vadd.f32 %v402, %v1298
      %v1300 = vpop.f32.mrb[0].mxu0
      %1301 = vmatprep.mubr.f32.mxu0 0.0
      %1302 = vmatmul.mubr.f32.gmra.mrb[0].mxu0 %v672
      %v1303 = vpop.f32.mrb[0].mxu0
      %v1304 = vadd.f32 %v402, %v1303
      %v1305 = vpop.f32.mrb[0].mxu0
      %1306 = vmatprep.mubr.f32.mxu0 0.0
      %1307 = vmatmul.mubr.f32.gmra.mrb[0].mxu0 %v675
      %v1308 = vpop.f32.mrb[0].mxu0
      %v1309 = vadd.f32 %v402, %v1308
      %v1310 = vpop.f32.mrb[0].mxu0
      %1311 = vmatprep.mubr.f32.mxu0 0.0
      %1312 = vmatmul.mubr.f32.gmra.mrb[0].mxu0 %v678
      %v1313 = vpop.f32.mrb[0].mxu0
      %v1314 = vadd.f32 %v402, %v1313
      %v1315 = vpop.f32.mrb[0].mxu0
      %1316 = vmatprep.mubr.f32.mxu0 0.0
      %1317 = vmatmul.mubr.f32.gmra.mrb[0].mxu0 %v681
      %v1318 = vpop.f32.mrb[0].mxu0
      %v1319 = vadd.f32 %v402, %v1318
      %v1320 = vpop.f32.mrb[0].mxu0
      %1321 = vmatprep.mubr.f32.mxu0 0.0
      %1322 = vmatmul.mubr.f32.gmra.mrb[0].mxu0 %v684
      %v1323 = vpop.f32.mrb[0].mxu0
      %v1324 = vadd.f32 %v402, %v1323
      %v1325 = vpop.f32.mrb[0].mxu0
      %1326 = vmatprep.mubr.f32.mxu0 0.0
      %1327 = vmatmul.mubr.f32.gmra.mrb[0].mxu0 %v687
      %v1328 = vpop.f32.mrb[0].mxu0
      %v1329 = vadd.f32 %v402, %v1328
      %v1330 = vpop.f32.mrb[0].mxu0
      %1331 = vmatprep.mubr.f32.mxu0 0.0
      %1332 = vmatmul.mubr.f32.gmra.mrb[0].mxu0 %v690
      %v1333 = vpop.f32.mrb[0].mxu0
      %v1334 = vadd.f32 %v402, %v1333
      %v1335 = vpop.f32.mrb[0].mxu0
      %1336 = vmatprep.mubr.f32.mxu0 0.0
      %1337 = vmatmul.mubr.f32.gmra.mrb[0].mxu0 %v693
      %v1338 = vpop.f32.mrb[0].mxu0
      %v1339 = vadd.f32 %v402, %v1338
      %v1340 = vpop.f32.mrb[0].mxu0
      %1341 = vmatprep.mubr.f32.mxu0 0.0
      %1342 = vmatmul.mubr.f32.gmra.mrb[0].mxu0 %v696
      %v1343 = vpop.f32.mrb[0].mxu0
      %v1344 = vadd.f32 %v402, %v1343
      %v1345 = vpop.f32.mrb[0].mxu0
      %1346 = vmatprep.mubr.f32.mxu0 0.0
      %1347 = vmatmul.mubr.f32.gmra.mrb[0].mxu0 %v699
      %v1348 = vpop.f32.mrb[0].mxu0
      %v1349 = vadd.f32 %v402, %v1348
      %v1350 = vpop.f32.mrb[0].mxu0
      %1351 = vmatprep.mubr.f32.mxu0 0.0
      %1352 = vmatmul.mubr.f32.gmra.mrb[0].mxu0 %v702
      %v1353 = vpop.f32.mrb[0].mxu0
      %v1354 = vadd.f32 %v402, %v1353
      %v1355 = vpop.f32.mrb[0].mxu0
      %1356 = vmatprep.mubr.f32.mxu0 0.0
      %1357 = vmatmul.mubr.f32.gmra.mrb[0].mxu0 %v705
      %v1358 = vpop.f32.mrb[0].mxu0
      %v1359 = vadd.f32 %v402, %v1358
      %v1360 = vpop.f32.mrb[0].mxu0
      %1361 = vmatprep.mubr.f32.mxu0 0.0
      %1362 = vmatmul.mubr.f32.gmra.mrb[0].mxu0 %v708
      %v1363 = vpop.f32.mrb[0].mxu0
      %v1364 = vadd.f32 %v402, %v1363
      %v1365 = vpop.f32.mrb[0].mxu0
      %1366 = vmatprep.mubr.f32.mxu0 0.0
      %1367 = vmatmul.mubr.f32.gmra.mrb[0].mxu0 %v711
      %v1368 = vpop.f32.mrb[0].mxu0
      %v1369 = vadd.f32 %v402, %v1368
      %v1370 = vpop.f32.mrb[0].mxu0
      %1371 = vmatprep.mubr.f32.mxu0 0.0
      %1372 = vmatmul.mubr.f32.gmra.mrb[0].mxu0 %v714
      %v1373 = vpop.f32.mrb[0].mxu0
      %v1374 = vadd.f32 %v402, %v1373
      %v1375 = vpop.f32.mrb[0].mxu0
      %1376 = vmatprep.mubr.f32.mxu0 0.0
      %1377 = vmatmul.mubr.f32.gmra.mrb[0].mxu0 %v717
      %v1378 = vpop.f32.mrb[0].mxu0
      %v1379 = vadd.f32 %v402, %v1378
      %v1380 = vpop.f32.mrb[0].mxu0
      %1381 = vmatprep.mubr.f32.mxu0 0.0
      %1382 = vmatmul.mubr.f32.gmra.mrb[0].mxu0 %v720
      %v1383 = vpop.f32.mrb[0].mxu0
      %v1384 = vadd.f32 %v402, %v1383
      %v1385 = vpop.f32.mrb[0].mxu0
      %1386 = vmatprep.mubr.f32.mxu0 0.0
      %1387 = vmatmul.mubr.f32.gmra.mrb[0].mxu0 %v723
      %v1388 = vpop.f32.mrb[0].mxu0
      %v1389 = vadd.f32 %v402, %v1388
      %v1390 = vpop.f32.mrb[0].mxu0
      %1391 = vmatprep.mubr.f32.mxu0 0.0
      %1392 = vmatmul.mubr.f32.gmra.mrb[0].mxu0 %v726
      %v1393 = vpop.f32.mrb[0].mxu0
      %v1394 = vadd.f32 %v402, %v1393
      %v1395 = vpop.f32.mrb[0].mxu0
      %1396 = vmatprep.mubr.f32.mxu0 0.0
      %1397 = vmatmul.mubr.f32.gmra.mrb[0].mxu0 %v729
      %v1398 = vpop.f32.mrb[0].mxu0
      %v1399 = vadd.f32 %v402, %v1398
      %v1400 = vpop.f32.mrb[0].mxu0
      %1401 = vmatprep.mubr.f32.mxu0 0.0
      %1402 = vmatmul.mubr.f32.gmra.mrb[0].mxu0 %v732
      %v1403 = vpop.f32.mrb[0].mxu0
      %v1404 = vadd.f32 %v402, %v1403
      %v1405 = vpop.f32.mrb[0].mxu0
      %1406 = vmatprep.mubr.f32.mxu0 0.0
      %1407 = vmatmul.mubr.f32.gmra.mrb[0].mxu0 %v735
      %v1408 = vpop.f32.mrb[0].mxu0
      %v1409 = vadd.f32 %v402, %v1408
      %v1410 = vpop.f32.mrb[0].mxu0
      %1411 = vmatprep.mubr.f32.mxu0 0.0
      %1412 = vmatmul.mubr.f32.gmra.mrb[0].mxu0 %v738
      %v1413 = vpop.f32.mrb[0].mxu0
      %v1414 = vadd.f32 %v402, %v1413
      %v1415 = vpop.f32.mrb[0].mxu0
      %1416 = vmatprep.mubr.f32.mxu0 0.0
      %1417 = vmatmul.mubr.f32.gmra.mrb[0].mxu0 %v741
      %v1418 = vpop.f32.mrb[0].mxu0
      %v1419 = vadd.f32 %v402, %v1418
      %v1420 = vpop.f32.mrb[0].mxu0
      %1421 = vmatprep.mubr.f32.mxu0 0.0
      %1422 = vmatmul.mubr.f32.gmra.mrb[0].mxu0 %v744
      %v1423 = vpop.f32.mrb[0].mxu0
      %v1424 = vadd.f32 %v402, %v1423
      %v1425 = vpop.f32.mrb[0].mxu0
      %1426 = vmatprep.mubr.f32.mxu0 0.0
      %1427 = vmatmul.mubr.f32.gmra.mrb[0].mxu0 %v747
      %v1428 = vpop.f32.mrb[0].mxu0
      %v1429 = vadd.f32 %v402, %v1428
      %v1430 = vpop.f32.mrb[0].mxu0
      %1431 = vmatprep.mubr.f32.mxu0 0.0
      %1432 = vmatmul.mubr.f32.gmra.mrb[0].mxu0 %v750
      %v1433 = vpop.f32.mrb[0].mxu0
      %v1434 = vadd.f32 %v402, %v1433
      %v1435 = vpop.f32.mrb[0].mxu0
      %1436 = vmatprep.mubr.f32.mxu0 0.0
      %1437 = vmatmul.mubr.f32.gmra.mrb[0].mxu0 %v753
      %v1438 = vpop.f32.mrb[0].mxu0
      %v1439 = vadd.f32 %v402, %v1438
      %v1440 = vpop.f32.mrb[0].mxu0
      %1441 = vmatprep.mubr.f32.mxu0 0.0
      %1442 = vmatmul.mubr.f32.gmra.mrb[0].mxu0 %v756
      %v1443 = vpop.f32.mrb[0].mxu0
      %v1444 = vadd.f32 %v402, %v1443
      %v1445 = vpop.f32.mrb[0].mxu0
      %1446 = vmatprep.mubr.f32.mxu0 0.0
      %1447 = vmatmul.mubr.f32.gmra.mrb[0].mxu0 %v759
      %v1448 = vpop.f32.mrb[0].mxu0
      %v1449 = vadd.f32 %v402, %v1448
      %v1450 = vpop.f32.mrb[0].mxu0
      %1451 = vmatprep.mubr.f32.mxu0 0.0
      %1452 = vmatmul.mubr.f32.gmra.mrb[0].mxu0 %v762
      %v1453 = vpop.f32.mrb[0].mxu0
      %v1454 = vadd.f32 %v402, %v1453
      %v1455 = vpop.f32.mrb[0].mxu0
      %1456 = vmatprep.mubr.f32.mxu0 0.0
      %1457 = vmatmul.mubr.f32.gmra.mrb[0].mxu0 %v765
      %v1458 = vpop.f32.mrb[0].mxu0
      %v1459 = vadd.f32 %v402, %v1458
      %v1460 = vpop.f32.mrb[0].mxu0
      %1461 = vmatprep.mubr.f32.mxu0 0.0
      %1462 = vmatmul.mubr.f32.gmra.mrb[0].mxu0 %v768
      %v1463 = vpop.f32.mrb[0].mxu0
      %v1464 = vadd.f32 %v402, %v1463
      %v1465 = vpop.f32.mrb[0].mxu0
      %1466 = vmatprep.mubr.f32.mxu0 0.0
      %1467 = vmatmul.mubr.f32.gmra.mrb[0].mxu0 %v771
      %v1468 = vpop.f32.mrb[0].mxu0
      %v1469 = vadd.f32 %v402, %v1468
      %v1470 = vpop.f32.mrb[0].mxu0
      %1471 = vmatprep.mubr.f32.mxu0 0.0
      %1472 = vmatmul.mubr.f32.gmra.mrb[0].mxu0 %v774
      %v1473 = vpop.f32.mrb[0].mxu0
      %v1474 = vadd.f32 %v402, %v1473
      %v1475 = vpop.f32.mrb[0].mxu0
      %1476 = vmatprep.mubr.f32.mxu0 0.0
      %1477 = vmatmul.mubr.f32.gmra.mrb[0].mxu0 %v777
      %v1478 = vpop.f32.mrb[0].mxu0
      %v1479 = vadd.f32 %v402, %v1478
      %v1480 = vpop.f32.mrb[0].mxu0
      %1481 = vmatprep.mubr.f32.mxu0 0.0
      %1482 = vmatmul.mubr.f32.gmra.mrb[0].mxu0 %v780
      %v1483 = vpop.f32.mrb[0].mxu0
      %v1484 = vadd.f32 %v402, %v1483
      %v1485 = vpop.f32.mrb[0].mxu0
      %1486 = vmatprep.mubr.f32.mxu0 0.0
      %1487 = vmatmul.mubr.f32.gmra.mrb[0].mxu0 %v783
      %v1488 = vpop.f32.mrb[0].mxu0
      %v1489 = vadd.f32 %v402, %v1488
      %v1490 = vpop.f32.mrb[0].mxu0
      %1491 = vmatprep.mubr.f32.mxu0 0.0
      %1492 = vmatmul.mubr.f32.gmra.mrb[0].mxu0 %v786
      %v1493 = vpop.f32.mrb[0].mxu0
      %v1494 = vadd.f32 %v402, %v1493
      %v1495 = vpop.f32.mrb[0].mxu0
      %1496 = vdwg.mxu0
      %v1497 = vmax.f32 %v859, 0.0
      %v1498 = vmax.f32 %v864, 0.0
      %v1499 = vmax.f32 %v869, 0.0
      %v1500 = vmax.f32 %v874, 0.0
      %v1501 = vmax.f32 %v879, 0.0
      %v1502 = vmax.f32 %v884, 0.0
      %v1503 = vmax.f32 %v889, 0.0
      %v1504 = vmax.f32 %v894, 0.0
      %v1505 = vmax.f32 %v899, 0.0
      %v1506 = vmax.f32 %v904, 0.0
      %v1507 = vmax.f32 %v909, 0.0
      %v1508 = vmax.f32 %v914, 0.0
      %v1509 = vmax.f32 %v919, 0.0
      %v1510 = vmax.f32 %v924, 0.0
      %v1511 = vmax.f32 %v929, 0.0
      %v1512 = vmax.f32 %v934, 0.0
      %v1513 = vmax.f32 %v939, 0.0
      %v1514 = vmax.f32 %v944, 0.0
      %v1515 = vmax.f32 %v949, 0.0
      %v1516 = vmax.f32 %v954, 0.0
      %v1517 = vmax.f32 %v959, 0.0
      %v1518 = vmax.f32 %v964, 0.0
      %v1519 = vmax.f32 %v969, 0.0
      %v1520 = vmax.f32 %v974, 0.0
      %v1521 = vmax.f32 %v979, 0.0
      %v1522 = vmax.f32 %v984, 0.0
      %v1523 = vmax.f32 %v989, 0.0
      %v1524 = vmax.f32 %v994, 0.0
      %v1525 = vmax.f32 %v999, 0.0
      %v1526 = vmax.f32 %v1004, 0.0
      %v1527 = vmax.f32 %v1009, 0.0
      %v1528 = vmax.f32 %v1014, 0.0
      %v1529 = vmax.f32 %v1019, 0.0
      %v1530 = vmax.f32 %v1024, 0.0
      %v1531 = vmax.f32 %v1029, 0.0
      %v1532 = vmax.f32 %v1034, 0.0
      %v1533 = vmax.f32 %v1039, 0.0
      %v1534 = vmax.f32 %v1044, 0.0
      %v1535 = vmax.f32 %v1049, 0.0
      %v1536 = vmax.f32 %v1054, 0.0
      %v1537 = vmax.f32 %v1059, 0.0
      %v1538 = vmax.f32 %v1064, 0.0
      %v1539 = vmax.f32 %v1069, 0.0
      %v1540 = vmax.f32 %v1074, 0.0
      %v1541 = vmax.f32 %v1079, 0.0
      %v1542 = vmax.f32 %v1084, 0.0
      %v1543 = vmax.f32 %v1089, 0.0
      %v1544 = vmax.f32 %v1094, 0.0
      %v1545 = vmax.f32 %v1099, 0.0
      %v1546 = vmax.f32 %v1104, 0.0
      %v1547 = vmax.f32 %v1109, 0.0
      %v1548 = vmax.f32 %v1114, 0.0
      %v1549 = vmax.f32 %v1119, 0.0
      %v1550 = vmax.f32 %v1124, 0.0
      %v1551 = vmax.f32 %v1129, 0.0
      %v1552 = vmax.f32 %v1134, 0.0
      %v1553 = vmax.f32 %v1139, 0.0
      %v1554 = vmax.f32 %v1144, 0.0
      %v1555 = vmax.f32 %v1149, 0.0
      %v1556 = vmax.f32 %v1154, 0.0
      %v1557 = vmax.f32 %v1159, 0.0
      %v1558 = vmax.f32 %v1164, 0.0
      %v1559 = vmax.f32 %v1169, 0.0
      %v1560 = vmax.f32 %v1174, 0.0
      %v1561 = vmax.f32 %v1179, 0.0
      %v1562 = vmax.f32 %v1184, 0.0
      %v1563 = vmax.f32 %v1189, 0.0
      %v1564 = vmax.f32 %v1194, 0.0
      %v1565 = vmax.f32 %v1199, 0.0
      %v1566 = vmax.f32 %v1204, 0.0
      %v1567 = vmax.f32 %v1209, 0.0
      %v1568 = vmax.f32 %v1214, 0.0
      %v1569 = vmax.f32 %v1219, 0.0
      %v1570 = vmax.f32 %v1224, 0.0
      %v1571 = vmax.f32 %v1229, 0.0
      %v1572 = vmax.f32 %v1234, 0.0
      %v1573 = vmax.f32 %v1239, 0.0
      %v1574 = vmax.f32 %v1244, 0.0
      %v1575 = vmax.f32 %v1249, 0.0
      %v1576 = vmax.f32 %v1254, 0.0
      %v1577 = vmax.f32 %v1259, 0.0
      %v1578 = vmax.f32 %v1264, 0.0
      %v1579 = vmax.f32 %v1269, 0.0
      %v1580 = vmax.f32 %v1274, 0.0
      %v1581 = vmax.f32 %v1279, 0.0
      %v1582 = vmax.f32 %v1284, 0.0
      %v1583 = vmax.f32 %v1289, 0.0
      %v1584 = vmax.f32 %v1294, 0.0
      %v1585 = vmax.f32 %v1299, 0.0
      %v1586 = vmax.f32 %v1304, 0.0
      %v1587 = vmax.f32 %v1309, 0.0
      %v1588 = vmax.f32 %v1314, 0.0
      %v1589 = vmax.f32 %v1319, 0.0
      %v1590 = vmax.f32 %v1324, 0.0
      %v1591 = vmax.f32 %v1329, 0.0
      %v1592 = vmax.f32 %v1334, 0.0
      %v1593 = vmax.f32 %v1339, 0.0
      %v1594 = vmax.f32 %v1344, 0.0
      %v1595 = vmax.f32 %v1349, 0.0
      %v1596 = vmax.f32 %v1354, 0.0
      %v1597 = vmax.f32 %v1359, 0.0
      %v1598 = vmax.f32 %v1364, 0.0
      %v1599 = vmax.f32 %v1369, 0.0
      %v1600 = vmax.f32 %v1374, 0.0
      %v1601 = vmax.f32 %v1379, 0.0
      %v1602 = vmax.f32 %v1384, 0.0
      %v1603 = vmax.f32 %v1389, 0.0
      %v1604 = vmax.f32 %v1394, 0.0
      %v1605 = vmax.f32 %v1399, 0.0
      %v1606 = vmax.f32 %v1404, 0.0
      %v1607 = vmax.f32 %v1409, 0.0
      %v1608 = vmax.f32 %v1414, 0.0
      %v1609 = vmax.f32 %v1419, 0.0
      %v1610 = vmax.f32 %v1424, 0.0
      %v1611 = vmax.f32 %v1429, 0.0
      %v1612 = vmax.f32 %v1434, 0.0
      %v1613 = vmax.f32 %v1439, 0.0
      %v1614 = vmax.f32 %v1444, 0.0
      %v1615 = vmax.f32 %v1449, 0.0
      %v1616 = vmax.f32 %v1454, 0.0
      %v1617 = vmax.f32 %v1459, 0.0
      %v1618 = vmax.f32 %v1464, 0.0
      %v1619 = vmax.f32 %v1469, 0.0
      %v1620 = vmax.f32 %v1474, 0.0
      %v1621 = vmax.f32 %v1479, 0.0
      %v1622 = vmax.f32 %v1484, 0.0
      %v1623 = vmax.f32 %v1489, 0.0
      %v1624 = vmax.f32 %v1494, 0.0
      %v1625 = vlaneseq
      %v1626 = vand.u32 %v1625, 127
      %v1627 = vadd.s32 %v1626, 128
      %v1628 = vadd.s32 %v1626, 256
      %v1629 = vadd.s32 %v1626, 384
      %v1630 = vadd.s32 %v1626, 512
      %v1631 = vadd.s32 %v1626, 640
      %v1632 = vadd.s32 %v1626, 768
      %v1633 = vadd.s32 %v1626, 896
      %v1634 = vcvt.s32.f32 %v1626
      %v1635 = vcvt.s32.f32 %v1627
      %v1636 = vcvt.s32.f32 %v1628
      %v1637 = vcvt.s32.f32 %v1629
      %v1638 = vcvt.s32.f32 %v1630
      %v1639 = vcvt.s32.f32 %v1631
      %v1640 = vcvt.s32.f32 %v1632
      %v1641 = vcvt.s32.f32 %v1633
      %v1642 = vmul.f32 %v1634, 0.03125
      %v1643 = vmul.f32 %v1635, 0.03125
      %v1644 = vmul.f32 %v1636, 0.03125
      %v1645 = vmul.f32 %v1637, 0.03125
      %v1646 = vmul.f32 %v1638, 0.03125
      %v1647 = vmul.f32 %v1639, 0.03125
      %v1648 = vmul.f32 %v1640, 0.03125
      %v1649 = vmul.f32 %v1641, 0.03125
      %v1650 = vfloor.f32 %v1642
      %v1651 = vfloor.f32 %v1643
      %v1652 = vfloor.f32 %v1644
      %v1653 = vfloor.f32 %v1645
      %v1654 = vfloor.f32 %v1646
      %v1655 = vfloor.f32 %v1647
      %v1656 = vfloor.f32 %v1648
      %v1657 = vfloor.f32 %v1649
      %v1658 = vmul.f32 %v1650, 32.0
      %v1659 = vmul.f32 %v1651, 32.0
      %v1660 = vmul.f32 %v1652, 32.0
      %v1661 = vmul.f32 %v1653, 32.0
      %v1662 = vmul.f32 %v1654, 32.0
      %v1663 = vmul.f32 %v1655, 32.0
      %v1664 = vmul.f32 %v1656, 32.0
      %v1665 = vmul.f32 %v1657, 32.0
      %v1666 = vsub.f32 %v1634, %v1658
      %v1667 = vsub.f32 %v1635, %v1659
      %v1668 = vsub.f32 %v1636, %v1660
      %v1669 = vsub.f32 %v1637, %v1661
      %v1670 = vsub.f32 %v1638, %v1662
      %v1671 = vsub.f32 %v1639, %v1663
      %v1672 = vsub.f32 %v1640, %v1664
      %v1673 = vsub.f32 %v1641, %v1665
      %v1674 = vmul.f32 %v265, 0.484375
      %v1675 = vmul.f32 %v266, 0.484375
      %v1676 = vmul.f32 %v267, 0.484375
      %v1677 = vfloor.f32 %v1674
      %v1678 = vfloor.f32 %v1675
      %v1679 = vfloor.f32 %v1676
      %v1680 = vsub.f32 %v1674, %v1677
      %v1681 = vsub.f32 %v1675, %v1678
      %v1682 = vsub.f32 %v1676, %v1679
      %vm1683 = vcmp.ge.f32.partialorder %v1677, 0.0
      %vm1684 = vcmp.ge.f32.partialorder %v1678, 0.0
      %vm1685 = vcmp.ge.f32.partialorder %v1679, 0.0
      %vm1686 = vcmp.le.f32.partialorder %v1677, 31.0
      %vm1687 = vcmp.le.f32.partialorder %v1678, 31.0
      %vm1688 = vcmp.le.f32.partialorder %v1679, 31.0
      %vm1689 = vmand %vm1683, %vm1686
      %vm1690 = vmand %vm1684, %vm1687
      %vm1691 = vmand %vm1685, %vm1688
      %v1692 = vsub.f32 1.0, %v1680
      %v1693 = vsub.f32 1.0, %v1681
      %v1694 = vsub.f32 1.0, %v1682
      %v1695 = vsel %vm1689, %v1692, 0.0
      %v1696 = vsel %vm1690, %v1693, 0.0
      %v1697 = vsel %vm1691, %v1694, 0.0
      %v1698 = vadd.f32 %v1677, 1.0
      %v1699 = vadd.f32 %v1678, 1.0
      %v1700 = vadd.f32 %v1679, 1.0
      %vm1701 = vcmp.ge.f32.partialorder %v1698, 0.0
      %vm1702 = vcmp.ge.f32.partialorder %v1699, 0.0
      %vm1703 = vcmp.ge.f32.partialorder %v1700, 0.0
      %vm1704 = vcmp.le.f32.partialorder %v1698, 31.0
      %vm1705 = vcmp.le.f32.partialorder %v1699, 31.0
      %vm1706 = vcmp.le.f32.partialorder %v1700, 31.0
      %vm1707 = vmand %vm1701, %vm1704
      %vm1708 = vmand %vm1702, %vm1705
      %vm1709 = vmand %vm1703, %vm1706
      %v1710 = vsel %vm1707, %v1680, 0.0
      %v1711 = vsel %vm1708, %v1681, 0.0
      %v1712 = vsel %vm1709, %v1682, 0.0
      %1714 = vset.pattern.permute.xlu0 0
      %1715 = vperm.xlu0 %1714, %v1677
      %v1716 = vpop.permute.xlu0 %1715
      %1719 = vset.pattern.permute.xlu0 0
      %1720 = vperm.xlu0 %1719, %v1678
      %v1721 = vpop.permute.xlu0 %1720
      %1724 = vset.pattern.permute.xlu0 0
      %1725 = vperm.xlu0 %1724, %v1679
      %v1726 = vpop.permute.xlu0 %1725
      %vm1728 = vcmp.eq.f32.partialorder %v1666, %v1716
      %vm1729 = vcmp.eq.f32.partialorder %v1667, %v1716
      %vm1730 = vcmp.eq.f32.partialorder %v1668, %v1716
      %vm1731 = vcmp.eq.f32.partialorder %v1669, %v1716
      %vm1732 = vcmp.eq.f32.partialorder %v1670, %v1716
      %vm1733 = vcmp.eq.f32.partialorder %v1671, %v1716
      %vm1734 = vcmp.eq.f32.partialorder %v1672, %v1716
      %vm1735 = vcmp.eq.f32.partialorder %v1673, %v1716
      %vm1736 = vcmp.eq.f32.partialorder %v1666, %v1721
      %vm1737 = vcmp.eq.f32.partialorder %v1667, %v1721
      %vm1738 = vcmp.eq.f32.partialorder %v1668, %v1721
      %vm1739 = vcmp.eq.f32.partialorder %v1669, %v1721
      %vm1740 = vcmp.eq.f32.partialorder %v1670, %v1721
      %vm1741 = vcmp.eq.f32.partialorder %v1671, %v1721
      %vm1742 = vcmp.eq.f32.partialorder %v1672, %v1721
      %vm1743 = vcmp.eq.f32.partialorder %v1673, %v1721
      %vm1744 = vcmp.eq.f32.partialorder %v1666, %v1726
      %vm1745 = vcmp.eq.f32.partialorder %v1667, %v1726
      %vm1746 = vcmp.eq.f32.partialorder %v1668, %v1726
      %vm1747 = vcmp.eq.f32.partialorder %v1669, %v1726
      %vm1748 = vcmp.eq.f32.partialorder %v1670, %v1726
      %vm1749 = vcmp.eq.f32.partialorder %v1671, %v1726
      %vm1750 = vcmp.eq.f32.partialorder %v1672, %v1726
      %vm1751 = vcmp.eq.f32.partialorder %v1673, %v1726
      %1753 = vset.pattern.permute.xlu0 0
      %1754 = vperm.xlu0 %1753, %v1695
      %v1755 = vpop.permute.xlu0 %1754
      %1758 = vset.pattern.permute.xlu0 0
      %1759 = vperm.xlu0 %1758, %v1696
      %v1760 = vpop.permute.xlu0 %1759
      %1763 = vset.pattern.permute.xlu0 0
      %1764 = vperm.xlu0 %1763, %v1697
      %v1765 = vpop.permute.xlu0 %1764
      %v1767 = vsel %vm1728, %v1755, 0.0
      %v1768 = vsel %vm1729, %v1755, 0.0
      %v1769 = vsel %vm1730, %v1755, 0.0
      %v1770 = vsel %vm1731, %v1755, 0.0
      %v1771 = vsel %vm1732, %v1755, 0.0
      %v1772 = vsel %vm1733, %v1755, 0.0
      %v1773 = vsel %vm1734, %v1755, 0.0
      %v1774 = vsel %vm1735, %v1755, 0.0
      %v1775 = vsel %vm1736, %v1760, 0.0
      %v1776 = vsel %vm1737, %v1760, 0.0
      %v1777 = vsel %vm1738, %v1760, 0.0
      %v1778 = vsel %vm1739, %v1760, 0.0
      %v1779 = vsel %vm1740, %v1760, 0.0
      %v1780 = vsel %vm1741, %v1760, 0.0
      %v1781 = vsel %vm1742, %v1760, 0.0
      %v1782 = vsel %vm1743, %v1760, 0.0
      %v1783 = vsel %vm1744, %v1765, 0.0
      %v1784 = vsel %vm1745, %v1765, 0.0
      %v1785 = vsel %vm1746, %v1765, 0.0
      %v1786 = vsel %vm1747, %v1765, 0.0
      %v1787 = vsel %vm1748, %v1765, 0.0
      %v1788 = vsel %vm1749, %v1765, 0.0
      %v1789 = vsel %vm1750, %v1765, 0.0
      %v1790 = vsel %vm1751, %v1765, 0.0
      %1792 = vset.pattern.permute.xlu0 0
      %1793 = vperm.xlu0 %1792, %v1698
      %v1794 = vpop.permute.xlu0 %1793
      %1797 = vset.pattern.permute.xlu0 0
      %1798 = vperm.xlu0 %1797, %v1699
      %v1799 = vpop.permute.xlu0 %1798
      %1802 = vset.pattern.permute.xlu0 0
      %1803 = vperm.xlu0 %1802, %v1700
      %v1804 = vpop.permute.xlu0 %1803
      %vm1806 = vcmp.eq.f32.partialorder %v1666, %v1794
      %vm1807 = vcmp.eq.f32.partialorder %v1667, %v1794
      %vm1808 = vcmp.eq.f32.partialorder %v1668, %v1794
      %vm1809 = vcmp.eq.f32.partialorder %v1669, %v1794
      %vm1810 = vcmp.eq.f32.partialorder %v1670, %v1794
      %vm1811 = vcmp.eq.f32.partialorder %v1671, %v1794
      %vm1812 = vcmp.eq.f32.partialorder %v1672, %v1794
      %vm1813 = vcmp.eq.f32.partialorder %v1673, %v1794
      %vm1814 = vcmp.eq.f32.partialorder %v1666, %v1799
      %vm1815 = vcmp.eq.f32.partialorder %v1667, %v1799
      %vm1816 = vcmp.eq.f32.partialorder %v1668, %v1799
      %vm1817 = vcmp.eq.f32.partialorder %v1669, %v1799
      %vm1818 = vcmp.eq.f32.partialorder %v1670, %v1799
      %vm1819 = vcmp.eq.f32.partialorder %v1671, %v1799
      %vm1820 = vcmp.eq.f32.partialorder %v1672, %v1799
      %vm1821 = vcmp.eq.f32.partialorder %v1673, %v1799
      %vm1822 = vcmp.eq.f32.partialorder %v1666, %v1804
      %vm1823 = vcmp.eq.f32.partialorder %v1667, %v1804
      %vm1824 = vcmp.eq.f32.partialorder %v1668, %v1804
      %vm1825 = vcmp.eq.f32.partialorder %v1669, %v1804
      %vm1826 = vcmp.eq.f32.partialorder %v1670, %v1804
      %vm1827 = vcmp.eq.f32.partialorder %v1671, %v1804
      %vm1828 = vcmp.eq.f32.partialorder %v1672, %v1804
      %vm1829 = vcmp.eq.f32.partialorder %v1673, %v1804
      %1831 = vset.pattern.permute.xlu0 0
      %1832 = vperm.xlu0 %1831, %v1710
      %v1833 = vpop.permute.xlu0 %1832
      %1836 = vset.pattern.permute.xlu0 0
      %1837 = vperm.xlu0 %1836, %v1711
      %v1838 = vpop.permute.xlu0 %1837
      %1841 = vset.pattern.permute.xlu0 0
      %1842 = vperm.xlu0 %1841, %v1712
      %v1843 = vpop.permute.xlu0 %1842
      %v1845 = vsel %vm1806, %v1833, 0.0
      %v1846 = vsel %vm1807, %v1833, 0.0
      %v1847 = vsel %vm1808, %v1833, 0.0
      %v1848 = vsel %vm1809, %v1833, 0.0
      %v1849 = vsel %vm1810, %v1833, 0.0
      %v1850 = vsel %vm1811, %v1833, 0.0
      %v1851 = vsel %vm1812, %v1833, 0.0
      %v1852 = vsel %vm1813, %v1833, 0.0
      %v1853 = vsel %vm1814, %v1838, 0.0
      %v1854 = vsel %vm1815, %v1838, 0.0
      %v1855 = vsel %vm1816, %v1838, 0.0
      %v1856 = vsel %vm1817, %v1838, 0.0
      %v1857 = vsel %vm1818, %v1838, 0.0
      %v1858 = vsel %vm1819, %v1838, 0.0
      %v1859 = vsel %vm1820, %v1838, 0.0
      %v1860 = vsel %vm1821, %v1838, 0.0
      %v1861 = vsel %vm1822, %v1843, 0.0
      %v1862 = vsel %vm1823, %v1843, 0.0
      %v1863 = vsel %vm1824, %v1843, 0.0
      %v1864 = vsel %vm1825, %v1843, 0.0
      %v1865 = vsel %vm1826, %v1843, 0.0
      %v1866 = vsel %vm1827, %v1843, 0.0
      %v1867 = vsel %vm1828, %v1843, 0.0
      %v1868 = vsel %vm1829, %v1843, 0.0
      %v1869 = vadd.f32 %v1767, %v1845
      %v1870 = vadd.f32 %v1768, %v1846
      %v1871 = vadd.f32 %v1769, %v1847
      %v1872 = vadd.f32 %v1770, %v1848
      %v1873 = vadd.f32 %v1771, %v1849
      %v1874 = vadd.f32 %v1772, %v1850
      %v1875 = vadd.f32 %v1773, %v1851
      %v1876 = vadd.f32 %v1774, %v1852
      %v1877 = vadd.f32 %v1775, %v1853
      %v1878 = vadd.f32 %v1776, %v1854
      %v1879 = vadd.f32 %v1777, %v1855
      %v1880 = vadd.f32 %v1778, %v1856
      %v1881 = vadd.f32 %v1779, %v1857
      %v1882 = vadd.f32 %v1780, %v1858
      %v1883 = vadd.f32 %v1781, %v1859
      %v1884 = vadd.f32 %v1782, %v1860
      %v1885 = vadd.f32 %v1783, %v1861
      %v1886 = vadd.f32 %v1784, %v1862
      %v1887 = vadd.f32 %v1785, %v1863
      %v1888 = vadd.f32 %v1786, %v1864
      %v1889 = vadd.f32 %v1787, %v1865
      %v1890 = vadd.f32 %v1788, %v1866
      %v1891 = vadd.f32 %v1789, %v1867
      %v1892 = vadd.f32 %v1790, %v1868
      %1893 = vset.pattern.permute.xlu0 1
      %1894 = vperm.xlu0 %1893, %v1677
      %v1895 = vpop.permute.xlu0 %1894
      %1897 = vset.pattern.permute.xlu0 1
      %1898 = vperm.xlu0 %1897, %v1678
      %v1899 = vpop.permute.xlu0 %1898
      %1901 = vset.pattern.permute.xlu0 1
      %1902 = vperm.xlu0 %1901, %v1679
      %v1903 = vpop.permute.xlu0 %1902
      %vm1905 = vcmp.eq.f32.partialorder %v1650, %v1895
      %vm1906 = vcmp.eq.f32.partialorder %v1651, %v1895
      %vm1907 = vcmp.eq.f32.partialorder %v1652, %v1895
      %vm1908 = vcmp.eq.f32.partialorder %v1653, %v1895
      %vm1909 = vcmp.eq.f32.partialorder %v1654, %v1895
      %vm1910 = vcmp.eq.f32.partialorder %v1655, %v1895
      %vm1911 = vcmp.eq.f32.partialorder %v1656, %v1895
      %vm1912 = vcmp.eq.f32.partialorder %v1657, %v1895
      %vm1913 = vcmp.eq.f32.partialorder %v1650, %v1899
      %vm1914 = vcmp.eq.f32.partialorder %v1651, %v1899
      %vm1915 = vcmp.eq.f32.partialorder %v1652, %v1899
      %vm1916 = vcmp.eq.f32.partialorder %v1653, %v1899
      %vm1917 = vcmp.eq.f32.partialorder %v1654, %v1899
      %vm1918 = vcmp.eq.f32.partialorder %v1655, %v1899
      %vm1919 = vcmp.eq.f32.partialorder %v1656, %v1899
      %vm1920 = vcmp.eq.f32.partialorder %v1657, %v1899
      %vm1921 = vcmp.eq.f32.partialorder %v1650, %v1903
      %vm1922 = vcmp.eq.f32.partialorder %v1651, %v1903
      %vm1923 = vcmp.eq.f32.partialorder %v1652, %v1903
      %vm1924 = vcmp.eq.f32.partialorder %v1653, %v1903
      %vm1925 = vcmp.eq.f32.partialorder %v1654, %v1903
      %vm1926 = vcmp.eq.f32.partialorder %v1655, %v1903
      %vm1927 = vcmp.eq.f32.partialorder %v1656, %v1903
      %vm1928 = vcmp.eq.f32.partialorder %v1657, %v1903
      %1929 = vset.pattern.permute.xlu0 1
      %1930 = vperm.xlu0 %1929, %v1695
      %v1931 = vpop.permute.xlu0 %1930
      %1933 = vset.pattern.permute.xlu0 1
      %1934 = vperm.xlu0 %1933, %v1696
      %v1935 = vpop.permute.xlu0 %1934
      %1937 = vset.pattern.permute.xlu0 1
      %1938 = vperm.xlu0 %1937, %v1697
      %v1939 = vpop.permute.xlu0 %1938
      %v1941 = vsel %vm1905, %v1931, 0.0
      %v1942 = vsel %vm1906, %v1931, 0.0
      %v1943 = vsel %vm1907, %v1931, 0.0
      %v1944 = vsel %vm1908, %v1931, 0.0
      %v1945 = vsel %vm1909, %v1931, 0.0
      %v1946 = vsel %vm1910, %v1931, 0.0
      %v1947 = vsel %vm1911, %v1931, 0.0
      %v1948 = vsel %vm1912, %v1931, 0.0
      %v1949 = vsel %vm1913, %v1935, 0.0
      %v1950 = vsel %vm1914, %v1935, 0.0
      %v1951 = vsel %vm1915, %v1935, 0.0
      %v1952 = vsel %vm1916, %v1935, 0.0
      %v1953 = vsel %vm1917, %v1935, 0.0
      %v1954 = vsel %vm1918, %v1935, 0.0
      %v1955 = vsel %vm1919, %v1935, 0.0
      %v1956 = vsel %vm1920, %v1935, 0.0
      %v1957 = vsel %vm1921, %v1939, 0.0
      %v1958 = vsel %vm1922, %v1939, 0.0
      %v1959 = vsel %vm1923, %v1939, 0.0
      %v1960 = vsel %vm1924, %v1939, 0.0
      %v1961 = vsel %vm1925, %v1939, 0.0
      %v1962 = vsel %vm1926, %v1939, 0.0
      %v1963 = vsel %vm1927, %v1939, 0.0
      %v1964 = vsel %vm1928, %v1939, 0.0
      %1965 = vset.pattern.permute.xlu0 1
      %1966 = vperm.xlu0 %1965, %v1698
      %v1967 = vpop.permute.xlu0 %1966
      %1969 = vset.pattern.permute.xlu0 1
      %1970 = vperm.xlu0 %1969, %v1699
      %v1971 = vpop.permute.xlu0 %1970
      %1973 = vset.pattern.permute.xlu0 1
      %1974 = vperm.xlu0 %1973, %v1700
      %v1975 = vpop.permute.xlu0 %1974
      %vm1977 = vcmp.eq.f32.partialorder %v1650, %v1967
      %vm1978 = vcmp.eq.f32.partialorder %v1651, %v1967
      %vm1979 = vcmp.eq.f32.partialorder %v1652, %v1967
      %vm1980 = vcmp.eq.f32.partialorder %v1653, %v1967
      %vm1981 = vcmp.eq.f32.partialorder %v1654, %v1967
      %vm1982 = vcmp.eq.f32.partialorder %v1655, %v1967
      %vm1983 = vcmp.eq.f32.partialorder %v1656, %v1967
      %vm1984 = vcmp.eq.f32.partialorder %v1657, %v1967
      %vm1985 = vcmp.eq.f32.partialorder %v1650, %v1971
      %vm1986 = vcmp.eq.f32.partialorder %v1651, %v1971
      %vm1987 = vcmp.eq.f32.partialorder %v1652, %v1971
      %vm1988 = vcmp.eq.f32.partialorder %v1653, %v1971
      %vm1989 = vcmp.eq.f32.partialorder %v1654, %v1971
      %vm1990 = vcmp.eq.f32.partialorder %v1655, %v1971
      %vm1991 = vcmp.eq.f32.partialorder %v1656, %v1971
      %vm1992 = vcmp.eq.f32.partialorder %v1657, %v1971
      %vm1993 = vcmp.eq.f32.partialorder %v1650, %v1975
      %vm1994 = vcmp.eq.f32.partialorder %v1651, %v1975
      %vm1995 = vcmp.eq.f32.partialorder %v1652, %v1975
      %vm1996 = vcmp.eq.f32.partialorder %v1653, %v1975
      %vm1997 = vcmp.eq.f32.partialorder %v1654, %v1975
      %vm1998 = vcmp.eq.f32.partialorder %v1655, %v1975
      %vm1999 = vcmp.eq.f32.partialorder %v1656, %v1975
      %vm2000 = vcmp.eq.f32.partialorder %v1657, %v1975
      %2001 = vset.pattern.permute.xlu0 1
      %2002 = vperm.xlu0 %2001, %v1710
      %v2003 = vpop.permute.xlu0 %2002
      %2005 = vset.pattern.permute.xlu0 1
      %2006 = vperm.xlu0 %2005, %v1711
      %v2007 = vpop.permute.xlu0 %2006
      %2009 = vset.pattern.permute.xlu0 1
      %2010 = vperm.xlu0 %2009, %v1712
      %v2011 = vpop.permute.xlu0 %2010
      %v2013 = vsel %vm1977, %v2003, 0.0
      %v2014 = vsel %vm1978, %v2003, 0.0
      %v2015 = vsel %vm1979, %v2003, 0.0
      %v2016 = vsel %vm1980, %v2003, 0.0
      %v2017 = vsel %vm1981, %v2003, 0.0
      %v2018 = vsel %vm1982, %v2003, 0.0
      %v2019 = vsel %vm1983, %v2003, 0.0
      %v2020 = vsel %vm1984, %v2003, 0.0
      %v2021 = vsel %vm1985, %v2007, 0.0
      %v2022 = vsel %vm1986, %v2007, 0.0
      %v2023 = vsel %vm1987, %v2007, 0.0
      %v2024 = vsel %vm1988, %v2007, 0.0
      %v2025 = vsel %vm1989, %v2007, 0.0
      %v2026 = vsel %vm1990, %v2007, 0.0
      %v2027 = vsel %vm1991, %v2007, 0.0
      %v2028 = vsel %vm1992, %v2007, 0.0
      %v2029 = vsel %vm1993, %v2011, 0.0
      %v2030 = vsel %vm1994, %v2011, 0.0
      %v2031 = vsel %vm1995, %v2011, 0.0
      %v2032 = vsel %vm1996, %v2011, 0.0
      %v2033 = vsel %vm1997, %v2011, 0.0
      %v2034 = vsel %vm1998, %v2011, 0.0
      %v2035 = vsel %vm1999, %v2011, 0.0
      %v2036 = vsel %vm2000, %v2011, 0.0
      %v2037 = vadd.f32 %v1941, %v2013
      %v2038 = vadd.f32 %v1942, %v2014
      %v2039 = vadd.f32 %v1943, %v2015
      %v2040 = vadd.f32 %v1944, %v2016
      %v2041 = vadd.f32 %v1945, %v2017
      %v2042 = vadd.f32 %v1946, %v2018
      %v2043 = vadd.f32 %v1947, %v2019
      %v2044 = vadd.f32 %v1948, %v2020
      %v2045 = vadd.f32 %v1949, %v2021
      %v2046 = vadd.f32 %v1950, %v2022
      %v2047 = vadd.f32 %v1951, %v2023
      %v2048 = vadd.f32 %v1952, %v2024
      %v2049 = vadd.f32 %v1953, %v2025
      %v2050 = vadd.f32 %v1954, %v2026
      %v2051 = vadd.f32 %v1955, %v2027
      %v2052 = vadd.f32 %v1956, %v2028
      %v2053 = vadd.f32 %v1957, %v2029
      %v2054 = vadd.f32 %v1958, %v2030
      %v2055 = vadd.f32 %v1959, %v2031
      %v2056 = vadd.f32 %v1960, %v2032
      %v2057 = vadd.f32 %v1961, %v2033
      %v2058 = vadd.f32 %v1962, %v2034
      %v2059 = vadd.f32 %v1963, %v2035
      %v2060 = vadd.f32 %v1964, %v2036
      %v2061 = vmul.f32 %v2037, %v1869
      %v2062 = vmul.f32 %v2038, %v1870
      %v2063 = vmul.f32 %v2039, %v1871
      %v2064 = vmul.f32 %v2040, %v1872
      %v2065 = vmul.f32 %v2041, %v1873
      %v2066 = vmul.f32 %v2042, %v1874
      %v2067 = vmul.f32 %v2043, %v1875
      %v2068 = vmul.f32 %v2044, %v1876
      %v2069 = vmul.f32 %v2045, %v1877
      %v2070 = vmul.f32 %v2046, %v1878
      %v2071 = vmul.f32 %v2047, %v1879
      %v2072 = vmul.f32 %v2048, %v1880
      %v2073 = vmul.f32 %v2049, %v1881
      %v2074 = vmul.f32 %v2050, %v1882
      %v2075 = vmul.f32 %v2051, %v1883
      %v2076 = vmul.f32 %v2052, %v1884
      %v2077 = vmul.f32 %v2053, %v1885
      %v2078 = vmul.f32 %v2054, %v1886
      %v2079 = vmul.f32 %v2055, %v1887
      %v2080 = vmul.f32 %v2056, %v1888
      %v2081 = vmul.f32 %v2057, %v1889
      %v2082 = vmul.f32 %v2058, %v1890
      %v2083 = vmul.f32 %v2059, %v1891
      %v2084 = vmul.f32 %v2060, %v1892
      %2085 = vmatprep.subr.mxu0 0.0
      %2086 = vmatpush1.msra.mxu0 %v1497
      %2087 = vmatprep.subr.mxu0 0.0
      %2088 = vmatpush1.msra.mxu0 %v1498
      %2089 = vmatprep.subr.mxu0 0.0
      %2090 = vmatpush1.msra.mxu0 %v1499
      %2091 = vmatprep.subr.mxu0 0.0
      %2092 = vmatpush1.msra.mxu0 %v1500
      %2093 = vmatprep.subr.mxu0 0.0
      %2094 = vmatpush1.msra.mxu0 %v1501
      %2095 = vmatprep.subr.mxu0 0.0
      %2096 = vmatpush1.msra.mxu0 %v1502
      %2097 = vmatprep.subr.mxu0 0.0
      %2098 = vmatpush1.msra.mxu0 %v1503
      %2099 = vmatprep.subr.mxu0 0.0
      %2100 = vmatpush1.msra.mxu0 %v1504
      %2101 = vmatprep.subr.mxu0 0.0
      %2102 = vmatpush1.msra.mxu0 %v1505
      %2103 = vmatprep.subr.mxu0 0.0
      %2104 = vmatpush1.msra.mxu0 %v1506
      %2105 = vmatprep.subr.mxu0 0.0
      %2106 = vmatpush1.msra.mxu0 %v1507
      %2107 = vmatprep.subr.mxu0 0.0
      %2108 = vmatpush1.msra.mxu0 %v1508
      %2109 = vmatprep.subr.mxu0 0.0
      %2110 = vmatpush1.msra.mxu0 %v1509
      %2111 = vmatprep.subr.mxu0 0.0
      %2112 = vmatpush1.msra.mxu0 %v1510
      %2113 = vmatprep.subr.mxu0 0.0
      %2114 = vmatpush1.msra.mxu0 %v1511
      %2115 = vmatprep.subr.mxu0 0.0
      %2116 = vmatpush1.msra.mxu0 %v1512
      %2117 = vmatprep.subr.mxu0 0.0
      %2118 = vmatpush1.msra.mxu0 %v1513
      %2119 = vmatprep.subr.mxu0 0.0
      %2120 = vmatpush1.msra.mxu0 %v1514
      %2121 = vmatprep.subr.mxu0 0.0
      %2122 = vmatpush1.msra.mxu0 %v1515
      %2123 = vmatprep.subr.mxu0 0.0
      %2124 = vmatpush1.msra.mxu0 %v1516
      %2125 = vmatprep.subr.mxu0 0.0
      %2126 = vmatpush1.msra.mxu0 %v1517
      %2127 = vmatprep.subr.mxu0 0.0
      %2128 = vmatpush1.msra.mxu0 %v1518
      %2129 = vmatprep.subr.mxu0 0.0
      %2130 = vmatpush1.msra.mxu0 %v1519
      %2131 = vmatprep.subr.mxu0 0.0
      %2132 = vmatpush1.msra.mxu0 %v1520
      %2133 = vmatprep.subr.mxu0 0.0
      %2134 = vmatpush1.msra.mxu0 %v1521
      %2135 = vmatprep.subr.mxu0 0.0
      %2136 = vmatpush1.msra.mxu0 %v1522
      %2137 = vmatprep.subr.mxu0 0.0
      %2138 = vmatpush1.msra.mxu0 %v1523
      %2139 = vmatprep.subr.mxu0 0.0
      %2140 = vmatpush1.msra.mxu0 %v1524
      %2141 = vmatprep.subr.mxu0 0.0
      %2142 = vmatpush1.msra.mxu0 %v1525
      %2143 = vmatprep.subr.mxu0 0.0
      %2144 = vmatpush1.msra.mxu0 %v1526
      %2145 = vmatprep.subr.mxu0 0.0
      %2146 = vmatpush1.msra.mxu0 %v1527
      %2147 = vmatprep.subr.mxu0 0.0
      %2148 = vmatpush1.msra.mxu0 %v1528
      %2149 = vmatprep.mubr.f32.mxu0 %v2062
      %2150 = vmatmul.mubr.f32.gmra.mrb[0].mxu0 %v2061
      %v2151 = vpop.f32.mrb[0].mxu0
      %v2152 = vadd.f32 0.0, %v2151
      %v2153 = vpop.f32.mrb[0].mxu0
      %2154 = vmatprep.mubr.f32.mxu0 %v2070
      %2155 = vmatmul.mubr.f32.gmra.mrb[0].mxu0 %v2069
      %v2156 = vpop.f32.mrb[0].mxu0
      %v2157 = vadd.f32 0.0, %v2156
      %v2158 = vpop.f32.mrb[0].mxu0
      %2159 = vmatprep.mubr.f32.mxu0 %v2078
      %2160 = vmatmul.mubr.f32.gmra.mrb[0].mxu0 %v2077
      %v2161 = vpop.f32.mrb[0].mxu0
      %v2162 = vadd.f32 0.0, %v2161
      %v2163 = vpop.f32.mrb[0].mxu0
      %2164 = vdwg.mxu0
      %2165 = vmatprep.subr.mxu0 0.0
      %2166 = vmatpush1.msra.mxu0 %v1529
      %2167 = vmatprep.subr.mxu0 0.0
      %2168 = vmatpush1.msra.mxu0 %v1530
      %2169 = vmatprep.subr.mxu0 0.0
      %2170 = vmatpush1.msra.mxu0 %v1531
      %2171 = vmatprep.subr.mxu0 0.0
      %2172 = vmatpush1.msra.mxu0 %v1532
      %2173 = vmatprep.subr.mxu0 0.0
      %2174 = vmatpush1.msra.mxu0 %v1533
      %2175 = vmatprep.subr.mxu0 0.0
      %2176 = vmatpush1.msra.mxu0 %v1534
      %2177 = vmatprep.subr.mxu0 0.0
      %2178 = vmatpush1.msra.mxu0 %v1535
      %2179 = vmatprep.subr.mxu0 0.0
      %2180 = vmatpush1.msra.mxu0 %v1536
      %2181 = vmatprep.subr.mxu0 0.0
      %2182 = vmatpush1.msra.mxu0 %v1537
      %2183 = vmatprep.subr.mxu0 0.0
      %2184 = vmatpush1.msra.mxu0 %v1538
      %2185 = vmatprep.subr.mxu0 0.0
      %2186 = vmatpush1.msra.mxu0 %v1539
      %2187 = vmatprep.subr.mxu0 0.0
      %2188 = vmatpush1.msra.mxu0 %v1540
      %2189 = vmatprep.subr.mxu0 0.0
      %2190 = vmatpush1.msra.mxu0 %v1541
      %2191 = vmatprep.subr.mxu0 0.0
      %2192 = vmatpush1.msra.mxu0 %v1542
      %2193 = vmatprep.subr.mxu0 0.0
      %2194 = vmatpush1.msra.mxu0 %v1543
      %2195 = vmatprep.subr.mxu0 0.0
      %2196 = vmatpush1.msra.mxu0 %v1544
      %2197 = vmatprep.subr.mxu0 0.0
      %2198 = vmatpush1.msra.mxu0 %v1545
      %2199 = vmatprep.subr.mxu0 0.0
      %2200 = vmatpush1.msra.mxu0 %v1546
      %2201 = vmatprep.subr.mxu0 0.0
      %2202 = vmatpush1.msra.mxu0 %v1547
      %2203 = vmatprep.subr.mxu0 0.0
      %2204 = vmatpush1.msra.mxu0 %v1548
      %2205 = vmatprep.subr.mxu0 0.0
      %2206 = vmatpush1.msra.mxu0 %v1549
      %2207 = vmatprep.subr.mxu0 0.0
      %2208 = vmatpush1.msra.mxu0 %v1550
      %2209 = vmatprep.subr.mxu0 0.0
      %2210 = vmatpush1.msra.mxu0 %v1551
      %2211 = vmatprep.subr.mxu0 0.0
      %2212 = vmatpush1.msra.mxu0 %v1552
      %2213 = vmatprep.subr.mxu0 0.0
      %2214 = vmatpush1.msra.mxu0 %v1553
      %2215 = vmatprep.subr.mxu0 0.0
      %2216 = vmatpush1.msra.mxu0 %v1554
      %2217 = vmatprep.subr.mxu0 0.0
      %2218 = vmatpush1.msra.mxu0 %v1555
      %2219 = vmatprep.subr.mxu0 0.0
      %2220 = vmatpush1.msra.mxu0 %v1556
      %2221 = vmatprep.subr.mxu0 0.0
      %2222 = vmatpush1.msra.mxu0 %v1557
      %2223 = vmatprep.subr.mxu0 0.0
      %2224 = vmatpush1.msra.mxu0 %v1558
      %2225 = vmatprep.subr.mxu0 0.0
      %2226 = vmatpush1.msra.mxu0 %v1559
      %2227 = vmatprep.subr.mxu0 0.0
      %2228 = vmatpush1.msra.mxu0 %v1560
      %2229 = vmatprep.mubr.f32.mxu0 %v2064
      %2230 = vmatmul.mubr.f32.gmra.mrb[0].mxu0 %v2063
      %v2231 = vpop.f32.mrb[0].mxu0
      %v2232 = vadd.f32 %v2152, %v2231
      %v2233 = vpop.f32.mrb[0].mxu0
      %2234 = vmatprep.mubr.f32.mxu0 %v2072
      %2235 = vmatmul.mubr.f32.gmra.mrb[0].mxu0 %v2071
      %v2236 = vpop.f32.mrb[0].mxu0
      %v2237 = vadd.f32 %v2157, %v2236
      %v2238 = vpop.f32.mrb[0].mxu0
      %2239 = vmatprep.mubr.f32.mxu0 %v2080
      %2240 = vmatmul.mubr.f32.gmra.mrb[0].mxu0 %v2079
      %v2241 = vpop.f32.mrb[0].mxu0
      %v2242 = vadd.f32 %v2162, %v2241
      %v2243 = vpop.f32.mrb[0].mxu0
      %2244 = vdwg.mxu0
      %2245 = vmatprep.subr.mxu0 0.0
      %2246 = vmatpush1.msra.mxu0 %v1561
      %2247 = vmatprep.subr.mxu0 0.0
      %2248 = vmatpush1.msra.mxu0 %v1562
      %2249 = vmatprep.subr.mxu0 0.0
      %2250 = vmatpush1.msra.mxu0 %v1563
      %2251 = vmatprep.subr.mxu0 0.0
      %2252 = vmatpush1.msra.mxu0 %v1564
      %2253 = vmatprep.subr.mxu0 0.0
      %2254 = vmatpush1.msra.mxu0 %v1565
      %2255 = vmatprep.subr.mxu0 0.0
      %2256 = vmatpush1.msra.mxu0 %v1566
      %2257 = vmatprep.subr.mxu0 0.0
      %2258 = vmatpush1.msra.mxu0 %v1567
      %2259 = vmatprep.subr.mxu0 0.0
      %2260 = vmatpush1.msra.mxu0 %v1568
      %2261 = vmatprep.subr.mxu0 0.0
      %2262 = vmatpush1.msra.mxu0 %v1569
      %2263 = vmatprep.subr.mxu0 0.0
      %2264 = vmatpush1.msra.mxu0 %v1570
      %2265 = vmatprep.subr.mxu0 0.0
      %2266 = vmatpush1.msra.mxu0 %v1571
      %2267 = vmatprep.subr.mxu0 0.0
      %2268 = vmatpush1.msra.mxu0 %v1572
      %2269 = vmatprep.subr.mxu0 0.0
      %2270 = vmatpush1.msra.mxu0 %v1573
      %2271 = vmatprep.subr.mxu0 0.0
      %2272 = vmatpush1.msra.mxu0 %v1574
      %2273 = vmatprep.subr.mxu0 0.0
      %2274 = vmatpush1.msra.mxu0 %v1575
      %2275 = vmatprep.subr.mxu0 0.0
      %2276 = vmatpush1.msra.mxu0 %v1576
      %2277 = vmatprep.subr.mxu0 0.0
      %2278 = vmatpush1.msra.mxu0 %v1577
      %2279 = vmatprep.subr.mxu0 0.0
      %2280 = vmatpush1.msra.mxu0 %v1578
      %2281 = vmatprep.subr.mxu0 0.0
      %2282 = vmatpush1.msra.mxu0 %v1579
      %2283 = vmatprep.subr.mxu0 0.0
      %2284 = vmatpush1.msra.mxu0 %v1580
      %2285 = vmatprep.subr.mxu0 0.0
      %2286 = vmatpush1.msra.mxu0 %v1581
      %2287 = vmatprep.subr.mxu0 0.0
      %2288 = vmatpush1.msra.mxu0 %v1582
      %2289 = vmatprep.subr.mxu0 0.0
      %2290 = vmatpush1.msra.mxu0 %v1583
      %2291 = vmatprep.subr.mxu0 0.0
      %2292 = vmatpush1.msra.mxu0 %v1584
      %2293 = vmatprep.subr.mxu0 0.0
      %2294 = vmatpush1.msra.mxu0 %v1585
      %2295 = vmatprep.subr.mxu0 0.0
      %2296 = vmatpush1.msra.mxu0 %v1586
      %2297 = vmatprep.subr.mxu0 0.0
      %2298 = vmatpush1.msra.mxu0 %v1587
      %2299 = vmatprep.subr.mxu0 0.0
      %2300 = vmatpush1.msra.mxu0 %v1588
      %2301 = vmatprep.subr.mxu0 0.0
      %2302 = vmatpush1.msra.mxu0 %v1589
      %2303 = vmatprep.subr.mxu0 0.0
      %2304 = vmatpush1.msra.mxu0 %v1590
      %2305 = vmatprep.subr.mxu0 0.0
      %2306 = vmatpush1.msra.mxu0 %v1591
      %2307 = vmatprep.subr.mxu0 0.0
      %2308 = vmatpush1.msra.mxu0 %v1592
      %2309 = vmatprep.mubr.f32.mxu0 %v2066
      %2310 = vmatmul.mubr.f32.gmra.mrb[0].mxu0 %v2065
      %v2311 = vpop.f32.mrb[0].mxu0
      %v2312 = vadd.f32 %v2232, %v2311
      %v2313 = vpop.f32.mrb[0].mxu0
      %2314 = vmatprep.mubr.f32.mxu0 %v2074
      %2315 = vmatmul.mubr.f32.gmra.mrb[0].mxu0 %v2073
      %v2316 = vpop.f32.mrb[0].mxu0
      %v2317 = vadd.f32 %v2237, %v2316
      %v2318 = vpop.f32.mrb[0].mxu0
      %2319 = vmatprep.mubr.f32.mxu0 %v2082
      %2320 = vmatmul.mubr.f32.gmra.mrb[0].mxu0 %v2081
      %v2321 = vpop.f32.mrb[0].mxu0
      %v2322 = vadd.f32 %v2242, %v2321
      %v2323 = vpop.f32.mrb[0].mxu0
      %2324 = vdwg.mxu0
      %2325 = vmatprep.subr.mxu0 0.0
      %2326 = vmatpush1.msra.mxu0 %v1593
      %2327 = vmatprep.subr.mxu0 0.0
      %2328 = vmatpush1.msra.mxu0 %v1594
      %2329 = vmatprep.subr.mxu0 0.0
      %2330 = vmatpush1.msra.mxu0 %v1595
      %2331 = vmatprep.subr.mxu0 0.0
      %2332 = vmatpush1.msra.mxu0 %v1596
      %2333 = vmatprep.subr.mxu0 0.0
      %2334 = vmatpush1.msra.mxu0 %v1597
      %2335 = vmatprep.subr.mxu0 0.0
      %2336 = vmatpush1.msra.mxu0 %v1598
      %2337 = vmatprep.subr.mxu0 0.0
      %2338 = vmatpush1.msra.mxu0 %v1599
      %2339 = vmatprep.subr.mxu0 0.0
      %2340 = vmatpush1.msra.mxu0 %v1600
      %2341 = vmatprep.subr.mxu0 0.0
      %2342 = vmatpush1.msra.mxu0 %v1601
      %2343 = vmatprep.subr.mxu0 0.0
      %2344 = vmatpush1.msra.mxu0 %v1602
      %2345 = vmatprep.subr.mxu0 0.0
      %2346 = vmatpush1.msra.mxu0 %v1603
      %2347 = vmatprep.subr.mxu0 0.0
      %2348 = vmatpush1.msra.mxu0 %v1604
      %2349 = vmatprep.subr.mxu0 0.0
      %2350 = vmatpush1.msra.mxu0 %v1605
      %2351 = vmatprep.subr.mxu0 0.0
      %2352 = vmatpush1.msra.mxu0 %v1606
      %2353 = vmatprep.subr.mxu0 0.0
      %2354 = vmatpush1.msra.mxu0 %v1607
      %2355 = vmatprep.subr.mxu0 0.0
      %2356 = vmatpush1.msra.mxu0 %v1608
      %2357 = vmatprep.subr.mxu0 0.0
      %2358 = vmatpush1.msra.mxu0 %v1609
      %2359 = vmatprep.subr.mxu0 0.0
      %2360 = vmatpush1.msra.mxu0 %v1610
      %2361 = vmatprep.subr.mxu0 0.0
      %2362 = vmatpush1.msra.mxu0 %v1611
      %2363 = vmatprep.subr.mxu0 0.0
      %2364 = vmatpush1.msra.mxu0 %v1612
      %2365 = vmatprep.subr.mxu0 0.0
      %2366 = vmatpush1.msra.mxu0 %v1613
      %2367 = vmatprep.subr.mxu0 0.0
      %2368 = vmatpush1.msra.mxu0 %v1614
      %2369 = vmatprep.subr.mxu0 0.0
      %2370 = vmatpush1.msra.mxu0 %v1615
      %2371 = vmatprep.subr.mxu0 0.0
      %2372 = vmatpush1.msra.mxu0 %v1616
      %2373 = vmatprep.subr.mxu0 0.0
      %2374 = vmatpush1.msra.mxu0 %v1617
      %2375 = vmatprep.subr.mxu0 0.0
      %2376 = vmatpush1.msra.mxu0 %v1618
      %2377 = vmatprep.subr.mxu0 0.0
      %2378 = vmatpush1.msra.mxu0 %v1619
      %2379 = vmatprep.subr.mxu0 0.0
      %2380 = vmatpush1.msra.mxu0 %v1620
      %2381 = vmatprep.subr.mxu0 0.0
      %2382 = vmatpush1.msra.mxu0 %v1621
      %2383 = vmatprep.subr.mxu0 0.0
      %2384 = vmatpush1.msra.mxu0 %v1622
      %2385 = vmatprep.subr.mxu0 0.0
      %2386 = vmatpush1.msra.mxu0 %v1623
      %2387 = vmatprep.subr.mxu0 0.0
      %2388 = vmatpush1.msra.mxu0 %v1624
      %2389 = vmatprep.mubr.f32.mxu0 %v2068
      %2390 = vmatmul.mubr.f32.gmra.mrb[0].mxu0 %v2067
      %v2391 = vpop.f32.mrb[0].mxu0
      %v2392 = vadd.f32 %v2312, %v2391
      %v2393 = vpop.f32.mrb[0].mxu0
      %2394 = vmatprep.mubr.f32.mxu0 %v2076
      %2395 = vmatmul.mubr.f32.gmra.mrb[0].mxu0 %v2075
      %v2396 = vpop.f32.mrb[0].mxu0
      %v2397 = vadd.f32 %v2317, %v2396
      %v2398 = vpop.f32.mrb[0].mxu0
      %2399 = vmatprep.mubr.f32.mxu0 %v2084
      %2400 = vmatmul.mubr.f32.gmra.mrb[0].mxu0 %v2083
      %v2401 = vpop.f32.mrb[0].mxu0
      %v2402 = vadd.f32 %v2322, %v2401
      %v2403 = vpop.f32.mrb[0].mxu0
      %2404 = vdwg.mxu0
      %v2405 = vld [vmem:[%s4 + $0x118] sm:$0x1]
      %v2406 = vld [vmem:[%s4 + $0x120] sm:$0xff]
      %v2407 = vld [vmem:[%s4 + $0x128] sm:$0xff]
      %v2408 = vld [vmem:[%s4 + $0x130] sm:$0xff]
      %v2409 = vld [vmem:[%s4 + $0x138] sm:$0xff]
      %v2410 = vlaneseq
      %v2411 = vshrl.u32 %v2410, 7
      %v2412 = vsub.s32 0, %v2411
      %v2413 = vrot.slane %v2405, %v2412
      %vm2414 = vcmask 261120
      %v2416 = vsel %vm2414, %v2392, 0
      %v2419 = vsel %vm2414, %v2397, 0
      %v2422 = vsel %vm2414, %v2402, 0
      %2424 = vmatprep.subr.mxu0 0.0
      %2425 = vmatpush1.msra.mxu0 %v2406
      %2426 = vmatprep.subr.mxu0 0.0
      %2427 = vmatpush1.msra.mxu0 %v2407
      %2428 = vmatprep.subr.mxu0 0.0
      %2429 = vmatpush1.msra.mxu0 %v2408
      %2430 = vmatprep.subr.mxu0 0.0
      %2431 = vmatpush1.msra.mxu0 %v2409
      %2432 = vmatprep.subr.mxu0 0.0
      %2433 = vmatpush1.msra.mxu0 0.0
      %2434 = vmatprep.subr.mxu0 0.0
      %2435 = vmatpush1.msra.mxu0 0.0
      %2436 = vmatprep.subr.mxu0 0.0
      %2437 = vmatpush1.msra.mxu0 0.0
      %2438 = vmatprep.subr.mxu0 0.0
      %2439 = vmatpush1.msra.mxu0 0.0
      %2440 = vmatprep.subr.mxu0 0.0
      %2441 = vmatpush1.msra.mxu0 0.0
      %2442 = vmatprep.subr.mxu0 0.0
      %2443 = vmatpush1.msra.mxu0 0.0
      %2444 = vmatprep.subr.mxu0 0.0
      %2445 = vmatpush1.msra.mxu0 0.0
      %2446 = vmatprep.subr.mxu0 0.0
      %2447 = vmatpush1.msra.mxu0 0.0
      %2448 = vmatprep.subr.mxu0 0.0
      %2449 = vmatpush1.msra.mxu0 0.0
      %2450 = vmatprep.subr.mxu0 0.0
      %2451 = vmatpush1.msra.mxu0 0.0
      %2452 = vmatprep.subr.mxu0 0.0
      %2453 = vmatpush1.msra.mxu0 0.0
      %2454 = vmatprep.subr.mxu0 0.0
      %2455 = vmatpush1.msra.mxu0 0.0
      %2456 = vmatprep.subr.mxu0 0.0
      %2457 = vmatpush1.msra.mxu0 0.0
      %2458 = vmatprep.subr.mxu0 0.0
      %2459 = vmatpush1.msra.mxu0 0.0
      %2460 = vmatprep.subr.mxu0 0.0
      %2461 = vmatpush1.msra.mxu0 0.0
      %2462 = vmatprep.subr.mxu0 0.0
      %2463 = vmatpush1.msra.mxu0 0.0
      %2464 = vmatprep.subr.mxu0 0.0
      %2465 = vmatpush1.msra.mxu0 0.0
      %2466 = vmatprep.subr.mxu0 0.0
      %2467 = vmatpush1.msra.mxu0 0.0
      %2468 = vmatprep.subr.mxu0 0.0
      %2469 = vmatpush1.msra.mxu0 0.0
      %2470 = vmatprep.subr.mxu0 0.0
      %2471 = vmatpush1.msra.mxu0 0.0
      %2472 = vmatprep.subr.mxu0 0.0
      %2473 = vmatpush1.msra.mxu0 0.0
      %2474 = vmatprep.subr.mxu0 0.0
      %2475 = vmatpush1.msra.mxu0 0.0
      %2476 = vmatprep.subr.mxu0 0.0
      %2477 = vmatpush1.msra.mxu0 0.0
      %2478 = vmatprep.subr.mxu0 0.0
      %2479 = vmatpush1.msra.mxu0 0.0
      %2480 = vmatprep.subr.mxu0 0.0
      %2481 = vmatpush1.msra.mxu0 0.0
      %2482 = vmatprep.subr.mxu0 0.0
      %2483 = vmatpush1.msra.mxu0 0.0
      %2484 = vmatprep.subr.mxu0 0.0
      %2485 = vmatpush1.msra.mxu0 0.0
      %2486 = vmatprep.subr.mxu0 0.0
      %2487 = vmatpush1.msra.mxu0 0.0
      %2488 = vmatprep.mubr.f32.mxu0 0.0
      %2489 = vmatmul.mubr.f32.gmra.mrb[0].mxu0 %v2416
      %v2490 = vpop.f32.mrb[0].mxu0
      %v2491 = vadd.f32 %v2413, %v2490
      %v2492 = vpop.f32.mrb[0].mxu0
      %2493 = vmatprep.mubr.f32.mxu0 0.0
      %2494 = vmatmul.mubr.f32.gmra.mrb[0].mxu0 %v2419
      %v2495 = vpop.f32.mrb[0].mxu0
      %v2496 = vadd.f32 %v2413, %v2495
      %v2497 = vpop.f32.mrb[0].mxu0
      %2498 = vmatprep.mubr.f32.mxu0 0.0
      %2499 = vmatmul.mubr.f32.gmra.mrb[0].mxu0 %v2422
      %v2500 = vpop.f32.mrb[0].mxu0
      %v2501 = vadd.f32 %v2413, %v2500
      %v2502 = vpop.f32.mrb[0].mxu0
      %2503 = vdwg.mxu0
      %v2504 = vmax.f32 %v2491, 0.0
      %v2505 = vmax.f32 %v2496, 0.0
      %v2506 = vmax.f32 %v2501, 0.0
      %v2507 = vld [vmem:[%s4 + $0x140] sm:$0x1]
      %v2508 = vld [vmem:[%s4 + $0x148] sm:$0xff]
      %v2509 = vld [vmem:[%s4 + $0x150] sm:$0xff]
      %v2510 = vld [vmem:[%s4 + $0x158] sm:$0xff]
      %v2511 = vld [vmem:[%s4 + $0x160] sm:$0xff]
      %v2512 = vlaneseq
      %v2513 = vshrl.u32 %v2512, 7
      %v2514 = vsub.s32 0, %v2513
      %v2515 = vrot.slane %v2507, %v2514
      %v2517 = vsel %vm2414, %v2504, 0
      %v2520 = vsel %vm2414, %v2505, 0
      %v2523 = vsel %vm2414, %v2506, 0
      %2525 = vmatprep.subr.mxu0 0.0
      %2526 = vmatpush1.msra.mxu0 %v2508
      %2527 = vmatprep.subr.mxu0 0.0
      %2528 = vmatpush1.msra.mxu0 %v2509
      %2529 = vmatprep.subr.mxu0 0.0
      %2530 = vmatpush1.msra.mxu0 %v2510
      %2531 = vmatprep.subr.mxu0 0.0
      %2532 = vmatpush1.msra.mxu0 %v2511
      %2533 = vmatprep.subr.mxu0 0.0
      %2534 = vmatpush1.msra.mxu0 0.0
      %2535 = vmatprep.subr.mxu0 0.0
      %2536 = vmatpush1.msra.mxu0 0.0
      %2537 = vmatprep.subr.mxu0 0.0
      %2538 = vmatpush1.msra.mxu0 0.0
      %2539 = vmatprep.subr.mxu0 0.0
      %2540 = vmatpush1.msra.mxu0 0.0
      %2541 = vmatprep.subr.mxu0 0.0
      %2542 = vmatpush1.msra.mxu0 0.0
      %2543 = vmatprep.subr.mxu0 0.0
      %2544 = vmatpush1.msra.mxu0 0.0
      %2545 = vmatprep.subr.mxu0 0.0
      %2546 = vmatpush1.msra.mxu0 0.0
      %2547 = vmatprep.subr.mxu0 0.0
      %2548 = vmatpush1.msra.mxu0 0.0
      %2549 = vmatprep.subr.mxu0 0.0
      %2550 = vmatpush1.msra.mxu0 0.0
      %2551 = vmatprep.subr.mxu0 0.0
      %2552 = vmatpush1.msra.mxu0 0.0
      %2553 = vmatprep.subr.mxu0 0.0
      %2554 = vmatpush1.msra.mxu0 0.0
      %2555 = vmatprep.subr.mxu0 0.0
      %2556 = vmatpush1.msra.mxu0 0.0
      %2557 = vmatprep.subr.mxu0 0.0
      %2558 = vmatpush1.msra.mxu0 0.0
      %2559 = vmatprep.subr.mxu0 0.0
      %2560 = vmatpush1.msra.mxu0 0.0
      %2561 = vmatprep.subr.mxu0 0.0
      %2562 = vmatpush1.msra.mxu0 0.0
      %2563 = vmatprep.subr.mxu0 0.0
      %2564 = vmatpush1.msra.mxu0 0.0
      %2565 = vmatprep.subr.mxu0 0.0
      %2566 = vmatpush1.msra.mxu0 0.0
      %2567 = vmatprep.subr.mxu0 0.0
      %2568 = vmatpush1.msra.mxu0 0.0
      %2569 = vmatprep.subr.mxu0 0.0
      %2570 = vmatpush1.msra.mxu0 0.0
      %2571 = vmatprep.subr.mxu0 0.0
      %2572 = vmatpush1.msra.mxu0 0.0
      %2573 = vmatprep.subr.mxu0 0.0
      %2574 = vmatpush1.msra.mxu0 0.0
      %2575 = vmatprep.subr.mxu0 0.0
      %2576 = vmatpush1.msra.mxu0 0.0
      %2577 = vmatprep.subr.mxu0 0.0
      %2578 = vmatpush1.msra.mxu0 0.0
      %2579 = vmatprep.subr.mxu0 0.0
      %2580 = vmatpush1.msra.mxu0 0.0
      %2581 = vmatprep.subr.mxu0 0.0
      %2582 = vmatpush1.msra.mxu0 0.0
      %2583 = vmatprep.subr.mxu0 0.0
      %2584 = vmatpush1.msra.mxu0 0.0
      %2585 = vmatprep.subr.mxu0 0.0
      %2586 = vmatpush1.msra.mxu0 0.0
      %2587 = vmatprep.subr.mxu0 0.0
      %2588 = vmatpush1.msra.mxu0 0.0
      %2589 = vmatprep.mubr.f32.mxu0 0.0
      %2590 = vmatmul.mubr.f32.gmra.mrb[0].mxu0 %v2517
      %v2591 = vpop.f32.mrb[0].mxu0
      %v2592 = vadd.f32 %v2515, %v2591
      %v2593 = vpop.f32.mrb[0].mxu0
      %2594 = vmatprep.mubr.f32.mxu0 0.0
      %2595 = vmatmul.mubr.f32.gmra.mrb[0].mxu0 %v2520
      %v2596 = vpop.f32.mrb[0].mxu0
      %v2597 = vadd.f32 %v2515, %v2596
      %v2598 = vpop.f32.mrb[0].mxu0
      %2599 = vmatprep.mubr.f32.mxu0 0.0
      %2600 = vmatmul.mubr.f32.gmra.mrb[0].mxu0 %v2523
      %v2601 = vpop.f32.mrb[0].mxu0
      %v2602 = vadd.f32 %v2515, %v2601
      %v2603 = vpop.f32.mrb[0].mxu0
      %2604 = vdwg.mxu0
      %v2605 = vadd.f32 %v265, %v2592
      %v2606 = vadd.f32 %v266, %v2597
      %v2607 = vadd.f32 %v267, %v2602
      %v2608 = vmul.f32 %v2605, 0.484375
      %v2609 = vmul.f32 %v2606, 0.484375
      %v2610 = vmul.f32 %v2607, 0.484375
      %v2611 = vfloor.f32 %v2608
      %v2612 = vfloor.f32 %v2609
      %v2613 = vfloor.f32 %v2610
      %v2614 = vsub.f32 %v2608, %v2611
      %v2615 = vsub.f32 %v2609, %v2612
      %v2616 = vsub.f32 %v2610, %v2613
      %vm2617 = vcmp.ge.f32.partialorder %v2611, 0.0
      %vm2618 = vcmp.ge.f32.partialorder %v2612, 0.0
      %vm2619 = vcmp.ge.f32.partialorder %v2613, 0.0
      %vm2620 = vcmp.le.f32.partialorder %v2611, 31.0
      %vm2621 = vcmp.le.f32.partialorder %v2612, 31.0
      %vm2622 = vcmp.le.f32.partialorder %v2613, 31.0
      %vm2623 = vmand %vm2617, %vm2620
      %vm2624 = vmand %vm2618, %vm2621
      %vm2625 = vmand %vm2619, %vm2622
      %v2626 = vsub.f32 1.0, %v2614
      %v2627 = vsub.f32 1.0, %v2615
      %v2628 = vsub.f32 1.0, %v2616
      %v2629 = vsel %vm2623, %v2626, 0.0
      %v2630 = vsel %vm2624, %v2627, 0.0
      %v2631 = vsel %vm2625, %v2628, 0.0
      %v2632 = vadd.f32 %v2611, 1.0
      %v2633 = vadd.f32 %v2612, 1.0
      %v2634 = vadd.f32 %v2613, 1.0
      %vm2635 = vcmp.ge.f32.partialorder %v2632, 0.0
      %vm2636 = vcmp.ge.f32.partialorder %v2633, 0.0
      %vm2637 = vcmp.ge.f32.partialorder %v2634, 0.0
      %vm2638 = vcmp.le.f32.partialorder %v2632, 31.0
      %vm2639 = vcmp.le.f32.partialorder %v2633, 31.0
      %vm2640 = vcmp.le.f32.partialorder %v2634, 31.0
      %vm2641 = vmand %vm2635, %vm2638
      %vm2642 = vmand %vm2636, %vm2639
      %vm2643 = vmand %vm2637, %vm2640
      %v2644 = vsel %vm2641, %v2614, 0.0
      %v2645 = vsel %vm2642, %v2615, 0.0
      %v2646 = vsel %vm2643, %v2616, 0.0
      %2648 = vset.pattern.permute.xlu0 0
      %2649 = vperm.xlu0 %2648, %v2611
      %v2650 = vpop.permute.xlu0 %2649
      %2653 = vset.pattern.permute.xlu0 0
      %2654 = vperm.xlu0 %2653, %v2612
      %v2655 = vpop.permute.xlu0 %2654
      %2658 = vset.pattern.permute.xlu0 0
      %2659 = vperm.xlu0 %2658, %v2613
      %v2660 = vpop.permute.xlu0 %2659
      %vm2662 = vcmp.eq.f32.partialorder %v1666, %v2650
      %vm2663 = vcmp.eq.f32.partialorder %v1667, %v2650
      %vm2664 = vcmp.eq.f32.partialorder %v1668, %v2650
      %vm2665 = vcmp.eq.f32.partialorder %v1669, %v2650
      %vm2666 = vcmp.eq.f32.partialorder %v1670, %v2650
      %vm2667 = vcmp.eq.f32.partialorder %v1671, %v2650
      %vm2668 = vcmp.eq.f32.partialorder %v1672, %v2650
      %vm2669 = vcmp.eq.f32.partialorder %v1673, %v2650
      %vm2670 = vcmp.eq.f32.partialorder %v1666, %v2655
      %vm2671 = vcmp.eq.f32.partialorder %v1667, %v2655
      %vm2672 = vcmp.eq.f32.partialorder %v1668, %v2655
      %vm2673 = vcmp.eq.f32.partialorder %v1669, %v2655
      %vm2674 = vcmp.eq.f32.partialorder %v1670, %v2655
      %vm2675 = vcmp.eq.f32.partialorder %v1671, %v2655
      %vm2676 = vcmp.eq.f32.partialorder %v1672, %v2655
      %vm2677 = vcmp.eq.f32.partialorder %v1673, %v2655
      %vm2678 = vcmp.eq.f32.partialorder %v1666, %v2660
      %vm2679 = vcmp.eq.f32.partialorder %v1667, %v2660
      %vm2680 = vcmp.eq.f32.partialorder %v1668, %v2660
      %vm2681 = vcmp.eq.f32.partialorder %v1669, %v2660
      %vm2682 = vcmp.eq.f32.partialorder %v1670, %v2660
      %vm2683 = vcmp.eq.f32.partialorder %v1671, %v2660
      %vm2684 = vcmp.eq.f32.partialorder %v1672, %v2660
      %vm2685 = vcmp.eq.f32.partialorder %v1673, %v2660
      %2687 = vset.pattern.permute.xlu0 0
      %2688 = vperm.xlu0 %2687, %v2629
      %v2689 = vpop.permute.xlu0 %2688
      %2692 = vset.pattern.permute.xlu0 0
      %2693 = vperm.xlu0 %2692, %v2630
      %v2694 = vpop.permute.xlu0 %2693
      %2697 = vset.pattern.permute.xlu0 0
      %2698 = vperm.xlu0 %2697, %v2631
      %v2699 = vpop.permute.xlu0 %2698
      %v2701 = vsel %vm2662, %v2689, 0.0
      %v2702 = vsel %vm2663, %v2689, 0.0
      %v2703 = vsel %vm2664, %v2689, 0.0
      %v2704 = vsel %vm2665, %v2689, 0.0
      %v2705 = vsel %vm2666, %v2689, 0.0
      %v2706 = vsel %vm2667, %v2689, 0.0
      %v2707 = vsel %vm2668, %v2689, 0.0
      %v2708 = vsel %vm2669, %v2689, 0.0
      %v2709 = vsel %vm2670, %v2694, 0.0
      %v2710 = vsel %vm2671, %v2694, 0.0
      %v2711 = vsel %vm2672, %v2694, 0.0
      %v2712 = vsel %vm2673, %v2694, 0.0
      %v2713 = vsel %vm2674, %v2694, 0.0
      %v2714 = vsel %vm2675, %v2694, 0.0
      %v2715 = vsel %vm2676, %v2694, 0.0
      %v2716 = vsel %vm2677, %v2694, 0.0
      %v2717 = vsel %vm2678, %v2699, 0.0
      %v2718 = vsel %vm2679, %v2699, 0.0
      %v2719 = vsel %vm2680, %v2699, 0.0
      %v2720 = vsel %vm2681, %v2699, 0.0
      %v2721 = vsel %vm2682, %v2699, 0.0
      %v2722 = vsel %vm2683, %v2699, 0.0
      %v2723 = vsel %vm2684, %v2699, 0.0
      %v2724 = vsel %vm2685, %v2699, 0.0
      %2726 = vset.pattern.permute.xlu0 0
      %2727 = vperm.xlu0 %2726, %v2632
      %v2728 = vpop.permute.xlu0 %2727
      %2731 = vset.pattern.permute.xlu0 0
      %2732 = vperm.xlu0 %2731, %v2633
      %v2733 = vpop.permute.xlu0 %2732
      %2736 = vset.pattern.permute.xlu0 0
      %2737 = vperm.xlu0 %2736, %v2634
      %v2738 = vpop.permute.xlu0 %2737
      %vm2740 = vcmp.eq.f32.partialorder %v1666, %v2728
      %vm2741 = vcmp.eq.f32.partialorder %v1667, %v2728
      %vm2742 = vcmp.eq.f32.partialorder %v1668, %v2728
      %vm2743 = vcmp.eq.f32.partialorder %v1669, %v2728
      %vm2744 = vcmp.eq.f32.partialorder %v1670, %v2728
      %vm2745 = vcmp.eq.f32.partialorder %v1671, %v2728
      %vm2746 = vcmp.eq.f32.partialorder %v1672, %v2728
      %vm2747 = vcmp.eq.f32.partialorder %v1673, %v2728
      %vm2748 = vcmp.eq.f32.partialorder %v1666, %v2733
      %vm2749 = vcmp.eq.f32.partialorder %v1667, %v2733
      %vm2750 = vcmp.eq.f32.partialorder %v1668, %v2733
      %vm2751 = vcmp.eq.f32.partialorder %v1669, %v2733
      %vm2752 = vcmp.eq.f32.partialorder %v1670, %v2733
      %vm2753 = vcmp.eq.f32.partialorder %v1671, %v2733
      %vm2754 = vcmp.eq.f32.partialorder %v1672, %v2733
      %vm2755 = vcmp.eq.f32.partialorder %v1673, %v2733
      %vm2756 = vcmp.eq.f32.partialorder %v1666, %v2738
      %vm2757 = vcmp.eq.f32.partialorder %v1667, %v2738
      %vm2758 = vcmp.eq.f32.partialorder %v1668, %v2738
      %vm2759 = vcmp.eq.f32.partialorder %v1669, %v2738
      %vm2760 = vcmp.eq.f32.partialorder %v1670, %v2738
      %vm2761 = vcmp.eq.f32.partialorder %v1671, %v2738
      %vm2762 = vcmp.eq.f32.partialorder %v1672, %v2738
      %vm2763 = vcmp.eq.f32.partialorder %v1673, %v2738
      %2765 = vset.pattern.permute.xlu0 0
      %2766 = vperm.xlu0 %2765, %v2644
      %v2767 = vpop.permute.xlu0 %2766
      %2770 = vset.pattern.permute.xlu0 0
      %2771 = vperm.xlu0 %2770, %v2645
      %v2772 = vpop.permute.xlu0 %2771
      %2775 = vset.pattern.permute.xlu0 0
      %2776 = vperm.xlu0 %2775, %v2646
      %v2777 = vpop.permute.xlu0 %2776
      %v2779 = vsel %vm2740, %v2767, 0.0
      %v2780 = vsel %vm2741, %v2767, 0.0
      %v2781 = vsel %vm2742, %v2767, 0.0
      %v2782 = vsel %vm2743, %v2767, 0.0
      %v2783 = vsel %vm2744, %v2767, 0.0
      %v2784 = vsel %vm2745, %v2767, 0.0
      %v2785 = vsel %vm2746, %v2767, 0.0
      %v2786 = vsel %vm2747, %v2767, 0.0
      %v2787 = vsel %vm2748, %v2772, 0.0
      %v2788 = vsel %vm2749, %v2772, 0.0
      %v2789 = vsel %vm2750, %v2772, 0.0
      %v2790 = vsel %vm2751, %v2772, 0.0
      %v2791 = vsel %vm2752, %v2772, 0.0
      %v2792 = vsel %vm2753, %v2772, 0.0
      %v2793 = vsel %vm2754, %v2772, 0.0
      %v2794 = vsel %vm2755, %v2772, 0.0
      %v2795 = vsel %vm2756, %v2777, 0.0
      %v2796 = vsel %vm2757, %v2777, 0.0
      %v2797 = vsel %vm2758, %v2777, 0.0
      %v2798 = vsel %vm2759, %v2777, 0.0
      %v2799 = vsel %vm2760, %v2777, 0.0
      %v2800 = vsel %vm2761, %v2777, 0.0
      %v2801 = vsel %vm2762, %v2777, 0.0
      %v2802 = vsel %vm2763, %v2777, 0.0
      %v2803 = vadd.f32 %v2701, %v2779
      %v2804 = vadd.f32 %v2702, %v2780
      %v2805 = vadd.f32 %v2703, %v2781
      %v2806 = vadd.f32 %v2704, %v2782
      %v2807 = vadd.f32 %v2705, %v2783
      %v2808 = vadd.f32 %v2706, %v2784
      %v2809 = vadd.f32 %v2707, %v2785
      %v2810 = vadd.f32 %v2708, %v2786
      %v2811 = vadd.f32 %v2709, %v2787
      %v2812 = vadd.f32 %v2710, %v2788
      %v2813 = vadd.f32 %v2711, %v2789
      %v2814 = vadd.f32 %v2712, %v2790
      %v2815 = vadd.f32 %v2713, %v2791
      %v2816 = vadd.f32 %v2714, %v2792
      %v2817 = vadd.f32 %v2715, %v2793
      %v2818 = vadd.f32 %v2716, %v2794
      %v2819 = vadd.f32 %v2717, %v2795
      %v2820 = vadd.f32 %v2718, %v2796
      %v2821 = vadd.f32 %v2719, %v2797
      %v2822 = vadd.f32 %v2720, %v2798
      %v2823 = vadd.f32 %v2721, %v2799
      %v2824 = vadd.f32 %v2722, %v2800
      %v2825 = vadd.f32 %v2723, %v2801
      %v2826 = vadd.f32 %v2724, %v2802
      %2827 = vset.pattern.permute.xlu0 1
      %2828 = vperm.xlu0 %2827, %v2611
      %v2829 = vpop.permute.xlu0 %2828
      %2831 = vset.pattern.permute.xlu0 1
      %2832 = vperm.xlu0 %2831, %v2612
      %v2833 = vpop.permute.xlu0 %2832
      %2835 = vset.pattern.permute.xlu0 1
      %2836 = vperm.xlu0 %2835, %v2613
      %v2837 = vpop.permute.xlu0 %2836
      %vm2839 = vcmp.eq.f32.partialorder %v1650, %v2829
      %vm2840 = vcmp.eq.f32.partialorder %v1651, %v2829
      %vm2841 = vcmp.eq.f32.partialorder %v1652, %v2829
      %vm2842 = vcmp.eq.f32.partialorder %v1653, %v2829
      %vm2843 = vcmp.eq.f32.partialorder %v1654, %v2829
      %vm2844 = vcmp.eq.f32.partialorder %v1655, %v2829
      %vm2845 = vcmp.eq.f32.partialorder %v1656, %v2829
      %vm2846 = vcmp.eq.f32.partialorder %v1657, %v2829
      %vm2847 = vcmp.eq.f32.partialorder %v1650, %v2833
      %vm2848 = vcmp.eq.f32.partialorder %v1651, %v2833
      %vm2849 = vcmp.eq.f32.partialorder %v1652, %v2833
      %vm2850 = vcmp.eq.f32.partialorder %v1653, %v2833
      %vm2851 = vcmp.eq.f32.partialorder %v1654, %v2833
      %vm2852 = vcmp.eq.f32.partialorder %v1655, %v2833
      %vm2853 = vcmp.eq.f32.partialorder %v1656, %v2833
      %vm2854 = vcmp.eq.f32.partialorder %v1657, %v2833
      %vm2855 = vcmp.eq.f32.partialorder %v1650, %v2837
      %vm2856 = vcmp.eq.f32.partialorder %v1651, %v2837
      %vm2857 = vcmp.eq.f32.partialorder %v1652, %v2837
      %vm2858 = vcmp.eq.f32.partialorder %v1653, %v2837
      %vm2859 = vcmp.eq.f32.partialorder %v1654, %v2837
      %vm2860 = vcmp.eq.f32.partialorder %v1655, %v2837
      %vm2861 = vcmp.eq.f32.partialorder %v1656, %v2837
      %vm2862 = vcmp.eq.f32.partialorder %v1657, %v2837
      %2863 = vset.pattern.permute.xlu0 1
      %2864 = vperm.xlu0 %2863, %v2629
      %v2865 = vpop.permute.xlu0 %2864
      %2867 = vset.pattern.permute.xlu0 1
      %2868 = vperm.xlu0 %2867, %v2630
      %v2869 = vpop.permute.xlu0 %2868
      %2871 = vset.pattern.permute.xlu0 1
      %2872 = vperm.xlu0 %2871, %v2631
      %v2873 = vpop.permute.xlu0 %2872
      %v2875 = vsel %vm2839, %v2865, 0.0
      %v2876 = vsel %vm2840, %v2865, 0.0
      %v2877 = vsel %vm2841, %v2865, 0.0
      %v2878 = vsel %vm2842, %v2865, 0.0
      %v2879 = vsel %vm2843, %v2865, 0.0
      %v2880 = vsel %vm2844, %v2865, 0.0
      %v2881 = vsel %vm2845, %v2865, 0.0
      %v2882 = vsel %vm2846, %v2865, 0.0
      %v2883 = vsel %vm2847, %v2869, 0.0
      %v2884 = vsel %vm2848, %v2869, 0.0
      %v2885 = vsel %vm2849, %v2869, 0.0
      %v2886 = vsel %vm2850, %v2869, 0.0
      %v2887 = vsel %vm2851, %v2869, 0.0
      %v2888 = vsel %vm2852, %v2869, 0.0
      %v2889 = vsel %vm2853, %v2869, 0.0
      %v2890 = vsel %vm2854, %v2869, 0.0
      %v2891 = vsel %vm2855, %v2873, 0.0
      %v2892 = vsel %vm2856, %v2873, 0.0
      %v2893 = vsel %vm2857, %v2873, 0.0
      %v2894 = vsel %vm2858, %v2873, 0.0
      %v2895 = vsel %vm2859, %v2873, 0.0
      %v2896 = vsel %vm2860, %v2873, 0.0
      %v2897 = vsel %vm2861, %v2873, 0.0
      %v2898 = vsel %vm2862, %v2873, 0.0
      %2899 = vset.pattern.permute.xlu0 1
      %2900 = vperm.xlu0 %2899, %v2632
      %v2901 = vpop.permute.xlu0 %2900
      %2903 = vset.pattern.permute.xlu0 1
      %2904 = vperm.xlu0 %2903, %v2633
      %v2905 = vpop.permute.xlu0 %2904
      %2907 = vset.pattern.permute.xlu0 1
      %2908 = vperm.xlu0 %2907, %v2634
      %v2909 = vpop.permute.xlu0 %2908
      %vm2911 = vcmp.eq.f32.partialorder %v1650, %v2901
      %vm2912 = vcmp.eq.f32.partialorder %v1651, %v2901
      %vm2913 = vcmp.eq.f32.partialorder %v1652, %v2901
      %vm2914 = vcmp.eq.f32.partialorder %v1653, %v2901
      %vm2915 = vcmp.eq.f32.partialorder %v1654, %v2901
      %vm2916 = vcmp.eq.f32.partialorder %v1655, %v2901
      %vm2917 = vcmp.eq.f32.partialorder %v1656, %v2901
      %vm2918 = vcmp.eq.f32.partialorder %v1657, %v2901
      %vm2919 = vcmp.eq.f32.partialorder %v1650, %v2905
      %vm2920 = vcmp.eq.f32.partialorder %v1651, %v2905
      %vm2921 = vcmp.eq.f32.partialorder %v1652, %v2905
      %vm2922 = vcmp.eq.f32.partialorder %v1653, %v2905
      %vm2923 = vcmp.eq.f32.partialorder %v1654, %v2905
      %vm2924 = vcmp.eq.f32.partialorder %v1655, %v2905
      %vm2925 = vcmp.eq.f32.partialorder %v1656, %v2905
      %vm2926 = vcmp.eq.f32.partialorder %v1657, %v2905
      %vm2927 = vcmp.eq.f32.partialorder %v1650, %v2909
      %vm2928 = vcmp.eq.f32.partialorder %v1651, %v2909
      %vm2929 = vcmp.eq.f32.partialorder %v1652, %v2909
      %vm2930 = vcmp.eq.f32.partialorder %v1653, %v2909
      %vm2931 = vcmp.eq.f32.partialorder %v1654, %v2909
      %vm2932 = vcmp.eq.f32.partialorder %v1655, %v2909
      %vm2933 = vcmp.eq.f32.partialorder %v1656, %v2909
      %vm2934 = vcmp.eq.f32.partialorder %v1657, %v2909
      %2935 = vset.pattern.permute.xlu0 1
      %2936 = vperm.xlu0 %2935, %v2644
      %v2937 = vpop.permute.xlu0 %2936
      %2939 = vset.pattern.permute.xlu0 1
      %2940 = vperm.xlu0 %2939, %v2645
      %v2941 = vpop.permute.xlu0 %2940
      %2943 = vset.pattern.permute.xlu0 1
      %2944 = vperm.xlu0 %2943, %v2646
      %v2945 = vpop.permute.xlu0 %2944
      %v2947 = vsel %vm2911, %v2937, 0.0
      %v2948 = vsel %vm2912, %v2937, 0.0
      %v2949 = vsel %vm2913, %v2937, 0.0
      %v2950 = vsel %vm2914, %v2937, 0.0
      %v2951 = vsel %vm2915, %v2937, 0.0
      %v2952 = vsel %vm2916, %v2937, 0.0
      %v2953 = vsel %vm2917, %v2937, 0.0
      %v2954 = vsel %vm2918, %v2937, 0.0
      %v2955 = vsel %vm2919, %v2941, 0.0
      %v2956 = vsel %vm2920, %v2941, 0.0
      %v2957 = vsel %vm2921, %v2941, 0.0
      %v2958 = vsel %vm2922, %v2941, 0.0
      %v2959 = vsel %vm2923, %v2941, 0.0
      %v2960 = vsel %vm2924, %v2941, 0.0
      %v2961 = vsel %vm2925, %v2941, 0.0
      %v2962 = vsel %vm2926, %v2941, 0.0
      %v2963 = vsel %vm2927, %v2945, 0.0
      %v2964 = vsel %vm2928, %v2945, 0.0
      %v2965 = vsel %vm2929, %v2945, 0.0
      %v2966 = vsel %vm2930, %v2945, 0.0
      %v2967 = vsel %vm2931, %v2945, 0.0
      %v2968 = vsel %vm2932, %v2945, 0.0
      %v2969 = vsel %vm2933, %v2945, 0.0
      %v2970 = vsel %vm2934, %v2945, 0.0
      %v2971 = vadd.f32 %v2875, %v2947
      %v2972 = vadd.f32 %v2876, %v2948
      %v2973 = vadd.f32 %v2877, %v2949
      %v2974 = vadd.f32 %v2878, %v2950
      %v2975 = vadd.f32 %v2879, %v2951
      %v2976 = vadd.f32 %v2880, %v2952
      %v2977 = vadd.f32 %v2881, %v2953
      %v2978 = vadd.f32 %v2882, %v2954
      %v2979 = vadd.f32 %v2883, %v2955
      %v2980 = vadd.f32 %v2884, %v2956
      %v2981 = vadd.f32 %v2885, %v2957
      %v2982 = vadd.f32 %v2886, %v2958
      %v2983 = vadd.f32 %v2887, %v2959
      %v2984 = vadd.f32 %v2888, %v2960
      %v2985 = vadd.f32 %v2889, %v2961
      %v2986 = vadd.f32 %v2890, %v2962
      %v2987 = vadd.f32 %v2891, %v2963
      %v2988 = vadd.f32 %v2892, %v2964
      %v2989 = vadd.f32 %v2893, %v2965
      %v2990 = vadd.f32 %v2894, %v2966
      %v2991 = vadd.f32 %v2895, %v2967
      %v2992 = vadd.f32 %v2896, %v2968
      %v2993 = vadd.f32 %v2897, %v2969
      %v2994 = vadd.f32 %v2898, %v2970
      %v2995 = vmul.f32 %v2971, %v2803
      %v2996 = vmul.f32 %v2972, %v2804
      %v2997 = vmul.f32 %v2973, %v2805
      %v2998 = vmul.f32 %v2974, %v2806
      %v2999 = vmul.f32 %v2975, %v2807
      %v3000 = vmul.f32 %v2976, %v2808
      %v3001 = vmul.f32 %v2977, %v2809
      %v3002 = vmul.f32 %v2978, %v2810
      %v3003 = vmul.f32 %v2979, %v2811
      %v3004 = vmul.f32 %v2980, %v2812
      %v3005 = vmul.f32 %v2981, %v2813
      %v3006 = vmul.f32 %v2982, %v2814
      %v3007 = vmul.f32 %v2983, %v2815
      %v3008 = vmul.f32 %v2984, %v2816
      %v3009 = vmul.f32 %v2985, %v2817
      %v3010 = vmul.f32 %v2986, %v2818
      %v3011 = vmul.f32 %v2987, %v2819
      %v3012 = vmul.f32 %v2988, %v2820
      %v3013 = vmul.f32 %v2989, %v2821
      %v3014 = vmul.f32 %v2990, %v2822
      %v3015 = vmul.f32 %v2991, %v2823
      %v3016 = vmul.f32 %v2992, %v2824
      %v3017 = vmul.f32 %v2993, %v2825
      %v3018 = vmul.f32 %v2994, %v2826
      %3019 = vmatprep.subr.mxu0 0.0
      %3020 = vmatpush1.msra.mxu0 %v1497
      %3021 = vmatprep.subr.mxu0 0.0
      %3022 = vmatpush1.msra.mxu0 %v1498
      %3023 = vmatprep.subr.mxu0 0.0
      %3024 = vmatpush1.msra.mxu0 %v1499
      %3025 = vmatprep.subr.mxu0 0.0
      %3026 = vmatpush1.msra.mxu0 %v1500
      %3027 = vmatprep.subr.mxu0 0.0
      %3028 = vmatpush1.msra.mxu0 %v1501
      %3029 = vmatprep.subr.mxu0 0.0
      %3030 = vmatpush1.msra.mxu0 %v1502
      %3031 = vmatprep.subr.mxu0 0.0
      %3032 = vmatpush1.msra.mxu0 %v1503
      %3033 = vmatprep.subr.mxu0 0.0
      %3034 = vmatpush1.msra.mxu0 %v1504
      %3035 = vmatprep.subr.mxu0 0.0
      %3036 = vmatpush1.msra.mxu0 %v1505
      %3037 = vmatprep.subr.mxu0 0.0
      %3038 = vmatpush1.msra.mxu0 %v1506
      %3039 = vmatprep.subr.mxu0 0.0
      %3040 = vmatpush1.msra.mxu0 %v1507
      %3041 = vmatprep.subr.mxu0 0.0
      %3042 = vmatpush1.msra.mxu0 %v1508
      %3043 = vmatprep.subr.mxu0 0.0
      %3044 = vmatpush1.msra.mxu0 %v1509
      %3045 = vmatprep.subr.mxu0 0.0
      %3046 = vmatpush1.msra.mxu0 %v1510
      %3047 = vmatprep.subr.mxu0 0.0
      %3048 = vmatpush1.msra.mxu0 %v1511
      %3049 = vmatprep.subr.mxu0 0.0
      %3050 = vmatpush1.msra.mxu0 %v1512
      %3051 = vmatprep.subr.mxu0 0.0
      %3052 = vmatpush1.msra.mxu0 %v1513
      %3053 = vmatprep.subr.mxu0 0.0
      %3054 = vmatpush1.msra.mxu0 %v1514
      %3055 = vmatprep.subr.mxu0 0.0
      %3056 = vmatpush1.msra.mxu0 %v1515
      %3057 = vmatprep.subr.mxu0 0.0
      %3058 = vmatpush1.msra.mxu0 %v1516
      %3059 = vmatprep.subr.mxu0 0.0
      %3060 = vmatpush1.msra.mxu0 %v1517
      %3061 = vmatprep.subr.mxu0 0.0
      %3062 = vmatpush1.msra.mxu0 %v1518
      %3063 = vmatprep.subr.mxu0 0.0
      %3064 = vmatpush1.msra.mxu0 %v1519
      %3065 = vmatprep.subr.mxu0 0.0
      %3066 = vmatpush1.msra.mxu0 %v1520
      %3067 = vmatprep.subr.mxu0 0.0
      %3068 = vmatpush1.msra.mxu0 %v1521
      %3069 = vmatprep.subr.mxu0 0.0
      %3070 = vmatpush1.msra.mxu0 %v1522
      %3071 = vmatprep.subr.mxu0 0.0
      %3072 = vmatpush1.msra.mxu0 %v1523
      %3073 = vmatprep.subr.mxu0 0.0
      %3074 = vmatpush1.msra.mxu0 %v1524
      %3075 = vmatprep.subr.mxu0 0.0
      %3076 = vmatpush1.msra.mxu0 %v1525
      %3077 = vmatprep.subr.mxu0 0.0
      %3078 = vmatpush1.msra.mxu0 %v1526
      %3079 = vmatprep.subr.mxu0 0.0
      %3080 = vmatpush1.msra.mxu0 %v1527
      %3081 = vmatprep.subr.mxu0 0.0
      %3082 = vmatpush1.msra.mxu0 %v1528
      %3083 = vmatprep.mubr.f32.mxu0 %v2996
      %3084 = vmatmul.mubr.f32.gmra.mrb[0].mxu0 %v2995
      %v3085 = vpop.f32.mrb[0].mxu0
      %v3086 = vadd.f32 0.0, %v3085
      %v3087 = vpop.f32.mrb[0].mxu0
      %3088 = vmatprep.mubr.f32.mxu0 %v3004
      %3089 = vmatmul.mubr.f32.gmra.mrb[0].mxu0 %v3003
      %v3090 = vpop.f32.mrb[0].mxu0
      %v3091 = vadd.f32 0.0, %v3090
      %v3092 = vpop.f32.mrb[0].mxu0
      %3093 = vmatprep.mubr.f32.mxu0 %v3012
      %3094 = vmatmul.mubr.f32.gmra.mrb[0].mxu0 %v3011
      %v3095 = vpop.f32.mrb[0].mxu0
      %v3096 = vadd.f32 0.0, %v3095
      %v3097 = vpop.f32.mrb[0].mxu0
      %3098 = vdwg.mxu0
      %3099 = vmatprep.subr.mxu0 0.0
      %3100 = vmatpush1.msra.mxu0 %v1529
      %3101 = vmatprep.subr.mxu0 0.0
      %3102 = vmatpush1.msra.mxu0 %v1530
      %3103 = vmatprep.subr.mxu0 0.0
      %3104 = vmatpush1.msra.mxu0 %v1531
      %3105 = vmatprep.subr.mxu0 0.0
      %3106 = vmatpush1.msra.mxu0 %v1532
      %3107 = vmatprep.subr.mxu0 0.0
      %3108 = vmatpush1.msra.mxu0 %v1533
      %3109 = vmatprep.subr.mxu0 0.0
      %3110 = vmatpush1.msra.mxu0 %v1534
      %3111 = vmatprep.subr.mxu0 0.0
      %3112 = vmatpush1.msra.mxu0 %v1535
      %3113 = vmatprep.subr.mxu0 0.0
      %3114 = vmatpush1.msra.mxu0 %v1536
      %3115 = vmatprep.subr.mxu0 0.0
      %3116 = vmatpush1.msra.mxu0 %v1537
      %3117 = vmatprep.subr.mxu0 0.0
      %3118 = vmatpush1.msra.mxu0 %v1538
      %3119 = vmatprep.subr.mxu0 0.0
      %3120 = vmatpush1.msra.mxu0 %v1539
      %3121 = vmatprep.subr.mxu0 0.0
      %3122 = vmatpush1.msra.mxu0 %v1540
      %3123 = vmatprep.subr.mxu0 0.0
      %3124 = vmatpush1.msra.mxu0 %v1541
      %3125 = vmatprep.subr.mxu0 0.0
      %3126 = vmatpush1.msra.mxu0 %v1542
      %3127 = vmatprep.subr.mxu0 0.0
      %3128 = vmatpush1.msra.mxu0 %v1543
      %3129 = vmatprep.subr.mxu0 0.0
      %3130 = vmatpush1.msra.mxu0 %v1544
      %3131 = vmatprep.subr.mxu0 0.0
      %3132 = vmatpush1.msra.mxu0 %v1545
      %3133 = vmatprep.subr.mxu0 0.0
      %3134 = vmatpush1.msra.mxu0 %v1546
      %3135 = vmatprep.subr.mxu0 0.0
      %3136 = vmatpush1.msra.mxu0 %v1547
      %3137 = vmatprep.subr.mxu0 0.0
      %3138 = vmatpush1.msra.mxu0 %v1548
      %3139 = vmatprep.subr.mxu0 0.0
      %3140 = vmatpush1.msra.mxu0 %v1549
      %3141 = vmatprep.subr.mxu0 0.0
      %3142 = vmatpush1.msra.mxu0 %v1550
      %3143 = vmatprep.subr.mxu0 0.0
      %3144 = vmatpush1.msra.mxu0 %v1551
      %3145 = vmatprep.subr.mxu0 0.0
      %3146 = vmatpush1.msra.mxu0 %v1552
      %3147 = vmatprep.subr.mxu0 0.0
      %3148 = vmatpush1.msra.mxu0 %v1553
      %3149 = vmatprep.subr.mxu0 0.0
      %3150 = vmatpush1.msra.mxu0 %v1554
      %3151 = vmatprep.subr.mxu0 0.0
      %3152 = vmatpush1.msra.mxu0 %v1555
      %3153 = vmatprep.subr.mxu0 0.0
      %3154 = vmatpush1.msra.mxu0 %v1556
      %3155 = vmatprep.subr.mxu0 0.0
      %3156 = vmatpush1.msra.mxu0 %v1557
      %3157 = vmatprep.subr.mxu0 0.0
      %3158 = vmatpush1.msra.mxu0 %v1558
      %3159 = vmatprep.subr.mxu0 0.0
      %3160 = vmatpush1.msra.mxu0 %v1559
      %3161 = vmatprep.subr.mxu0 0.0
      %3162 = vmatpush1.msra.mxu0 %v1560
      %3163 = vmatprep.mubr.f32.mxu0 %v2998
      %3164 = vmatmul.mubr.f32.gmra.mrb[0].mxu0 %v2997
      %v3165 = vpop.f32.mrb[0].mxu0
      %v3166 = vadd.f32 %v3086, %v3165
      %v3167 = vpop.f32.mrb[0].mxu0
      %3168 = vmatprep.mubr.f32.mxu0 %v3006
      %3169 = vmatmul.mubr.f32.gmra.mrb[0].mxu0 %v3005
      %v3170 = vpop.f32.mrb[0].mxu0
      %v3171 = vadd.f32 %v3091, %v3170
      %v3172 = vpop.f32.mrb[0].mxu0
      %3173 = vmatprep.mubr.f32.mxu0 %v3014
      %3174 = vmatmul.mubr.f32.gmra.mrb[0].mxu0 %v3013
      %v3175 = vpop.f32.mrb[0].mxu0
      %v3176 = vadd.f32 %v3096, %v3175
      %v3177 = vpop.f32.mrb[0].mxu0
      %3178 = vdwg.mxu0
      %3179 = vmatprep.subr.mxu0 0.0
      %3180 = vmatpush1.msra.mxu0 %v1561
      %3181 = vmatprep.subr.mxu0 0.0
      %3182 = vmatpush1.msra.mxu0 %v1562
      %3183 = vmatprep.subr.mxu0 0.0
      %3184 = vmatpush1.msra.mxu0 %v1563
      %3185 = vmatprep.subr.mxu0 0.0
      %3186 = vmatpush1.msra.mxu0 %v1564
      %3187 = vmatprep.subr.mxu0 0.0
      %3188 = vmatpush1.msra.mxu0 %v1565
      %3189 = vmatprep.subr.mxu0 0.0
      %3190 = vmatpush1.msra.mxu0 %v1566
      %3191 = vmatprep.subr.mxu0 0.0
      %3192 = vmatpush1.msra.mxu0 %v1567
      %3193 = vmatprep.subr.mxu0 0.0
      %3194 = vmatpush1.msra.mxu0 %v1568
      %3195 = vmatprep.subr.mxu0 0.0
      %3196 = vmatpush1.msra.mxu0 %v1569
      %3197 = vmatprep.subr.mxu0 0.0
      %3198 = vmatpush1.msra.mxu0 %v1570
      %3199 = vmatprep.subr.mxu0 0.0
      %3200 = vmatpush1.msra.mxu0 %v1571
      %3201 = vmatprep.subr.mxu0 0.0
      %3202 = vmatpush1.msra.mxu0 %v1572
      %3203 = vmatprep.subr.mxu0 0.0
      %3204 = vmatpush1.msra.mxu0 %v1573
      %3205 = vmatprep.subr.mxu0 0.0
      %3206 = vmatpush1.msra.mxu0 %v1574
      %3207 = vmatprep.subr.mxu0 0.0
      %3208 = vmatpush1.msra.mxu0 %v1575
      %3209 = vmatprep.subr.mxu0 0.0
      %3210 = vmatpush1.msra.mxu0 %v1576
      %3211 = vmatprep.subr.mxu0 0.0
      %3212 = vmatpush1.msra.mxu0 %v1577
      %3213 = vmatprep.subr.mxu0 0.0
      %3214 = vmatpush1.msra.mxu0 %v1578
      %3215 = vmatprep.subr.mxu0 0.0
      %3216 = vmatpush1.msra.mxu0 %v1579
      %3217 = vmatprep.subr.mxu0 0.0
      %3218 = vmatpush1.msra.mxu0 %v1580
      %3219 = vmatprep.subr.mxu0 0.0
      %3220 = vmatpush1.msra.mxu0 %v1581
      %3221 = vmatprep.subr.mxu0 0.0
      %3222 = vmatpush1.msra.mxu0 %v1582
      %3223 = vmatprep.subr.mxu0 0.0
      %3224 = vmatpush1.msra.mxu0 %v1583
      %3225 = vmatprep.subr.mxu0 0.0
      %3226 = vmatpush1.msra.mxu0 %v1584
      %3227 = vmatprep.subr.mxu0 0.0
      %3228 = vmatpush1.msra.mxu0 %v1585
      %3229 = vmatprep.subr.mxu0 0.0
      %3230 = vmatpush1.msra.mxu0 %v1586
      %3231 = vmatprep.subr.mxu0 0.0
      %3232 = vmatpush1.msra.mxu0 %v1587
      %3233 = vmatprep.subr.mxu0 0.0
      %3234 = vmatpush1.msra.mxu0 %v1588
      %3235 = vmatprep.subr.mxu0 0.0
      %3236 = vmatpush1.msra.mxu0 %v1589
      %3237 = vmatprep.subr.mxu0 0.0
      %3238 = vmatpush1.msra.mxu0 %v1590
      %3239 = vmatprep.subr.mxu0 0.0
      %3240 = vmatpush1.msra.mxu0 %v1591
      %3241 = vmatprep.subr.mxu0 0.0
      %3242 = vmatpush1.msra.mxu0 %v1592
      %3243 = vmatprep.mubr.f32.mxu0 %v3000
      %3244 = vmatmul.mubr.f32.gmra.mrb[0].mxu0 %v2999
      %v3245 = vpop.f32.mrb[0].mxu0
      %v3246 = vadd.f32 %v3166, %v3245
      %v3247 = vpop.f32.mrb[0].mxu0
      %3248 = vmatprep.mubr.f32.mxu0 %v3008
      %3249 = vmatmul.mubr.f32.gmra.mrb[0].mxu0 %v3007
      %v3250 = vpop.f32.mrb[0].mxu0
      %v3251 = vadd.f32 %v3171, %v3250
      %v3252 = vpop.f32.mrb[0].mxu0
      %3253 = vmatprep.mubr.f32.mxu0 %v3016
      %3254 = vmatmul.mubr.f32.gmra.mrb[0].mxu0 %v3015
      %v3255 = vpop.f32.mrb[0].mxu0
      %v3256 = vadd.f32 %v3176, %v3255
      %v3257 = vpop.f32.mrb[0].mxu0
      %3258 = vdwg.mxu0
      %3259 = vmatprep.subr.mxu0 0.0
      %3260 = vmatpush1.msra.mxu0 %v1593
      %3261 = vmatprep.subr.mxu0 0.0
      %3262 = vmatpush1.msra.mxu0 %v1594
      %3263 = vmatprep.subr.mxu0 0.0
      %3264 = vmatpush1.msra.mxu0 %v1595
      %3265 = vmatprep.subr.mxu0 0.0
      %3266 = vmatpush1.msra.mxu0 %v1596
      %3267 = vmatprep.subr.mxu0 0.0
      %3268 = vmatpush1.msra.mxu0 %v1597
      %3269 = vmatprep.subr.mxu0 0.0
      %3270 = vmatpush1.msra.mxu0 %v1598
      %3271 = vmatprep.subr.mxu0 0.0
      %3272 = vmatpush1.msra.mxu0 %v1599
      %3273 = vmatprep.subr.mxu0 0.0
      %3274 = vmatpush1.msra.mxu0 %v1600
      %3275 = vmatprep.subr.mxu0 0.0
      %3276 = vmatpush1.msra.mxu0 %v1601
      %3277 = vmatprep.subr.mxu0 0.0
      %3278 = vmatpush1.msra.mxu0 %v1602
      %3279 = vmatprep.subr.mxu0 0.0
      %3280 = vmatpush1.msra.mxu0 %v1603
      %3281 = vmatprep.subr.mxu0 0.0
      %3282 = vmatpush1.msra.mxu0 %v1604
      %3283 = vmatprep.subr.mxu0 0.0
      %3284 = vmatpush1.msra.mxu0 %v1605
      %3285 = vmatprep.subr.mxu0 0.0
      %3286 = vmatpush1.msra.mxu0 %v1606
      %3287 = vmatprep.subr.mxu0 0.0
      %3288 = vmatpush1.msra.mxu0 %v1607
      %3289 = vmatprep.subr.mxu0 0.0
      %3290 = vmatpush1.msra.mxu0 %v1608
      %3291 = vmatprep.subr.mxu0 0.0
      %3292 = vmatpush1.msra.mxu0 %v1609
      %3293 = vmatprep.subr.mxu0 0.0
      %3294 = vmatpush1.msra.mxu0 %v1610
      %3295 = vmatprep.subr.mxu0 0.0
      %3296 = vmatpush1.msra.mxu0 %v1611
      %3297 = vmatprep.subr.mxu0 0.0
      %3298 = vmatpush1.msra.mxu0 %v1612
      %3299 = vmatprep.subr.mxu0 0.0
      %3300 = vmatpush1.msra.mxu0 %v1613
      %3301 = vmatprep.subr.mxu0 0.0
      %3302 = vmatpush1.msra.mxu0 %v1614
      %3303 = vmatprep.subr.mxu0 0.0
      %3304 = vmatpush1.msra.mxu0 %v1615
      %3305 = vmatprep.subr.mxu0 0.0
      %3306 = vmatpush1.msra.mxu0 %v1616
      %3307 = vmatprep.subr.mxu0 0.0
      %3308 = vmatpush1.msra.mxu0 %v1617
      %3309 = vmatprep.subr.mxu0 0.0
      %3310 = vmatpush1.msra.mxu0 %v1618
      %3311 = vmatprep.subr.mxu0 0.0
      %3312 = vmatpush1.msra.mxu0 %v1619
      %3313 = vmatprep.subr.mxu0 0.0
      %3314 = vmatpush1.msra.mxu0 %v1620
      %3315 = vmatprep.subr.mxu0 0.0
      %3316 = vmatpush1.msra.mxu0 %v1621
      %3317 = vmatprep.subr.mxu0 0.0
      %3318 = vmatpush1.msra.mxu0 %v1622
      %3319 = vmatprep.subr.mxu0 0.0
      %3320 = vmatpush1.msra.mxu0 %v1623
      %3321 = vmatprep.subr.mxu0 0.0
      %3322 = vmatpush1.msra.mxu0 %v1624
      %3323 = vmatprep.mubr.f32.mxu0 %v3002
      %3324 = vmatmul.mubr.f32.gmra.mrb[0].mxu0 %v3001
      %v3325 = vpop.f32.mrb[0].mxu0
      %v3326 = vadd.f32 %v3246, %v3325
      %v3327 = vpop.f32.mrb[0].mxu0
      %3328 = vmatprep.mubr.f32.mxu0 %v3010
      %3329 = vmatmul.mubr.f32.gmra.mrb[0].mxu0 %v3009
      %v3330 = vpop.f32.mrb[0].mxu0
      %v3331 = vadd.f32 %v3251, %v3330
      %v3332 = vpop.f32.mrb[0].mxu0
      %3333 = vmatprep.mubr.f32.mxu0 %v3018
      %3334 = vmatmul.mubr.f32.gmra.mrb[0].mxu0 %v3017
      %v3335 = vpop.f32.mrb[0].mxu0
      %v3336 = vadd.f32 %v3256, %v3335
      %v3337 = vpop.f32.mrb[0].mxu0
      %3338 = vdwg.mxu0
      %v3339 = vld [vmem:[%s254] sm:$0xff]
      %v3340 = vld [vmem:[%s254 + $0x8] sm:$0xff]
      %v3341 = vld [vmem:[%s254 + $0x10] sm:$0xff]
      %v3342 = vld [vmem:[%s254 + $0x18] sm:$0xff]
      %v3343 = vld [vmem:[%s254 + $0x20] sm:$0xff]
      %v3344 = vld [vmem:[%s254 + $0x28] sm:$0xff]
      %v3345 = vld [vmem:[%s254 + $0x30] sm:$0xff]
      %v3346 = vld [vmem:[%s254 + $0x38] sm:$0xff]
      %v3347 = vld [vmem:[%s254 + $0x40] sm:$0xff]
      %v3348 = vld [vmem:[%s254 + $0x48] sm:$0xff]
      %v3349 = vld [vmem:[%s254 + $0x50] sm:$0xff]
      %v3350 = vld [vmem:[%s254 + $0x58] sm:$0xff]
      %v3351 = vld [vmem:[%s254 + $0x60] sm:$0xff]
      %v3352 = vld [vmem:[%s254 + $0x68] sm:$0xff]
      %v3353 = vld [vmem:[%s254 + $0x70] sm:$0xff]
      %v3354 = vld [vmem:[%s254 + $0x78] sm:$0xff]
      %v3355 = vld [vmem:[%s254 + $0x80] sm:$0xff]
      %v3356 = vld [vmem:[%s254 + $0x88] sm:$0xff]
      %v3357 = vld [vmem:[%s254 + $0x90] sm:$0xff]
      %v3358 = vld [vmem:[%s254 + $0x98] sm:$0xff]
      %v3359 = vld [vmem:[%s254 + $0xa0] sm:$0xff]
      %v3360 = vld [vmem:[%s254 + $0xa8] sm:$0xff]
      %v3361 = vld [vmem:[%s254 + $0xb0] sm:$0xff]
      %v3362 = vld [vmem:[%s254 + $0xb8] sm:$0xff]
      %v3363 = vld [vmem:[%s254 + $0xc0] sm:$0xff]
      %v3364 = vld [vmem:[%s254 + $0xc8] sm:$0xff]
      %v3365 = vld [vmem:[%s254 + $0xd0] sm:$0xff]
      %v3366 = vld [vmem:[%s254 + $0xd8] sm:$0xff]
      %v3367 = vld [vmem:[%s254 + $0xe0] sm:$0xff]
      %v3368 = vld [vmem:[%s254 + $0xe8] sm:$0xff]
      %v3369 = vld [vmem:[%s254 + $0xf0] sm:$0xff]
      %v3370 = vld [vmem:[%s254 + $0xf8] sm:$0xff]
      %v3371 = vld [vmem:[%s4 + $0x18] sm:$0x1]
      %v3372 = vld [vmem:[%s4 + $0x20] sm:$0xff]
      %v3373 = vld [vmem:[%s4 + $0x28] sm:$0xff]
      %v3374 = vld [vmem:[%s4 + $0x30] sm:$0xff]
      %v3375 = vld [vmem:[%s4 + $0x38] sm:$0xff]
      %v3376 = vld [vmem:[%s4 + $0x40] sm:$0xff]
      %v3377 = vld [vmem:[%s4 + $0x48] sm:$0xff]
      %v3378 = vlaneseq
      %v3379 = vshrl.u32 %v3378, 7
      %v3380 = vsub.s32 0, %v3379
      %v3381 = vrot.slane %v3371, %v3380
      %vm3382 = vcmask 392192
      %v3384 = vsel %vm3382, %v3339, 0
      %v3387 = vsel %vm3382, %v3340, 0
      %v3390 = vsel %vm3382, %v3341, 0
      %v3393 = vsel %vm3382, %v3342, 0
      %v3396 = vsel %vm3382, %v3343, 0
      %v3399 = vsel %vm3382, %v3344, 0
      %v3402 = vsel %vm3382, %v3345, 0
      %v3405 = vsel %vm3382, %v3346, 0
      %v3408 = vsel %vm3382, %v3347, 0
      %v3411 = vsel %vm3382, %v3348, 0
      %v3414 = vsel %vm3382, %v3349, 0
      %v3417 = vsel %vm3382, %v3350, 0
      %v3420 = vsel %vm3382, %v3351, 0
      %v3423 = vsel %vm3382, %v3352, 0
      %v3426 = vsel %vm3382, %v3353, 0
      %v3429 = vsel %vm3382, %v3354, 0
      %v3432 = vsel %vm3382, %v3355, 0
      %v3435 = vsel %vm3382, %v3356, 0
      %v3438 = vsel %vm3382, %v3357, 0
      %v3441 = vsel %vm3382, %v3358, 0
      %v3444 = vsel %vm3382, %v3359, 0
      %v3447 = vsel %vm3382, %v3360, 0
      %v3450 = vsel %vm3382, %v3361, 0
      %v3453 = vsel %vm3382, %v3362, 0
      %v3456 = vsel %vm3382, %v3363, 0
      %v3459 = vsel %vm3382, %v3364, 0
      %v3462 = vsel %vm3382, %v3365, 0
      %v3465 = vsel %vm3382, %v3366, 0
      %v3468 = vsel %vm3382, %v3367, 0
      %v3471 = vsel %vm3382, %v3368, 0
      %v3474 = vsel %vm3382, %v3369, 0
      %v3477 = vsel %vm3382, %v3370, 0
      %3479 = vmatprep.subr.mxu0 0.0
      %3480 = vmatpush1.msra.mxu0 %v3372
      %3481 = vmatprep.subr.mxu0 0.0
      %3482 = vmatpush1.msra.mxu0 %v3373
      %3483 = vmatprep.subr.mxu0 0.0
      %3484 = vmatpush1.msra.mxu0 %v3374
      %3485 = vmatprep.subr.mxu0 0.0
      %3486 = vmatpush1.msra.mxu0 %v3375
      %3487 = vmatprep.subr.mxu0 0.0
      %3488 = vmatpush1.msra.mxu0 %v3376
      %3489 = vmatprep.subr.mxu0 0.0
      %3490 = vmatpush1.msra.mxu0 %v3377
      %3491 = vmatprep.subr.mxu0 0.0
      %3492 = vmatpush1.msra.mxu0 0.0
      %3493 = vmatprep.subr.mxu0 0.0
      %3494 = vmatpush1.msra.mxu0 0.0
      %3495 = vmatprep.subr.mxu0 0.0
      %3496 = vmatpush1.msra.mxu0 0.0
      %3497 = vmatprep.subr.mxu0 0.0
      %3498 = vmatpush1.msra.mxu0 0.0
      %3499 = vmatprep.subr.mxu0 0.0
      %3500 = vmatpush1.msra.mxu0 0.0
      %3501 = vmatprep.subr.mxu0 0.0
      %3502 = vmatpush1.msra.mxu0 0.0
      %3503 = vmatprep.subr.mxu0 0.0
      %3504 = vmatpush1.msra.mxu0 0.0
      %3505 = vmatprep.subr.mxu0 0.0
      %3506 = vmatpush1.msra.mxu0 0.0
      %3507 = vmatprep.subr.mxu0 0.0
      %3508 = vmatpush1.msra.mxu0 0.0
      %3509 = vmatprep.subr.mxu0 0.0
      %3510 = vmatpush1.msra.mxu0 0.0
      %3511 = vmatprep.subr.mxu0 0.0
      %3512 = vmatpush1.msra.mxu0 0.0
      %3513 = vmatprep.subr.mxu0 0.0
      %3514 = vmatpush1.msra.mxu0 0.0
      %3515 = vmatprep.subr.mxu0 0.0
      %3516 = vmatpush1.msra.mxu0 0.0
      %3517 = vmatprep.subr.mxu0 0.0
      %3518 = vmatpush1.msra.mxu0 0.0
      %3519 = vmatprep.subr.mxu0 0.0
      %3520 = vmatpush1.msra.mxu0 0.0
      %3521 = vmatprep.subr.mxu0 0.0
      %3522 = vmatpush1.msra.mxu0 0.0
      %3523 = vmatprep.subr.mxu0 0.0
      %3524 = vmatpush1.msra.mxu0 0.0
      %3525 = vmatprep.subr.mxu0 0.0
      %3526 = vmatpush1.msra.mxu0 0.0
      %3527 = vmatprep.subr.mxu0 0.0
      %3528 = vmatpush1.msra.mxu0 0.0
      %3529 = vmatprep.subr.mxu0 0.0
      %3530 = vmatpush1.msra.mxu0 0.0
      %3531 = vmatprep.subr.mxu0 0.0
      %3532 = vmatpush1.msra.mxu0 0.0
      %3533 = vmatprep.subr.mxu0 0.0
      %3534 = vmatpush1.msra.mxu0 0.0
      %3535 = vmatprep.subr.mxu0 0.0
      %3536 = vmatpush1.msra.mxu0 0.0
      %3537 = vmatprep.subr.mxu0 0.0
      %3538 = vmatpush1.msra.mxu0 0.0
      %3539 = vmatprep.subr.mxu0 0.0
      %3540 = vmatpush1.msra.mxu0 0.0
      %3541 = vmatprep.subr.mxu0 0.0
      %3542 = vmatpush1.msra.mxu0 0.0
      %3543 = vmatprep.mubr.f32.mxu0 0.0
      %3544 = vmatmul.mubr.f32.gmra.mrb[0].mxu0 %v3384
      %v3545 = vpop.f32.mrb[0].mxu0
      %v3546 = vadd.f32 %v3381, %v3545
      %v3547 = vpop.f32.mrb[0].mxu0
      %3548 = vmatprep.mubr.f32.mxu0 0.0
      %3549 = vmatmul.mubr.f32.gmra.mrb[0].mxu0 %v3387
      %v3550 = vpop.f32.mrb[0].mxu0
      %v3551 = vadd.f32 %v3381, %v3550
      %v3552 = vpop.f32.mrb[0].mxu0
      %3553 = vmatprep.mubr.f32.mxu0 0.0
      %3554 = vmatmul.mubr.f32.gmra.mrb[0].mxu0 %v3390
      %v3555 = vpop.f32.mrb[0].mxu0
      %v3556 = vadd.f32 %v3381, %v3555
      %v3557 = vpop.f32.mrb[0].mxu0
      %3558 = vmatprep.mubr.f32.mxu0 0.0
      %3559 = vmatmul.mubr.f32.gmra.mrb[0].mxu0 %v3393
      %v3560 = vpop.f32.mrb[0].mxu0
      %v3561 = vadd.f32 %v3381, %v3560
      %v3562 = vpop.f32.mrb[0].mxu0
      %3563 = vmatprep.mubr.f32.mxu0 0.0
      %3564 = vmatmul.mubr.f32.gmra.mrb[0].mxu0 %v3396
      %v3565 = vpop.f32.mrb[0].mxu0
      %v3566 = vadd.f32 %v3381, %v3565
      %v3567 = vpop.f32.mrb[0].mxu0
      %3568 = vmatprep.mubr.f32.mxu0 0.0
      %3569 = vmatmul.mubr.f32.gmra.mrb[0].mxu0 %v3399
      %v3570 = vpop.f32.mrb[0].mxu0
      %v3571 = vadd.f32 %v3381, %v3570
      %v3572 = vpop.f32.mrb[0].mxu0
      %3573 = vmatprep.mubr.f32.mxu0 0.0
      %3574 = vmatmul.mubr.f32.gmra.mrb[0].mxu0 %v3402
      %v3575 = vpop.f32.mrb[0].mxu0
      %v3576 = vadd.f32 %v3381, %v3575
      %v3577 = vpop.f32.mrb[0].mxu0
      %3578 = vmatprep.mubr.f32.mxu0 0.0
      %3579 = vmatmul.mubr.f32.gmra.mrb[0].mxu0 %v3405
      %v3580 = vpop.f32.mrb[0].mxu0
      %v3581 = vadd.f32 %v3381, %v3580
      %v3582 = vpop.f32.mrb[0].mxu0
      %3583 = vmatprep.mubr.f32.mxu0 0.0
      %3584 = vmatmul.mubr.f32.gmra.mrb[0].mxu0 %v3408
      %v3585 = vpop.f32.mrb[0].mxu0
      %v3586 = vadd.f32 %v3381, %v3585
      %v3587 = vpop.f32.mrb[0].mxu0
      %3588 = vmatprep.mubr.f32.mxu0 0.0
      %3589 = vmatmul.mubr.f32.gmra.mrb[0].mxu0 %v3411
      %v3590 = vpop.f32.mrb[0].mxu0
      %v3591 = vadd.f32 %v3381, %v3590
      %v3592 = vpop.f32.mrb[0].mxu0
      %3593 = vmatprep.mubr.f32.mxu0 0.0
      %3594 = vmatmul.mubr.f32.gmra.mrb[0].mxu0 %v3414
      %v3595 = vpop.f32.mrb[0].mxu0
      %v3596 = vadd.f32 %v3381, %v3595
      %v3597 = vpop.f32.mrb[0].mxu0
      %3598 = vmatprep.mubr.f32.mxu0 0.0
      %3599 = vmatmul.mubr.f32.gmra.mrb[0].mxu0 %v3417
      %v3600 = vpop.f32.mrb[0].mxu0
      %v3601 = vadd.f32 %v3381, %v3600
      %v3602 = vpop.f32.mrb[0].mxu0
      %3603 = vmatprep.mubr.f32.mxu0 0.0
      %3604 = vmatmul.mubr.f32.gmra.mrb[0].mxu0 %v3420
      %v3605 = vpop.f32.mrb[0].mxu0
      %v3606 = vadd.f32 %v3381, %v3605
      %v3607 = vpop.f32.mrb[0].mxu0
      %3608 = vmatprep.mubr.f32.mxu0 0.0
      %3609 = vmatmul.mubr.f32.gmra.mrb[0].mxu0 %v3423
      %v3610 = vpop.f32.mrb[0].mxu0
      %v3611 = vadd.f32 %v3381, %v3610
      %v3612 = vpop.f32.mrb[0].mxu0
      %3613 = vmatprep.mubr.f32.mxu0 0.0
      %3614 = vmatmul.mubr.f32.gmra.mrb[0].mxu0 %v3426
      %v3615 = vpop.f32.mrb[0].mxu0
      %v3616 = vadd.f32 %v3381, %v3615
      %v3617 = vpop.f32.mrb[0].mxu0
      %3618 = vmatprep.mubr.f32.mxu0 0.0
      %3619 = vmatmul.mubr.f32.gmra.mrb[0].mxu0 %v3429
      %v3620 = vpop.f32.mrb[0].mxu0
      %v3621 = vadd.f32 %v3381, %v3620
      %v3622 = vpop.f32.mrb[0].mxu0
      %3623 = vmatprep.mubr.f32.mxu0 0.0
      %3624 = vmatmul.mubr.f32.gmra.mrb[0].mxu0 %v3432
      %v3625 = vpop.f32.mrb[0].mxu0
      %v3626 = vadd.f32 %v3381, %v3625
      %v3627 = vpop.f32.mrb[0].mxu0
      %3628 = vmatprep.mubr.f32.mxu0 0.0
      %3629 = vmatmul.mubr.f32.gmra.mrb[0].mxu0 %v3435
      %v3630 = vpop.f32.mrb[0].mxu0
      %v3631 = vadd.f32 %v3381, %v3630
      %v3632 = vpop.f32.mrb[0].mxu0
      %3633 = vmatprep.mubr.f32.mxu0 0.0
      %3634 = vmatmul.mubr.f32.gmra.mrb[0].mxu0 %v3438
      %v3635 = vpop.f32.mrb[0].mxu0
      %v3636 = vadd.f32 %v3381, %v3635
      %v3637 = vpop.f32.mrb[0].mxu0
      %3638 = vmatprep.mubr.f32.mxu0 0.0
      %3639 = vmatmul.mubr.f32.gmra.mrb[0].mxu0 %v3441
      %v3640 = vpop.f32.mrb[0].mxu0
      %v3641 = vadd.f32 %v3381, %v3640
      %v3642 = vpop.f32.mrb[0].mxu0
      %3643 = vmatprep.mubr.f32.mxu0 0.0
      %3644 = vmatmul.mubr.f32.gmra.mrb[0].mxu0 %v3444
      %v3645 = vpop.f32.mrb[0].mxu0
      %v3646 = vadd.f32 %v3381, %v3645
      %v3647 = vpop.f32.mrb[0].mxu0
      %3648 = vmatprep.mubr.f32.mxu0 0.0
      %3649 = vmatmul.mubr.f32.gmra.mrb[0].mxu0 %v3447
      %v3650 = vpop.f32.mrb[0].mxu0
      %v3651 = vadd.f32 %v3381, %v3650
      %v3652 = vpop.f32.mrb[0].mxu0
      %3653 = vmatprep.mubr.f32.mxu0 0.0
      %3654 = vmatmul.mubr.f32.gmra.mrb[0].mxu0 %v3450
      %v3655 = vpop.f32.mrb[0].mxu0
      %v3656 = vadd.f32 %v3381, %v3655
      %v3657 = vpop.f32.mrb[0].mxu0
      %3658 = vmatprep.mubr.f32.mxu0 0.0
      %3659 = vmatmul.mubr.f32.gmra.mrb[0].mxu0 %v3453
      %v3660 = vpop.f32.mrb[0].mxu0
      %v3661 = vadd.f32 %v3381, %v3660
      %v3662 = vpop.f32.mrb[0].mxu0
      %3663 = vmatprep.mubr.f32.mxu0 0.0
      %3664 = vmatmul.mubr.f32.gmra.mrb[0].mxu0 %v3456
      %v3665 = vpop.f32.mrb[0].mxu0
      %v3666 = vadd.f32 %v3381, %v3665
      %v3667 = vpop.f32.mrb[0].mxu0
      %3668 = vmatprep.mubr.f32.mxu0 0.0
      %3669 = vmatmul.mubr.f32.gmra.mrb[0].mxu0 %v3459
      %v3670 = vpop.f32.mrb[0].mxu0
      %v3671 = vadd.f32 %v3381, %v3670
      %v3672 = vpop.f32.mrb[0].mxu0
      %3673 = vmatprep.mubr.f32.mxu0 0.0
      %3674 = vmatmul.mubr.f32.gmra.mrb[0].mxu0 %v3462
      %v3675 = vpop.f32.mrb[0].mxu0
      %v3676 = vadd.f32 %v3381, %v3675
      %v3677 = vpop.f32.mrb[0].mxu0
      %3678 = vmatprep.mubr.f32.mxu0 0.0
      %3679 = vmatmul.mubr.f32.gmra.mrb[0].mxu0 %v3465
      %v3680 = vpop.f32.mrb[0].mxu0
      %v3681 = vadd.f32 %v3381, %v3680
      %v3682 = vpop.f32.mrb[0].mxu0
      %3683 = vmatprep.mubr.f32.mxu0 0.0
      %3684 = vmatmul.mubr.f32.gmra.mrb[0].mxu0 %v3468
      %v3685 = vpop.f32.mrb[0].mxu0
      %v3686 = vadd.f32 %v3381, %v3685
      %v3687 = vpop.f32.mrb[0].mxu0
      %3688 = vmatprep.mubr.f32.mxu0 0.0
      %3689 = vmatmul.mubr.f32.gmra.mrb[0].mxu0 %v3471
      %v3690 = vpop.f32.mrb[0].mxu0
      %v3691 = vadd.f32 %v3381, %v3690
      %v3692 = vpop.f32.mrb[0].mxu0
      %3693 = vmatprep.mubr.f32.mxu0 0.0
      %3694 = vmatmul.mubr.f32.gmra.mrb[0].mxu0 %v3474
      %v3695 = vpop.f32.mrb[0].mxu0
      %v3696 = vadd.f32 %v3381, %v3695
      %v3697 = vpop.f32.mrb[0].mxu0
      %3698 = vmatprep.mubr.f32.mxu0 0.0
      %3699 = vmatmul.mubr.f32.gmra.mrb[0].mxu0 %v3477
      %v3700 = vpop.f32.mrb[0].mxu0
      %v3701 = vadd.f32 %v3381, %v3700
      %v3702 = vpop.f32.mrb[0].mxu0
      %3703 = vdwg.mxu0
      %v3704 = vmax.f32 %v3546, 0.0
      %v3705 = vmax.f32 %v3551, 0.0
      %v3706 = vmax.f32 %v3556, 0.0
      %v3707 = vmax.f32 %v3561, 0.0
      %v3708 = vmax.f32 %v3566, 0.0
      %v3709 = vmax.f32 %v3571, 0.0
      %v3710 = vmax.f32 %v3576, 0.0
      %v3711 = vmax.f32 %v3581, 0.0
      %v3712 = vmax.f32 %v3586, 0.0
      %v3713 = vmax.f32 %v3591, 0.0
      %v3714 = vmax.f32 %v3596, 0.0
      %v3715 = vmax.f32 %v3601, 0.0
      %v3716 = vmax.f32 %v3606, 0.0
      %v3717 = vmax.f32 %v3611, 0.0
      %v3718 = vmax.f32 %v3616, 0.0
      %v3719 = vmax.f32 %v3621, 0.0
      %v3720 = vmax.f32 %v3626, 0.0
      %v3721 = vmax.f32 %v3631, 0.0
      %v3722 = vmax.f32 %v3636, 0.0
      %v3723 = vmax.f32 %v3641, 0.0
      %v3724 = vmax.f32 %v3646, 0.0
      %v3725 = vmax.f32 %v3651, 0.0
      %v3726 = vmax.f32 %v3656, 0.0
      %v3727 = vmax.f32 %v3661, 0.0
      %v3728 = vmax.f32 %v3666, 0.0
      %v3729 = vmax.f32 %v3671, 0.0
      %v3730 = vmax.f32 %v3676, 0.0
      %v3731 = vmax.f32 %v3681, 0.0
      %v3732 = vmax.f32 %v3686, 0.0
      %v3733 = vmax.f32 %v3691, 0.0
      %v3734 = vmax.f32 %v3696, 0.0
      %v3735 = vmax.f32 %v3701, 0.0
      %v3736 = vmul.f32 %v1634, 0.0625
      %v3737 = vmul.f32 %v1635, 0.0625
      %v3738 = vfloor.f32 %v3736
      %v3739 = vfloor.f32 %v3737
      %v3740 = vmul.f32 %v3738, 16.0
      %v3741 = vmul.f32 %v3739, 16.0
      %v3742 = vsub.f32 %v1634, %v3740
      %v3743 = vsub.f32 %v1635, %v3741
      %v3744 = vmul.f32 %v265, 0.234375
      %v3745 = vmul.f32 %v266, 0.234375
      %v3746 = vmul.f32 %v267, 0.234375
      %v3747 = vfloor.f32 %v3744
      %v3748 = vfloor.f32 %v3745
      %v3749 = vfloor.f32 %v3746
      %v3750 = vsub.f32 %v3744, %v3747
      %v3751 = vsub.f32 %v3745, %v3748
      %v3752 = vsub.f32 %v3746, %v3749
      %vm3753 = vcmp.ge.f32.partialorder %v3747, 0.0
      %vm3754 = vcmp.ge.f32.partialorder %v3748, 0.0
      %vm3755 = vcmp.ge.f32.partialorder %v3749, 0.0
      %vm3756 = vcmp.le.f32.partialorder %v3747, 15.0
      %vm3757 = vcmp.le.f32.partialorder %v3748, 15.0
      %vm3758 = vcmp.le.f32.partialorder %v3749, 15.0
      %vm3759 = vmand %vm3753, %vm3756
      %vm3760 = vmand %vm3754, %vm3757
      %vm3761 = vmand %vm3755, %vm3758
      %v3762 = vsub.f32 1.0, %v3750
      %v3763 = vsub.f32 1.0, %v3751
      %v3764 = vsub.f32 1.0, %v3752
      %v3765 = vsel %vm3759, %v3762, 0.0
      %v3766 = vsel %vm3760, %v3763, 0.0
      %v3767 = vsel %vm3761, %v3764, 0.0
      %v3768 = vadd.f32 %v3747, 1.0
      %v3769 = vadd.f32 %v3748, 1.0
      %v3770 = vadd.f32 %v3749, 1.0
      %vm3771 = vcmp.ge.f32.partialorder %v3768, 0.0
      %vm3772 = vcmp.ge.f32.partialorder %v3769, 0.0
      %vm3773 = vcmp.ge.f32.partialorder %v3770, 0.0
      %vm3774 = vcmp.le.f32.partialorder %v3768, 15.0
      %vm3775 = vcmp.le.f32.partialorder %v3769, 15.0
      %vm3776 = vcmp.le.f32.partialorder %v3770, 15.0
      %vm3777 = vmand %vm3771, %vm3774
      %vm3778 = vmand %vm3772, %vm3775
      %vm3779 = vmand %vm3773, %vm3776
      %v3780 = vsel %vm3777, %v3750, 0.0
      %v3781 = vsel %vm3778, %v3751, 0.0
      %v3782 = vsel %vm3779, %v3752, 0.0
      %3784 = vset.pattern.permute.xlu0 0
      %3785 = vperm.xlu0 %3784, %v3747
      %v3786 = vpop.permute.xlu0 %3785
      %3789 = vset.pattern.permute.xlu0 0
      %3790 = vperm.xlu0 %3789, %v3748
      %v3791 = vpop.permute.xlu0 %3790
      %3794 = vset.pattern.permute.xlu0 0
      %3795 = vperm.xlu0 %3794, %v3749
      %v3796 = vpop.permute.xlu0 %3795
      %vm3798 = vcmp.eq.f32.partialorder %v3742, %v3786
      %vm3799 = vcmp.eq.f32.partialorder %v3743, %v3786
      %vm3800 = vcmp.eq.f32.partialorder %v3742, %v3791
      %vm3801 = vcmp.eq.f32.partialorder %v3743, %v3791
      %vm3802 = vcmp.eq.f32.partialorder %v3742, %v3796
      %vm3803 = vcmp.eq.f32.partialorder %v3743, %v3796
      %3805 = vset.pattern.permute.xlu0 0
      %3806 = vperm.xlu0 %3805, %v3765
      %v3807 = vpop.permute.xlu0 %3806
      %3810 = vset.pattern.permute.xlu0 0
      %3811 = vperm.xlu0 %3810, %v3766
      %v3812 = vpop.permute.xlu0 %3811
      %3815 = vset.pattern.permute.xlu0 0
      %3816 = vperm.xlu0 %3815, %v3767
      %v3817 = vpop.permute.xlu0 %3816
      %v3819 = vsel %vm3798, %v3807, 0.0
      %v3820 = vsel %vm3799, %v3807, 0.0
      %v3821 = vsel %vm3800, %v3812, 0.0
      %v3822 = vsel %vm3801, %v3812, 0.0
      %v3823 = vsel %vm3802, %v3817, 0.0
      %v3824 = vsel %vm3803, %v3817, 0.0
      %3826 = vset.pattern.permute.xlu0 0
      %3827 = vperm.xlu0 %3826, %v3768
      %v3828 = vpop.permute.xlu0 %3827
      %3831 = vset.pattern.permute.xlu0 0
      %3832 = vperm.xlu0 %3831, %v3769
      %v3833 = vpop.permute.xlu0 %3832
      %3836 = vset.pattern.permute.xlu0 0
      %3837 = vperm.xlu0 %3836, %v3770
      %v3838 = vpop.permute.xlu0 %3837
      %vm3840 = vcmp.eq.f32.partialorder %v3742, %v3828
      %vm3841 = vcmp.eq.f32.partialorder %v3743, %v3828
      %vm3842 = vcmp.eq.f32.partialorder %v3742, %v3833
      %vm3843 = vcmp.eq.f32.partialorder %v3743, %v3833
      %vm3844 = vcmp.eq.f32.partialorder %v3742, %v3838
      %vm3845 = vcmp.eq.f32.partialorder %v3743, %v3838
      %3847 = vset.pattern.permute.xlu0 0
      %3848 = vperm.xlu0 %3847, %v3780
      %v3849 = vpop.permute.xlu0 %3848
      %3852 = vset.pattern.permute.xlu0 0
      %3853 = vperm.xlu0 %3852, %v3781
      %v3854 = vpop.permute.xlu0 %3853
      %3857 = vset.pattern.permute.xlu0 0
      %3858 = vperm.xlu0 %3857, %v3782
      %v3859 = vpop.permute.xlu0 %3858
      %v3861 = vsel %vm3840, %v3849, 0.0
      %v3862 = vsel %vm3841, %v3849, 0.0
      %v3863 = vsel %vm3842, %v3854, 0.0
      %v3864 = vsel %vm3843, %v3854, 0.0
      %v3865 = vsel %vm3844, %v3859, 0.0
      %v3866 = vsel %vm3845, %v3859, 0.0
      %v3867 = vadd.f32 %v3819, %v3861
      %v3868 = vadd.f32 %v3820, %v3862
      %v3869 = vadd.f32 %v3821, %v3863
      %v3870 = vadd.f32 %v3822, %v3864
      %v3871 = vadd.f32 %v3823, %v3865
      %v3872 = vadd.f32 %v3824, %v3866
      %3873 = vset.pattern.permute.xlu0 1
      %3874 = vperm.xlu0 %3873, %v3747
      %v3875 = vpop.permute.xlu0 %3874
      %3877 = vset.pattern.permute.xlu0 1
      %3878 = vperm.xlu0 %3877, %v3748
      %v3879 = vpop.permute.xlu0 %3878
      %3881 = vset.pattern.permute.xlu0 1
      %3882 = vperm.xlu0 %3881, %v3749
      %v3883 = vpop.permute.xlu0 %3882
      %vm3885 = vcmp.eq.f32.partialorder %v3738, %v3875
      %vm3886 = vcmp.eq.f32.partialorder %v3739, %v3875
      %vm3887 = vcmp.eq.f32.partialorder %v3738, %v3879
      %vm3888 = vcmp.eq.f32.partialorder %v3739, %v3879
      %vm3889 = vcmp.eq.f32.partialorder %v3738, %v3883
      %vm3890 = vcmp.eq.f32.partialorder %v3739, %v3883
      %3891 = vset.pattern.permute.xlu0 1
      %3892 = vperm.xlu0 %3891, %v3765
      %v3893 = vpop.permute.xlu0 %3892
      %3895 = vset.pattern.permute.xlu0 1
      %3896 = vperm.xlu0 %3895, %v3766
      %v3897 = vpop.permute.xlu0 %3896
      %3899 = vset.pattern.permute.xlu0 1
      %3900 = vperm.xlu0 %3899, %v3767
      %v3901 = vpop.permute.xlu0 %3900
      %v3903 = vsel %vm3885, %v3893, 0.0
      %v3904 = vsel %vm3886, %v3893, 0.0
      %v3905 = vsel %vm3887, %v3897, 0.0
      %v3906 = vsel %vm3888, %v3897, 0.0
      %v3907 = vsel %vm3889, %v3901, 0.0
      %v3908 = vsel %vm3890, %v3901, 0.0
      %3909 = vset.pattern.permute.xlu0 1
      %3910 = vperm.xlu0 %3909, %v3768
      %v3911 = vpop.permute.xlu0 %3910
      %3913 = vset.pattern.permute.xlu0 1
      %3914 = vperm.xlu0 %3913, %v3769
      %v3915 = vpop.permute.xlu0 %3914
      %3917 = vset.pattern.permute.xlu0 1
      %3918 = vperm.xlu0 %3917, %v3770
      %v3919 = vpop.permute.xlu0 %3918
      %vm3921 = vcmp.eq.f32.partialorder %v3738, %v3911
      %vm3922 = vcmp.eq.f32.partialorder %v3739, %v3911
      %vm3923 = vcmp.eq.f32.partialorder %v3738, %v3915
      %vm3924 = vcmp.eq.f32.partialorder %v3739, %v3915
      %vm3925 = vcmp.eq.f32.partialorder %v3738, %v3919
      %vm3926 = vcmp.eq.f32.partialorder %v3739, %v3919
      %3927 = vset.pattern.permute.xlu0 1
      %3928 = vperm.xlu0 %3927, %v3780
      %v3929 = vpop.permute.xlu0 %3928
      %3931 = vset.pattern.permute.xlu0 1
      %3932 = vperm.xlu0 %3931, %v3781
      %v3933 = vpop.permute.xlu0 %3932
      %3935 = vset.pattern.permute.xlu0 1
      %3936 = vperm.xlu0 %3935, %v3782
      %v3937 = vpop.permute.xlu0 %3936
      %v3939 = vsel %vm3921, %v3929, 0.0
      %v3940 = vsel %vm3922, %v3929, 0.0
      %v3941 = vsel %vm3923, %v3933, 0.0
      %v3942 = vsel %vm3924, %v3933, 0.0
      %v3943 = vsel %vm3925, %v3937, 0.0
      %v3944 = vsel %vm3926, %v3937, 0.0
      %v3945 = vadd.f32 %v3903, %v3939
      %v3946 = vadd.f32 %v3904, %v3940
      %v3947 = vadd.f32 %v3905, %v3941
      %v3948 = vadd.f32 %v3906, %v3942
      %v3949 = vadd.f32 %v3907, %v3943
      %v3950 = vadd.f32 %v3908, %v3944
      %v3951 = vmul.f32 %v3945, %v3867
      %v3952 = vmul.f32 %v3946, %v3868
      %v3953 = vmul.f32 %v3947, %v3869
      %v3954 = vmul.f32 %v3948, %v3870
      %v3955 = vmul.f32 %v3949, %v3871
      %v3956 = vmul.f32 %v3950, %v3872
      %3957 = vmatprep.subr.mxu0 0.0
      %3958 = vmatpush1.msra.mxu0 %v3704
      %3959 = vmatprep.subr.mxu0 0.0
      %3960 = vmatpush1.msra.mxu0 %v3705
      %3961 = vmatprep.subr.mxu0 0.0
      %3962 = vmatpush1.msra.mxu0 %v3706
      %3963 = vmatprep.subr.mxu0 0.0
      %3964 = vmatpush1.msra.mxu0 %v3707
      %3965 = vmatprep.subr.mxu0 0.0
      %3966 = vmatpush1.msra.mxu0 %v3708
      %3967 = vmatprep.subr.mxu0 0.0
      %3968 = vmatpush1.msra.mxu0 %v3709
      %3969 = vmatprep.subr.mxu0 0.0
      %3970 = vmatpush1.msra.mxu0 %v3710
      %3971 = vmatprep.subr.mxu0 0.0
      %3972 = vmatpush1.msra.mxu0 %v3711
      %3973 = vmatprep.subr.mxu0 0.0
      %3974 = vmatpush1.msra.mxu0 %v3712
      %3975 = vmatprep.subr.mxu0 0.0
      %3976 = vmatpush1.msra.mxu0 %v3713
      %3977 = vmatprep.subr.mxu0 0.0
      %3978 = vmatpush1.msra.mxu0 %v3714
      %3979 = vmatprep.subr.mxu0 0.0
      %3980 = vmatpush1.msra.mxu0 %v3715
      %3981 = vmatprep.subr.mxu0 0.0
      %3982 = vmatpush1.msra.mxu0 %v3716
      %3983 = vmatprep.subr.mxu0 0.0
      %3984 = vmatpush1.msra.mxu0 %v3717
      %3985 = vmatprep.subr.mxu0 0.0
      %3986 = vmatpush1.msra.mxu0 %v3718
      %3987 = vmatprep.subr.mxu0 0.0
      %3988 = vmatpush1.msra.mxu0 %v3719
      %3989 = vmatprep.subr.mxu0 0.0
      %3990 = vmatpush1.msra.mxu0 %v3720
      %3991 = vmatprep.subr.mxu0 0.0
      %3992 = vmatpush1.msra.mxu0 %v3721
      %3993 = vmatprep.subr.mxu0 0.0
      %3994 = vmatpush1.msra.mxu0 %v3722
      %3995 = vmatprep.subr.mxu0 0.0
      %3996 = vmatpush1.msra.mxu0 %v3723
      %3997 = vmatprep.subr.mxu0 0.0
      %3998 = vmatpush1.msra.mxu0 %v3724
      %3999 = vmatprep.subr.mxu0 0.0
      %4000 = vmatpush1.msra.mxu0 %v3725
      %4001 = vmatprep.subr.mxu0 0.0
      %4002 = vmatpush1.msra.mxu0 %v3726
      %4003 = vmatprep.subr.mxu0 0.0
      %4004 = vmatpush1.msra.mxu0 %v3727
      %4005 = vmatprep.subr.mxu0 0.0
      %4006 = vmatpush1.msra.mxu0 %v3728
      %4007 = vmatprep.subr.mxu0 0.0
      %4008 = vmatpush1.msra.mxu0 %v3729
      %4009 = vmatprep.subr.mxu0 0.0
      %4010 = vmatpush1.msra.mxu0 %v3730
      %4011 = vmatprep.subr.mxu0 0.0
      %4012 = vmatpush1.msra.mxu0 %v3731
      %4013 = vmatprep.subr.mxu0 0.0
      %4014 = vmatpush1.msra.mxu0 %v3732
      %4015 = vmatprep.subr.mxu0 0.0
      %4016 = vmatpush1.msra.mxu0 %v3733
      %4017 = vmatprep.subr.mxu0 0.0
      %4018 = vmatpush1.msra.mxu0 %v3734
      %4019 = vmatprep.subr.mxu0 0.0
      %4020 = vmatpush1.msra.mxu0 %v3735
      %4021 = vmatprep.mubr.f32.mxu0 %v3952
      %4022 = vmatmul.mubr.f32.gmra.mrb[0].mxu0 %v3951
      %v4023 = vpop.f32.mrb[0].mxu0
      %v4024 = vadd.f32 0.0, %v4023
      %v4025 = vpop.f32.mrb[0].mxu0
      %4026 = vmatprep.mubr.f32.mxu0 %v3954
      %4027 = vmatmul.mubr.f32.gmra.mrb[0].mxu0 %v3953
      %v4028 = vpop.f32.mrb[0].mxu0
      %v4029 = vadd.f32 0.0, %v4028
      %v4030 = vpop.f32.mrb[0].mxu0
      %4031 = vmatprep.mubr.f32.mxu0 %v3956
      %4032 = vmatmul.mubr.f32.gmra.mrb[0].mxu0 %v3955
      %v4033 = vpop.f32.mrb[0].mxu0
      %v4034 = vadd.f32 0.0, %v4033
      %v4035 = vpop.f32.mrb[0].mxu0
      %4036 = vdwg.mxu0
      %v4037 = vld [vmem:[%s4 + $0x168] sm:$0x1]
      %v4038 = vld [vmem:[%s4 + $0x170] sm:$0xff]
      %v4039 = vld [vmem:[%s4 + $0x178] sm:$0xff]
      %v4040 = vld [vmem:[%s4 + $0x180] sm:$0xff]
      %v4041 = vld [vmem:[%s4 + $0x188] sm:$0xff]
      %v4042 = vlaneseq
      %v4043 = vshrl.u32 %v4042, 7
      %v4044 = vsub.s32 0, %v4043
      %v4045 = vrot.slane %v4037, %v4044
      %v4047 = vsel %vm2414, %v4024, 0
      %v4050 = vsel %vm2414, %v4029, 0
      %v4053 = vsel %vm2414, %v4034, 0
      %4055 = vmatprep.subr.mxu0 0.0
      %4056 = vmatpush1.msra.mxu0 %v4038
      %4057 = vmatprep.subr.mxu0 0.0
      %4058 = vmatpush1.msra.mxu0 %v4039
      %4059 = vmatprep.subr.mxu0 0.0
      %4060 = vmatpush1.msra.mxu0 %v4040
      %4061 = vmatprep.subr.mxu0 0.0
      %4062 = vmatpush1.msra.mxu0 %v4041
      %4063 = vmatprep.subr.mxu0 0.0
      %4064 = vmatpush1.msra.mxu0 0.0
      %4065 = vmatprep.subr.mxu0 0.0
      %4066 = vmatpush1.msra.mxu0 0.0
      %4067 = vmatprep.subr.mxu0 0.0
      %4068 = vmatpush1.msra.mxu0 0.0
      %4069 = vmatprep.subr.mxu0 0.0
      %4070 = vmatpush1.msra.mxu0 0.0
      %4071 = vmatprep.subr.mxu0 0.0
      %4072 = vmatpush1.msra.mxu0 0.0
      %4073 = vmatprep.subr.mxu0 0.0
      %4074 = vmatpush1.msra.mxu0 0.0
      %4075 = vmatprep.subr.mxu0 0.0
      %4076 = vmatpush1.msra.mxu0 0.0
      %4077 = vmatprep.subr.mxu0 0.0
      %4078 = vmatpush1.msra.mxu0 0.0
      %4079 = vmatprep.subr.mxu0 0.0
      %4080 = vmatpush1.msra.mxu0 0.0
      %4081 = vmatprep.subr.mxu0 0.0
      %4082 = vmatpush1.msra.mxu0 0.0
      %4083 = vmatprep.subr.mxu0 0.0
      %4084 = vmatpush1.msra.mxu0 0.0
      %4085 = vmatprep.subr.mxu0 0.0
      %4086 = vmatpush1.msra.mxu0 0.0
      %4087 = vmatprep.subr.mxu0 0.0
      %4088 = vmatpush1.msra.mxu0 0.0
      %4089 = vmatprep.subr.mxu0 0.0
      %4090 = vmatpush1.msra.mxu0 0.0
      %4091 = vmatprep.subr.mxu0 0.0
      %4092 = vmatpush1.msra.mxu0 0.0
      %4093 = vmatprep.subr.mxu0 0.0
      %4094 = vmatpush1.msra.mxu0 0.0
      %4095 = vmatprep.subr.mxu0 0.0
      %4096 = vmatpush1.msra.mxu0 0.0
      %4097 = vmatprep.subr.mxu0 0.0
      %4098 = vmatpush1.msra.mxu0 0.0
      %4099 = vmatprep.subr.mxu0 0.0
      %4100 = vmatpush1.msra.mxu0 0.0
      %4101 = vmatprep.subr.mxu0 0.0
      %4102 = vmatpush1.msra.mxu0 0.0
      %4103 = vmatprep.subr.mxu0 0.0
      %4104 = vmatpush1.msra.mxu0 0.0
      %4105 = vmatprep.subr.mxu0 0.0
      %4106 = vmatpush1.msra.mxu0 0.0
      %4107 = vmatprep.subr.mxu0 0.0
      %4108 = vmatpush1.msra.mxu0 0.0
      %4109 = vmatprep.subr.mxu0 0.0
      %4110 = vmatpush1.msra.mxu0 0.0
      %4111 = vmatprep.subr.mxu0 0.0
      %4112 = vmatpush1.msra.mxu0 0.0
      %4113 = vmatprep.subr.mxu0 0.0
      %4114 = vmatpush1.msra.mxu0 0.0
      %4115 = vmatprep.subr.mxu0 0.0
      %4116 = vmatpush1.msra.mxu0 0.0
      %4117 = vmatprep.subr.mxu0 0.0
      %4118 = vmatpush1.msra.mxu0 0.0
      %4119 = vmatprep.mubr.f32.mxu0 0.0
      %4120 = vmatmul.mubr.f32.gmra.mrb[0].mxu0 %v4047
      %v4121 = vpop.f32.mrb[0].mxu0
      %v4122 = vadd.f32 %v4045, %v4121
      %v4123 = vpop.f32.mrb[0].mxu0
      %4124 = vmatprep.mubr.f32.mxu0 0.0
      %4125 = vmatmul.mubr.f32.gmra.mrb[0].mxu0 %v4050
      %v4126 = vpop.f32.mrb[0].mxu0
      %v4127 = vadd.f32 %v4045, %v4126
      %v4128 = vpop.f32.mrb[0].mxu0
      %4129 = vmatprep.mubr.f32.mxu0 0.0
      %4130 = vmatmul.mubr.f32.gmra.mrb[0].mxu0 %v4053
      %v4131 = vpop.f32.mrb[0].mxu0
      %v4132 = vadd.f32 %v4045, %v4131
      %v4133 = vpop.f32.mrb[0].mxu0
      %4134 = vdwg.mxu0
      %v4135 = vmax.f32 %v4122, 0.0
      %v4136 = vmax.f32 %v4127, 0.0
      %v4137 = vmax.f32 %v4132, 0.0
      %v4138 = vld [vmem:[%s4 + $0x190] sm:$0x1]
      %v4139 = vld [vmem:[%s4 + $0x198] sm:$0xff]
      %v4140 = vld [vmem:[%s4 + $0x1a0] sm:$0xff]
      %v4141 = vld [vmem:[%s4 + $0x1a8] sm:$0xff]
      %v4142 = vld [vmem:[%s4 + $0x1b0] sm:$0xff]
      %v4143 = vlaneseq
      %v4144 = vshrl.u32 %v4143, 7
      %v4145 = vsub.s32 0, %v4144
      %v4146 = vrot.slane %v4138, %v4145
      %v4148 = vsel %vm2414, %v4135, 0
      %v4151 = vsel %vm2414, %v4136, 0
      %v4154 = vsel %vm2414, %v4137, 0
      %4156 = vmatprep.subr.mxu0 0.0
      %4157 = vmatpush1.msra.mxu0 %v4139
      %4158 = vmatprep.subr.mxu0 0.0
      %4159 = vmatpush1.msra.mxu0 %v4140
      %4160 = vmatprep.subr.mxu0 0.0
      %4161 = vmatpush1.msra.mxu0 %v4141
      %4162 = vmatprep.subr.mxu0 0.0
      %4163 = vmatpush1.msra.mxu0 %v4142
      %4164 = vmatprep.subr.mxu0 0.0
      %4165 = vmatpush1.msra.mxu0 0.0
      %4166 = vmatprep.subr.mxu0 0.0
      %4167 = vmatpush1.msra.mxu0 0.0
      %4168 = vmatprep.subr.mxu0 0.0
      %4169 = vmatpush1.msra.mxu0 0.0
      %4170 = vmatprep.subr.mxu0 0.0
      %4171 = vmatpush1.msra.mxu0 0.0
      %4172 = vmatprep.subr.mxu0 0.0
      %4173 = vmatpush1.msra.mxu0 0.0
      %4174 = vmatprep.subr.mxu0 0.0
      %4175 = vmatpush1.msra.mxu0 0.0
      %4176 = vmatprep.subr.mxu0 0.0
      %4177 = vmatpush1.msra.mxu0 0.0
      %4178 = vmatprep.subr.mxu0 0.0
      %4179 = vmatpush1.msra.mxu0 0.0
      %4180 = vmatprep.subr.mxu0 0.0
      %4181 = vmatpush1.msra.mxu0 0.0
      %4182 = vmatprep.subr.mxu0 0.0
      %4183 = vmatpush1.msra.mxu0 0.0
      %4184 = vmatprep.subr.mxu0 0.0
      %4185 = vmatpush1.msra.mxu0 0.0
      %4186 = vmatprep.subr.mxu0 0.0
      %4187 = vmatpush1.msra.mxu0 0.0
      %4188 = vmatprep.subr.mxu0 0.0
      %4189 = vmatpush1.msra.mxu0 0.0
      %4190 = vmatprep.subr.mxu0 0.0
      %4191 = vmatpush1.msra.mxu0 0.0
      %4192 = vmatprep.subr.mxu0 0.0
      %4193 = vmatpush1.msra.mxu0 0.0
      %4194 = vmatprep.subr.mxu0 0.0
      %4195 = vmatpush1.msra.mxu0 0.0
      %4196 = vmatprep.subr.mxu0 0.0
      %4197 = vmatpush1.msra.mxu0 0.0
      %4198 = vmatprep.subr.mxu0 0.0
      %4199 = vmatpush1.msra.mxu0 0.0
      %4200 = vmatprep.subr.mxu0 0.0
      %4201 = vmatpush1.msra.mxu0 0.0
      %4202 = vmatprep.subr.mxu0 0.0
      %4203 = vmatpush1.msra.mxu0 0.0
      %4204 = vmatprep.subr.mxu0 0.0
      %4205 = vmatpush1.msra.mxu0 0.0
      %4206 = vmatprep.subr.mxu0 0.0
      %4207 = vmatpush1.msra.mxu0 0.0
      %4208 = vmatprep.subr.mxu0 0.0
      %4209 = vmatpush1.msra.mxu0 0.0
      %4210 = vmatprep.subr.mxu0 0.0
      %4211 = vmatpush1.msra.mxu0 0.0
      %4212 = vmatprep.subr.mxu0 0.0
      %4213 = vmatpush1.msra.mxu0 0.0
      %4214 = vmatprep.subr.mxu0 0.0
      %4215 = vmatpush1.msra.mxu0 0.0
      %4216 = vmatprep.subr.mxu0 0.0
      %4217 = vmatpush1.msra.mxu0 0.0
      %4218 = vmatprep.subr.mxu0 0.0
      %4219 = vmatpush1.msra.mxu0 0.0
      %4220 = vmatprep.mubr.f32.mxu0 0.0
      %4221 = vmatmul.mubr.f32.gmra.mrb[0].mxu0 %v4148
      %v4222 = vpop.f32.mrb[0].mxu0
      %v4223 = vadd.f32 %v4146, %v4222
      %v4224 = vpop.f32.mrb[0].mxu0
      %4225 = vmatprep.mubr.f32.mxu0 0.0
      %4226 = vmatmul.mubr.f32.gmra.mrb[0].mxu0 %v4151
      %v4227 = vpop.f32.mrb[0].mxu0
      %v4228 = vadd.f32 %v4146, %v4227
      %v4229 = vpop.f32.mrb[0].mxu0
      %4230 = vmatprep.mubr.f32.mxu0 0.0
      %4231 = vmatmul.mubr.f32.gmra.mrb[0].mxu0 %v4154
      %v4232 = vpop.f32.mrb[0].mxu0
      %v4233 = vadd.f32 %v4146, %v4232
      %v4234 = vpop.f32.mrb[0].mxu0
      %4235 = vdwg.mxu0
      %v4236 = vadd.f32 %v265, %v4223
      %v4237 = vadd.f32 %v266, %v4228
      %v4238 = vadd.f32 %v267, %v4233
      %v4239 = vmul.f32 %v4236, 0.234375
      %v4240 = vmul.f32 %v4237, 0.234375
      %v4241 = vmul.f32 %v4238, 0.234375
      %v4242 = vfloor.f32 %v4239
      %v4243 = vfloor.f32 %v4240
      %v4244 = vfloor.f32 %v4241
      %v4245 = vsub.f32 %v4239, %v4242
      %v4246 = vsub.f32 %v4240, %v4243
      %v4247 = vsub.f32 %v4241, %v4244
      %vm4248 = vcmp.ge.f32.partialorder %v4242, 0.0
      %vm4249 = vcmp.ge.f32.partialorder %v4243, 0.0
      %vm4250 = vcmp.ge.f32.partialorder %v4244, 0.0
      %vm4251 = vcmp.le.f32.partialorder %v4242, 15.0
      %vm4252 = vcmp.le.f32.partialorder %v4243, 15.0
      %vm4253 = vcmp.le.f32.partialorder %v4244, 15.0
      %vm4254 = vmand %vm4248, %vm4251
      %vm4255 = vmand %vm4249, %vm4252
      %vm4256 = vmand %vm4250, %vm4253
      %v4257 = vsub.f32 1.0, %v4245
      %v4258 = vsub.f32 1.0, %v4246
      %v4259 = vsub.f32 1.0, %v4247
      %v4260 = vsel %vm4254, %v4257, 0.0
      %v4261 = vsel %vm4255, %v4258, 0.0
      %v4262 = vsel %vm4256, %v4259, 0.0
      %v4263 = vadd.f32 %v4242, 1.0
      %v4264 = vadd.f32 %v4243, 1.0
      %v4265 = vadd.f32 %v4244, 1.0
      %vm4266 = vcmp.ge.f32.partialorder %v4263, 0.0
      %vm4267 = vcmp.ge.f32.partialorder %v4264, 0.0
      %vm4268 = vcmp.ge.f32.partialorder %v4265, 0.0
      %vm4269 = vcmp.le.f32.partialorder %v4263, 15.0
      %vm4270 = vcmp.le.f32.partialorder %v4264, 15.0
      %vm4271 = vcmp.le.f32.partialorder %v4265, 15.0
      %vm4272 = vmand %vm4266, %vm4269
      %vm4273 = vmand %vm4267, %vm4270
      %vm4274 = vmand %vm4268, %vm4271
      %v4275 = vsel %vm4272, %v4245, 0.0
      %v4276 = vsel %vm4273, %v4246, 0.0
      %v4277 = vsel %vm4274, %v4247, 0.0
      %4279 = vset.pattern.permute.xlu0 0
      %4280 = vperm.xlu0 %4279, %v4242
      %v4281 = vpop.permute.xlu0 %4280
      %4284 = vset.pattern.permute.xlu0 0
      %4285 = vperm.xlu0 %4284, %v4243
      %v4286 = vpop.permute.xlu0 %4285
      %4289 = vset.pattern.permute.xlu0 0
      %4290 = vperm.xlu0 %4289, %v4244
      %v4291 = vpop.permute.xlu0 %4290
      %vm4293 = vcmp.eq.f32.partialorder %v3742, %v4281
      %vm4294 = vcmp.eq.f32.partialorder %v3743, %v4281
      %vm4295 = vcmp.eq.f32.partialorder %v3742, %v4286
      %vm4296 = vcmp.eq.f32.partialorder %v3743, %v4286
      %vm4297 = vcmp.eq.f32.partialorder %v3742, %v4291
      %vm4298 = vcmp.eq.f32.partialorder %v3743, %v4291
      %4300 = vset.pattern.permute.xlu0 0
      %4301 = vperm.xlu0 %4300, %v4260
      %v4302 = vpop.permute.xlu0 %4301
      %4305 = vset.pattern.permute.xlu0 0
      %4306 = vperm.xlu0 %4305, %v4261
      %v4307 = vpop.permute.xlu0 %4306
      %4310 = vset.pattern.permute.xlu0 0
      %4311 = vperm.xlu0 %4310, %v4262
      %v4312 = vpop.permute.xlu0 %4311
      %v4314 = vsel %vm4293, %v4302, 0.0
      %v4315 = vsel %vm4294, %v4302, 0.0
      %v4316 = vsel %vm4295, %v4307, 0.0
      %v4317 = vsel %vm4296, %v4307, 0.0
      %v4318 = vsel %vm4297, %v4312, 0.0
      %v4319 = vsel %vm4298, %v4312, 0.0
      %4321 = vset.pattern.permute.xlu0 0
      %4322 = vperm.xlu0 %4321, %v4263
      %v4323 = vpop.permute.xlu0 %4322
      %4326 = vset.pattern.permute.xlu0 0
      %4327 = vperm.xlu0 %4326, %v4264
      %v4328 = vpop.permute.xlu0 %4327
      %4331 = vset.pattern.permute.xlu0 0
      %4332 = vperm.xlu0 %4331, %v4265
      %v4333 = vpop.permute.xlu0 %4332
      %vm4335 = vcmp.eq.f32.partialorder %v3742, %v4323
      %vm4336 = vcmp.eq.f32.partialorder %v3743, %v4323
      %vm4337 = vcmp.eq.f32.partialorder %v3742, %v4328
      %vm4338 = vcmp.eq.f32.partialorder %v3743, %v4328
      %vm4339 = vcmp.eq.f32.partialorder %v3742, %v4333
      %vm4340 = vcmp.eq.f32.partialorder %v3743, %v4333
      %4342 = vset.pattern.permute.xlu0 0
      %4343 = vperm.xlu0 %4342, %v4275
      %v4344 = vpop.permute.xlu0 %4343
      %4347 = vset.pattern.permute.xlu0 0
      %4348 = vperm.xlu0 %4347, %v4276
      %v4349 = vpop.permute.xlu0 %4348
      %4352 = vset.pattern.permute.xlu0 0
      %4353 = vperm.xlu0 %4352, %v4277
      %v4354 = vpop.permute.xlu0 %4353
      %v4356 = vsel %vm4335, %v4344, 0.0
      %v4357 = vsel %vm4336, %v4344, 0.0
      %v4358 = vsel %vm4337, %v4349, 0.0
      %v4359 = vsel %vm4338, %v4349, 0.0
      %v4360 = vsel %vm4339, %v4354, 0.0
      %v4361 = vsel %vm4340, %v4354, 0.0
      %v4362 = vadd.f32 %v4314, %v4356
      %v4363 = vadd.f32 %v4315, %v4357
      %v4364 = vadd.f32 %v4316, %v4358
      %v4365 = vadd.f32 %v4317, %v4359
      %v4366 = vadd.f32 %v4318, %v4360
      %v4367 = vadd.f32 %v4319, %v4361
      %4368 = vset.pattern.permute.xlu0 1
      %4369 = vperm.xlu0 %4368, %v4242
      %v4370 = vpop.permute.xlu0 %4369
      %4372 = vset.pattern.permute.xlu0 1
      %4373 = vperm.xlu0 %4372, %v4243
      %v4374 = vpop.permute.xlu0 %4373
      %4376 = vset.pattern.permute.xlu0 1
      %4377 = vperm.xlu0 %4376, %v4244
      %v4378 = vpop.permute.xlu0 %4377
      %vm4380 = vcmp.eq.f32.partialorder %v3738, %v4370
      %vm4381 = vcmp.eq.f32.partialorder %v3739, %v4370
      %vm4382 = vcmp.eq.f32.partialorder %v3738, %v4374
      %vm4383 = vcmp.eq.f32.partialorder %v3739, %v4374
      %vm4384 = vcmp.eq.f32.partialorder %v3738, %v4378
      %vm4385 = vcmp.eq.f32.partialorder %v3739, %v4378
      %4386 = vset.pattern.permute.xlu0 1
      %4387 = vperm.xlu0 %4386, %v4260
      %v4388 = vpop.permute.xlu0 %4387
      %4390 = vset.pattern.permute.xlu0 1
      %4391 = vperm.xlu0 %4390, %v4261
      %v4392 = vpop.permute.xlu0 %4391
      %4394 = vset.pattern.permute.xlu0 1
      %4395 = vperm.xlu0 %4394, %v4262
      %v4396 = vpop.permute.xlu0 %4395
      %v4398 = vsel %vm4380, %v4388, 0.0
      %v4399 = vsel %vm4381, %v4388, 0.0
      %v4400 = vsel %vm4382, %v4392, 0.0
      %v4401 = vsel %vm4383, %v4392, 0.0
      %v4402 = vsel %vm4384, %v4396, 0.0
      %v4403 = vsel %vm4385, %v4396, 0.0
      %4404 = vset.pattern.permute.xlu0 1
      %4405 = vperm.xlu0 %4404, %v4263
      %v4406 = vpop.permute.xlu0 %4405
      %4408 = vset.pattern.permute.xlu0 1
      %4409 = vperm.xlu0 %4408, %v4264
      %v4410 = vpop.permute.xlu0 %4409
      %4412 = vset.pattern.permute.xlu0 1
      %4413 = vperm.xlu0 %4412, %v4265
      %v4414 = vpop.permute.xlu0 %4413
      %vm4416 = vcmp.eq.f32.partialorder %v3738, %v4406
      %vm4417 = vcmp.eq.f32.partialorder %v3739, %v4406
      %vm4418 = vcmp.eq.f32.partialorder %v3738, %v4410
      %vm4419 = vcmp.eq.f32.partialorder %v3739, %v4410
      %vm4420 = vcmp.eq.f32.partialorder %v3738, %v4414
      %vm4421 = vcmp.eq.f32.partialorder %v3739, %v4414
      %4422 = vset.pattern.permute.xlu0 1
      %4423 = vperm.xlu0 %4422, %v4275
      %v4424 = vpop.permute.xlu0 %4423
      %4426 = vset.pattern.permute.xlu0 1
      %4427 = vperm.xlu0 %4426, %v4276
      %v4428 = vpop.permute.xlu0 %4427
      %4430 = vset.pattern.permute.xlu0 1
      %4431 = vperm.xlu0 %4430, %v4277
      %v4432 = vpop.permute.xlu0 %4431
      %v4434 = vsel %vm4416, %v4424, 0.0
      %v4435 = vsel %vm4417, %v4424, 0.0
      %v4436 = vsel %vm4418, %v4428, 0.0
      %v4437 = vsel %vm4419, %v4428, 0.0
      %v4438 = vsel %vm4420, %v4432, 0.0
      %v4439 = vsel %vm4421, %v4432, 0.0
      %v4440 = vadd.f32 %v4398, %v4434
      %v4441 = vadd.f32 %v4399, %v4435
      %v4442 = vadd.f32 %v4400, %v4436
      %v4443 = vadd.f32 %v4401, %v4437
      %v4444 = vadd.f32 %v4402, %v4438
      %v4445 = vadd.f32 %v4403, %v4439
      %v4446 = vmul.f32 %v4440, %v4362
      %v4447 = vmul.f32 %v4441, %v4363
      %v4448 = vmul.f32 %v4442, %v4364
      %v4449 = vmul.f32 %v4443, %v4365
      %v4450 = vmul.f32 %v4444, %v4366
      %v4451 = vmul.f32 %v4445, %v4367
      %4452 = vmatprep.subr.mxu0 0.0
      %4453 = vmatpush1.msra.mxu0 %v3704
      %4454 = vmatprep.subr.mxu0 0.0
      %4455 = vmatpush1.msra.mxu0 %v3705
      %4456 = vmatprep.subr.mxu0 0.0
      %4457 = vmatpush1.msra.mxu0 %v3706
      %4458 = vmatprep.subr.mxu0 0.0
      %4459 = vmatpush1.msra.mxu0 %v3707
      %4460 = vmatprep.subr.mxu0 0.0
      %4461 = vmatpush1.msra.mxu0 %v3708
      %4462 = vmatprep.subr.mxu0 0.0
      %4463 = vmatpush1.msra.mxu0 %v3709
      %4464 = vmatprep.subr.mxu0 0.0
      %4465 = vmatpush1.msra.mxu0 %v3710
      %4466 = vmatprep.subr.mxu0 0.0
      %4467 = vmatpush1.msra.mxu0 %v3711
      %4468 = vmatprep.subr.mxu0 0.0
      %4469 = vmatpush1.msra.mxu0 %v3712
      %4470 = vmatprep.subr.mxu0 0.0
      %4471 = vmatpush1.msra.mxu0 %v3713
      %4472 = vmatprep.subr.mxu0 0.0
      %4473 = vmatpush1.msra.mxu0 %v3714
      %4474 = vmatprep.subr.mxu0 0.0
      %4475 = vmatpush1.msra.mxu0 %v3715
      %4476 = vmatprep.subr.mxu0 0.0
      %4477 = vmatpush1.msra.mxu0 %v3716
      %4478 = vmatprep.subr.mxu0 0.0
      %4479 = vmatpush1.msra.mxu0 %v3717
      %4480 = vmatprep.subr.mxu0 0.0
      %4481 = vmatpush1.msra.mxu0 %v3718
      %4482 = vmatprep.subr.mxu0 0.0
      %4483 = vmatpush1.msra.mxu0 %v3719
      %4484 = vmatprep.subr.mxu0 0.0
      %4485 = vmatpush1.msra.mxu0 %v3720
      %4486 = vmatprep.subr.mxu0 0.0
      %4487 = vmatpush1.msra.mxu0 %v3721
      %4488 = vmatprep.subr.mxu0 0.0
      %4489 = vmatpush1.msra.mxu0 %v3722
      %4490 = vmatprep.subr.mxu0 0.0
      %4491 = vmatpush1.msra.mxu0 %v3723
      %4492 = vmatprep.subr.mxu0 0.0
      %4493 = vmatpush1.msra.mxu0 %v3724
      %4494 = vmatprep.subr.mxu0 0.0
      %4495 = vmatpush1.msra.mxu0 %v3725
      %4496 = vmatprep.subr.mxu0 0.0
      %4497 = vmatpush1.msra.mxu0 %v3726
      %4498 = vmatprep.subr.mxu0 0.0
      %4499 = vmatpush1.msra.mxu0 %v3727
      %4500 = vmatprep.subr.mxu0 0.0
      %4501 = vmatpush1.msra.mxu0 %v3728
      %4502 = vmatprep.subr.mxu0 0.0
      %4503 = vmatpush1.msra.mxu0 %v3729
      %4504 = vmatprep.subr.mxu0 0.0
      %4505 = vmatpush1.msra.mxu0 %v3730
      %4506 = vmatprep.subr.mxu0 0.0
      %4507 = vmatpush1.msra.mxu0 %v3731
      %4508 = vmatprep.subr.mxu0 0.0
      %4509 = vmatpush1.msra.mxu0 %v3732
      %4510 = vmatprep.subr.mxu0 0.0
      %4511 = vmatpush1.msra.mxu0 %v3733
      %4512 = vmatprep.subr.mxu0 0.0
      %4513 = vmatpush1.msra.mxu0 %v3734
      %4514 = vmatprep.subr.mxu0 0.0
      %4515 = vmatpush1.msra.mxu0 %v3735
      %4516 = vmatprep.mubr.f32.mxu0 %v4447
      %4517 = vmatmul.mubr.f32.gmra.mrb[0].mxu0 %v4446
      %v4518 = vpop.f32.mrb[0].mxu0
      %v4519 = vadd.f32 0.0, %v4518
      %v4520 = vpop.f32.mrb[0].mxu0
      %4521 = vmatprep.mubr.f32.mxu0 %v4449
      %4522 = vmatmul.mubr.f32.gmra.mrb[0].mxu0 %v4448
      %v4523 = vpop.f32.mrb[0].mxu0
      %v4524 = vadd.f32 0.0, %v4523
      %v4525 = vpop.f32.mrb[0].mxu0
      %4526 = vmatprep.mubr.f32.mxu0 %v4451
      %4527 = vmatmul.mubr.f32.gmra.mrb[0].mxu0 %v4450
      %v4528 = vpop.f32.mrb[0].mxu0
      %v4529 = vadd.f32 0.0, %v4528
      %v4530 = vpop.f32.mrb[0].mxu0
      %4531 = vdwg.mxu0
      %v4532 = vld [vmem:[%s259] sm:$0xff]
      %v4533 = vld [vmem:[%s259 + $0x8] sm:$0xff]
      %v4534 = vld [vmem:[%s259 + $0x10] sm:$0xff]
      %v4535 = vld [vmem:[%s259 + $0x18] sm:$0xff]
      %v4536 = vld [vmem:[%s259 + $0x20] sm:$0xff]
      %v4537 = vld [vmem:[%s259 + $0x28] sm:$0xff]
      %v4538 = vld [vmem:[%s259 + $0x30] sm:$0xff]
      %v4539 = vld [vmem:[%s259 + $0x38] sm:$0xff]
      %v4540 = vld [vmem:[%s259 + $0x40] sm:$0xff]
      %v4541 = vld [vmem:[%s259 + $0x48] sm:$0xff]
      %v4542 = vld [vmem:[%s259 + $0x50] sm:$0xff]
      %v4543 = vld [vmem:[%s259 + $0x58] sm:$0xff]
      %v4544 = vld [vmem:[%s259 + $0x60] sm:$0xff]
      %v4545 = vld [vmem:[%s259 + $0x68] sm:$0xff]
      %v4546 = vld [vmem:[%s259 + $0x70] sm:$0xff]
      %v4547 = vld [vmem:[%s259 + $0x78] sm:$0xff]
      %v4548 = vld [vmem:[%s4 + $0x50] sm:$0x1]
      %v4549 = vld [vmem:[%s4 + $0x58] sm:$0xff]
      %v4550 = vld [vmem:[%s4 + $0x60] sm:$0xff]
      %v4551 = vld [vmem:[%s4 + $0x68] sm:$0xff]
      %v4552 = vld [vmem:[%s4 + $0x70] sm:$0xff]
      %v4553 = vld [vmem:[%s4 + $0x78] sm:$0xff]
      %v4554 = vld [vmem:[%s4 + $0x80] sm:$0xff]
      %v4555 = vld [vmem:[%s4 + $0x88] sm:$0xff]
      %v4556 = vld [vmem:[%s4 + $0x90] sm:$0xff]
      %v4557 = vld [vmem:[%s4 + $0x98] sm:$0xff]
      %v4558 = vld [vmem:[%s4 + $0xa0] sm:$0xff]
      %v4559 = vld [vmem:[%s4 + $0xa8] sm:$0xff]
      %v4560 = vld [vmem:[%s4 + $0xb0] sm:$0xff]
      %v4561 = vld [vmem:[%s4 + $0xb8] sm:$0xff]
      %v4562 = vld [vmem:[%s4 + $0xc0] sm:$0xff]
      %v4563 = vld [vmem:[%s4 + $0xc8] sm:$0xff]
      %v4564 = vld [vmem:[%s4 + $0xd0] sm:$0xff]
      %v4565 = vld [vmem:[%s4 + $0xd8] sm:$0xff]
      %v4566 = vld [vmem:[%s4 + $0xe0] sm:$0xff]
      %v4567 = vld [vmem:[%s4 + $0xe8] sm:$0xff]
      %v4568 = vld [vmem:[%s4 + $0xf0] sm:$0xff]
      %v4569 = vld [vmem:[%s4 + $0xf8] sm:$0xff]
      %v4570 = vld [vmem:[%s4 + $0x100] sm:$0xff]
      %v4571 = vld [vmem:[%s4 + $0x108] sm:$0xff]
      %v4572 = vld [vmem:[%s4 + $0x110] sm:$0xff]
      %v4573 = vlaneseq
      %v4574 = vshrl.u32 %v4573, 7
      %v4575 = vsub.s32 0, %v4574
      %v4576 = vrot.slane %v4548, %v4575
      %vm4577 = vcmask 523264
      %v4579 = vsel %vm4577, %v4533, 0
      %v4582 = vsel %vm4577, %v4535, 0
      %v4585 = vsel %vm4577, %v4537, 0
      %v4588 = vsel %vm4577, %v4539, 0
      %v4591 = vsel %vm4577, %v4541, 0
      %v4594 = vsel %vm4577, %v4543, 0
      %v4597 = vsel %vm4577, %v4545, 0
      %v4600 = vsel %vm4577, %v4547, 0
      %4602 = vmatprep.subr.mxu0 0.0
      %4603 = vmatpush1.msra.mxu0 %v4549
      %4604 = vmatprep.subr.mxu0 0.0
      %4605 = vmatpush1.msra.mxu0 %v4550
      %4606 = vmatprep.subr.mxu0 0.0
      %4607 = vmatpush1.msra.mxu0 %v4551
      %4608 = vmatprep.subr.mxu0 0.0
      %4609 = vmatpush1.msra.mxu0 %v4552
      %4610 = vmatprep.subr.mxu0 0.0
      %4611 = vmatpush1.msra.mxu0 %v4553
      %4612 = vmatprep.subr.mxu0 0.0
      %4613 = vmatpush1.msra.mxu0 %v4554
      %4614 = vmatprep.subr.mxu0 0.0
      %4615 = vmatpush1.msra.mxu0 %v4555
      %4616 = vmatprep.subr.mxu0 0.0
      %4617 = vmatpush1.msra.mxu0 %v4556
      %4618 = vmatprep.subr.mxu0 0.0
      %4619 = vmatpush1.msra.mxu0 %v4557
      %4620 = vmatprep.subr.mxu0 0.0
      %4621 = vmatpush1.msra.mxu0 %v4558
      %4622 = vmatprep.subr.mxu0 0.0
      %4623 = vmatpush1.msra.mxu0 %v4559
      %4624 = vmatprep.subr.mxu0 0.0
      %4625 = vmatpush1.msra.mxu0 %v4560
      %4626 = vmatprep.subr.mxu0 0.0
      %4627 = vmatpush1.msra.mxu0 %v4561
      %4628 = vmatprep.subr.mxu0 0.0
      %4629 = vmatpush1.msra.mxu0 %v4562
      %4630 = vmatprep.subr.mxu0 0.0
      %4631 = vmatpush1.msra.mxu0 %v4563
      %4632 = vmatprep.subr.mxu0 0.0
      %4633 = vmatpush1.msra.mxu0 %v4564
      %4634 = vmatprep.subr.mxu0 0.0
      %4635 = vmatpush1.msra.mxu0 %v4565
      %4636 = vmatprep.subr.mxu0 0.0
      %4637 = vmatpush1.msra.mxu0 %v4566
      %4638 = vmatprep.subr.mxu0 0.0
      %4639 = vmatpush1.msra.mxu0 %v4567
      %4640 = vmatprep.subr.mxu0 0.0
      %4641 = vmatpush1.msra.mxu0 %v4568
      %4642 = vmatprep.subr.mxu0 0.0
      %4643 = vmatpush1.msra.mxu0 %v4569
      %4644 = vmatprep.subr.mxu0 0.0
      %4645 = vmatpush1.msra.mxu0 %v4570
      %4646 = vmatprep.subr.mxu0 0.0
      %4647 = vmatpush1.msra.mxu0 %v4571
      %4648 = vmatprep.subr.mxu0 0.0
      %4649 = vmatpush1.msra.mxu0 %v4572
      %4650 = vmatprep.subr.mxu0 0.0
      %4651 = vmatpush1.msra.mxu0 0.0
      %4652 = vmatprep.subr.mxu0 0.0
      %4653 = vmatpush1.msra.mxu0 0.0
      %4654 = vmatprep.subr.mxu0 0.0
      %4655 = vmatpush1.msra.mxu0 0.0
      %4656 = vmatprep.subr.mxu0 0.0
      %4657 = vmatpush1.msra.mxu0 0.0
      %4658 = vmatprep.subr.mxu0 0.0
      %4659 = vmatpush1.msra.mxu0 0.0
      %4660 = vmatprep.subr.mxu0 0.0
      %4661 = vmatpush1.msra.mxu0 0.0
      %4662 = vmatprep.subr.mxu0 0.0
      %4663 = vmatpush1.msra.mxu0 0.0
      %4664 = vmatprep.subr.mxu0 0.0
      %4665 = vmatpush1.msra.mxu0 0.0
      %4666 = vmatprep.mubr.f32.mxu0 %v4579
      %4667 = vmatmul.mubr.f32.gmra.mrb[0].mxu0 %v4532
      %v4668 = vpop.f32.mrb[0].mxu0
      %v4669 = vadd.f32 %v4576, %v4668
      %v4670 = vpop.f32.mrb[0].mxu0
      %4671 = vmatprep.mubr.f32.mxu0 %v4582
      %4672 = vmatmul.mubr.f32.gmra.mrb[0].mxu0 %v4534
      %v4673 = vpop.f32.mrb[0].mxu0
      %v4674 = vadd.f32 %v4576, %v4673
      %v4675 = vpop.f32.mrb[0].mxu0
      %4676 = vmatprep.mubr.f32.mxu0 %v4585
      %4677 = vmatmul.mubr.f32.gmra.mrb[0].mxu0 %v4536
      %v4678 = vpop.f32.mrb[0].mxu0
      %v4679 = vadd.f32 %v4576, %v4678
      %v4680 = vpop.f32.mrb[0].mxu0
      %4681 = vmatprep.mubr.f32.mxu0 %v4588
      %4682 = vmatmul.mubr.f32.gmra.mrb[0].mxu0 %v4538
      %v4683 = vpop.f32.mrb[0].mxu0
      %v4684 = vadd.f32 %v4576, %v4683
      %v4685 = vpop.f32.mrb[0].mxu0
      %4686 = vmatprep.mubr.f32.mxu0 %v4591
      %4687 = vmatmul.mubr.f32.gmra.mrb[0].mxu0 %v4540
      %v4688 = vpop.f32.mrb[0].mxu0
      %v4689 = vadd.f32 %v4576, %v4688
      %v4690 = vpop.f32.mrb[0].mxu0
      %4691 = vmatprep.mubr.f32.mxu0 %v4594
      %4692 = vmatmul.mubr.f32.gmra.mrb[0].mxu0 %v4542
      %v4693 = vpop.f32.mrb[0].mxu0
      %v4694 = vadd.f32 %v4576, %v4693
      %v4695 = vpop.f32.mrb[0].mxu0
      %4696 = vmatprep.mubr.f32.mxu0 %v4597
      %4697 = vmatmul.mubr.f32.gmra.mrb[0].mxu0 %v4544
      %v4698 = vpop.f32.mrb[0].mxu0
      %v4699 = vadd.f32 %v4576, %v4698
      %v4700 = vpop.f32.mrb[0].mxu0
      %4701 = vmatprep.mubr.f32.mxu0 %v4600
      %4702 = vmatmul.mubr.f32.gmra.mrb[0].mxu0 %v4546
      %v4703 = vpop.f32.mrb[0].mxu0
      %v4704 = vadd.f32 %v4576, %v4703
      %v4705 = vpop.f32.mrb[0].mxu0
      %4706 = vdwg.mxu0
      %v4707 = vmax.f32 %v4669, 0.0
      %v4708 = vmax.f32 %v4674, 0.0
      %v4709 = vmax.f32 %v4679, 0.0
      %v4710 = vmax.f32 %v4684, 0.0
      %v4711 = vmax.f32 %v4689, 0.0
      %v4712 = vmax.f32 %v4694, 0.0
      %v4713 = vmax.f32 %v4699, 0.0
      %v4714 = vmax.f32 %v4704, 0.0
      %v4715 = vmul.f32 %v1634, 0.125
      %v4716 = vfloor.f32 %v4715
      %v4717 = vmul.f32 %v4716, 8.0
      %v4718 = vsub.f32 %v1634, %v4717
      %v4719 = vmul.f32 %v265, 0.109375
      %v4720 = vmul.f32 %v266, 0.109375
      %v4721 = vmul.f32 %v267, 0.109375
      %v4722 = vfloor.f32 %v4719
      %v4723 = vfloor.f32 %v4720
      %v4724 = vfloor.f32 %v4721
      %v4725 = vsub.f32 %v4719, %v4722
      %v4726 = vsub.f32 %v4720, %v4723
      %v4727 = vsub.f32 %v4721, %v4724
      %vm4728 = vcmp.ge.f32.partialorder %v4722, 0.0
      %vm4729 = vcmp.ge.f32.partialorder %v4723, 0.0
      %vm4730 = vcmp.ge.f32.partialorder %v4724, 0.0
      %vm4731 = vcmp.le.f32.partialorder %v4722, 7.0
      %vm4732 = vcmp.le.f32.partialorder %v4723, 7.0
      %vm4733 = vcmp.le.f32.partialorder %v4724, 7.0
      %vm4734 = vmand %vm4728, %vm4731
      %vm4735 = vmand %vm4729, %vm4732
      %vm4736 = vmand %vm4730, %vm4733
      %v4737 = vsub.f32 1.0, %v4725
      %v4738 = vsub.f32 1.0, %v4726
      %v4739 = vsub.f32 1.0, %v4727
      %v4740 = vsel %vm4734, %v4737, 0.0
      %v4741 = vsel %vm4735, %v4738, 0.0
      %v4742 = vsel %vm4736, %v4739, 0.0
      %v4743 = vadd.f32 %v4722, 1.0
      %v4744 = vadd.f32 %v4723, 1.0
      %v4745 = vadd.f32 %v4724, 1.0
      %vm4746 = vcmp.ge.f32.partialorder %v4743, 0.0
      %vm4747 = vcmp.ge.f32.partialorder %v4744, 0.0
      %vm4748 = vcmp.ge.f32.partialorder %v4745, 0.0
      %vm4749 = vcmp.le.f32.partialorder %v4743, 7.0
      %vm4750 = vcmp.le.f32.partialorder %v4744, 7.0
      %vm4751 = vcmp.le.f32.partialorder %v4745, 7.0
      %vm4752 = vmand %vm4746, %vm4749
      %vm4753 = vmand %vm4747, %vm4750
      %vm4754 = vmand %vm4748, %vm4751
      %v4755 = vsel %vm4752, %v4725, 0.0
      %v4756 = vsel %vm4753, %v4726, 0.0
      %v4757 = vsel %vm4754, %v4727, 0.0
      %4759 = vset.pattern.permute.xlu0 0
      %4760 = vperm.xlu0 %4759, %v4722
      %v4761 = vpop.permute.xlu0 %4760
      %4764 = vset.pattern.permute.xlu0 0
      %4765 = vperm.xlu0 %4764, %v4723
      %v4766 = vpop.permute.xlu0 %4765
      %4769 = vset.pattern.permute.xlu0 0
      %4770 = vperm.xlu0 %4769, %v4724
      %v4771 = vpop.permute.xlu0 %4770
      %vm4773 = vcmp.eq.f32.partialorder %v4718, %v4761
      %vm4774 = vcmp.eq.f32.partialorder %v4718, %v4766
      %vm4775 = vcmp.eq.f32.partialorder %v4718, %v4771
      %4777 = vset.pattern.permute.xlu0 0
      %4778 = vperm.xlu0 %4777, %v4740
      %v4779 = vpop.permute.xlu0 %4778
      %4782 = vset.pattern.permute.xlu0 0
      %4783 = vperm.xlu0 %4782, %v4741
      %v4784 = vpop.permute.xlu0 %4783
      %4787 = vset.pattern.permute.xlu0 0
      %4788 = vperm.xlu0 %4787, %v4742
      %v4789 = vpop.permute.xlu0 %4788
      %v4791 = vsel %vm4773, %v4779, 0.0
      %v4792 = vsel %vm4774, %v4784, 0.0
      %v4793 = vsel %vm4775, %v4789, 0.0
      %4795 = vset.pattern.permute.xlu0 0
      %4796 = vperm.xlu0 %4795, %v4743
      %v4797 = vpop.permute.xlu0 %4796
      %4800 = vset.pattern.permute.xlu0 0
      %4801 = vperm.xlu0 %4800, %v4744
      %v4802 = vpop.permute.xlu0 %4801
      %4805 = vset.pattern.permute.xlu0 0
      %4806 = vperm.xlu0 %4805, %v4745
      %v4807 = vpop.permute.xlu0 %4806
      %vm4809 = vcmp.eq.f32.partialorder %v4718, %v4797
      %vm4810 = vcmp.eq.f32.partialorder %v4718, %v4802
      %vm4811 = vcmp.eq.f32.partialorder %v4718, %v4807
      %4813 = vset.pattern.permute.xlu0 0
      %4814 = vperm.xlu0 %4813, %v4755
      %v4815 = vpop.permute.xlu0 %4814
      %4818 = vset.pattern.permute.xlu0 0
      %4819 = vperm.xlu0 %4818, %v4756
      %v4820 = vpop.permute.xlu0 %4819
      %4823 = vset.pattern.permute.xlu0 0
      %4824 = vperm.xlu0 %4823, %v4757
      %v4825 = vpop.permute.xlu0 %4824
      %v4827 = vsel %vm4809, %v4815, 0.0
      %v4828 = vsel %vm4810, %v4820, 0.0
      %v4829 = vsel %vm4811, %v4825, 0.0
      %v4830 = vadd.f32 %v4791, %v4827
      %v4831 = vadd.f32 %v4792, %v4828
      %v4832 = vadd.f32 %v4793, %v4829
      %4833 = vset.pattern.permute.xlu0 1
      %4834 = vperm.xlu0 %4833, %v4722
      %v4835 = vpop.permute.xlu0 %4834
      %4837 = vset.pattern.permute.xlu0 1
      %4838 = vperm.xlu0 %4837, %v4723
      %v4839 = vpop.permute.xlu0 %4838
      %4841 = vset.pattern.permute.xlu0 1
      %4842 = vperm.xlu0 %4841, %v4724
      %v4843 = vpop.permute.xlu0 %4842
      %vm4845 = vcmp.eq.f32.partialorder %v4716, %v4835
      %vm4846 = vcmp.eq.f32.partialorder %v4716, %v4839
      %vm4847 = vcmp.eq.f32.partialorder %v4716, %v4843
      %4848 = vset.pattern.permute.xlu0 1
      %4849 = vperm.xlu0 %4848, %v4740
      %v4850 = vpop.permute.xlu0 %4849
      %4852 = vset.pattern.permute.xlu0 1
      %4853 = vperm.xlu0 %4852, %v4741
      %v4854 = vpop.permute.xlu0 %4853
      %4856 = vset.pattern.permute.xlu0 1
      %4857 = vperm.xlu0 %4856, %v4742
      %v4858 = vpop.permute.xlu0 %4857
      %v4860 = vsel %vm4845, %v4850, 0.0
      %v4861 = vsel %vm4846, %v4854, 0.0
      %v4862 = vsel %vm4847, %v4858, 0.0
      %4863 = vset.pattern.permute.xlu0 1
      %4864 = vperm.xlu0 %4863, %v4743
      %v4865 = vpop.permute.xlu0 %4864
      %4867 = vset.pattern.permute.xlu0 1
      %4868 = vperm.xlu0 %4867, %v4744
      %v4869 = vpop.permute.xlu0 %4868
      %4871 = vset.pattern.permute.xlu0 1
      %4872 = vperm.xlu0 %4871, %v4745
      %v4873 = vpop.permute.xlu0 %4872
      %vm4875 = vcmp.eq.f32.partialorder %v4716, %v4865
      %vm4876 = vcmp.eq.f32.partialorder %v4716, %v4869
      %vm4877 = vcmp.eq.f32.partialorder %v4716, %v4873
      %4878 = vset.pattern.permute.xlu0 1
      %4879 = vperm.xlu0 %4878, %v4755
      %v4880 = vpop.permute.xlu0 %4879
      %4882 = vset.pattern.permute.xlu0 1
      %4883 = vperm.xlu0 %4882, %v4756
      %v4884 = vpop.permute.xlu0 %4883
      %4886 = vset.pattern.permute.xlu0 1
      %4887 = vperm.xlu0 %4886, %v4757
      %v4888 = vpop.permute.xlu0 %4887
      %v4890 = vsel %vm4875, %v4880, 0.0
      %v4891 = vsel %vm4876, %v4884, 0.0
      %v4892 = vsel %vm4877, %v4888, 0.0
      %v4893 = vadd.f32 %v4860, %v4890
      %v4894 = vadd.f32 %v4861, %v4891
      %v4895 = vadd.f32 %v4862, %v4892
      %v4896 = vmul.f32 %v4893, %v4830
      %v4897 = vmul.f32 %v4894, %v4831
      %v4898 = vmul.f32 %v4895, %v4832
      %v4900 = vsel %vm4577, %v4896, 0
      %v4903 = vsel %vm4577, %v4897, 0
      %v4906 = vsel %vm4577, %v4898, 0
      %4908 = vmatprep.subr.mxu0 0.0
      %4909 = vmatpush1.msra.mxu0 %v4707
      %4910 = vmatprep.subr.mxu0 0.0
      %4911 = vmatpush1.msra.mxu0 %v4708
      %4912 = vmatprep.subr.mxu0 0.0
      %4913 = vmatpush1.msra.mxu0 %v4709
      %4914 = vmatprep.subr.mxu0 0.0
      %4915 = vmatpush1.msra.mxu0 %v4710
      %4916 = vmatprep.subr.mxu0 0.0
      %4917 = vmatpush1.msra.mxu0 %v4711
      %4918 = vmatprep.subr.mxu0 0.0
      %4919 = vmatpush1.msra.mxu0 %v4712
      %4920 = vmatprep.subr.mxu0 0.0
      %4921 = vmatpush1.msra.mxu0 %v4713
      %4922 = vmatprep.subr.mxu0 0.0
      %4923 = vmatpush1.msra.mxu0 %v4714
      %4924 = vmatprep.subr.mxu0 0.0
      %4925 = vmatpush1.msra.mxu0 0.0
      %4926 = vmatprep.subr.mxu0 0.0
      %4927 = vmatpush1.msra.mxu0 0.0
      %4928 = vmatprep.subr.mxu0 0.0
      %4929 = vmatpush1.msra.mxu0 0.0
      %4930 = vmatprep.subr.mxu0 0.0
      %4931 = vmatpush1.msra.mxu0 0.0
      %4932 = vmatprep.subr.mxu0 0.0
      %4933 = vmatpush1.msra.mxu0 0.0
      %4934 = vmatprep.subr.mxu0 0.0
      %4935 = vmatpush1.msra.mxu0 0.0
      %4936 = vmatprep.subr.mxu0 0.0
      %4937 = vmatpush1.msra.mxu0 0.0
      %4938 = vmatprep.subr.mxu0 0.0
      %4939 = vmatpush1.msra.mxu0 0.0
      %4940 = vmatprep.subr.mxu0 0.0
      %4941 = vmatpush1.msra.mxu0 0.0
      %4942 = vmatprep.subr.mxu0 0.0
      %4943 = vmatpush1.msra.mxu0 0.0
      %4944 = vmatprep.subr.mxu0 0.0
      %4945 = vmatpush1.msra.mxu0 0.0
      %4946 = vmatprep.subr.mxu0 0.0
      %4947 = vmatpush1.msra.mxu0 0.0
      %4948 = vmatprep.subr.mxu0 0.0
      %4949 = vmatpush1.msra.mxu0 0.0
      %4950 = vmatprep.subr.mxu0 0.0
      %4951 = vmatpush1.msra.mxu0 0.0
      %4952 = vmatprep.subr.mxu0 0.0
      %4953 = vmatpush1.msra.mxu0 0.0
      %4954 = vmatprep.subr.mxu0 0.0
      %4955 = vmatpush1.msra.mxu0 0.0
      %4956 = vmatprep.subr.mxu0 0.0
      %4957 = vmatpush1.msra.mxu0 0.0
      %4958 = vmatprep.subr.mxu0 0.0
      %4959 = vmatpush1.msra.mxu0 0.0
      %4960 = vmatprep.subr.mxu0 0.0
      %4961 = vmatpush1.msra.mxu0 0.0
      %4962 = vmatprep.subr.mxu0 0.0
      %4963 = vmatpush1.msra.mxu0 0.0
      %4964 = vmatprep.subr.mxu0 0.0
      %4965 = vmatpush1.msra.mxu0 0.0
      %4966 = vmatprep.subr.mxu0 0.0
      %4967 = vmatpush1.msra.mxu0 0.0
      %4968 = vmatprep.subr.mxu0 0.0
      %4969 = vmatpush1.msra.mxu0 0.0
      %4970 = vmatprep.subr.mxu0 0.0
      %4971 = vmatpush1.msra.mxu0 0.0
      %4972 = vmatprep.mubr.f32.mxu0 0.0
      %4973 = vmatmul.mubr.f32.gmra.mrb[0].mxu0 %v4900
      %v4974 = vpop.f32.mrb[0].mxu0
      %v4975 = vadd.f32 0.0, %v4974
      %v4976 = vpop.f32.mrb[0].mxu0
      %4977 = vmatprep.mubr.f32.mxu0 0.0
      %4978 = vmatmul.mubr.f32.gmra.mrb[0].mxu0 %v4903
      %v4979 = vpop.f32.mrb[0].mxu0
      %v4980 = vadd.f32 0.0, %v4979
      %v4981 = vpop.f32.mrb[0].mxu0
      %4982 = vmatprep.mubr.f32.mxu0 0.0
      %4983 = vmatmul.mubr.f32.gmra.mrb[0].mxu0 %v4906
      %v4984 = vpop.f32.mrb[0].mxu0
      %v4985 = vadd.f32 0.0, %v4984
      %v4986 = vpop.f32.mrb[0].mxu0
      %4987 = vdwg.mxu0
      %v4988 = vld [vmem:[%s4 + $0x1b8] sm:$0x1]
      %v4989 = vld [vmem:[%s4 + $0x1c0] sm:$0xff]
      %v4990 = vld [vmem:[%s4 + $0x1c8] sm:$0xff]
      %v4991 = vld [vmem:[%s4 + $0x1d0] sm:$0xff]
      %v4992 = vld [vmem:[%s4 + $0x1d8] sm:$0xff]
      %v4993 = vlaneseq
      %v4994 = vshrl.u32 %v4993, 7
      %v4995 = vsub.s32 0, %v4994
      %v4996 = vrot.slane %v4988, %v4995
      %v4998 = vsel %vm2414, %v4975, 0
      %v5001 = vsel %vm2414, %v4980, 0
      %v5004 = vsel %vm2414, %v4985, 0
      %5006 = vmatprep.subr.mxu0 0.0
      %5007 = vmatpush1.msra.mxu0 %v4989
      %5008 = vmatprep.subr.mxu0 0.0
      %5009 = vmatpush1.msra.mxu0 %v4990
      %5010 = vmatprep.subr.mxu0 0.0
      %5011 = vmatpush1.msra.mxu0 %v4991
      %5012 = vmatprep.subr.mxu0 0.0
      %5013 = vmatpush1.msra.mxu0 %v4992
      %5014 = vmatprep.subr.mxu0 0.0
      %5015 = vmatpush1.msra.mxu0 0.0
      %5016 = vmatprep.subr.mxu0 0.0
      %5017 = vmatpush1.msra.mxu0 0.0
      %5018 = vmatprep.subr.mxu0 0.0
      %5019 = vmatpush1.msra.mxu0 0.0
      %5020 = vmatprep.subr.mxu0 0.0
      %5021 = vmatpush1.msra.mxu0 0.0
      %5022 = vmatprep.subr.mxu0 0.0
      %5023 = vmatpush1.msra.mxu0 0.0
      %5024 = vmatprep.subr.mxu0 0.0
      %5025 = vmatpush1.msra.mxu0 0.0
      %5026 = vmatprep.subr.mxu0 0.0
      %5027 = vmatpush1.msra.mxu0 0.0
      %5028 = vmatprep.subr.mxu0 0.0
      %5029 = vmatpush1.msra.mxu0 0.0
      %5030 = vmatprep.subr.mxu0 0.0
      %5031 = vmatpush1.msra.mxu0 0.0
      %5032 = vmatprep.subr.mxu0 0.0
      %5033 = vmatpush1.msra.mxu0 0.0
      %5034 = vmatprep.subr.mxu0 0.0
      %5035 = vmatpush1.msra.mxu0 0.0
      %5036 = vmatprep.subr.mxu0 0.0
      %5037 = vmatpush1.msra.mxu0 0.0
      %5038 = vmatprep.subr.mxu0 0.0
      %5039 = vmatpush1.msra.mxu0 0.0
      %5040 = vmatprep.subr.mxu0 0.0
      %5041 = vmatpush1.msra.mxu0 0.0
      %5042 = vmatprep.subr.mxu0 0.0
      %5043 = vmatpush1.msra.mxu0 0.0
      %5044 = vmatprep.subr.mxu0 0.0
      %5045 = vmatpush1.msra.mxu0 0.0
      %5046 = vmatprep.subr.mxu0 0.0
      %5047 = vmatpush1.msra.mxu0 0.0
      %5048 = vmatprep.subr.mxu0 0.0
      %5049 = vmatpush1.msra.mxu0 0.0
      %5050 = vmatprep.subr.mxu0 0.0
      %5051 = vmatpush1.msra.mxu0 0.0
      %5052 = vmatprep.subr.mxu0 0.0
      %5053 = vmatpush1.msra.mxu0 0.0
      %5054 = vmatprep.subr.mxu0 0.0
      %5055 = vmatpush1.msra.mxu0 0.0
      %5056 = vmatprep.subr.mxu0 0.0
      %5057 = vmatpush1.msra.mxu0 0.0
      %5058 = vmatprep.subr.mxu0 0.0
      %5059 = vmatpush1.msra.mxu0 0.0
      %5060 = vmatprep.subr.mxu0 0.0
      %5061 = vmatpush1.msra.mxu0 0.0
      %5062 = vmatprep.subr.mxu0 0.0
      %5063 = vmatpush1.msra.mxu0 0.0
      %5064 = vmatprep.subr.mxu0 0.0
      %5065 = vmatpush1.msra.mxu0 0.0
      %5066 = vmatprep.subr.mxu0 0.0
      %5067 = vmatpush1.msra.mxu0 0.0
      %5068 = vmatprep.subr.mxu0 0.0
      %5069 = vmatpush1.msra.mxu0 0.0
      %5070 = vmatprep.mubr.f32.mxu0 0.0
      %5071 = vmatmul.mubr.f32.gmra.mrb[0].mxu0 %v4998
      %v5072 = vpop.f32.mrb[0].mxu0
      %v5073 = vadd.f32 %v4996, %v5072
      %v5074 = vpop.f32.mrb[0].mxu0
      %5075 = vmatprep.mubr.f32.mxu0 0.0
      %5076 = vmatmul.mubr.f32.gmra.mrb[0].mxu0 %v5001
      %v5077 = vpop.f32.mrb[0].mxu0
      %v5078 = vadd.f32 %v4996, %v5077
      %v5079 = vpop.f32.mrb[0].mxu0
      %5080 = vmatprep.mubr.f32.mxu0 0.0
      %5081 = vmatmul.mubr.f32.gmra.mrb[0].mxu0 %v5004
      %v5082 = vpop.f32.mrb[0].mxu0
      %v5083 = vadd.f32 %v4996, %v5082
      %v5084 = vpop.f32.mrb[0].mxu0
      %5085 = vdwg.mxu0
      %v5086 = vmax.f32 %v5073, 0.0
      %v5087 = vmax.f32 %v5078, 0.0
      %v5088 = vmax.f32 %v5083, 0.0
      %v5089 = vld [vmem:[%s4 + $0x1e0] sm:$0x1]
      %v5090 = vld [vmem:[%s4 + $0x1e8] sm:$0xff]
      %v5091 = vld [vmem:[%s4 + $0x1f0] sm:$0xff]
      %v5092 = vld [vmem:[%s4 + $0x1f8] sm:$0xff]
      %v5093 = vld [vmem:[%s4 + $0x200] sm:$0xff]
      %v5094 = vlaneseq
      %v5095 = vshrl.u32 %v5094, 7
      %v5096 = vsub.s32 0, %v5095
      %v5097 = vrot.slane %v5089, %v5096
      %v5099 = vsel %vm2414, %v5086, 0
      %v5102 = vsel %vm2414, %v5087, 0
      %v5105 = vsel %vm2414, %v5088, 0
      %5107 = vmatprep.subr.mxu0 0.0
      %5108 = vmatpush1.msra.mxu0 %v5090
      %5109 = vmatprep.subr.mxu0 0.0
      %5110 = vmatpush1.msra.mxu0 %v5091
      %5111 = vmatprep.subr.mxu0 0.0
      %5112 = vmatpush1.msra.mxu0 %v5092
      %5113 = vmatprep.subr.mxu0 0.0
      %5114 = vmatpush1.msra.mxu0 %v5093
      %5115 = vmatprep.subr.mxu0 0.0
      %5116 = vmatpush1.msra.mxu0 0.0
      %5117 = vmatprep.subr.mxu0 0.0
      %5118 = vmatpush1.msra.mxu0 0.0
      %5119 = vmatprep.subr.mxu0 0.0
      %5120 = vmatpush1.msra.mxu0 0.0
      %5121 = vmatprep.subr.mxu0 0.0
      %5122 = vmatpush1.msra.mxu0 0.0
      %5123 = vmatprep.subr.mxu0 0.0
      %5124 = vmatpush1.msra.mxu0 0.0
      %5125 = vmatprep.subr.mxu0 0.0
      %5126 = vmatpush1.msra.mxu0 0.0
      %5127 = vmatprep.subr.mxu0 0.0
      %5128 = vmatpush1.msra.mxu0 0.0
      %5129 = vmatprep.subr.mxu0 0.0
      %5130 = vmatpush1.msra.mxu0 0.0
      %5131 = vmatprep.subr.mxu0 0.0
      %5132 = vmatpush1.msra.mxu0 0.0
      %5133 = vmatprep.subr.mxu0 0.0
      %5134 = vmatpush1.msra.mxu0 0.0
      %5135 = vmatprep.subr.mxu0 0.0
      %5136 = vmatpush1.msra.mxu0 0.0
      %5137 = vmatprep.subr.mxu0 0.0
      %5138 = vmatpush1.msra.mxu0 0.0
      %5139 = vmatprep.subr.mxu0 0.0
      %5140 = vmatpush1.msra.mxu0 0.0
      %5141 = vmatprep.subr.mxu0 0.0
      %5142 = vmatpush1.msra.mxu0 0.0
      %5143 = vmatprep.subr.mxu0 0.0
      %5144 = vmatpush1.msra.mxu0 0.0
      %5145 = vmatprep.subr.mxu0 0.0
      %5146 = vmatpush1.msra.mxu0 0.0
      %5147 = vmatprep.subr.mxu0 0.0
      %5148 = vmatpush1.msra.mxu0 0.0
      %5149 = vmatprep.subr.mxu0 0.0
      %5150 = vmatpush1.msra.mxu0 0.0
      %5151 = vmatprep.subr.mxu0 0.0
      %5152 = vmatpush1.msra.mxu0 0.0
      %5153 = vmatprep.subr.mxu0 0.0
      %5154 = vmatpush1.msra.mxu0 0.0
      %5155 = vmatprep.subr.mxu0 0.0
      %5156 = vmatpush1.msra.mxu0 0.0
      %5157 = vmatprep.subr.mxu0 0.0
      %5158 = vmatpush1.msra.mxu0 0.0
      %5159 = vmatprep.subr.mxu0 0.0
      %5160 = vmatpush1.msra.mxu0 0.0
      %5161 = vmatprep.subr.mxu0 0.0
      %5162 = vmatpush1.msra.mxu0 0.0
      %5163 = vmatprep.subr.mxu0 0.0
      %5164 = vmatpush1.msra.mxu0 0.0
      %5165 = vmatprep.subr.mxu0 0.0
      %5166 = vmatpush1.msra.mxu0 0.0
      %5167 = vmatprep.subr.mxu0 0.0
      %5168 = vmatpush1.msra.mxu0 0.0
      %5169 = vmatprep.subr.mxu0 0.0
      %5170 = vmatpush1.msra.mxu0 0.0
      %5171 = vmatprep.mubr.f32.mxu0 0.0
      %5172 = vmatmul.mubr.f32.gmra.mrb[0].mxu0 %v5099
      %v5173 = vpop.f32.mrb[0].mxu0
      %v5174 = vadd.f32 %v5097, %v5173
      %v5175 = vpop.f32.mrb[0].mxu0
      %5176 = vmatprep.mubr.f32.mxu0 0.0
      %5177 = vmatmul.mubr.f32.gmra.mrb[0].mxu0 %v5102
      %v5178 = vpop.f32.mrb[0].mxu0
      %v5179 = vadd.f32 %v5097, %v5178
      %v5180 = vpop.f32.mrb[0].mxu0
      %5181 = vmatprep.mubr.f32.mxu0 0.0
      %5182 = vmatmul.mubr.f32.gmra.mrb[0].mxu0 %v5105
      %v5183 = vpop.f32.mrb[0].mxu0
      %v5184 = vadd.f32 %v5097, %v5183
      %v5185 = vpop.f32.mrb[0].mxu0
      %5186 = vdwg.mxu0
      %v5187 = vadd.f32 %v265, %v5174
      %v5188 = vadd.f32 %v266, %v5179
      %v5189 = vadd.f32 %v267, %v5184
      %v5190 = vmul.f32 %v5187, 0.109375
      %v5191 = vmul.f32 %v5188, 0.109375
      %v5192 = vmul.f32 %v5189, 0.109375
      %v5193 = vfloor.f32 %v5190
      %v5194 = vfloor.f32 %v5191
      %v5195 = vfloor.f32 %v5192
      %v5196 = vsub.f32 %v5190, %v5193
      %v5197 = vsub.f32 %v5191, %v5194
      %v5198 = vsub.f32 %v5192, %v5195
      %vm5199 = vcmp.ge.f32.partialorder %v5193, 0.0
      %vm5200 = vcmp.ge.f32.partialorder %v5194, 0.0
      %vm5201 = vcmp.ge.f32.partialorder %v5195, 0.0
      %vm5202 = vcmp.le.f32.partialorder %v5193, 7.0
      %vm5203 = vcmp.le.f32.partialorder %v5194, 7.0
      %vm5204 = vcmp.le.f32.partialorder %v5195, 7.0
      %vm5205 = vmand %vm5199, %vm5202
      %vm5206 = vmand %vm5200, %vm5203
      %vm5207 = vmand %vm5201, %vm5204
      %v5208 = vsub.f32 1.0, %v5196
      %v5209 = vsub.f32 1.0, %v5197
      %v5210 = vsub.f32 1.0, %v5198
      %v5211 = vsel %vm5205, %v5208, 0.0
      %v5212 = vsel %vm5206, %v5209, 0.0
      %v5213 = vsel %vm5207, %v5210, 0.0
      %v5214 = vadd.f32 %v5193, 1.0
      %v5215 = vadd.f32 %v5194, 1.0
      %v5216 = vadd.f32 %v5195, 1.0
      %vm5217 = vcmp.ge.f32.partialorder %v5214, 0.0
      %vm5218 = vcmp.ge.f32.partialorder %v5215, 0.0
      %vm5219 = vcmp.ge.f32.partialorder %v5216, 0.0
      %vm5220 = vcmp.le.f32.partialorder %v5214, 7.0
      %vm5221 = vcmp.le.f32.partialorder %v5215, 7.0
      %vm5222 = vcmp.le.f32.partialorder %v5216, 7.0
      %vm5223 = vmand %vm5217, %vm5220
      %vm5224 = vmand %vm5218, %vm5221
      %vm5225 = vmand %vm5219, %vm5222
      %v5226 = vsel %vm5223, %v5196, 0.0
      %v5227 = vsel %vm5224, %v5197, 0.0
      %v5228 = vsel %vm5225, %v5198, 0.0
      %5230 = vset.pattern.permute.xlu0 0
      %5231 = vperm.xlu0 %5230, %v5193
      %v5232 = vpop.permute.xlu0 %5231
      %5235 = vset.pattern.permute.xlu0 0
      %5236 = vperm.xlu0 %5235, %v5194
      %v5237 = vpop.permute.xlu0 %5236
      %5240 = vset.pattern.permute.xlu0 0
      %5241 = vperm.xlu0 %5240, %v5195
      %v5242 = vpop.permute.xlu0 %5241
      %vm5244 = vcmp.eq.f32.partialorder %v4718, %v5232
      %vm5245 = vcmp.eq.f32.partialorder %v4718, %v5237
      %vm5246 = vcmp.eq.f32.partialorder %v4718, %v5242
      %5248 = vset.pattern.permute.xlu0 0
      %5249 = vperm.xlu0 %5248, %v5211
      %v5250 = vpop.permute.xlu0 %5249
      %5253 = vset.pattern.permute.xlu0 0
      %5254 = vperm.xlu0 %5253, %v5212
      %v5255 = vpop.permute.xlu0 %5254
      %5258 = vset.pattern.permute.xlu0 0
      %5259 = vperm.xlu0 %5258, %v5213
      %v5260 = vpop.permute.xlu0 %5259
      %v5262 = vsel %vm5244, %v5250, 0.0
      %v5263 = vsel %vm5245, %v5255, 0.0
      %v5264 = vsel %vm5246, %v5260, 0.0
      %5266 = vset.pattern.permute.xlu0 0
      %5267 = vperm.xlu0 %5266, %v5214
      %v5268 = vpop.permute.xlu0 %5267
      %5271 = vset.pattern.permute.xlu0 0
      %5272 = vperm.xlu0 %5271, %v5215
      %v5273 = vpop.permute.xlu0 %5272
      %5276 = vset.pattern.permute.xlu0 0
      %5277 = vperm.xlu0 %5276, %v5216
      %v5278 = vpop.permute.xlu0 %5277
      %vm5280 = vcmp.eq.f32.partialorder %v4718, %v5268
      %vm5281 = vcmp.eq.f32.partialorder %v4718, %v5273
      %vm5282 = vcmp.eq.f32.partialorder %v4718, %v5278
      %5284 = vset.pattern.permute.xlu0 0
      %5285 = vperm.xlu0 %5284, %v5226
      %v5286 = vpop.permute.xlu0 %5285
      %5289 = vset.pattern.permute.xlu0 0
      %5290 = vperm.xlu0 %5289, %v5227
      %v5291 = vpop.permute.xlu0 %5290
      %5294 = vset.pattern.permute.xlu0 0
      %5295 = vperm.xlu0 %5294, %v5228
      %v5296 = vpop.permute.xlu0 %5295
      %v5298 = vsel %vm5280, %v5286, 0.0
      %v5299 = vsel %vm5281, %v5291, 0.0
      %v5300 = vsel %vm5282, %v5296, 0.0
      %v5301 = vadd.f32 %v5262, %v5298
      %v5302 = vadd.f32 %v5263, %v5299
      %v5303 = vadd.f32 %v5264, %v5300
      %5304 = vset.pattern.permute.xlu0 1
      %5305 = vperm.xlu0 %5304, %v5193
      %v5306 = vpop.permute.xlu0 %5305
      %5308 = vset.pattern.permute.xlu0 1
      %5309 = vperm.xlu0 %5308, %v5194
      %v5310 = vpop.permute.xlu0 %5309
      %5312 = vset.pattern.permute.xlu0 1
      %5313 = vperm.xlu0 %5312, %v5195
      %v5314 = vpop.permute.xlu0 %5313
      %vm5316 = vcmp.eq.f32.partialorder %v4716, %v5306
      %vm5317 = vcmp.eq.f32.partialorder %v4716, %v5310
      %vm5318 = vcmp.eq.f32.partialorder %v4716, %v5314
      %5319 = vset.pattern.permute.xlu0 1
      %5320 = vperm.xlu0 %5319, %v5211
      %v5321 = vpop.permute.xlu0 %5320
      %5323 = vset.pattern.permute.xlu0 1
      %5324 = vperm.xlu0 %5323, %v5212
      %v5325 = vpop.permute.xlu0 %5324
      %5327 = vset.pattern.permute.xlu0 1
      %5328 = vperm.xlu0 %5327, %v5213
      %v5329 = vpop.permute.xlu0 %5328
      %v5331 = vsel %vm5316, %v5321, 0.0
      %v5332 = vsel %vm5317, %v5325, 0.0
      %v5333 = vsel %vm5318, %v5329, 0.0
      %5334 = vset.pattern.permute.xlu0 1
      %5335 = vperm.xlu0 %5334, %v5214
      %v5336 = vpop.permute.xlu0 %5335
      %5338 = vset.pattern.permute.xlu0 1
      %5339 = vperm.xlu0 %5338, %v5215
      %v5340 = vpop.permute.xlu0 %5339
      %5342 = vset.pattern.permute.xlu0 1
      %5343 = vperm.xlu0 %5342, %v5216
      %v5344 = vpop.permute.xlu0 %5343
      %vm5346 = vcmp.eq.f32.partialorder %v4716, %v5336
      %vm5347 = vcmp.eq.f32.partialorder %v4716, %v5340
      %vm5348 = vcmp.eq.f32.partialorder %v4716, %v5344
      %5349 = vset.pattern.permute.xlu0 1
      %5350 = vperm.xlu0 %5349, %v5226
      %v5351 = vpop.permute.xlu0 %5350
      %5353 = vset.pattern.permute.xlu0 1
      %5354 = vperm.xlu0 %5353, %v5227
      %v5355 = vpop.permute.xlu0 %5354
      %5357 = vset.pattern.permute.xlu0 1
      %5358 = vperm.xlu0 %5357, %v5228
      %v5359 = vpop.permute.xlu0 %5358
      %v5361 = vsel %vm5346, %v5351, 0.0
      %v5362 = vsel %vm5347, %v5355, 0.0
      %v5363 = vsel %vm5348, %v5359, 0.0
      %v5364 = vadd.f32 %v5331, %v5361
      %v5365 = vadd.f32 %v5332, %v5362
      %v5366 = vadd.f32 %v5333, %v5363
      %v5367 = vmul.f32 %v5364, %v5301
      %v5368 = vmul.f32 %v5365, %v5302
      %v5369 = vmul.f32 %v5366, %v5303
      %v5371 = vsel %vm4577, %v5367, 0
      %v5374 = vsel %vm4577, %v5368, 0
      %v5377 = vsel %vm4577, %v5369, 0
      %5379 = vmatprep.subr.mxu0 0.0
      %5380 = vmatpush1.msra.mxu0 %v4707
      %5381 = vmatprep.subr.mxu0 0.0
      %5382 = vmatpush1.msra.mxu0 %v4708
      %5383 = vmatprep.subr.mxu0 0.0
      %5384 = vmatpush1.msra.mxu0 %v4709
      %5385 = vmatprep.subr.mxu0 0.0
      %5386 = vmatpush1.msra.mxu0 %v4710
      %5387 = vmatprep.subr.mxu0 0.0
      %5388 = vmatpush1.msra.mxu0 %v4711
      %5389 = vmatprep.subr.mxu0 0.0
      %5390 = vmatpush1.msra.mxu0 %v4712
      %5391 = vmatprep.subr.mxu0 0.0
      %5392 = vmatpush1.msra.mxu0 %v4713
      %5393 = vmatprep.subr.mxu0 0.0
      %5394 = vmatpush1.msra.mxu0 %v4714
      %5395 = vmatprep.subr.mxu0 0.0
      %5396 = vmatpush1.msra.mxu0 0.0
      %5397 = vmatprep.subr.mxu0 0.0
      %5398 = vmatpush1.msra.mxu0 0.0
      %5399 = vmatprep.subr.mxu0 0.0
      %5400 = vmatpush1.msra.mxu0 0.0
      %5401 = vmatprep.subr.mxu0 0.0
      %5402 = vmatpush1.msra.mxu0 0.0
      %5403 = vmatprep.subr.mxu0 0.0
      %5404 = vmatpush1.msra.mxu0 0.0
      %5405 = vmatprep.subr.mxu0 0.0
      %5406 = vmatpush1.msra.mxu0 0.0
      %5407 = vmatprep.subr.mxu0 0.0
      %5408 = vmatpush1.msra.mxu0 0.0
      %5409 = vmatprep.subr.mxu0 0.0
      %5410 = vmatpush1.msra.mxu0 0.0
      %5411 = vmatprep.subr.mxu0 0.0
      %5412 = vmatpush1.msra.mxu0 0.0
      %5413 = vmatprep.subr.mxu0 0.0
      %5414 = vmatpush1.msra.mxu0 0.0
      %5415 = vmatprep.subr.mxu0 0.0
      %5416 = vmatpush1.msra.mxu0 0.0
      %5417 = vmatprep.subr.mxu0 0.0
      %5418 = vmatpush1.msra.mxu0 0.0
      %5419 = vmatprep.subr.mxu0 0.0
      %5420 = vmatpush1.msra.mxu0 0.0
      %5421 = vmatprep.subr.mxu0 0.0
      %5422 = vmatpush1.msra.mxu0 0.0
      %5423 = vmatprep.subr.mxu0 0.0
      %5424 = vmatpush1.msra.mxu0 0.0
      %5425 = vmatprep.subr.mxu0 0.0
      %5426 = vmatpush1.msra.mxu0 0.0
      %5427 = vmatprep.subr.mxu0 0.0
      %5428 = vmatpush1.msra.mxu0 0.0
      %5429 = vmatprep.subr.mxu0 0.0
      %5430 = vmatpush1.msra.mxu0 0.0
      %5431 = vmatprep.subr.mxu0 0.0
      %5432 = vmatpush1.msra.mxu0 0.0
      %5433 = vmatprep.subr.mxu0 0.0
      %5434 = vmatpush1.msra.mxu0 0.0
      %5435 = vmatprep.subr.mxu0 0.0
      %5436 = vmatpush1.msra.mxu0 0.0
      %5437 = vmatprep.subr.mxu0 0.0
      %5438 = vmatpush1.msra.mxu0 0.0
      %5439 = vmatprep.subr.mxu0 0.0
      %5440 = vmatpush1.msra.mxu0 0.0
      %5441 = vmatprep.subr.mxu0 0.0
      %5442 = vmatpush1.msra.mxu0 0.0
      %5443 = vmatprep.mubr.f32.mxu0 0.0
      %5444 = vmatmul.mubr.f32.gmra.mrb[0].mxu0 %v5371
      %v5445 = vpop.f32.mrb[0].mxu0
      %v5446 = vadd.f32 0.0, %v5445
      %v5447 = vpop.f32.mrb[0].mxu0
      %5448 = vmatprep.mubr.f32.mxu0 0.0
      %5449 = vmatmul.mubr.f32.gmra.mrb[0].mxu0 %v5374
      %v5450 = vpop.f32.mrb[0].mxu0
      %v5451 = vadd.f32 0.0, %v5450
      %v5452 = vpop.f32.mrb[0].mxu0
      %5453 = vmatprep.mubr.f32.mxu0 0.0
      %5454 = vmatmul.mubr.f32.gmra.mrb[0].mxu0 %v5377
      %v5455 = vpop.f32.mrb[0].mxu0
      %v5456 = vadd.f32 0.0, %v5455
      %v5457 = vpop.f32.mrb[0].mxu0
      %5458 = vdwg.mxu0
      %5462 = vrot.lane.b32.xlu0 %v4519, 32
      %v5463 = vpop.permute.xlu0 %5462
      %5464 = vrot.lane.b32.xlu0 %v4524, 32
      %v5465 = vpop.permute.xlu0 %5464
      %5466 = vrot.lane.b32.xlu0 %v4529, 32
      %v5467 = vpop.permute.xlu0 %5466
      %5474 = vrot.lane.b32.xlu0 %v5446, 64
      %v5475 = vpop.permute.xlu0 %5474
      %5476 = vrot.lane.b32.xlu0 %v5451, 64
      %v5477 = vpop.permute.xlu0 %5476
      %5478 = vrot.lane.b32.xlu0 %v5456, 64
      %v5479 = vpop.permute.xlu0 %5478
      %v5483 = vsel %vm2414, %v3326, %v5463
      %v5484 = vsel %vm2414, %v3331, %v5465
      %v5485 = vsel %vm2414, %v3336, %v5467
      %v5486 = vsel %vm4577, %v5483, %v5475
      %v5487 = vsel %vm4577, %v5484, %v5477
      %v5488 = vsel %vm4577, %v5485, %v5479
      %v5489 = vld [vmem:[%s4 + $0x2a8] sm:$0x1]
      %v5490 = vld [vmem:[%s4 + $0x2b0] sm:$0xff]
      %v5491 = vld [vmem:[%s4 + $0x2b8] sm:$0xff]
      %v5492 = vld [vmem:[%s4 + $0x2c0] sm:$0xff]
      %v5493 = vld [vmem:[%s4 + $0x2c8] sm:$0xff]
      %v5494 = vld [vmem:[%s4 + $0x2d0] sm:$0xff]
      %v5495 = vld [vmem:[%s4 + $0x2d8] sm:$0xff]
      %v5496 = vld [vmem:[%s4 + $0x2e0] sm:$0xff]
      %v5497 = vld [vmem:[%s4 + $0x2e8] sm:$0xff]
      %v5498 = vld [vmem:[%s4 + $0x2f0] sm:$0xff]
      %v5499 = vld [vmem:[%s4 + $0x2f8] sm:$0xff]
      %v5500 = vld [vmem:[%s4 + $0x300] sm:$0xff]
      %v5501 = vld [vmem:[%s4 + $0x308] sm:$0xff]
      %v5502 = vlaneseq
      %v5503 = vshrl.u32 %v5502, 7
      %v5504 = vsub.s32 0, %v5503
      %v5505 = vrot.slane %v5489, %v5504
      %vm5506 = vcmask 785408
      %v5508 = vsel %vm5506, %v5486, 0
      %v5511 = vsel %vm5506, %v5487, 0
      %v5514 = vsel %vm5506, %v5488, 0
      %5516 = vmatprep.subr.mxu0 0.0
      %5517 = vmatpush1.msra.mxu0 %v5490
      %5518 = vmatprep.subr.mxu0 0.0
      %5519 = vmatpush1.msra.mxu0 %v5491
      %5520 = vmatprep.subr.mxu0 0.0
      %5521 = vmatpush1.msra.mxu0 %v5492
      %5522 = vmatprep.subr.mxu0 0.0
      %5523 = vmatpush1.msra.mxu0 %v5493
      %5524 = vmatprep.subr.mxu0 0.0
      %5525 = vmatpush1.msra.mxu0 %v5494
      %5526 = vmatprep.subr.mxu0 0.0
      %5527 = vmatpush1.msra.mxu0 %v5495
      %5528 = vmatprep.subr.mxu0 0.0
      %5529 = vmatpush1.msra.mxu0 %v5496
      %5530 = vmatprep.subr.mxu0 0.0
      %5531 = vmatpush1.msra.mxu0 %v5497
      %5532 = vmatprep.subr.mxu0 0.0
      %5533 = vmatpush1.msra.mxu0 %v5498
      %5534 = vmatprep.subr.mxu0 0.0
      %5535 = vmatpush1.msra.mxu0 %v5499
      %5536 = vmatprep.subr.mxu0 0.0
      %5537 = vmatpush1.msra.mxu0 %v5500
      %5538 = vmatprep.subr.mxu0 0.0
      %5539 = vmatpush1.msra.mxu0 %v5501
      %5540 = vmatprep.subr.mxu0 0.0
      %5541 = vmatpush1.msra.mxu0 0.0
      %5542 = vmatprep.subr.mxu0 0.0
      %5543 = vmatpush1.msra.mxu0 0.0
      %5544 = vmatprep.subr.mxu0 0.0
      %5545 = vmatpush1.msra.mxu0 0.0
      %5546 = vmatprep.subr.mxu0 0.0
      %5547 = vmatpush1.msra.mxu0 0.0
      %5548 = vmatprep.subr.mxu0 0.0
      %5549 = vmatpush1.msra.mxu0 0.0
      %5550 = vmatprep.subr.mxu0 0.0
      %5551 = vmatpush1.msra.mxu0 0.0
      %5552 = vmatprep.subr.mxu0 0.0
      %5553 = vmatpush1.msra.mxu0 0.0
      %5554 = vmatprep.subr.mxu0 0.0
      %5555 = vmatpush1.msra.mxu0 0.0
      %5556 = vmatprep.subr.mxu0 0.0
      %5557 = vmatpush1.msra.mxu0 0.0
      %5558 = vmatprep.subr.mxu0 0.0
      %5559 = vmatpush1.msra.mxu0 0.0
      %5560 = vmatprep.subr.mxu0 0.0
      %5561 = vmatpush1.msra.mxu0 0.0
      %5562 = vmatprep.subr.mxu0 0.0
      %5563 = vmatpush1.msra.mxu0 0.0
      %5564 = vmatprep.subr.mxu0 0.0
      %5565 = vmatpush1.msra.mxu0 0.0
      %5566 = vmatprep.subr.mxu0 0.0
      %5567 = vmatpush1.msra.mxu0 0.0
      %5568 = vmatprep.subr.mxu0 0.0
      %5569 = vmatpush1.msra.mxu0 0.0
      %5570 = vmatprep.subr.mxu0 0.0
      %5571 = vmatpush1.msra.mxu0 0.0
      %5572 = vmatprep.subr.mxu0 0.0
      %5573 = vmatpush1.msra.mxu0 0.0
      %5574 = vmatprep.subr.mxu0 0.0
      %5575 = vmatpush1.msra.mxu0 0.0
      %5576 = vmatprep.subr.mxu0 0.0
      %5577 = vmatpush1.msra.mxu0 0.0
      %5578 = vmatprep.subr.mxu0 0.0
      %5579 = vmatpush1.msra.mxu0 0.0
      %5580 = vmatprep.mubr.f32.mxu0 0.0
      %5581 = vmatmul.mubr.f32.gmra.mrb[0].mxu0 %v5508
      %v5582 = vpop.f32.mrb[0].mxu0
      %v5583 = vadd.f32 %v5505, %v5582
      %v5584 = vpop.f32.mrb[0].mxu0
      %5585 = vmatprep.mubr.f32.mxu0 0.0
      %5586 = vmatmul.mubr.f32.gmra.mrb[0].mxu0 %v5511
      %v5587 = vpop.f32.mrb[0].mxu0
      %v5588 = vadd.f32 %v5505, %v5587
      %v5589 = vpop.f32.mrb[0].mxu0
      %5590 = vmatprep.mubr.f32.mxu0 0.0
      %5591 = vmatmul.mubr.f32.gmra.mrb[0].mxu0 %v5514
      %v5592 = vpop.f32.mrb[0].mxu0
      %v5593 = vadd.f32 %v5505, %v5592
      %v5594 = vpop.f32.mrb[0].mxu0
      %5595 = vdwg.mxu0
      %v5596 = vmax.f32 %v5583, 0.0
      %v5597 = vmax.f32 %v5588, 0.0
      %v5598 = vmax.f32 %v5593, 0.0
      %v5599 = vld [vmem:[%s4 + $0x310] sm:$0x1]
      %v5600 = vld [vmem:[%s4 + $0x318] sm:$0xff]
      %v5601 = vld [vmem:[%s4 + $0x320] sm:$0xff]
      %v5602 = vld [vmem:[%s4 + $0x328] sm:$0xff]
      %v5603 = vld [vmem:[%s4 + $0x330] sm:$0xff]
      %v5604 = vlaneseq
      %v5605 = vshrl.u32 %v5604, 7
      %v5606 = vsub.s32 0, %v5605
      %v5607 = vrot.slane %v5599, %v5606
      %v5609 = vsel %vm2414, %v5596, 0
      %v5612 = vsel %vm2414, %v5597, 0
      %v5615 = vsel %vm2414, %v5598, 0
      %5617 = vmatprep.subr.mxu0 0.0
      %5618 = vmatpush1.msra.mxu0 %v5600
      %5619 = vmatprep.subr.mxu0 0.0
      %5620 = vmatpush1.msra.mxu0 %v5601
      %5621 = vmatprep.subr.mxu0 0.0
      %5622 = vmatpush1.msra.mxu0 %v5602
      %5623 = vmatprep.subr.mxu0 0.0
      %5624 = vmatpush1.msra.mxu0 %v5603
      %5625 = vmatprep.subr.mxu0 0.0
      %5626 = vmatpush1.msra.mxu0 0.0
      %5627 = vmatprep.subr.mxu0 0.0
      %5628 = vmatpush1.msra.mxu0 0.0
      %5629 = vmatprep.subr.mxu0 0.0
      %5630 = vmatpush1.msra.mxu0 0.0
      %5631 = vmatprep.subr.mxu0 0.0
      %5632 = vmatpush1.msra.mxu0 0.0
      %5633 = vmatprep.subr.mxu0 0.0
      %5634 = vmatpush1.msra.mxu0 0.0
      %5635 = vmatprep.subr.mxu0 0.0
      %5636 = vmatpush1.msra.mxu0 0.0
      %5637 = vmatprep.subr.mxu0 0.0
      %5638 = vmatpush1.msra.mxu0 0.0
      %5639 = vmatprep.subr.mxu0 0.0
      %5640 = vmatpush1.msra.mxu0 0.0
      %5641 = vmatprep.subr.mxu0 0.0
      %5642 = vmatpush1.msra.mxu0 0.0
      %5643 = vmatprep.subr.mxu0 0.0
      %5644 = vmatpush1.msra.mxu0 0.0
      %5645 = vmatprep.subr.mxu0 0.0
      %5646 = vmatpush1.msra.mxu0 0.0
      %5647 = vmatprep.subr.mxu0 0.0
      %5648 = vmatpush1.msra.mxu0 0.0
      %5649 = vmatprep.subr.mxu0 0.0
      %5650 = vmatpush1.msra.mxu0 0.0
      %5651 = vmatprep.subr.mxu0 0.0
      %5652 = vmatpush1.msra.mxu0 0.0
      %5653 = vmatprep.subr.mxu0 0.0
      %5654 = vmatpush1.msra.mxu0 0.0
      %5655 = vmatprep.subr.mxu0 0.0
      %5656 = vmatpush1.msra.mxu0 0.0
      %5657 = vmatprep.subr.mxu0 0.0
      %5658 = vmatpush1.msra.mxu0 0.0
      %5659 = vmatprep.subr.mxu0 0.0
      %5660 = vmatpush1.msra.mxu0 0.0
      %5661 = vmatprep.subr.mxu0 0.0
      %5662 = vmatpush1.msra.mxu0 0.0
      %5663 = vmatprep.subr.mxu0 0.0
      %5664 = vmatpush1.msra.mxu0 0.0
      %5665 = vmatprep.subr.mxu0 0.0
      %5666 = vmatpush1.msra.mxu0 0.0
      %5667 = vmatprep.subr.mxu0 0.0
      %5668 = vmatpush1.msra.mxu0 0.0
      %5669 = vmatprep.subr.mxu0 0.0
      %5670 = vmatpush1.msra.mxu0 0.0
      %5671 = vmatprep.subr.mxu0 0.0
      %5672 = vmatpush1.msra.mxu0 0.0
      %5673 = vmatprep.subr.mxu0 0.0
      %5674 = vmatpush1.msra.mxu0 0.0
      %5675 = vmatprep.subr.mxu0 0.0
      %5676 = vmatpush1.msra.mxu0 0.0
      %5677 = vmatprep.subr.mxu0 0.0
      %5678 = vmatpush1.msra.mxu0 0.0
      %5679 = vmatprep.subr.mxu0 0.0
      %5680 = vmatpush1.msra.mxu0 0.0
      %5681 = vmatprep.mubr.f32.mxu0 0.0
      %5682 = vmatmul.mubr.f32.gmra.mrb[0].mxu0 %v5609
      %v5683 = vpop.f32.mrb[0].mxu0
      %v5684 = vadd.f32 %v5607, %v5683
      %v5685 = vpop.f32.mrb[0].mxu0
      %5686 = vmatprep.mubr.f32.mxu0 0.0
      %5687 = vmatmul.mubr.f32.gmra.mrb[0].mxu0 %v5612
      %v5688 = vpop.f32.mrb[0].mxu0
      %v5689 = vadd.f32 %v5607, %v5688
      %v5690 = vpop.f32.mrb[0].mxu0
      %5691 = vmatprep.mubr.f32.mxu0 0.0
      %5692 = vmatmul.mubr.f32.gmra.mrb[0].mxu0 %v5615
      %v5693 = vpop.f32.mrb[0].mxu0
      %v5694 = vadd.f32 %v5607, %v5693
      %v5695 = vpop.f32.mrb[0].mxu0
      %5696 = vdwg.mxu0
      %vm5697 = vcmask 23552
      %v5698 = vsel %vm5697, %v5684, -inf
      %5699 = vmax.xlane.f32.xlu0 %v5698
      %v5700 = vpop.xlane.xlu0 %5699
      %v5701 = vsel %vm5697, %v5689, -inf
      %5702 = vmax.xlane.f32.xlu0 %v5701
      %v5703 = vpop.xlane.xlu0 %5702
      %vm5704 = vcmask 19456
      %v5705 = vsel %vm5704, %v5694, -inf
      %5706 = vmax.xlane.f32.xlu0 %v5705
      %v5707 = vpop.xlane.xlu0 %5706
      %v5708 = vsub.f32 %v5684, %v5700
      %v5709 = vsub.f32 %v5689, %v5703
      %v5710 = vsub.f32 %v5694, %v5707
      %v5711 = vmul.f32 %v5708, 1.442695
      %v5712 = vpow.pop %v5711
      %v5713 = vmul.f32 %v5709, 1.442695
      %v5714 = vpow.pop %v5713
      %v5715 = vmul.f32 %v5710, 1.442695
      %v5716 = vpow.pop %v5715
      %v5717 = vsel %vm5697, %v5712, 0.0
      %5718 = vadd.xlane.f32.xlu0 %v5717
      %v5719 = vpop.xlane.xlu0 %5718
      %v5720 = vsel %vm5697, %v5714, 0.0
      %5721 = vadd.xlane.f32.xlu0 %v5720
      %v5722 = vpop.xlane.xlu0 %5721
      %v5723 = vsel %vm5704, %v5716, 0.0
      %5724 = vadd.xlane.f32.xlu0 %v5723
      %v5725 = vpop.xlane.xlu0 %5724
      %v5726 = vrcp.pop %v5719
      %v5727 = vmul.f32 %v5712, %v5726
      %v5728 = vrcp.pop %v5722
      %v5729 = vmul.f32 %v5714, %v5728
      %v5730 = vrcp.pop %v5725
      %v5731 = vmul.f32 %v5716, %v5730
      %v5732 = vld [vmem:[%s4 + $0x338] sm:$0x1]
      %v5733 = vld [vmem:[%s4 + $0x340] sm:$0xff]
      %v5734 = vld [vmem:[%s4 + $0x348] sm:$0xff]
      %v5735 = vld [vmem:[%s4 + $0x350] sm:$0xff]
      %v5736 = vld [vmem:[%s4 + $0x358] sm:$0xff]
      %v5737 = vld [vmem:[%s4 + $0x360] sm:$0xff]
      %v5738 = vld [vmem:[%s4 + $0x368] sm:$0xff]
      %v5739 = vld [vmem:[%s4 + $0x370] sm:$0xff]
      %v5740 = vld [vmem:[%s4 + $0x378] sm:$0xff]
      %v5741 = vld [vmem:[%s4 + $0x380] sm:$0xff]
      %v5742 = vld [vmem:[%s4 + $0x388] sm:$0xff]
      %v5743 = vld [vmem:[%s4 + $0x390] sm:$0xff]
      %v5744 = vld [vmem:[%s4 + $0x398] sm:$0xff]
      %v5745 = vlaneseq
      %v5746 = vshrl.u32 %v5745, 7
      %v5747 = vsub.s32 0, %v5746
      %v5748 = vrot.slane %v5732, %v5747
      %5749 = vmatprep.subr.mxu0 0.0
      %5750 = vmatpush1.msra.mxu0 %v5733
      %5751 = vmatprep.subr.mxu0 0.0
      %5752 = vmatpush1.msra.mxu0 %v5734
      %5753 = vmatprep.subr.mxu0 0.0
      %5754 = vmatpush1.msra.mxu0 %v5735
      %5755 = vmatprep.subr.mxu0 0.0
      %5756 = vmatpush1.msra.mxu0 %v5736
      %5757 = vmatprep.subr.mxu0 0.0
      %5758 = vmatpush1.msra.mxu0 %v5737
      %5759 = vmatprep.subr.mxu0 0.0
      %5760 = vmatpush1.msra.mxu0 %v5738
      %5761 = vmatprep.subr.mxu0 0.0
      %5762 = vmatpush1.msra.mxu0 %v5739
      %5763 = vmatprep.subr.mxu0 0.0
      %5764 = vmatpush1.msra.mxu0 %v5740
      %5765 = vmatprep.subr.mxu0 0.0
      %5766 = vmatpush1.msra.mxu0 %v5741
      %5767 = vmatprep.subr.mxu0 0.0
      %5768 = vmatpush1.msra.mxu0 %v5742
      %5769 = vmatprep.subr.mxu0 0.0
      %5770 = vmatpush1.msra.mxu0 %v5743
      %5771 = vmatprep.subr.mxu0 0.0
      %5772 = vmatpush1.msra.mxu0 %v5744
      %5773 = vmatprep.subr.mxu0 0.0
      %5774 = vmatpush1.msra.mxu0 0.0
      %5775 = vmatprep.subr.mxu0 0.0
      %5776 = vmatpush1.msra.mxu0 0.0
      %5777 = vmatprep.subr.mxu0 0.0
      %5778 = vmatpush1.msra.mxu0 0.0
      %5779 = vmatprep.subr.mxu0 0.0
      %5780 = vmatpush1.msra.mxu0 0.0
      %5781 = vmatprep.subr.mxu0 0.0
      %5782 = vmatpush1.msra.mxu0 0.0
      %5783 = vmatprep.subr.mxu0 0.0
      %5784 = vmatpush1.msra.mxu0 0.0
      %5785 = vmatprep.subr.mxu0 0.0
      %5786 = vmatpush1.msra.mxu0 0.0
      %5787 = vmatprep.subr.mxu0 0.0
      %5788 = vmatpush1.msra.mxu0 0.0
      %5789 = vmatprep.subr.mxu0 0.0
      %5790 = vmatpush1.msra.mxu0 0.0
      %5791 = vmatprep.subr.mxu0 0.0
      %5792 = vmatpush1.msra.mxu0 0.0
      %5793 = vmatprep.subr.mxu0 0.0
      %5794 = vmatpush1.msra.mxu0 0.0
      %5795 = vmatprep.subr.mxu0 0.0
      %5796 = vmatpush1.msra.mxu0 0.0
      %5797 = vmatprep.subr.mxu0 0.0
      %5798 = vmatpush1.msra.mxu0 0.0
      %5799 = vmatprep.subr.mxu0 0.0
      %5800 = vmatpush1.msra.mxu0 0.0
      %5801 = vmatprep.subr.mxu0 0.0
      %5802 = vmatpush1.msra.mxu0 0.0
      %5803 = vmatprep.subr.mxu0 0.0
      %5804 = vmatpush1.msra.mxu0 0.0
      %5805 = vmatprep.subr.mxu0 0.0
      %5806 = vmatpush1.msra.mxu0 0.0
      %5807 = vmatprep.subr.mxu0 0.0
      %5808 = vmatpush1.msra.mxu0 0.0
      %5809 = vmatprep.subr.mxu0 0.0
      %5810 = vmatpush1.msra.mxu0 0.0
      %5811 = vmatprep.subr.mxu0 0.0
      %5812 = vmatpush1.msra.mxu0 0.0
      %5813 = vmatprep.mubr.f32.mxu0 0.0
      %5814 = vmatmul.mubr.f32.gmra.mrb[0].mxu0 %v5508
      %v5815 = vpop.f32.mrb[0].mxu0
      %v5816 = vadd.f32 %v5748, %v5815
      %v5817 = vpop.f32.mrb[0].mxu0
      %5818 = vmatprep.mubr.f32.mxu0 0.0
      %5819 = vmatmul.mubr.f32.gmra.mrb[0].mxu0 %v5511
      %v5820 = vpop.f32.mrb[0].mxu0
      %v5821 = vadd.f32 %v5748, %v5820
      %v5822 = vpop.f32.mrb[0].mxu0
      %5823 = vmatprep.mubr.f32.mxu0 0.0
      %5824 = vmatmul.mubr.f32.gmra.mrb[0].mxu0 %v5514
      %v5825 = vpop.f32.mrb[0].mxu0
      %v5826 = vadd.f32 %v5748, %v5825
      %v5827 = vpop.f32.mrb[0].mxu0
      %5828 = vdwg.mxu0
      %v5829 = vmax.f32 %v5816, 0.0
      %v5830 = vmax.f32 %v5821, 0.0
      %v5831 = vmax.f32 %v5826, 0.0
      %v5832 = vld [vmem:[%s4 + $0x3a0] sm:$0x1]
      %v5833 = vld [vmem:[%s4 + $0x3a8] sm:$0xff]
      %v5834 = vld [vmem:[%s4 + $0x3b0] sm:$0xff]
      %v5835 = vld [vmem:[%s4 + $0x3b8] sm:$0xff]
      %v5836 = vld [vmem:[%s4 + $0x3c0] sm:$0xff]
      %v5837 = vlaneseq
      %v5838 = vshrl.u32 %v5837, 7
      %v5839 = vsub.s32 0, %v5838
      %v5840 = vrot.slane %v5832, %v5839
      %v5842 = vsel %vm2414, %v5829, 0
      %v5845 = vsel %vm2414, %v5830, 0
      %v5848 = vsel %vm2414, %v5831, 0
      %5850 = vmatprep.subr.mxu0 0.0
      %5851 = vmatpush1.msra.mxu0 %v5833
      %5852 = vmatprep.subr.mxu0 0.0
      %5853 = vmatpush1.msra.mxu0 %v5834
      %5854 = vmatprep.subr.mxu0 0.0
      %5855 = vmatpush1.msra.mxu0 %v5835
      %5856 = vmatprep.subr.mxu0 0.0
      %5857 = vmatpush1.msra.mxu0 %v5836
      %5858 = vmatprep.subr.mxu0 0.0
      %5859 = vmatpush1.msra.mxu0 0.0
      %5860 = vmatprep.subr.mxu0 0.0
      %5861 = vmatpush1.msra.mxu0 0.0
      %5862 = vmatprep.subr.mxu0 0.0
      %5863 = vmatpush1.msra.mxu0 0.0
      %5864 = vmatprep.subr.mxu0 0.0
      %5865 = vmatpush1.msra.mxu0 0.0
      %5866 = vmatprep.subr.mxu0 0.0
      %5867 = vmatpush1.msra.mxu0 0.0
      %5868 = vmatprep.subr.mxu0 0.0
      %5869 = vmatpush1.msra.mxu0 0.0
      %5870 = vmatprep.subr.mxu0 0.0
      %5871 = vmatpush1.msra.mxu0 0.0
      %5872 = vmatprep.subr.mxu0 0.0
      %5873 = vmatpush1.msra.mxu0 0.0
      %5874 = vmatprep.subr.mxu0 0.0
      %5875 = vmatpush1.msra.mxu0 0.0
      %5876 = vmatprep.subr.mxu0 0.0
      %5877 = vmatpush1.msra.mxu0 0.0
      %5878 = vmatprep.subr.mxu0 0.0
      %5879 = vmatpush1.msra.mxu0 0.0
      %5880 = vmatprep.subr.mxu0 0.0
      %5881 = vmatpush1.msra.mxu0 0.0
      %5882 = vmatprep.subr.mxu0 0.0
      %5883 = vmatpush1.msra.mxu0 0.0
      %5884 = vmatprep.subr.mxu0 0.0
      %5885 = vmatpush1.msra.mxu0 0.0
      %5886 = vmatprep.subr.mxu0 0.0
      %5887 = vmatpush1.msra.mxu0 0.0
      %5888 = vmatprep.subr.mxu0 0.0
      %5889 = vmatpush1.msra.mxu0 0.0
      %5890 = vmatprep.subr.mxu0 0.0
      %5891 = vmatpush1.msra.mxu0 0.0
      %5892 = vmatprep.subr.mxu0 0.0
      %5893 = vmatpush1.msra.mxu0 0.0
      %5894 = vmatprep.subr.mxu0 0.0
      %5895 = vmatpush1.msra.mxu0 0.0
      %5896 = vmatprep.subr.mxu0 0.0
      %5897 = vmatpush1.msra.mxu0 0.0
      %5898 = vmatprep.subr.mxu0 0.0
      %5899 = vmatpush1.msra.mxu0 0.0
      %5900 = vmatprep.subr.mxu0 0.0
      %5901 = vmatpush1.msra.mxu0 0.0
      %5902 = vmatprep.subr.mxu0 0.0
      %5903 = vmatpush1.msra.mxu0 0.0
      %5904 = vmatprep.subr.mxu0 0.0
      %5905 = vmatpush1.msra.mxu0 0.0
      %5906 = vmatprep.subr.mxu0 0.0
      %5907 = vmatpush1.msra.mxu0 0.0
      %5908 = vmatprep.subr.mxu0 0.0
      %5909 = vmatpush1.msra.mxu0 0.0
      %5910 = vmatprep.subr.mxu0 0.0
      %5911 = vmatpush1.msra.mxu0 0.0
      %5912 = vmatprep.subr.mxu0 0.0
      %5913 = vmatpush1.msra.mxu0 0.0
      %5914 = vmatprep.mubr.f32.mxu0 0.0
      %5915 = vmatmul.mubr.f32.gmra.mrb[0].mxu0 %v5842
      %v5916 = vpop.f32.mrb[0].mxu0
      %v5917 = vadd.f32 %v5840, %v5916
      %v5918 = vpop.f32.mrb[0].mxu0
      %5919 = vmatprep.mubr.f32.mxu0 0.0
      %5920 = vmatmul.mubr.f32.gmra.mrb[0].mxu0 %v5845
      %v5921 = vpop.f32.mrb[0].mxu0
      %v5922 = vadd.f32 %v5840, %v5921
      %v5923 = vpop.f32.mrb[0].mxu0
      %5924 = vmatprep.mubr.f32.mxu0 0.0
      %5925 = vmatmul.mubr.f32.gmra.mrb[0].mxu0 %v5848
      %v5926 = vpop.f32.mrb[0].mxu0
      %v5927 = vadd.f32 %v5840, %v5926
      %v5928 = vpop.f32.mrb[0].mxu0
      %5929 = vdwg.mxu0
      %v5930 = vsel %vm5697, %v5917, -inf
      %5931 = vmax.xlane.f32.xlu0 %v5930
      %v5932 = vpop.xlane.xlu0 %5931
      %v5933 = vsel %vm5697, %v5922, -inf
      %5934 = vmax.xlane.f32.xlu0 %v5933
      %v5935 = vpop.xlane.xlu0 %5934
      %v5936 = vsel %vm5704, %v5927, -inf
      %5937 = vmax.xlane.f32.xlu0 %v5936
      %v5938 = vpop.xlane.xlu0 %5937
      %v5939 = vsub.f32 %v5917, %v5932
      %v5940 = vsub.f32 %v5922, %v5935
      %v5941 = vsub.f32 %v5927, %v5938
      %v5942 = vmul.f32 %v5939, 1.442695
      %v5943 = vpow.pop %v5942
      %v5944 = vmul.f32 %v5940, 1.442695
      %v5945 = vpow.pop %v5944
      %v5946 = vmul.f32 %v5941, 1.442695
      %v5947 = vpow.pop %v5946
      %v5948 = vsel %vm5697, %v5943, 0.0
      %5949 = vadd.xlane.f32.xlu0 %v5948
      %v5950 = vpop.xlane.xlu0 %5949
      %v5951 = vsel %vm5697, %v5945, 0.0
      %5952 = vadd.xlane.f32.xlu0 %v5951
      %v5953 = vpop.xlane.xlu0 %5952
      %v5954 = vsel %vm5704, %v5947, 0.0
      %5955 = vadd.xlane.f32.xlu0 %v5954
      %v5956 = vpop.xlane.xlu0 %5955
      %v5957 = vrcp.pop %v5950
      %v5958 = vmul.f32 %v5943, %v5957
      %v5959 = vrcp.pop %v5953
      %v5960 = vmul.f32 %v5945, %v5959
      %v5961 = vrcp.pop %v5956
      %v5962 = vmul.f32 %v5947, %v5961
      %5964 = vset.pattern.permute.xlu0 0
      %5965 = vperm.xlu0 %5964, %v5727
      %v5966 = vpop.permute.xlu0 %5965
      %5969 = vset.pattern.permute.xlu0 0
      %5970 = vperm.xlu0 %5969, %v5729
      %v5971 = vpop.permute.xlu0 %5970
      %5974 = vset.pattern.permute.xlu0 0
      %5975 = vperm.xlu0 %5974, %v5731
      %v5976 = vpop.permute.xlu0 %5975
      %v5978 = vmul.f32 %v5966, %v3326
      %v5979 = vmul.f32 %v5971, %v3331
      %v5980 = vmul.f32 %v5976, %v3336
      %v5981 = vadd.f32 %v5978, 0.0
      %v5982 = vadd.f32 %v5979, 0.0
      %v5983 = vadd.f32 %v5980, 0.0
      %5985 = vset.pattern.permute.xlu0 0
      %5986 = vperm.xlu0 %5985, %v5958
      %v5987 = vpop.permute.xlu0 %5986
      %5990 = vset.pattern.permute.xlu0 0
      %5991 = vperm.xlu0 %5990, %v5960
      %v5992 = vpop.permute.xlu0 %5991
      %5995 = vset.pattern.permute.xlu0 0
      %5996 = vperm.xlu0 %5995, %v5962
      %v5997 = vpop.permute.xlu0 %5996
      %v5999 = vmul.f32 %v5987, %v3326
      %v6000 = vmul.f32 %v5992, %v3331
      %v6001 = vmul.f32 %v5997, %v3336
      %v6002 = vadd.f32 %v5999, 0.0
      %v6003 = vadd.f32 %v6000, 0.0
      %v6004 = vadd.f32 %v6001, 0.0
      %6005 = vset.pattern.permute.xlu0 1
      %6006 = vperm.xlu0 %6005, %v5727
      %v6007 = vpop.permute.xlu0 %6006
      %6009 = vset.pattern.permute.xlu0 1
      %6010 = vperm.xlu0 %6009, %v5729
      %v6011 = vpop.permute.xlu0 %6010
      %6013 = vset.pattern.permute.xlu0 1
      %6014 = vperm.xlu0 %6013, %v5731
      %v6015 = vpop.permute.xlu0 %6014
      %v6017 = vmul.f32 %v6007, %v4519
      %v6018 = vmul.f32 %v6011, %v4524
      %v6019 = vmul.f32 %v6015, %v4529
      %v6020 = vadd.f32 %v5981, %v6017
      %v6021 = vadd.f32 %v5982, %v6018
      %v6022 = vadd.f32 %v5983, %v6019
      %6023 = vset.pattern.permute.xlu0 1
      %6024 = vperm.xlu0 %6023, %v5958
      %v6025 = vpop.permute.xlu0 %6024
      %6027 = vset.pattern.permute.xlu0 1
      %6028 = vperm.xlu0 %6027, %v5960
      %v6029 = vpop.permute.xlu0 %6028
      %6031 = vset.pattern.permute.xlu0 1
      %6032 = vperm.xlu0 %6031, %v5962
      %v6033 = vpop.permute.xlu0 %6032
      %v6035 = vmul.f32 %v6025, %v4519
      %v6036 = vmul.f32 %v6029, %v4524
      %v6037 = vmul.f32 %v6033, %v4529
      %v6038 = vadd.f32 %v6002, %v6035
      %v6039 = vadd.f32 %v6003, %v6036
      %v6040 = vadd.f32 %v6004, %v6037
      %6041 = vset.pattern.permute.xlu0 2
      %6042 = vperm.xlu0 %6041, %v5727
      %v6043 = vpop.permute.xlu0 %6042
      %6045 = vset.pattern.permute.xlu0 2
      %6046 = vperm.xlu0 %6045, %v5729
      %v6047 = vpop.permute.xlu0 %6046
      %6049 = vset.pattern.permute.xlu0 2
      %6050 = vperm.xlu0 %6049, %v5731
      %v6051 = vpop.permute.xlu0 %6050
      %v6053 = vmul.f32 %v6043, %v5446
      %v6054 = vmul.f32 %v6047, %v5451
      %v6055 = vmul.f32 %v6051, %v5456
      %v6056 = vadd.f32 %v6020, %v6053
      %v6057 = vadd.f32 %v6021, %v6054
      %v6058 = vadd.f32 %v6022, %v6055
      %6059 = vset.pattern.permute.xlu0 2
      %6060 = vperm.xlu0 %6059, %v5958
      %v6061 = vpop.permute.xlu0 %6060
      %6063 = vset.pattern.permute.xlu0 2
      %6064 = vperm.xlu0 %6063, %v5960
      %v6065 = vpop.permute.xlu0 %6064
      %6067 = vset.pattern.permute.xlu0 2
      %6068 = vperm.xlu0 %6067, %v5962
      %v6069 = vpop.permute.xlu0 %6068
      %v6071 = vmul.f32 %v6061, %v5446
      %v6072 = vmul.f32 %v6065, %v5451
      %v6073 = vmul.f32 %v6069, %v5456
      %v6074 = vadd.f32 %v6038, %v6071
      %v6075 = vadd.f32 %v6039, %v6072
      %v6076 = vadd.f32 %v6040, %v6073
      %v6077 = vld [vmem:[%s4 + $0x208] sm:$0x1]
      %v6078 = vld [vmem:[%s4 + $0x210] sm:$0xff]
      %v6079 = vld [vmem:[%s4 + $0x218] sm:$0xff]
      %v6080 = vld [vmem:[%s4 + $0x220] sm:$0xff]
      %v6081 = vld [vmem:[%s4 + $0x228] sm:$0xff]
      %v6082 = vlaneseq
      %v6083 = vshrl.u32 %v6082, 7
      %v6084 = vsub.s32 0, %v6083
      %v6085 = vrot.slane %v6077, %v6084
      %v6087 = vsel %vm2414, %v6056, 0
      %v6090 = vsel %vm2414, %v6057, 0
      %v6093 = vsel %vm2414, %v6058, 0
      %6095 = vmatprep.subr.mxu0 0.0
      %6096 = vmatpush1.msra.mxu0 %v6078
      %6097 = vmatprep.subr.mxu0 0.0
      %6098 = vmatpush1.msra.mxu0 %v6079
      %6099 = vmatprep.subr.mxu0 0.0
      %6100 = vmatpush1.msra.mxu0 %v6080
      %6101 = vmatprep.subr.mxu0 0.0
      %6102 = vmatpush1.msra.mxu0 %v6081
      %6103 = vmatprep.subr.mxu0 0.0
      %6104 = vmatpush1.msra.mxu0 0.0
      %6105 = vmatprep.subr.mxu0 0.0
      %6106 = vmatpush1.msra.mxu0 0.0
      %6107 = vmatprep.subr.mxu0 0.0
      %6108 = vmatpush1.msra.mxu0 0.0
      %6109 = vmatprep.subr.mxu0 0.0
      %6110 = vmatpush1.msra.mxu0 0.0
      %6111 = vmatprep.subr.mxu0 0.0
      %6112 = vmatpush1.msra.mxu0 0.0
      %6113 = vmatprep.subr.mxu0 0.0
      %6114 = vmatpush1.msra.mxu0 0.0
      %6115 = vmatprep.subr.mxu0 0.0
      %6116 = vmatpush1.msra.mxu0 0.0
      %6117 = vmatprep.subr.mxu0 0.0
      %6118 = vmatpush1.msra.mxu0 0.0
      %6119 = vmatprep.subr.mxu0 0.0
      %6120 = vmatpush1.msra.mxu0 0.0
      %6121 = vmatprep.subr.mxu0 0.0
      %6122 = vmatpush1.msra.mxu0 0.0
      %6123 = vmatprep.subr.mxu0 0.0
      %6124 = vmatpush1.msra.mxu0 0.0
      %6125 = vmatprep.subr.mxu0 0.0
      %6126 = vmatpush1.msra.mxu0 0.0
      %6127 = vmatprep.subr.mxu0 0.0
      %6128 = vmatpush1.msra.mxu0 0.0
      %6129 = vmatprep.subr.mxu0 0.0
      %6130 = vmatpush1.msra.mxu0 0.0
      %6131 = vmatprep.subr.mxu0 0.0
      %6132 = vmatpush1.msra.mxu0 0.0
      %6133 = vmatprep.subr.mxu0 0.0
      %6134 = vmatpush1.msra.mxu0 0.0
      %6135 = vmatprep.subr.mxu0 0.0
      %6136 = vmatpush1.msra.mxu0 0.0
      %6137 = vmatprep.subr.mxu0 0.0
      %6138 = vmatpush1.msra.mxu0 0.0
      %6139 = vmatprep.subr.mxu0 0.0
      %6140 = vmatpush1.msra.mxu0 0.0
      %6141 = vmatprep.subr.mxu0 0.0
      %6142 = vmatpush1.msra.mxu0 0.0
      %6143 = vmatprep.subr.mxu0 0.0
      %6144 = vmatpush1.msra.mxu0 0.0
      %6145 = vmatprep.subr.mxu0 0.0
      %6146 = vmatpush1.msra.mxu0 0.0
      %6147 = vmatprep.subr.mxu0 0.0
      %6148 = vmatpush1.msra.mxu0 0.0
      %6149 = vmatprep.subr.mxu0 0.0
      %6150 = vmatpush1.msra.mxu0 0.0
      %6151 = vmatprep.subr.mxu0 0.0
      %6152 = vmatpush1.msra.mxu0 0.0
      %6153 = vmatprep.subr.mxu0 0.0
      %6154 = vmatpush1.msra.mxu0 0.0
      %6155 = vmatprep.subr.mxu0 0.0
      %6156 = vmatpush1.msra.mxu0 0.0
      %6157 = vmatprep.subr.mxu0 0.0
      %6158 = vmatpush1.msra.mxu0 0.0
      %6159 = vmatprep.mubr.f32.mxu0 0.0
      %6160 = vmatmul.mubr.f32.gmra.mrb[0].mxu0 %v6087
      %v6161 = vpop.f32.mrb[0].mxu0
      %v6162 = vadd.f32 %v6085, %v6161
      %v6163 = vpop.f32.mrb[0].mxu0
      %6164 = vmatprep.mubr.f32.mxu0 0.0
      %6165 = vmatmul.mubr.f32.gmra.mrb[0].mxu0 %v6090
      %v6166 = vpop.f32.mrb[0].mxu0
      %v6167 = vadd.f32 %v6085, %v6166
      %v6168 = vpop.f32.mrb[0].mxu0
      %6169 = vmatprep.mubr.f32.mxu0 0.0
      %6170 = vmatmul.mubr.f32.gmra.mrb[0].mxu0 %v6093
      %v6171 = vpop.f32.mrb[0].mxu0
      %v6172 = vadd.f32 %v6085, %v6171
      %v6173 = vpop.f32.mrb[0].mxu0
      %6174 = vdwg.mxu0
      %v6175 = vmax.f32 %v6162, 0.0
      %v6176 = vmax.f32 %v6167, 0.0
      %v6177 = vmax.f32 %v6172, 0.0
      %v6178 = vld [vmem:[%s4 + $0x230] sm:$0x1]
      %v6179 = vld [vmem:[%s4 + $0x238] sm:$0xff]
      %v6180 = vld [vmem:[%s4 + $0x240] sm:$0xff]
      %v6181 = vld [vmem:[%s4 + $0x248] sm:$0xff]
      %v6182 = vld [vmem:[%s4 + $0x250] sm:$0xff]
      %v6183 = vlaneseq
      %v6184 = vshrl.u32 %v6183, 7
      %v6185 = vsub.s32 0, %v6184
      %v6186 = vrot.slane %v6178, %v6185
      %v6188 = vsel %vm2414, %v6175, 0
      %v6191 = vsel %vm2414, %v6176, 0
      %v6194 = vsel %vm2414, %v6177, 0
      %6196 = vmatprep.subr.mxu0 0.0
      %6197 = vmatpush1.msra.mxu0 %v6179
      %6198 = vmatprep.subr.mxu0 0.0
      %6199 = vmatpush1.msra.mxu0 %v6180
      %6200 = vmatprep.subr.mxu0 0.0
      %6201 = vmatpush1.msra.mxu0 %v6181
      %6202 = vmatprep.subr.mxu0 0.0
      %6203 = vmatpush1.msra.mxu0 %v6182
      %6204 = vmatprep.subr.mxu0 0.0
      %6205 = vmatpush1.msra.mxu0 0.0
      %6206 = vmatprep.subr.mxu0 0.0
      %6207 = vmatpush1.msra.mxu0 0.0
      %6208 = vmatprep.subr.mxu0 0.0
      %6209 = vmatpush1.msra.mxu0 0.0
      %6210 = vmatprep.subr.mxu0 0.0
      %6211 = vmatpush1.msra.mxu0 0.0
      %6212 = vmatprep.subr.mxu0 0.0
      %6213 = vmatpush1.msra.mxu0 0.0
      %6214 = vmatprep.subr.mxu0 0.0
      %6215 = vmatpush1.msra.mxu0 0.0
      %6216 = vmatprep.subr.mxu0 0.0
      %6217 = vmatpush1.msra.mxu0 0.0
      %6218 = vmatprep.subr.mxu0 0.0
      %6219 = vmatpush1.msra.mxu0 0.0
      %6220 = vmatprep.subr.mxu0 0.0
      %6221 = vmatpush1.msra.mxu0 0.0
      %6222 = vmatprep.subr.mxu0 0.0
      %6223 = vmatpush1.msra.mxu0 0.0
      %6224 = vmatprep.subr.mxu0 0.0
      %6225 = vmatpush1.msra.mxu0 0.0
      %6226 = vmatprep.subr.mxu0 0.0
      %6227 = vmatpush1.msra.mxu0 0.0
      %6228 = vmatprep.subr.mxu0 0.0
      %6229 = vmatpush1.msra.mxu0 0.0
      %6230 = vmatprep.subr.mxu0 0.0
      %6231 = vmatpush1.msra.mxu0 0.0
      %6232 = vmatprep.subr.mxu0 0.0
      %6233 = vmatpush1.msra.mxu0 0.0
      %6234 = vmatprep.subr.mxu0 0.0
      %6235 = vmatpush1.msra.mxu0 0.0
      %6236 = vmatprep.subr.mxu0 0.0
      %6237 = vmatpush1.msra.mxu0 0.0
      %6238 = vmatprep.subr.mxu0 0.0
      %6239 = vmatpush1.msra.mxu0 0.0
      %6240 = vmatprep.subr.mxu0 0.0
      %6241 = vmatpush1.msra.mxu0 0.0
      %6242 = vmatprep.subr.mxu0 0.0
      %6243 = vmatpush1.msra.mxu0 0.0
      %6244 = vmatprep.subr.mxu0 0.0
      %6245 = vmatpush1.msra.mxu0 0.0
      %6246 = vmatprep.subr.mxu0 0.0
      %6247 = vmatpush1.msra.mxu0 0.0
      %6248 = vmatprep.subr.mxu0 0.0
      %6249 = vmatpush1.msra.mxu0 0.0
      %6250 = vmatprep.subr.mxu0 0.0
      %6251 = vmatpush1.msra.mxu0 0.0
      %6252 = vmatprep.subr.mxu0 0.0
      %6253 = vmatpush1.msra.mxu0 0.0
      %6254 = vmatprep.subr.mxu0 0.0
      %6255 = vmatpush1.msra.mxu0 0.0
      %6256 = vmatprep.subr.mxu0 0.0
      %6257 = vmatpush1.msra.mxu0 0.0
      %6258 = vmatprep.subr.mxu0 0.0
      %6259 = vmatpush1.msra.mxu0 0.0
      %6260 = vmatprep.mubr.f32.mxu0 0.0
      %6261 = vmatmul.mubr.f32.gmra.mrb[0].mxu0 %v6188
      %v6262 = vpop.f32.mrb[0].mxu0
      %v6263 = vadd.f32 %v6186, %v6262
      %v6264 = vpop.f32.mrb[0].mxu0
      %6265 = vmatprep.mubr.f32.mxu0 0.0
      %6266 = vmatmul.mubr.f32.gmra.mrb[0].mxu0 %v6191
      %v6267 = vpop.f32.mrb[0].mxu0
      %v6268 = vadd.f32 %v6186, %v6267
      %v6269 = vpop.f32.mrb[0].mxu0
      %6270 = vmatprep.mubr.f32.mxu0 0.0
      %6271 = vmatmul.mubr.f32.gmra.mrb[0].mxu0 %v6194
      %v6272 = vpop.f32.mrb[0].mxu0
      %v6273 = vadd.f32 %v6186, %v6272
      %v6274 = vpop.f32.mrb[0].mxu0
      %6275 = vdwg.mxu0
      %v6276 = vmax.f32 %v6263, 0.0
      %v6277 = vmax.f32 %v6268, 0.0
      %v6278 = vmax.f32 %v6273, 0.0
      %v6279 = vld [vmem:[%s4 + $0x258] sm:$0x1]
      %v6280 = vld [vmem:[%s4 + $0x260] sm:$0xff]
      %v6281 = vld [vmem:[%s4 + $0x268] sm:$0xff]
      %v6282 = vld [vmem:[%s4 + $0x270] sm:$0xff]
      %v6283 = vld [vmem:[%s4 + $0x278] sm:$0xff]
      %v6284 = vlaneseq
      %v6285 = vshrl.u32 %v6284, 7
      %v6286 = vsub.s32 0, %v6285
      %v6287 = vrot.slane %v6279, %v6286
      %v6289 = vsel %vm2414, %v6276, 0
      %v6292 = vsel %vm2414, %v6277, 0
      %v6295 = vsel %vm2414, %v6278, 0
      %6297 = vmatprep.subr.mxu0 0.0
      %6298 = vmatpush1.msra.mxu0 %v6280
      %6299 = vmatprep.subr.mxu0 0.0
      %6300 = vmatpush1.msra.mxu0 %v6281
      %6301 = vmatprep.subr.mxu0 0.0
      %6302 = vmatpush1.msra.mxu0 %v6282
      %6303 = vmatprep.subr.mxu0 0.0
      %6304 = vmatpush1.msra.mxu0 %v6283
      %6305 = vmatprep.subr.mxu0 0.0
      %6306 = vmatpush1.msra.mxu0 0.0
      %6307 = vmatprep.subr.mxu0 0.0
      %6308 = vmatpush1.msra.mxu0 0.0
      %6309 = vmatprep.subr.mxu0 0.0
      %6310 = vmatpush1.msra.mxu0 0.0
      %6311 = vmatprep.subr.mxu0 0.0
      %6312 = vmatpush1.msra.mxu0 0.0
      %6313 = vmatprep.subr.mxu0 0.0
      %6314 = vmatpush1.msra.mxu0 0.0
      %6315 = vmatprep.subr.mxu0 0.0
      %6316 = vmatpush1.msra.mxu0 0.0
      %6317 = vmatprep.subr.mxu0 0.0
      %6318 = vmatpush1.msra.mxu0 0.0
      %6319 = vmatprep.subr.mxu0 0.0
      %6320 = vmatpush1.msra.mxu0 0.0
      %6321 = vmatprep.subr.mxu0 0.0
      %6322 = vmatpush1.msra.mxu0 0.0
      %6323 = vmatprep.subr.mxu0 0.0
      %6324 = vmatpush1.msra.mxu0 0.0
      %6325 = vmatprep.subr.mxu0 0.0
      %6326 = vmatpush1.msra.mxu0 0.0
      %6327 = vmatprep.subr.mxu0 0.0
      %6328 = vmatpush1.msra.mxu0 0.0
      %6329 = vmatprep.subr.mxu0 0.0
      %6330 = vmatpush1.msra.mxu0 0.0
      %6331 = vmatprep.subr.mxu0 0.0
      %6332 = vmatpush1.msra.mxu0 0.0
      %6333 = vmatprep.subr.mxu0 0.0
      %6334 = vmatpush1.msra.mxu0 0.0
      %6335 = vmatprep.subr.mxu0 0.0
      %6336 = vmatpush1.msra.mxu0 0.0
      %6337 = vmatprep.subr.mxu0 0.0
      %6338 = vmatpush1.msra.mxu0 0.0
      %6339 = vmatprep.subr.mxu0 0.0
      %6340 = vmatpush1.msra.mxu0 0.0
      %6341 = vmatprep.subr.mxu0 0.0
      %6342 = vmatpush1.msra.mxu0 0.0
      %6343 = vmatprep.subr.mxu0 0.0
      %6344 = vmatpush1.msra.mxu0 0.0
      %6345 = vmatprep.subr.mxu0 0.0
      %6346 = vmatpush1.msra.mxu0 0.0
      %6347 = vmatprep.subr.mxu0 0.0
      %6348 = vmatpush1.msra.mxu0 0.0
      %6349 = vmatprep.subr.mxu0 0.0
      %6350 = vmatpush1.msra.mxu0 0.0
      %6351 = vmatprep.subr.mxu0 0.0
      %6352 = vmatpush1.msra.mxu0 0.0
      %6353 = vmatprep.subr.mxu0 0.0
      %6354 = vmatpush1.msra.mxu0 0.0
      %6355 = vmatprep.subr.mxu0 0.0
      %6356 = vmatpush1.msra.mxu0 0.0
      %6357 = vmatprep.subr.mxu0 0.0
      %6358 = vmatpush1.msra.mxu0 0.0
      %6359 = vmatprep.subr.mxu0 0.0
      %6360 = vmatpush1.msra.mxu0 0.0
      %6361 = vmatprep.mubr.f32.mxu0 0.0
      %6362 = vmatmul.mubr.f32.gmra.mrb[0].mxu0 %v6289
      %v6363 = vpop.f32.mrb[0].mxu0
      %v6364 = vadd.f32 %v6287, %v6363
      %v6365 = vpop.f32.mrb[0].mxu0
      %6366 = vmatprep.mubr.f32.mxu0 0.0
      %6367 = vmatmul.mubr.f32.gmra.mrb[0].mxu0 %v6292
      %v6368 = vpop.f32.mrb[0].mxu0
      %v6369 = vadd.f32 %v6287, %v6368
      %v6370 = vpop.f32.mrb[0].mxu0
      %6371 = vmatprep.mubr.f32.mxu0 0.0
      %6372 = vmatmul.mubr.f32.gmra.mrb[0].mxu0 %v6295
      %v6373 = vpop.f32.mrb[0].mxu0
      %v6374 = vadd.f32 %v6287, %v6373
      %v6375 = vpop.f32.mrb[0].mxu0
      %6376 = vdwg.mxu0
      %v6377 = vadd.f32 %v6364, %v265
      %v6378 = vadd.f32 %v6369, %v266
      %v6379 = vadd.f32 %v6374, %v267
      %v6380 = vld [vmem:[%s4 + $0x280] sm:$0x1]
      %v6381 = vld [vmem:[%s4 + $0x288] sm:$0xff]
      %v6382 = vld [vmem:[%s4 + $0x290] sm:$0xff]
      %v6383 = vld [vmem:[%s4 + $0x298] sm:$0xff]
      %v6384 = vld [vmem:[%s4 + $0x2a0] sm:$0xff]
      %v6385 = vlaneseq
      %v6386 = vshrl.u32 %v6385, 7
      %v6387 = vsub.s32 0, %v6386
      %v6388 = vrot.slane %v6380, %v6387
      %v6390 = vsel %vm2414, %v6074, 0
      %v6393 = vsel %vm2414, %v6075, 0
      %v6396 = vsel %vm2414, %v6076, 0
      %6398 = vmatprep.subr.mxu0 0.0
      %6399 = vmatpush1.msra.mxu0 %v6381
      %6400 = vmatprep.subr.mxu0 0.0
      %6401 = vmatpush1.msra.mxu0 %v6382
      %6402 = vmatprep.subr.mxu0 0.0
      %6403 = vmatpush1.msra.mxu0 %v6383
      %6404 = vmatprep.subr.mxu0 0.0
      %6405 = vmatpush1.msra.mxu0 %v6384
      %6406 = vmatprep.subr.mxu0 0.0
      %6407 = vmatpush1.msra.mxu0 0.0
      %6408 = vmatprep.subr.mxu0 0.0
      %6409 = vmatpush1.msra.mxu0 0.0
      %6410 = vmatprep.subr.mxu0 0.0
      %6411 = vmatpush1.msra.mxu0 0.0
      %6412 = vmatprep.subr.mxu0 0.0
      %6413 = vmatpush1.msra.mxu0 0.0
      %6414 = vmatprep.subr.mxu0 0.0
      %6415 = vmatpush1.msra.mxu0 0.0
      %6416 = vmatprep.subr.mxu0 0.0
      %6417 = vmatpush1.msra.mxu0 0.0
      %6418 = vmatprep.subr.mxu0 0.0
      %6419 = vmatpush1.msra.mxu0 0.0
      %6420 = vmatprep.subr.mxu0 0.0
      %6421 = vmatpush1.msra.mxu0 0.0
      %6422 = vmatprep.subr.mxu0 0.0
      %6423 = vmatpush1.msra.mxu0 0.0
      %6424 = vmatprep.subr.mxu0 0.0
      %6425 = vmatpush1.msra.mxu0 0.0
      %6426 = vmatprep.subr.mxu0 0.0
      %6427 = vmatpush1.msra.mxu0 0.0
      %6428 = vmatprep.subr.mxu0 0.0
      %6429 = vmatpush1.msra.mxu0 0.0
      %6430 = vmatprep.subr.mxu0 0.0
      %6431 = vmatpush1.msra.mxu0 0.0
      %6432 = vmatprep.subr.mxu0 0.0
      %6433 = vmatpush1.msra.mxu0 0.0
      %6434 = vmatprep.subr.mxu0 0.0
      %6435 = vmatpush1.msra.mxu0 0.0
      %6436 = vmatprep.subr.mxu0 0.0
      %6437 = vmatpush1.msra.mxu0 0.0
      %6438 = vmatprep.subr.mxu0 0.0
      %6439 = vmatpush1.msra.mxu0 0.0
      %6440 = vmatprep.subr.mxu0 0.0
      %6441 = vmatpush1.msra.mxu0 0.0
      %6442 = vmatprep.subr.mxu0 0.0
      %6443 = vmatpush1.msra.mxu0 0.0
      %6444 = vmatprep.subr.mxu0 0.0
      %6445 = vmatpush1.msra.mxu0 0.0
      %6446 = vmatprep.subr.mxu0 0.0
      %6447 = vmatpush1.msra.mxu0 0.0
      %6448 = vmatprep.subr.mxu0 0.0
      %6449 = vmatpush1.msra.mxu0 0.0
      %6450 = vmatprep.subr.mxu0 0.0
      %6451 = vmatpush1.msra.mxu0 0.0
      %6452 = vmatprep.subr.mxu0 0.0
      %6453 = vmatpush1.msra.mxu0 0.0
      %6454 = vmatprep.subr.mxu0 0.0
      %6455 = vmatpush1.msra.mxu0 0.0
      %6456 = vmatprep.subr.mxu0 0.0
      %6457 = vmatpush1.msra.mxu0 0.0
      %6458 = vmatprep.subr.mxu0 0.0
      %6459 = vmatpush1.msra.mxu0 0.0
      %6460 = vmatprep.subr.mxu0 0.0
      %6461 = vmatpush1.msra.mxu0 0.0
      %6462 = vmatprep.mubr.f32.mxu0 0.0
      %6463 = vmatmul.mubr.f32.gmra.mrb[0].mxu0 %v6390
      %v6464 = vpop.f32.mrb[0].mxu0
      %v6465 = vadd.f32 %v6388, %v6464
      %v6466 = vpop.f32.mrb[0].mxu0
      %6467 = vmatprep.mubr.f32.mxu0 0.0
      %6468 = vmatmul.mubr.f32.gmra.mrb[0].mxu0 %v6393
      %v6469 = vpop.f32.mrb[0].mxu0
      %v6470 = vadd.f32 %v6388, %v6469
      %v6471 = vpop.f32.mrb[0].mxu0
      %6472 = vmatprep.mubr.f32.mxu0 0.0
      %6473 = vmatmul.mubr.f32.gmra.mrb[0].mxu0 %v6396
      %v6474 = vpop.f32.mrb[0].mxu0
      %v6475 = vadd.f32 %v6388, %v6474
      %v6476 = vpop.f32.mrb[0].mxu0
      %6477 = vdwg.mxu0
      %6481 = vrot.lane.b32.xlu0 %v6465, 2
      %v6482 = vpop.permute.xlu0 %6481
      %6483 = vrot.lane.b32.xlu0 %v6470, 2
      %v6484 = vpop.permute.xlu0 %6483
      %6485 = vrot.lane.b32.xlu0 %v6475, 2
      %v6486 = vpop.permute.xlu0 %6485
      %vm6490 = vcmask 15360
      %v6491 = vsel %vm6490, %v6377, %v6482
      %v6492 = vsel %vm6490, %v6378, %v6484
      %v6493 = vsel %vm6490, %v6379, %v6486
      %vm6494 = vcmask 48128
      %6495 = vst.msk [vmem:[%s264] sm:$0xff] %vm6494, %v6491
      %6496 = vst.msk [vmem:[%s264 + $0x8] sm:$0xff] %vm6494, %v6492
      %vm6497 = vcmask 44032
      %6498 = vst.msk [vmem:[%s264 + $0x10] sm:$0xf] %vm6497, %v6493
      %p6499 = scmp.lt.s32.totalorder %s16, 1
      %s6500 = scalar_select %p6499, %s16, 1
      %s6501 = smul.addr %s6500, 3
      %s6502 = smul.addr %s6501, 8
      %s6503 = scalar_lea.vmem %s5, %s6502
      // Predicated region
      $region41: #{_detr_forward_impl.1} parent=39 // pred_check
        %p6504 = pneg %p154
      $region42: #{_detr_forward_impl.1} parent=39 // pred_check_branch
        %6506 = sbr.rel (%p6504) target = $region44
      $region43: #{_detr_forward_impl.1} parent=39 // pred_region
        _
      $region44: #{_detr_forward_impl.1} parent=39 // pred_fallthru
        _
    $region40: #{_detr_forward_impl.1} parent=5 // pred_fallthru
      _
    %p6507 = scmp.le.s32.totalorder 2, %s11
    // Predicated region
    $region45: #{_detr_forward_impl.1} parent=5 // pred_check
      %p6508 = pneg %p6507
    $region46: #{_detr_forward_impl.1} parent=5 // pred_check_branch
      %6510 = sbr.rel (%p6508) target = $region48
    $region47: #{_detr_forward_impl.1} parent=5 // pred_region
      %s6511 = ssub.s32 %s11, 2
      // Predicated region
      $region49: #{_detr_forward_impl.1} parent=47 // pred_check
        %p6512 = pneg %p160
      $region50: #{_detr_forward_impl.1} parent=47 // pred_check_branch
        %6514 = sbr.rel (%p6512) target = $region52
      $region51: #{_detr_forward_impl.1} parent=47 // pred_region
        %p6515 = scmp.lt.s32.totalorder %s17, 1
        %s6516 = scalar_select %p6515, %s17, 1
        %s6517 = smul.addr %s6516, 3
        %s6518 = smul.addr %s6517, 8
        %s6519 = scalar_lea.vmem %s5, %s6518
      $region52: #{_detr_forward_impl.1} parent=47 // pred_fallthru
        _
    $region48: #{_detr_forward_impl.1} parent=5 // pred_fallthru
      _
  $region6: #{_detr_forward_impl.1} parent=0 // loop_footer
    %s15 = sadd.s32 1, %s11
  $region7: #{_detr_forward_impl.1} parent=0 // loop_footer_branch
    %10 = sbr.rel target = $region3
  $region8: #{_detr_forward_impl.1} parent=0 // loop_exit
    _

</llo_original>
